<compile_context>
chip_gen: v7x
topology: tpu7x:2x2x1
jax: 0.10.0
libtpu: 0.0.40
codegen_flags: <defaults>
</compile_context>

<pallas_src>
import jax
import jax.numpy as jnp
from jax import lax
from jax.experimental import pallas as pl
from jax.experimental.pallas import tpu as pltpu

# Synthetic RenderConfig
BOUND = 1.0          # cfg.bound
MIN_NEAR = 0.05      # cfg.min_near
NUM_STEPS = 64       # num_steps (S) -> sublane axis inside the kernel
HIDDEN = 32          # synthetic density-MLP hidden width
IMG_DIMS = 4         # latent_mode=True -> 3 + 1
OUTC = 1 + IMG_DIMS  # sigma + albedo channels
TR = 256             # rays per grid step (lane axis, multiple of 128)


def _nerf_render_kernel(ray_ref, w_in_ref, w_out_ref, ltri_ref, scal_ref,
                        pack_ref, weights_ref):
    S = NUM_STEPS
    f32 = jnp.float32
    tr = ray_ref.shape[1]

    # ray bundle rows: 0-2 rays_o, 3-5 rays_d, 6 near, 7 far     (8, TR)
    near = ray_ref[6:7, :]
    far = ray_ref[7:8, :]
    span = far - near                                            # (1, TR)

    # z_vals = near + (far - near) * linspace(0, 1, S)  (samples on sublanes)
    srow = lax.broadcasted_iota(jnp.int32, (S, tr), 0)
    t = srow.astype(f32) * (1.0 / (S - 1))
    z = near + span * t                                          # (S, TR)

    # xyzs = rays_o + rays_d * z, AABB-clamped; coordinate blocks stacked on
    # sublanes plus a ones block that carries the hidden bias through the MXU.
    X = jnp.clip(ray_ref[0:1, :] + ray_ref[3:4, :] * z, -BOUND, BOUND)
    Y = jnp.clip(ray_ref[1:2, :] + ray_ref[4:5, :] * z, -BOUND, BOUND)
    Z = jnp.clip(ray_ref[2:3, :] + ray_ref[5:6, :] * z, -BOUND, BOUND)
    p_aug = jnp.concatenate([X, Y, Z, jnp.ones((S, tr), f32)], axis=0)  # (4S,TR)

    # synthetic density() entirely on the MXU:
    #   h   = relu(W_in_big @ p_aug)          (HIDDEN*S, TR)
    #   out = W_out_big @ h                   (OUTC*S,  TR)  rows: [sigma|alb0..3]
    h = jnp.maximum(
        jnp.dot(w_in_ref[...], p_aug, preferred_element_type=f32), 0.0)
    out = jnp.dot(w_out_ref[...], h, preferred_element_type=f32)

    # sigma = softplus(.)   (numerically stable form)
    sig_pre = out[0:S, :] + scal_ref[0]
    sigma = jnp.maximum(sig_pre, 0.0) + jnp.log1p(jnp.exp(-jnp.abs(sig_pre)))

    # deltas: z[i+1]-z[i] == span/(S-1) for i < S-1, sample_dist=span/S at end
    deltas = jnp.where(srow == S - 1, span * (1.0 / S), span * (1.0 / (S - 1)))

    alphas = 1.0 - jnp.exp(-deltas * sigma)                      # (S, TR)
    # exclusive cumprod of (1 - alpha + 1e-15) as exp(cumsum_excl(log)) via MXU
    # with a precomputed strictly-lower-triangular (S, S) matrix.
    log_om = jnp.log(1.0 - alphas + 1e-15)
    trans = jnp.exp(jnp.dot(ltri_ref[...], log_om, preferred_element_type=f32))
    weights = alphas * trans                                     # (S, TR)

    wsum = jnp.sum(weights, axis=0, keepdims=True)               # (1, TR)
    depth = jnp.sum(weights * z, axis=0, keepdims=True)          # (1, TR)

    weights_ref[...] = weights

    # image channels (sigmoid albedo) + background mix, packed lane-dense:
    # rows = [img0..img3, depth, weights_sum]
    bg_gap = 1.0 - wsum
    rows = []
    for c in range(IMG_DIMS):
        alb_pre = out[(1 + c) * S:(2 + c) * S, :] + scal_ref[1 + c]
        alb = 1.0 / (1.0 + jnp.exp(-alb_pre))
        img_c = jnp.sum(weights * alb, axis=0, keepdims=True)
        rows.append(img_c + bg_gap * scal_ref[1 + IMG_DIMS + c])
    rows.append(depth)
    rows.append(wsum)
    pack_ref[...] = jnp.concatenate(rows, axis=0)                # (IMG_DIMS+2, TR)


def _prepare_constants(params):
    """Block-diagonal (kron) MLP weights + cumsum matrix, built once on host."""
    S = NUM_STEPS
    f32 = jnp.float32
    eye = jnp.eye(S, dtype=f32)

    # hidden layer: (HIDDEN*S, 3*S) kron weights + bias folded into a 4th block
    w_in = jnp.kron(params["w1"].T.astype(f32), eye)             # (H*S, 3*S)
    b_blk = jnp.zeros((HIDDEN * S, S), f32).at[:, 0].set(
        jnp.repeat(params["b1"].astype(f32), S))
    w_in_aug = jnp.concatenate([w_in, b_blk], axis=1)            # (H*S, 4*S)

    # output heads: [ws | wa]  -> (OUTC*S, HIDDEN*S)
    w_out = jnp.concatenate(
        [params["ws"].astype(f32)[:, None], params["wa"].astype(f32)], axis=1)
    m_out = jnp.kron(w_out.T, eye)                               # (OUTC*S, H*S)

    # strictly-lower-triangular ones: (L @ x)[s] = sum_{s'<s} x[s']
    r = jnp.arange(S)
    ltri = (r[:, None] > r[None, :]).astype(f32)                 # (S, S)
    return w_in_aug, m_out, ltri


def nerf_render(rays_o, rays_d, params, bg_image):
    """Pallas equivalent of NeRFRenderer.render()/run() (upsample_steps=0)."""
    prefix = rays_o.shape[:-1]
    ro = rays_o.reshape(-1, 3).astype(jnp.float32)
    rd = rays_d.reshape(-1, 3).astype(jnp.float32)
    R = ro.shape[0]

    # near_far_from_bound(..., type='sphere', min_near)  -- cheap glue
    radius = jnp.linalg.norm(ro, axis=-1, keepdims=True)
    nears = jnp.maximum(radius - BOUND, MIN_NEAR)
    fars = radius + BOUND

    # single lane-major ray bundle (8, R), zero-padded to a multiple of TR
    ray_data = jnp.concatenate([ro.T, rd.T, nears.T, fars.T], axis=0)
    Rp = ((R + TR - 1) // TR) * TR
    if Rp != R:
        ray_data = jnp.pad(ray_data, ((0, 0), (0, Rp - R)))

    w_in_aug, m_out, ltri = _prepare_constants(params)
    # SMEM scalars: [bs, ba(4), bg(4)]
    scal = jnp.concatenate(
        [params["bs"].astype(jnp.float32),
         params["ba"].astype(jnp.float32),
         bg_image.astype(jnp.float32)])

    S = NUM_STEPS
    out_shape = (
        jax.ShapeDtypeStruct((IMG_DIMS + 2, Rp), jnp.float32),   # [image|depth|wsum]
        jax.ShapeDtypeStruct((S, Rp), jnp.float32),              # weights (S, R)
    )
    in_specs = [
        pl.BlockSpec((8, TR), lambda i: (0, i)),                          # rays
        pl.BlockSpec((HIDDEN * S, 4 * S), lambda i: (0, 0)),              # W_in
        pl.BlockSpec((OUTC * S, HIDDEN * S), lambda i: (0, 0)),           # W_out
        pl.BlockSpec((S, S), lambda i: (0, 0)),                           # ltri
        pl.BlockSpec(memory_space=pltpu.MemorySpace.SMEM),                # scalars
    ]
    out_specs = (
        pl.BlockSpec((IMG_DIMS + 2, TR), lambda i: (0, i)),
        pl.BlockSpec((S, TR), lambda i: (0, i)),
    )

    packed, weights_sr = pl.pallas_call(
        _nerf_render_kernel,
        out_shape=out_shape,
        grid_spec=pltpu.PrefetchScalarGridSpec(
            num_scalar_prefetch=0,
            grid=(Rp // TR,),
            in_specs=in_specs,
            out_specs=out_specs),
        compiler_params=pltpu.CompilerParams(
            dimension_semantics=("parallel",),
            vmem_limit_bytes=32 * 1024 * 1024),
    )(ray_data, w_in_aug, m_out, ltri, scal)

    image = packed[:IMG_DIMS, :R].T                              # (R, IMG_DIMS)
    depth = packed[IMG_DIMS, :R]
    wsum = packed[IMG_DIMS + 1, :R]
    weights = weights_sr[:, :R].T                                # (R, S)

    # glue-side reconstruction of xyzs for the results dict (same formula the
    # kernel uses internally)
    z_vals = nears + (fars - nears) * jnp.linspace(0.0, 1.0, S)[None, :]
    xyzs = jnp.clip(ro[:, None, :] + rd[:, None, :] * z_vals[:, :, None],
                    -BOUND, BOUND)

    return {
        "image": image.reshape(*prefix, IMG_DIMS),
        "depth": depth.reshape(*prefix),
        "weights": weights,                       # (R, num_steps), like torch
        "weights_sum": wsum.reshape(*prefix),
        "mask": (nears < fars).reshape(*prefix),
        "xyzs": xyzs,
    }


def _reference(rays_o, rays_d, params, bg_image):
    """Plain-JAX, torch-faithful (cumprod/concat) reference for validation."""
    prefix = rays_o.shape[:-1]
    ro = rays_o.reshape(-1, 3)
    rd = rays_d.reshape(-1, 3)
    radius = jnp.linalg.norm(ro, axis=-1, keepdims=True)
    nears = jnp.maximum(radius - BOUND, MIN_NEAR)
    fars = radius + BOUND
    t = jnp.linspace(0.0, 1.0, NUM_STEPS)[None, :]
    z = nears + (fars - nears) * t
    sample_dist = (fars - nears) / NUM_STEPS
    xyz = jnp.clip(ro[:, None, :] + rd[:, None, :] * z[..., None],
                   -BOUND, BOUND)
    flat = xyz.reshape(-1, 3)
    h = jnp.maximum(flat @ params["w1"] + params["b1"], 0.0)
    sigma = jax.nn.softplus(h @ params["ws"] + params["bs"][0]).reshape(z.shape)
    albedo = jax.nn.sigmoid(h @ params["wa"] + params["ba"]
                            ).reshape(z.shape + (IMG_DIMS,))
    deltas = jnp.concatenate(
        [z[:, 1:] - z[:, :-1], sample_dist * jnp.ones_like(z[:, :1])], axis=-1)
    alphas = 1.0 - jnp.exp(-deltas * sigma)
    shifted = jnp.concatenate(
        [jnp.ones_like(alphas[:, :1]), 1.0 - alphas + 1e-15], axis=-1)
    weights = alphas * jnp.cumprod(shifted, axis=-1)[:, :-1]
    wsum = weights.sum(-1)
    depth = (weights * z).sum(-1)
    image = (weights[..., None] * albedo).sum(-2)
    image = image + (1.0 - wsum)[..., None] * bg_image[None, :]
    return {
        "image": image.reshape(*prefix, IMG_DIMS),
        "depth": depth.reshape(*prefix),
        "weights": weights,
        "weights_sum": wsum.reshape(*prefix),
    }


if __name__ == "__main__":
    key = jax.random.PRNGKey(0)
    kro, krd, k1, k2, k3, k4, k5, kbg = jax.random.split(key, 8)

    B, N = 2, 1024   # rays: (B, N, 3) -> R = 2048 rays, 8 grid steps at TR=256
    ro = jax.random.normal(kro, (B, N, 3), jnp.float32)
    ro = 1.5 * BOUND * ro / jnp.linalg.norm(ro, axis=-1, keepdims=True)
    rd = jax.random.normal(krd, (B, N, 3), jnp.float32)
    rd = rd / jnp.linalg.norm(rd, axis=-1, keepdims=True)

    params = {
        "w1": 0.5 * jax.random.normal(k1, (3, HIDDEN), jnp.float32),
        "b1": 0.1 * jax.random.normal(k2, (HIDDEN,), jnp.float32),
        "ws": 0.5 * jax.random.normal(k3, (HIDDEN,), jnp.float32),
        "bs": jnp.array([-0.5], jnp.float32),
        "wa": 0.5 * jax.random.normal(k4, (HIDDEN, IMG_DIMS), jnp.float32),
        "ba": 0.1 * jax.random.normal(k5, (IMG_DIMS,), jnp.float32),
    }
    # deterministic stand-in for the 'rand' background mode
    bg_image = jax.random.normal(kbg, (IMG_DIMS,), jnp.float32)

    results = nerf_render(ro, rd, params, bg_image)
    jax.block_until_ready(results)

    ref = _reference(ro, rd, params, bg_image)
    for name in ("image", "depth", "weights_sum", "weights"):
        assert jnp.allclose(results[name], ref[name], atol=1e-3, rtol=1e-3), name

    print("KERNEL_OK")
</pallas_src>

<mosaic_0001>
module attributes {stable_mosaic.version = 11 : i64} {
  func.func @_nerf_render_kernel(%arg0: i32, %arg1: memref<8x256xf32, #tpu.memory_space<vmem>>, %arg2: memref<2048x256xf32, #tpu.memory_space<vmem>>, %arg3: memref<320x2048xf32, #tpu.memory_space<vmem>>, %arg4: memref<64x64xf32, #tpu.memory_space<vmem>>, %arg5: memref<9xf32, #tpu.memory_space<smem>>, %arg6: memref<6x256xf32, #tpu.memory_space<vmem>>, %arg7: memref<64x256xf32, #tpu.memory_space<vmem>>) attributes {dimension_semantics = [#tpu.dimension_semantics<parallel>], iteration_bounds = array<i64: 8>, scalar_prefetch = 0 : i64, scratch_operands = 0 : i64, tpu.core_type = #tpu.core_type<tc>, window_params = [{transform_indices = @transform_0, window_bounds = array<i64: 8, 256>}, {pipeline_mode = #tpu.pipeline_mode<synchronous>, transform_indices = @transform_1, window_bounds = array<i64: 2048, 256>}, {pipeline_mode = #tpu.pipeline_mode<synchronous>, transform_indices = @transform_2, window_bounds = array<i64: 320, 2048>}, {pipeline_mode = #tpu.pipeline_mode<synchronous>, transform_indices = @transform_3, window_bounds = array<i64: 64, 64>}, {transform_indices = @transform_4, window_bounds = array<i64: 9>}, {transform_indices = @transform_5, window_bounds = array<i64: 6, 256>}, {transform_indices = @transform_6, window_bounds = array<i64: 64, 256>}]} {
    %c6 = arith.constant 6 : index
    %c0 = arith.constant 0 : index
    %0 = vector.load %arg1[%c6, %c0] : memref<8x256xf32, #tpu.memory_space<vmem>>, vector<1x256xf32>
    %c7 = arith.constant 7 : index
    %c0_0 = arith.constant 0 : index
    %1 = vector.load %arg1[%c7, %c0_0] : memref<8x256xf32, #tpu.memory_space<vmem>>, vector<1x256xf32>
    %2 = arith.subf %1, %0 : vector<1x256xf32>
    %3 = tpu.iota {dimensions = array<i32: 0>} : vector<64x256xi32>
    %4 = arith.sitofp %3 : vector<64x256xi32> to vector<64x256xf32>
    %cst = arith.constant 0.0158730168 : f32
    %5 = vector.broadcast %cst : f32 to vector<64x256xf32>
    %6 = arith.mulf %4, %5 : vector<64x256xf32>
    %7 = vector.broadcast %2 : vector<1x256xf32> to vector<64x256xf32>
    %8 = arith.mulf %7, %6 : vector<64x256xf32>
    %9 = vector.broadcast %0 : vector<1x256xf32> to vector<64x256xf32>
    %10 = arith.addf %9, %8 : vector<64x256xf32>
    %c0_1 = arith.constant 0 : index
    %c0_2 = arith.constant 0 : index
    %11 = vector.load %arg1[%c0_1, %c0_2] : memref<8x256xf32, #tpu.memory_space<vmem>>, vector<1x256xf32>
    %c3 = arith.constant 3 : index
    %c0_3 = arith.constant 0 : index
    %12 = vector.load %arg1[%c3, %c0_3] : memref<8x256xf32, #tpu.memory_space<vmem>>, vector<1x256xf32>
    %13 = vector.broadcast %12 : vector<1x256xf32> to vector<64x256xf32>
    %14 = arith.mulf %13, %10 : vector<64x256xf32>
    %15 = vector.broadcast %11 : vector<1x256xf32> to vector<64x256xf32>
    %16 = arith.addf %15, %14 : vector<64x256xf32>
    %cst_4 = arith.constant -1.000000e+00 : f32
    %cst_5 = arith.constant 1.000000e+00 : f32
    %17 = vector.broadcast %cst_4 : f32 to vector<64x256xf32>
    %18 = arith.maximumf %17, %16 : vector<64x256xf32>
    %19 = vector.broadcast %cst_5 : f32 to vector<64x256xf32>
    %20 = arith.minimumf %19, %18 : vector<64x256xf32>
    %c1 = arith.constant 1 : index
    %c0_6 = arith.constant 0 : index
    %21 = vector.load %arg1[%c1, %c0_6] : memref<8x256xf32, #tpu.memory_space<vmem>>, vector<1x256xf32>
    %c4 = arith.constant 4 : index
    %c0_7 = arith.constant 0 : index
    %22 = vector.load %arg1[%c4, %c0_7] : memref<8x256xf32, #tpu.memory_space<vmem>>, vector<1x256xf32>
    %23 = vector.broadcast %22 : vector<1x256xf32> to vector<64x256xf32>
    %24 = arith.mulf %23, %10 : vector<64x256xf32>
    %25 = vector.broadcast %21 : vector<1x256xf32> to vector<64x256xf32>
    %26 = arith.addf %25, %24 : vector<64x256xf32>
    %cst_8 = arith.constant -1.000000e+00 : f32
    %cst_9 = arith.constant 1.000000e+00 : f32
    %27 = vector.broadcast %cst_8 : f32 to vector<64x256xf32>
    %28 = arith.maximumf %27, %26 : vector<64x256xf32>
    %29 = vector.broadcast %cst_9 : f32 to vector<64x256xf32>
    %30 = arith.minimumf %29, %28 : vector<64x256xf32>
    %c2 = arith.constant 2 : index
    %c0_10 = arith.constant 0 : index
    %31 = vector.load %arg1[%c2, %c0_10] : memref<8x256xf32, #tpu.memory_space<vmem>>, vector<1x256xf32>
    %c5 = arith.constant 5 : index
    %c0_11 = arith.constant 0 : index
    %32 = vector.load %arg1[%c5, %c0_11] : memref<8x256xf32, #tpu.memory_space<vmem>>, vector<1x256xf32>
    %33 = vector.broadcast %32 : vector<1x256xf32> to vector<64x256xf32>
    %34 = arith.mulf %33, %10 : vector<64x256xf32>
    %35 = vector.broadcast %31 : vector<1x256xf32> to vector<64x256xf32>
    %36 = arith.addf %35, %34 : vector<64x256xf32>
    %cst_12 = arith.constant -1.000000e+00 : f32
    %cst_13 = arith.constant 1.000000e+00 : f32
    %37 = vector.broadcast %cst_12 : f32 to vector<64x256xf32>
    %38 = arith.maximumf %37, %36 : vector<64x256xf32>
    %39 = vector.broadcast %cst_13 : f32 to vector<64x256xf32>
    %40 = arith.minimumf %39, %38 : vector<64x256xf32>
    %cst_14 = arith.constant 1.000000e+00 : f32
    %41 = vector.broadcast %cst_14 : f32 to vector<64x256xf32>
    %42 = tpu.concatenate %20, %30, %40, %41 in 0 : vector<64x256xf32>, vector<64x256xf32>, vector<64x256xf32>, vector<64x256xf32> -> vector<256x256xf32>
    %c0_15 = arith.constant 0 : index
    %c0_16 = arith.constant 0 : index
    %43 = vector.load %arg2[%c0_15, %c0_16] : memref<2048x256xf32, #tpu.memory_space<vmem>>, vector<2048x256xf32>
    %cst_17 = arith.constant dense<0.000000e+00> : vector<2048x256xf32>
    %44 = tpu.matmul %43, %42, %cst_17 {dimension_numbers = #tpu.dot_dimension_numbers<[1], [0], [0], [1], [0, 0, 1, 1], [], []>} : vector<2048x256xf32>, vector<256x256xf32>, vector<2048x256xf32> -> vector<2048x256xf32>
    %cst_18 = arith.constant 0.000000e+00 : f32
    %45 = vector.broadcast %cst_18 : f32 to vector<2048x256xf32>
    %46 = arith.maximumf %44, %45 : vector<2048x256xf32>
    %c0_19 = arith.constant 0 : index
    %c0_20 = arith.constant 0 : index
    %47 = vector.load %arg3[%c0_19, %c0_20] : memref<320x2048xf32, #tpu.memory_space<vmem>>, vector<320x2048xf32>
    %cst_21 = arith.constant dense<0.000000e+00> : vector<320x256xf32>
    %48 = tpu.matmul %47, %46, %cst_21 {dimension_numbers = #tpu.dot_dimension_numbers<[1], [0], [0], [1], [0, 0, 1, 1], [], []>} : vector<320x2048xf32>, vector<2048x256xf32>, vector<320x256xf32> -> vector<320x256xf32>
    %49 = vector.extract_strided_slice %48 {offsets = [0, 0], sizes = [64, 256], strides = [1, 1]} : vector<320x256xf32> to vector<64x256xf32>
    %c0_22 = arith.constant 0 : index
    %50 = memref.load %arg5[%c0_22] : memref<9xf32, #tpu.memory_space<smem>>
    %51 = vector.broadcast %50 : f32 to vector<64x256xf32>
    %52 = arith.addf %49, %51 : vector<64x256xf32>
    %cst_23 = arith.constant 0.000000e+00 : f32
    %53 = vector.broadcast %cst_23 : f32 to vector<64x256xf32>
    %54 = arith.maximumf %52, %53 : vector<64x256xf32>
    %55 = math.absf %52 : vector<64x256xf32>
    %cst_24 = arith.constant 0.000000e+00 : f32
    %56 = vector.broadcast %cst_24 : f32 to vector<64x256xf32>
    %57 = arith.subf %56, %55 : vector<64x256xf32>
    %58 = math.exp %57 : vector<64x256xf32>
    %59 = math.log1p %58 : vector<64x256xf32>
    %60 = arith.addf %54, %59 : vector<64x256xf32>
    %c63_i32 = arith.constant 63 : i32
    %61 = vector.broadcast %c63_i32 : i32 to vector<64x256xi32>
    %62 = arith.cmpi eq, %3, %61 : vector<64x256xi32>
    %cst_25 = arith.constant 1.562500e-02 : f32
    %63 = vector.broadcast %cst_25 : f32 to vector<1x256xf32>
    %64 = arith.mulf %2, %63 : vector<1x256xf32>
    %cst_26 = arith.constant 0.0158730168 : f32
    %65 = vector.broadcast %cst_26 : f32 to vector<1x256xf32>
    %66 = arith.mulf %2, %65 : vector<1x256xf32>
    %67 = vector.shape_cast %64 : vector<1x256xf32> to vector<1x256xf32>
    %68 = vector.broadcast %67 : vector<1x256xf32> to vector<64x256xf32>
    %69 = vector.shape_cast %66 : vector<1x256xf32> to vector<1x256xf32>
    %70 = vector.broadcast %69 : vector<1x256xf32> to vector<64x256xf32>
    %71 = arith.select %62, %68, %70 : vector<64x256xi1>, vector<64x256xf32>
    %cst_27 = arith.constant 0.000000e+00 : f32
    %72 = vector.broadcast %cst_27 : f32 to vector<64x256xf32>
    %73 = arith.subf %72, %71 : vector<64x256xf32>
    %74 = arith.mulf %73, %60 : vector<64x256xf32>
    %75 = math.exp %74 : vector<64x256xf32>
    %cst_28 = arith.constant 1.000000e+00 : f32
    %76 = vector.broadcast %cst_28 : f32 to vector<64x256xf32>
    %77 = arith.subf %76, %75 : vector<64x256xf32>
    %cst_29 = arith.constant 1.000000e+00 : f32
    %78 = vector.broadcast %cst_29 : f32 to vector<64x256xf32>
    %79 = arith.subf %78, %77 : vector<64x256xf32>
    %cst_30 = arith.constant 1.000000e-15 : f32
    %80 = vector.broadcast %cst_30 : f32 to vector<64x256xf32>
    %81 = arith.addf %79, %80 : vector<64x256xf32>
    %82 = math.log %81 : vector<64x256xf32>
    %c0_31 = arith.constant 0 : index
    %c0_32 = arith.constant 0 : index
    %83 = vector.load %arg4[%c0_31, %c0_32] : memref<64x64xf32, #tpu.memory_space<vmem>>, vector<64x64xf32>
    %cst_33 = arith.constant dense<0.000000e+00> : vector<64x256xf32>
    %84 = tpu.matmul %83, %82, %cst_33 {dimension_numbers = #tpu.dot_dimension_numbers<[1], [0], [0], [1], [0, 0, 1, 1], [], []>} : vector<64x64xf32>, vector<64x256xf32>, vector<64x256xf32> -> vector<64x256xf32>
    %85 = math.exp %84 : vector<64x256xf32>
    %86 = arith.mulf %77, %85 : vector<64x256xf32>
    %cst_34 = arith.constant dense<0.000000e+00> : vector<256xf32>
    %87 = vector.multi_reduction <add>, %86, %cst_34 [0] : vector<64x256xf32> to vector<256xf32>
    %88 = vector.shape_cast %87 : vector<256xf32> to vector<1x256xf32>
    %89 = arith.mulf %86, %10 : vector<64x256xf32>
    %cst_35 = arith.constant dense<0.000000e+00> : vector<256xf32>
    %90 = vector.multi_reduction <add>, %89, %cst_35 [0] : vector<64x256xf32> to vector<256xf32>
    %91 = vector.shape_cast %90 : vector<256xf32> to vector<1x256xf32>
    %c0_36 = arith.constant 0 : index
    %c0_37 = arith.constant 0 : index
    %92 = vector.load %arg7[%c0_36, %c0_37] : memref<64x256xf32, #tpu.memory_space<vmem>>, vector<64x256xf32>
    tpu.vector_store %arg7[%c0_36, %c0_37], %86 {strides = array<i32>} : memref<64x256xf32, #tpu.memory_space<vmem>>, vector<64x256xf32>,
    %cst_38 = arith.constant 1.000000e+00 : f32
    %93 = vector.broadcast %cst_38 : f32 to vector<1x256xf32>
    %94 = arith.subf %93, %88 : vector<1x256xf32>
    %95 = vector.extract_strided_slice %48 {offsets = [64, 0], sizes = [64, 256], strides = [1, 1]} : vector<320x256xf32> to vector<64x256xf32>
    %c1_39 = arith.constant 1 : index
    %96 = memref.load %arg5[%c1_39] : memref<9xf32, #tpu.memory_space<smem>>
    %97 = vector.broadcast %96 : f32 to vector<64x256xf32>
    %98 = arith.addf %95, %97 : vector<64x256xf32>
    %cst_40 = arith.constant 0.000000e+00 : f32
    %99 = vector.broadcast %cst_40 : f32 to vector<64x256xf32>
    %100 = arith.subf %99, %98 : vector<64x256xf32>
    %101 = math.exp %100 : vector<64x256xf32>
    %cst_41 = arith.constant 1.000000e+00 : f32
    %102 = vector.broadcast %cst_41 : f32 to vector<64x256xf32>
    %103 = arith.addf %102, %101 : vector<64x256xf32>
    %cst_42 = arith.constant 1.000000e+00 : f32
    %104 = vector.broadcast %cst_42 : f32 to vector<64x256xf32>
    %105 = arith.divf %104, %103 : vector<64x256xf32>
    %106 = arith.mulf %86, %105 : vector<64x256xf32>
    %cst_43 = arith.constant dense<0.000000e+00> : vector<256xf32>
    %107 = vector.multi_reduction <add>, %106, %cst_43 [0] : vector<64x256xf32> to vector<256xf32>
    %108 = vector.shape_cast %107 : vector<256xf32> to vector<1x256xf32>
    %c5_44 = arith.constant 5 : index
    %109 = memref.load %arg5[%c5_44] : memref<9xf32, #tpu.memory_space<smem>>
    %110 = vector.broadcast %109 : f32 to vector<1x256xf32>
    %111 = arith.mulf %94, %110 : vector<1x256xf32>
    %112 = arith.addf %108, %111 : vector<1x256xf32>
    %113 = vector.extract_strided_slice %48 {offsets = [128, 0], sizes = [64, 256], strides = [1, 1]} : vector<320x256xf32> to vector<64x256xf32>
    %c2_45 = arith.constant 2 : index
    %114 = memref.load %arg5[%c2_45] : memref<9xf32, #tpu.memory_space<smem>>
    %115 = vector.broadcast %114 : f32 to vector<64x256xf32>
    %116 = arith.addf %113, %115 : vector<64x256xf32>
    %cst_46 = arith.constant 0.000000e+00 : f32
    %117 = vector.broadcast %cst_46 : f32 to vector<64x256xf32>
    %118 = arith.subf %117, %116 : vector<64x256xf32>
    %119 = math.exp %118 : vector<64x256xf32>
    %cst_47 = arith.constant 1.000000e+00 : f32
    %120 = vector.broadcast %cst_47 : f32 to vector<64x256xf32>
    %121 = arith.addf %120, %119 : vector<64x256xf32>
    %cst_48 = arith.constant 1.000000e+00 : f32
    %122 = vector.broadcast %cst_48 : f32 to vector<64x256xf32>
    %123 = arith.divf %122, %121 : vector<64x256xf32>
    %124 = arith.mulf %86, %123 : vector<64x256xf32>
    %cst_49 = arith.constant dense<0.000000e+00> : vector<256xf32>
    %125 = vector.multi_reduction <add>, %124, %cst_49 [0] : vector<64x256xf32> to vector<256xf32>
    %126 = vector.shape_cast %125 : vector<256xf32> to vector<1x256xf32>
    %c6_50 = arith.constant 6 : index
    %127 = memref.load %arg5[%c6_50] : memref<9xf32, #tpu.memory_space<smem>>
    %128 = vector.broadcast %127 : f32 to vector<1x256xf32>
    %129 = arith.mulf %94, %128 : vector<1x256xf32>
    %130 = arith.addf %126, %129 : vector<1x256xf32>
    %131 = vector.extract_strided_slice %48 {offsets = [192, 0], sizes = [64, 256], strides = [1, 1]} : vector<320x256xf32> to vector<64x256xf32>
    %c3_51 = arith.constant 3 : index
    %132 = memref.load %arg5[%c3_51] : memref<9xf32, #tpu.memory_space<smem>>
    %133 = vector.broadcast %132 : f32 to vector<64x256xf32>
    %134 = arith.addf %131, %133 : vector<64x256xf32>
    %cst_52 = arith.constant 0.000000e+00 : f32
    %135 = vector.broadcast %cst_52 : f32 to vector<64x256xf32>
    %136 = arith.subf %135, %134 : vector<64x256xf32>
    %137 = math.exp %136 : vector<64x256xf32>
    %cst_53 = arith.constant 1.000000e+00 : f32
    %138 = vector.broadcast %cst_53 : f32 to vector<64x256xf32>
    %139 = arith.addf %138, %137 : vector<64x256xf32>
    %cst_54 = arith.constant 1.000000e+00 : f32
    %140 = vector.broadcast %cst_54 : f32 to vector<64x256xf32>
    %141 = arith.divf %140, %139 : vector<64x256xf32>
    %142 = arith.mulf %86, %141 : vector<64x256xf32>
    %cst_55 = arith.constant dense<0.000000e+00> : vector<256xf32>
    %143 = vector.multi_reduction <add>, %142, %cst_55 [0] : vector<64x256xf32> to vector<256xf32>
    %144 = vector.shape_cast %143 : vector<256xf32> to vector<1x256xf32>
    %c7_56 = arith.constant 7 : index
    %145 = memref.load %arg5[%c7_56] : memref<9xf32, #tpu.memory_space<smem>>
    %146 = vector.broadcast %145 : f32 to vector<1x256xf32>
    %147 = arith.mulf %94, %146 : vector<1x256xf32>
    %148 = arith.addf %144, %147 : vector<1x256xf32>
    %149 = vector.extract_strided_slice %48 {offsets = [256, 0], sizes = [64, 256], strides = [1, 1]} : vector<320x256xf32> to vector<64x256xf32>
    %c4_57 = arith.constant 4 : index
    %150 = memref.load %arg5[%c4_57] : memref<9xf32, #tpu.memory_space<smem>>
    %151 = vector.broadcast %150 : f32 to vector<64x256xf32>
    %152 = arith.addf %149, %151 : vector<64x256xf32>
    %cst_58 = arith.constant 0.000000e+00 : f32
    %153 = vector.broadcast %cst_58 : f32 to vector<64x256xf32>
    %154 = arith.subf %153, %152 : vector<64x256xf32>
    %155 = math.exp %154 : vector<64x256xf32>
    %cst_59 = arith.constant 1.000000e+00 : f32
    %156 = vector.broadcast %cst_59 : f32 to vector<64x256xf32>
    %157 = arith.addf %156, %155 : vector<64x256xf32>
    %cst_60 = arith.constant 1.000000e+00 : f32
    %158 = vector.broadcast %cst_60 : f32 to vector<64x256xf32>
    %159 = arith.divf %158, %157 : vector<64x256xf32>
    %160 = arith.mulf %86, %159 : vector<64x256xf32>
    %cst_61 = arith.constant dense<0.000000e+00> : vector<256xf32>
    %161 = vector.multi_reduction <add>, %160, %cst_61 [0] : vector<64x256xf32> to vector<256xf32>
    %162 = vector.shape_cast %161 : vector<256xf32> to vector<1x256xf32>
    %c8 = arith.constant 8 : index
    %163 = memref.load %arg5[%c8] : memref<9xf32, #tpu.memory_space<smem>>
    %164 = vector.broadcast %163 : f32 to vector<1x256xf32>
    %165 = arith.mulf %94, %164 : vector<1x256xf32>
    %166 = arith.addf %162, %165 : vector<1x256xf32>
    %167 = tpu.concatenate %112, %130, %148, %166, %91, %88 in 0 : vector<1x256xf32>, vector<1x256xf32>, vector<1x256xf32>, vector<1x256xf32>, vector<1x256xf32>, vector<1x256xf32> -> vector<6x256xf32>
    %c0_62 = arith.constant 0 : index
    %c0_63 = arith.constant 0 : index
    %168 = vector.load %arg6[%c0_62, %c0_63] : memref<6x256xf32, #tpu.memory_space<vmem>>, vector<6x256xf32>
    tpu.vector_store %arg6[%c0_62, %c0_63], %167 {strides = array<i32>} : memref<6x256xf32, #tpu.memory_space<vmem>>, vector<6x256xf32>,
    return
  }
  func.func @transform_0(%arg0: i32) -> (i32, i32) {
    %c0_i32 = arith.constant 0 : i32
    %c0_i32_0 = arith.constant 0 : i32
    return %c0_i32, %arg0 : i32, i32
  }
  func.func @transform_1(%arg0: i32) -> (i32, i32) {
    %c0_i32 = arith.constant 0 : i32
    %c0_i32_0 = arith.constant 0 : i32
    %c0_i32_1 = arith.constant 0 : i32
    return %c0_i32, %c0_i32_0 : i32, i32
  }
  func.func @transform_2(%arg0: i32) -> (i32, i32) {
    %c0_i32 = arith.constant 0 : i32
    %c0_i32_0 = arith.constant 0 : i32
    %c0_i32_1 = arith.constant 0 : i32
    return %c0_i32, %c0_i32_0 : i32, i32
  }
  func.func @transform_3(%arg0: i32) -> (i32, i32) {
    %c0_i32 = arith.constant 0 : i32
    %c0_i32_0 = arith.constant 0 : i32
    %c0_i32_1 = arith.constant 0 : i32
    return %c0_i32, %c0_i32_0 : i32, i32
  }
  func.func @transform_4(%arg0: i32) -> i32 {
    %c0_i32 = arith.constant 0 : i32
    %c0_i32_0 = arith.constant 0 : i32
    return %c0_i32 : i32
  }
  func.func @transform_5(%arg0: i32) -> (i32, i32) {
    %c0_i32 = arith.constant 0 : i32
    %c0_i32_0 = arith.constant 0 : i32
    return %c0_i32, %arg0 : i32, i32
  }
  func.func @transform_6(%arg0: i32) -> (i32, i32) {
    %c0_i32 = arith.constant 0 : i32
    %c0_i32_0 = arith.constant 0 : i32
    return %c0_i32, %arg0 : i32, i32
  }
}

</mosaic_0001>

<llo_original>
// kernel: tpu_custom_call.1
$region0: #{tpu_custom_call.1}
  #allocation0 [shape = 'u32[]', space=smem, size = 0x4, offset = 0x4, fixed_abs, tag = 'smem constant byte address 0x4 - core index']
  #allocation1 [shape = 'u32[144,128]{1,0:T(1,128)}', space=vmem, size = 0x12000, scoped, tag = 'internal scratch']
  %s0 = inlined_call_operand.hbm [shape: f32[8,2048], index: 0, kind: input, shape index: {}]
  %s1 = inlined_call_operand.hbm [shape: f32[2048,256], index: 1, kind: input, shape index: {}]
  %s2 = inlined_call_operand.hbm [shape: f32[320,2048], index: 2, kind: input, shape index: {}]
  %s3 = inlined_call_operand.hbm [shape: f32[64,64], index: 3, kind: input, shape index: {}]
  %s4 = inlined_call_operand.hbm [shape: f32[9], index: 4, kind: input, shape index: {}]
  %s5 = inlined_call_operand.hbm [shape: f32[6,2048], index: 5, kind: output, shape index: {0}]
  %s6 = inlined_call_operand.hbm [shape: f32[64,2048], index: 6, kind: output, shape index: {1}]
  %7 = xla_tuple %s5, %s6
  %s8 = sld [smem:[#allocation0]]
  $region81: #{tpu_custom_call.1} parent=0
    _
  %s10 = ssub.s32 1, %s8
  %s11 = scalar_select 0, %s10, %s8
  $region1: #{tpu_custom_call.1} parent=0
    #allocation2 [shape = 'u8[16384]{0}', space=vmem, size = 0x4000, scoped, tag = 'input window, operand 0']
    #allocation3 [shape = 's32[2]{0}', space=sflag, size = 0x8, scoped, tag = 'scoped memory for tpu_custom_call.1']
    #allocation4 [shape = 's32[2]{0}', space=sflag, size = 0x8, scoped, tag = 'scoped memory for tpu_custom_call.1']
    #allocation5 [shape = 's32[2]{0}', space=sflag, size = 0x8, scoped, tag = 'scoped memory for tpu_custom_call.1']
    #allocation6 [shape = 'u8[2097152]{0}', space=vmem, size = 0x200000, scoped, tag = 'input window, operand 1, single buffered']
    #allocation7 [shape = 's32[1]{0}', space=sflag, size = 0x4, scoped, tag = 'scoped memory for tpu_custom_call.1']
    #allocation8 [shape = 'u8[2621440]{0}', space=vmem, size = 0x280000, scoped, tag = 'input window, operand 2, single buffered']
    #allocation9 [shape = 'u8[32768]{0}', space=vmem, size = 0x8000, scoped, tag = 'input window, operand 3, single buffered']
    #allocation10 [shape = 's32[1]{0}', space=sflag, size = 0x4, scoped, tag = 'scoped memory for tpu_custom_call.1']
    #allocation11 [shape = 'u8[512]{0}', space=smem, size = 0x200, scoped, tag = 'input window, operand 4, single buffered']
    #allocation12 [shape = 'u8[16384]{0}', space=vmem, size = 0x4000, scoped, tag = 'output window, operand 0']
    #allocation13 [shape = 'u8[131072]{0}', space=vmem, size = 0x20000, scoped, tag = 'output window, operand 1']
    #allocation14 [shape = 's32[2]{0}', space=sflag, size = 0x8, scoped, tag = 'scoped memory for tpu_custom_call.1']
    %12 = vsyncpa [#allocation3], 0
    %s13 = scalar_lea.sflag [#allocation3], 1
    %14 = vsyncpa %s13, 0
    %15 = vsyncpa [#allocation7], 0
    %16 = vsyncpa [#allocation10], 0
    %17 = vsyncpa [#allocation5], 0
    %18 = vsyncpa [#allocation4], 0
    %s19 = scalar_lea.sflag [#allocation4], 1
    %20 = vsyncpa %s19, 0
    %21 = vsyncpa [#allocation14], 0
    %s22 = scalar_lea.sflag [#allocation14], 1
    %23 = vsyncpa %s22, 0
    loop: start=0, step=1, limit=10
    $region2: #{tpu_custom_call.1} parent=1 // loop_pre_header
      _
    $region3: #{tpu_custom_call.1} parent=1 // loop_header
      %s25 = sphi 0, %s29
      %p26 = scmp.ge.s32.totalorder %s25, 10
      %s35 = sphi 0, %s37
      %s38 = sphi 0, %s35
      %s39 = sphi 0, %s38
      %s55 = sphi 0, %s39
      %s59 = sphi 0, %s59
      %s61 = sphi 0, %s59
      %s62 = sphi 0, %s61
      %s76 = sphi 0, %s62
      %s80 = sphi 0, %s80
      %s82 = sphi 0, %s80
      %s83 = sphi 0, %s82
      %s97 = sphi 0, %s83
      %s101 = sphi 0, %s101
      %s103 = sphi 0, %s101
      %s104 = sphi 0, %s103
      %s118 = sphi 0, %s104
      %s122 = sphi 0, %s122
      %s124 = sphi 0, %s122
      %s125 = sphi 0, %s124
      %s139 = sphi 0, %s125
      %s145 = sphi 0, %s147
      %s148 = sphi 0, %s145
      %s149 = sphi 0, %s148
      %s165 = sphi 0, %s149
      %s171 = sphi 0, %s173
      %s174 = sphi 0, %s171
      %s175 = sphi 0, %s174
      %s191 = sphi 0, %s175
    $region4: #{tpu_custom_call.1} parent=1 // loop_header_branch
      %28 = sbr.rel (%p26) target = $region8
    $region5: #{tpu_custom_call.1} parent=1 // loop_body
      %s30 = ssub.s32 %s25, 1
      %s31 = ssub.s32 %s25, 2
      %s32 = sadd.s32 %s25, 1
      %s33 = ssub.s32 %s25, %s32
      %p34 = scmp.eq.s32.totalorder %s33, 0
      %s36 = sadd.s32 %s35, 1
      %s37 = scalar_select %p34, %s35, %s36
      %p40 = pneg %p34
      %p41 = scmp.eq.s32.totalorder %s25, 7
      %p42 = por %p40, %p41
      %p43 = scmp.ne.s32.totalorder %s35, %s38
      %p44 = scmp.eq.s32.totalorder %s25, 0
      %p45 = por %p43, %p44
      %p46 = scmp.ne.s32.totalorder %s35, %s38
      %p47 = scmp.eq.s32.totalorder %s30, 7
      %p48 = por %p46, %p47
      %p49 = scmp.ne.s32.totalorder %s38, %s39
      %p50 = scmp.eq.s32.totalorder %s30, 0
      %p51 = por %p49, %p50
      %p52 = scmp.ne.s32.totalorder %s38, %s39
      %p53 = scmp.eq.s32.totalorder %s31, 7
      %p54 = por %p52, %p53
      %p56 = scmp.ne.s32.totalorder %s39, %s55
      %p57 = scmp.eq.s32.totalorder %s31, 0
      %p58 = por %p56, %p57
      %s60 = sadd.s32 %s59, 1
      %p63 = scmp.eq.s32.totalorder %s25, 7
      %p64 = scmp.ne.s32.totalorder %s59, %s61
      %p65 = scmp.eq.s32.totalorder %s25, 0
      %p66 = por %p64, %p65
      %p67 = scmp.ne.s32.totalorder %s59, %s61
      %p68 = scmp.eq.s32.totalorder %s30, 7
      %p69 = por %p67, %p68
      %p70 = scmp.ne.s32.totalorder %s61, %s62
      %p71 = scmp.eq.s32.totalorder %s30, 0
      %p72 = por %p70, %p71
      %p73 = scmp.ne.s32.totalorder %s61, %s62
      %p74 = scmp.eq.s32.totalorder %s31, 7
      %p75 = por %p73, %p74
      %p77 = scmp.ne.s32.totalorder %s62, %s76
      %p78 = scmp.eq.s32.totalorder %s31, 0
      %p79 = por %p77, %p78
      %s81 = sadd.s32 %s80, 1
      %p84 = scmp.eq.s32.totalorder %s25, 7
      %p85 = scmp.ne.s32.totalorder %s80, %s82
      %p86 = scmp.eq.s32.totalorder %s25, 0
      %p87 = por %p85, %p86
      %p88 = scmp.ne.s32.totalorder %s80, %s82
      %p89 = scmp.eq.s32.totalorder %s30, 7
      %p90 = por %p88, %p89
      %p91 = scmp.ne.s32.totalorder %s82, %s83
      %p92 = scmp.eq.s32.totalorder %s30, 0
      %p93 = por %p91, %p92
      %p94 = scmp.ne.s32.totalorder %s82, %s83
      %p95 = scmp.eq.s32.totalorder %s31, 7
      %p96 = por %p94, %p95
      %p98 = scmp.ne.s32.totalorder %s83, %s97
      %p99 = scmp.eq.s32.totalorder %s31, 0
      %p100 = por %p98, %p99
      %s102 = sadd.s32 %s101, 1
      %p105 = scmp.eq.s32.totalorder %s25, 7
      %p106 = scmp.ne.s32.totalorder %s101, %s103
      %p107 = scmp.eq.s32.totalorder %s25, 0
      %p108 = por %p106, %p107
      %p109 = scmp.ne.s32.totalorder %s101, %s103
      %p110 = scmp.eq.s32.totalorder %s30, 7
      %p111 = por %p109, %p110
      %p112 = scmp.ne.s32.totalorder %s103, %s104
      %p113 = scmp.eq.s32.totalorder %s30, 0
      %p114 = por %p112, %p113
      %p115 = scmp.ne.s32.totalorder %s103, %s104
      %p116 = scmp.eq.s32.totalorder %s31, 7
      %p117 = por %p115, %p116
      %p119 = scmp.ne.s32.totalorder %s104, %s118
      %p120 = scmp.eq.s32.totalorder %s31, 0
      %p121 = por %p119, %p120
      %s123 = sadd.s32 %s122, 1
      %p126 = scmp.eq.s32.totalorder %s25, 7
      %p127 = scmp.ne.s32.totalorder %s122, %s124
      %p128 = scmp.eq.s32.totalorder %s25, 0
      %p129 = por %p127, %p128
      %p130 = scmp.ne.s32.totalorder %s122, %s124
      %p131 = scmp.eq.s32.totalorder %s30, 7
      %p132 = por %p130, %p131
      %p133 = scmp.ne.s32.totalorder %s124, %s125
      %p134 = scmp.eq.s32.totalorder %s30, 0
      %p135 = por %p133, %p134
      %p136 = scmp.ne.s32.totalorder %s124, %s125
      %p137 = scmp.eq.s32.totalorder %s31, 7
      %p138 = por %p136, %p137
      %p140 = scmp.ne.s32.totalorder %s125, %s139
      %p141 = scmp.eq.s32.totalorder %s31, 0
      %p142 = por %p140, %p141
      %s143 = ssub.s32 %s25, %s32
      %p144 = scmp.eq.s32.totalorder %s143, 0
      %s146 = sadd.s32 %s145, 1
      %s147 = scalar_select %p144, %s145, %s146
      %p150 = pneg %p144
      %p151 = scmp.eq.s32.totalorder %s25, 7
      %p152 = por %p150, %p151
      %p153 = scmp.ne.s32.totalorder %s145, %s148
      %p154 = scmp.eq.s32.totalorder %s25, 0
      %p155 = por %p153, %p154
      %p156 = scmp.ne.s32.totalorder %s145, %s148
      %p157 = scmp.eq.s32.totalorder %s30, 7
      %p158 = por %p156, %p157
      %p159 = scmp.ne.s32.totalorder %s148, %s149
      %p160 = scmp.eq.s32.totalorder %s30, 0
      %p161 = por %p159, %p160
      %p162 = scmp.ne.s32.totalorder %s148, %s149
      %p163 = scmp.eq.s32.totalorder %s31, 7
      %p164 = por %p162, %p163
      %p166 = scmp.ne.s32.totalorder %s149, %s165
      %p167 = scmp.eq.s32.totalorder %s31, 0
      %p168 = por %p166, %p167
      %s169 = ssub.s32 %s25, %s32
      %p170 = scmp.eq.s32.totalorder %s169, 0
      %s172 = sadd.s32 %s171, 1
      %s173 = scalar_select %p170, %s171, %s172
      %p176 = pneg %p170
      %p177 = scmp.eq.s32.totalorder %s25, 7
      %p178 = por %p176, %p177
      %p179 = scmp.ne.s32.totalorder %s171, %s174
      %p180 = scmp.eq.s32.totalorder %s25, 0
      %p181 = por %p179, %p180
      %p182 = scmp.ne.s32.totalorder %s171, %s174
      %p183 = scmp.eq.s32.totalorder %s30, 7
      %p184 = por %p182, %p183
      %p185 = scmp.ne.s32.totalorder %s174, %s175
      %p186 = scmp.eq.s32.totalorder %s30, 0
      %p187 = por %p185, %p186
      %p188 = scmp.ne.s32.totalorder %s174, %s175
      %p189 = scmp.eq.s32.totalorder %s31, 7
      %p190 = por %p188, %p189
      %p192 = scmp.ne.s32.totalorder %s175, %s191
      %p193 = scmp.eq.s32.totalorder %s31, 0
      %p194 = por %p192, %p193
      %p195 = scmp.le.s32.totalorder 1, %s25
      %p196 = scmp.lt.s32.totalorder %s25, 9
      %p197 = pnand %p195, %p196
      %p198 = pneg %p197
      // Predicated region
      $region9: #{tpu_custom_call.1} parent=5 // pred_check
        _
      $region10: #{tpu_custom_call.1} parent=5 // pred_check_branch
        %200 = sbr.rel (%p197) target = $region12
      $region11: #{tpu_custom_call.1} parent=5 // pred_region
        %s201 = ssub.s32 %s25, 1
        // Predicated region
        $region13: #{tpu_custom_call.1} parent=11 // pred_check
          %p202 = pneg %p72
        $region14: #{tpu_custom_call.1} parent=11 // pred_check_branch
          %204 = sbr.rel (%p202) target = $region16
        $region15: #{tpu_custom_call.1} parent=11 // pred_region
          %s206 = ssub.s32 65536, 65536
          %207 = vsyncadd [#allocation7], %s206
          %s208 = sshll.u32 [#allocation6], 4
          %s209 = int_to_ptr.vmem [resolvable:$true] %s208
          %214 = dma.hbm_to_vmem [thread:$0]  %s1, 65536, %s209, [#allocation7], 256, 256, 16
        $region16: #{tpu_custom_call.1} parent=11 // pred_fallthru
          _
        // Predicated region
        $region17: #{tpu_custom_call.1} parent=11 // pred_check
          %p215 = pneg %p93
        $region18: #{tpu_custom_call.1} parent=11 // pred_check_branch
          %217 = sbr.rel (%p215) target = $region20
        $region19: #{tpu_custom_call.1} parent=11 // pred_region
          %s219 = ssub.s32 81920, 81920
          %220 = vsyncadd [#allocation7], %s219
          %s221 = sshll.u32 [#allocation8], 4
          %s222 = int_to_ptr.vmem [resolvable:$true] %s221
          %227 = dma.hbm_to_vmem [thread:$0]  %s2, 81920, %s222, [#allocation7], 2048, 2048, 128
        $region20: #{tpu_custom_call.1} parent=11 // pred_fallthru
          _
        // Predicated region
        $region21: #{tpu_custom_call.1} parent=11 // pred_check
          %p228 = pneg %p114
        $region22: #{tpu_custom_call.1} parent=11 // pred_check_branch
          %230 = sbr.rel (%p228) target = $region24
        $region23: #{tpu_custom_call.1} parent=11 // pred_region
          %s232 = ssub.s32 1024, 1024
          %233 = vsyncadd [#allocation10], %s232
          %s234 = sshll.u32 [#allocation9], 4
          %s235 = int_to_ptr.vmem [resolvable:$true] %s234
          %240 = dma.hbm_to_vmem [thread:$0]  %s3, 1024, %s235, [#allocation10], 128, 128, 8
        $region24: #{tpu_custom_call.1} parent=11 // pred_fallthru
          _
        // Predicated region
        $region25: #{tpu_custom_call.1} parent=11 // pred_check
          %p241 = pneg %p135
        $region26: #{tpu_custom_call.1} parent=11 // pred_check_branch
          %243 = sbr.rel (%p241) target = $region28
        $region27: #{tpu_custom_call.1} parent=11 // pred_region
          %s245 = ssub.s32 16, 16
          %246 = vsyncadd [#allocation5], %s245
          %249 = dma.hbm_to_smem %s4, 16, [#allocation11], [#allocation5]
        $region28: #{tpu_custom_call.1} parent=11 // pred_fallthru
          _
      $region12: #{tpu_custom_call.1} parent=5 // pred_fallthru
        _
      %p250 = scmp.lt.s32.totalorder %s25, 8
      // Predicated region
      $region29: #{tpu_custom_call.1} parent=5 // pred_check
        %p251 = pneg %p250
      $region30: #{tpu_custom_call.1} parent=5 // pred_check_branch
        %253 = sbr.rel (%p251) target = $region32
      $region31: #{tpu_custom_call.1} parent=5 // pred_region
        // Predicated region
        $region33: #{tpu_custom_call.1} parent=31 // pred_check
          %p254 = pneg %p45
        $region34: #{tpu_custom_call.1} parent=31 // pred_check_branch
          %256 = sbr.rel (%p254) target = $region36
        $region35: #{tpu_custom_call.1} parent=31 // pred_region
          %s257 = sand.u32 %s35, 1
          %s258 = scalar_lea.sflag [#allocation3], %s257
          %s259 = sand.u32 %s35, 1
          %s260 = smul.addr %s259, 16
          %s261 = scalar_lea.vmem [#allocation2], %s260
          %s262 = smul.u32 2, %s25
          %s264 = ssub.s32 256, 256
          %265 = vsyncadd %s258, %s264
          %s266 = smul.addr %s262, 128
          %s267 = scalar_lea.hbm %s0, %s266
          %s269 = sshll.u32 %s261, 4
          %s270 = int_to_ptr.vmem [resolvable:$true] %s269
          %272 = dma.hbm_to_vmem [thread:$0]  %s267, 256, %s270, %s258
        $region36: #{tpu_custom_call.1} parent=31 // pred_fallthru
          _
      $region32: #{tpu_custom_call.1} parent=5 // pred_fallthru
        _
      %p273 = scmp.le.s32.totalorder 1, %s25
      %p274 = scmp.lt.s32.totalorder %s25, 9
      %p275 = pnand %p273, %p274
      %p276 = pneg %p275
      // Predicated region
      $region37: #{tpu_custom_call.1} parent=5 // pred_check
        _
      $region38: #{tpu_custom_call.1} parent=5 // pred_check_branch
        %278 = sbr.rel (%p275) target = $region40
      $region39: #{tpu_custom_call.1} parent=5 // pred_region
        %s279 = ssub.s32 %s25, 1
        %s280 = sand.u32 %s38, 1
        %s281 = scalar_lea.sflag [#allocation3], %s280
        %s282 = sand.u32 %s38, 1
        %s283 = smul.addr %s282, 16
        %s284 = scalar_lea.vmem [#allocation2], %s283
        // Predicated region
        $region41: #{tpu_custom_call.1} parent=39 // pred_check
          %p285 = pneg %p51
        $region42: #{tpu_custom_call.1} parent=39 // pred_check_branch
          %287 = sbr.rel (%p285) target = $region44
        $region43: #{tpu_custom_call.1} parent=39 // pred_region
          %288 = dma.done %s281, 256
        $region44: #{tpu_custom_call.1} parent=39 // pred_fallthru
          _
        // Predicated region
        $region45: #{tpu_custom_call.1} parent=39 // pred_check
          %p289 = pneg %p72
        $region46: #{tpu_custom_call.1} parent=39 // pred_check_branch
          %291 = sbr.rel (%p289) target = $region48
        $region47: #{tpu_custom_call.1} parent=39 // pred_region
          %292 = dma.done [#allocation7], 65536
        $region48: #{tpu_custom_call.1} parent=39 // pred_fallthru
          _
        // Predicated region
        $region49: #{tpu_custom_call.1} parent=39 // pred_check
          %p293 = pneg %p93
        $region50: #{tpu_custom_call.1} parent=39 // pred_check_branch
          %295 = sbr.rel (%p293) target = $region52
        $region51: #{tpu_custom_call.1} parent=39 // pred_region
          %296 = dma.done [#allocation7], 81920
        $region52: #{tpu_custom_call.1} parent=39 // pred_fallthru
          _
        // Predicated region
        $region53: #{tpu_custom_call.1} parent=39 // pred_check
          %p297 = pneg %p114
        $region54: #{tpu_custom_call.1} parent=39 // pred_check_branch
          %299 = sbr.rel (%p297) target = $region56
        $region55: #{tpu_custom_call.1} parent=39 // pred_region
          %300 = dma.done [#allocation10], 1024
        $region56: #{tpu_custom_call.1} parent=39 // pred_fallthru
          _
        // Predicated region
        $region57: #{tpu_custom_call.1} parent=39 // pred_check
          %p301 = pneg %p135
        $region58: #{tpu_custom_call.1} parent=39 // pred_check_branch
          %303 = sbr.rel (%p301) target = $region60
        $region59: #{tpu_custom_call.1} parent=39 // pred_region
          %304 = dma.done [#allocation5], 16
        $region60: #{tpu_custom_call.1} parent=39 // pred_fallthru
          _
        %305 = sfence
        %s306 = sand.u32 %s38, 1
        %s307 = scalar_lea.sflag [#allocation3], %s306
        %s308 = sand.u32 %s38, 1
        %s309 = smul.addr %s308, 16
        %s310 = scalar_lea.vmem [#allocation2], %s309
        %p311 = pneg %p51
        %p312 = pneg %p48
        %p313 = pneg %p72
        %p314 = pneg %p69
        %p315 = pneg %p93
        %p316 = pneg %p90
        %p317 = pneg %p114
        %p318 = pneg %p111
        %p319 = pneg %p135
        %p320 = pneg %p132
        %p321 = pneg %p161
        %p322 = pneg %p158
        %s323 = sand.u32 %s148, 1
        %s324 = scalar_lea.sflag [#allocation4], %s323
        %s325 = sand.u32 %s148, 1
        %s326 = smul.addr %s325, 16
        %s327 = scalar_lea.vmem [#allocation12], %s326
        %p328 = pneg %p187
        %p329 = pneg %p184
        %s330 = sand.u32 %s174, 1
        %s331 = scalar_lea.sflag [#allocation14], %s330
        %s332 = sand.u32 %s174, 1
        %s333 = smul.addr %s332, 128
        %s334 = scalar_lea.vmem [#allocation13], %s333
        %s335 = smul.u32 2, %s30
        %s336 = smul.u32 2, %s30
        %s337 = smul.u32 2, %s30
        %s338 = scalar_lea.vmem %s284, 6 [#allocation2]
        %v339 = vld [vmem:[%s338] ss:$8 sm:$0x3]
        %s340 = scalar_lea.vmem %s284, 7 [#allocation2]
        %v341 = vld [vmem:[%s340] ss:$8 sm:$0x3]
        %v342 = vsub.f32 %v341, %v339
        %v343 = vlaneseq
        %v344 = vshrl.u32 %v343, 7
        %v345 = vadd.s32 %v344, 8
        %v346 = vadd.s32 %v344, 16
        %v347 = vadd.s32 %v344, 24
        %v348 = vadd.s32 %v344, 32
        %v349 = vadd.s32 %v344, 40
        %v350 = vadd.s32 %v344, 48
        %v351 = vadd.s32 %v344, 56
        %v352 = vcvt.s32.f32 %v344
        %v353 = vcvt.s32.f32 %v345
        %v354 = vcvt.s32.f32 %v346
        %v355 = vcvt.s32.f32 %v347
        %v356 = vcvt.s32.f32 %v348
        %v357 = vcvt.s32.f32 %v349
        %v358 = vcvt.s32.f32 %v350
        %v359 = vcvt.s32.f32 %v351
        %v360 = vmul.f32 %v352, 0.015873017
        %v361 = vmul.f32 %v353, 0.015873017
        %v362 = vmul.f32 %v354, 0.015873017
        %v363 = vmul.f32 %v355, 0.015873017
        %v364 = vmul.f32 %v356, 0.015873017
        %v365 = vmul.f32 %v357, 0.015873017
        %v366 = vmul.f32 %v358, 0.015873017
        %v367 = vmul.f32 %v359, 0.015873017
        %v369 = vlaneseq
        %v370 = vshrl.u32 %v369, 7
        %v371 = vsub.s32 0, %v370
        %v372 = vrot.slane %v342, %v371
        %v373 = vlaneseq
        %v374 = vshrl.u32 %v373, 7
        %v375 = vsub.s32 1, %v374
        %v376 = vrot.slane %v342, %v375
        %v379 = vmul.f32 %v372, %v360
        %v380 = vmul.f32 %v376, %v360
        %v381 = vmul.f32 %v372, %v361
        %v382 = vmul.f32 %v376, %v361
        %v383 = vmul.f32 %v372, %v362
        %v384 = vmul.f32 %v376, %v362
        %v385 = vmul.f32 %v372, %v363
        %v386 = vmul.f32 %v376, %v363
        %v387 = vmul.f32 %v372, %v364
        %v388 = vmul.f32 %v376, %v364
        %v389 = vmul.f32 %v372, %v365
        %v390 = vmul.f32 %v376, %v365
        %v391 = vmul.f32 %v372, %v366
        %v392 = vmul.f32 %v376, %v366
        %v393 = vmul.f32 %v372, %v367
        %v394 = vmul.f32 %v376, %v367
        %v396 = vlaneseq
        %v397 = vshrl.u32 %v396, 7
        %v398 = vsub.s32 0, %v397
        %v399 = vrot.slane %v339, %v398
        %v400 = vlaneseq
        %v401 = vshrl.u32 %v400, 7
        %v402 = vsub.s32 1, %v401
        %v403 = vrot.slane %v339, %v402
        %v406 = vadd.f32 %v399, %v379
        %v407 = vadd.f32 %v403, %v380
        %v408 = vadd.f32 %v399, %v381
        %v409 = vadd.f32 %v403, %v382
        %v410 = vadd.f32 %v399, %v383
        %v411 = vadd.f32 %v403, %v384
        %v412 = vadd.f32 %v399, %v385
        %v413 = vadd.f32 %v403, %v386
        %v414 = vadd.f32 %v399, %v387
        %v415 = vadd.f32 %v403, %v388
        %v416 = vadd.f32 %v399, %v389
        %v417 = vadd.f32 %v403, %v390
        %v418 = vadd.f32 %v399, %v391
        %v419 = vadd.f32 %v403, %v392
        %v420 = vadd.f32 %v399, %v393
        %v421 = vadd.f32 %v403, %v394
        %v422 = vld [vmem:[%s284] ss:$8 sm:$0x3]
        %s423 = scalar_lea.vmem %s284, 3 [#allocation2]
        %v424 = vld [vmem:[%s423] ss:$8 sm:$0x3]
        %v426 = vlaneseq
        %v427 = vshrl.u32 %v426, 7
        %v428 = vsub.s32 0, %v427
        %v429 = vrot.slane %v424, %v428
        %v430 = vlaneseq
        %v431 = vshrl.u32 %v430, 7
        %v432 = vsub.s32 1, %v431
        %v433 = vrot.slane %v424, %v432
        %v436 = vmul.f32 %v429, %v406
        %v437 = vmul.f32 %v433, %v407
        %v438 = vmul.f32 %v429, %v408
        %v439 = vmul.f32 %v433, %v409
        %v440 = vmul.f32 %v429, %v410
        %v441 = vmul.f32 %v433, %v411
        %v442 = vmul.f32 %v429, %v412
        %v443 = vmul.f32 %v433, %v413
        %v444 = vmul.f32 %v429, %v414
        %v445 = vmul.f32 %v433, %v415
        %v446 = vmul.f32 %v429, %v416
        %v447 = vmul.f32 %v433, %v417
        %v448 = vmul.f32 %v429, %v418
        %v449 = vmul.f32 %v433, %v419
        %v450 = vmul.f32 %v429, %v420
        %v451 = vmul.f32 %v433, %v421
        %v453 = vlaneseq
        %v454 = vshrl.u32 %v453, 7
        %v455 = vsub.s32 0, %v454
        %v456 = vrot.slane %v422, %v455
        %v457 = vlaneseq
        %v458 = vshrl.u32 %v457, 7
        %v459 = vsub.s32 1, %v458
        %v460 = vrot.slane %v422, %v459
        %v463 = vadd.f32 %v456, %v436
        %v464 = vadd.f32 %v460, %v437
        %v465 = vadd.f32 %v456, %v438
        %v466 = vadd.f32 %v460, %v439
        %v467 = vadd.f32 %v456, %v440
        %v468 = vadd.f32 %v460, %v441
        %v469 = vadd.f32 %v456, %v442
        %v470 = vadd.f32 %v460, %v443
        %v471 = vadd.f32 %v456, %v444
        %v472 = vadd.f32 %v460, %v445
        %v473 = vadd.f32 %v456, %v446
        %v474 = vadd.f32 %v460, %v447
        %v475 = vadd.f32 %v456, %v448
        %v476 = vadd.f32 %v460, %v449
        %v477 = vadd.f32 %v456, %v450
        %v478 = vadd.f32 %v460, %v451
        %v479 = vmax.f32 %v463, -1.0
        %v480 = vmax.f32 %v464, -1.0
        %v481 = vmax.f32 %v465, -1.0
        %v482 = vmax.f32 %v466, -1.0
        %v483 = vmax.f32 %v467, -1.0
        %v484 = vmax.f32 %v468, -1.0
        %v485 = vmax.f32 %v469, -1.0
        %v486 = vmax.f32 %v470, -1.0
        %v487 = vmax.f32 %v471, -1.0
        %v488 = vmax.f32 %v472, -1.0
        %v489 = vmax.f32 %v473, -1.0
        %v490 = vmax.f32 %v474, -1.0
        %v491 = vmax.f32 %v475, -1.0
        %v492 = vmax.f32 %v476, -1.0
        %v493 = vmax.f32 %v477, -1.0
        %v494 = vmax.f32 %v478, -1.0
        %v495 = vmin.f32 %v479, 1.0
        %v496 = vmin.f32 %v480, 1.0
        %v497 = vmin.f32 %v481, 1.0
        %v498 = vmin.f32 %v482, 1.0
        %v499 = vmin.f32 %v483, 1.0
        %v500 = vmin.f32 %v484, 1.0
        %v501 = vmin.f32 %v485, 1.0
        %v502 = vmin.f32 %v486, 1.0
        %v503 = vmin.f32 %v487, 1.0
        %v504 = vmin.f32 %v488, 1.0
        %v505 = vmin.f32 %v489, 1.0
        %v506 = vmin.f32 %v490, 1.0
        %v507 = vmin.f32 %v491, 1.0
        %v508 = vmin.f32 %v492, 1.0
        %v509 = vmin.f32 %v493, 1.0
        %v510 = vmin.f32 %v494, 1.0
        %s511 = scalar_lea.vmem %s284, 1 [#allocation2]
        %v512 = vld [vmem:[%s511] ss:$8 sm:$0x3]
        %s513 = scalar_lea.vmem %s284, 4 [#allocation2]
        %v514 = vld [vmem:[%s513] ss:$8 sm:$0x3]
        %v516 = vlaneseq
        %v517 = vshrl.u32 %v516, 7
        %v518 = vsub.s32 0, %v517
        %v519 = vrot.slane %v514, %v518
        %v520 = vlaneseq
        %v521 = vshrl.u32 %v520, 7
        %v522 = vsub.s32 1, %v521
        %v523 = vrot.slane %v514, %v522
        %v526 = vmul.f32 %v519, %v406
        %v527 = vmul.f32 %v523, %v407
        %v528 = vmul.f32 %v519, %v408
        %v529 = vmul.f32 %v523, %v409
        %v530 = vmul.f32 %v519, %v410
        %v531 = vmul.f32 %v523, %v411
        %v532 = vmul.f32 %v519, %v412
        %v533 = vmul.f32 %v523, %v413
        %v534 = vmul.f32 %v519, %v414
        %v535 = vmul.f32 %v523, %v415
        %v536 = vmul.f32 %v519, %v416
        %v537 = vmul.f32 %v523, %v417
        %v538 = vmul.f32 %v519, %v418
        %v539 = vmul.f32 %v523, %v419
        %v540 = vmul.f32 %v519, %v420
        %v541 = vmul.f32 %v523, %v421
        %v543 = vlaneseq
        %v544 = vshrl.u32 %v543, 7
        %v545 = vsub.s32 0, %v544
        %v546 = vrot.slane %v512, %v545
        %v547 = vlaneseq
        %v548 = vshrl.u32 %v547, 7
        %v549 = vsub.s32 1, %v548
        %v550 = vrot.slane %v512, %v549
        %v553 = vadd.f32 %v546, %v526
        %v554 = vadd.f32 %v550, %v527
        %v555 = vadd.f32 %v546, %v528
        %v556 = vadd.f32 %v550, %v529
        %v557 = vadd.f32 %v546, %v530
        %v558 = vadd.f32 %v550, %v531
        %v559 = vadd.f32 %v546, %v532
        %v560 = vadd.f32 %v550, %v533
        %v561 = vadd.f32 %v546, %v534
        %v562 = vadd.f32 %v550, %v535
        %v563 = vadd.f32 %v546, %v536
        %v564 = vadd.f32 %v550, %v537
        %v565 = vadd.f32 %v546, %v538
        %v566 = vadd.f32 %v550, %v539
        %v567 = vadd.f32 %v546, %v540
        %v568 = vadd.f32 %v550, %v541
        %v569 = vmax.f32 %v553, -1.0
        %v570 = vmax.f32 %v554, -1.0
        %v571 = vmax.f32 %v555, -1.0
        %v572 = vmax.f32 %v556, -1.0
        %v573 = vmax.f32 %v557, -1.0
        %v574 = vmax.f32 %v558, -1.0
        %v575 = vmax.f32 %v559, -1.0
        %v576 = vmax.f32 %v560, -1.0
        %v577 = vmax.f32 %v561, -1.0
        %v578 = vmax.f32 %v562, -1.0
        %v579 = vmax.f32 %v563, -1.0
        %v580 = vmax.f32 %v564, -1.0
        %v581 = vmax.f32 %v565, -1.0
        %v582 = vmax.f32 %v566, -1.0
        %v583 = vmax.f32 %v567, -1.0
        %v584 = vmax.f32 %v568, -1.0
        %v585 = vmin.f32 %v569, 1.0
        %v586 = vmin.f32 %v570, 1.0
        %v587 = vmin.f32 %v571, 1.0
        %v588 = vmin.f32 %v572, 1.0
        %v589 = vmin.f32 %v573, 1.0
        %v590 = vmin.f32 %v574, 1.0
        %v591 = vmin.f32 %v575, 1.0
        %v592 = vmin.f32 %v576, 1.0
        %v593 = vmin.f32 %v577, 1.0
        %v594 = vmin.f32 %v578, 1.0
        %v595 = vmin.f32 %v579, 1.0
        %v596 = vmin.f32 %v580, 1.0
        %v597 = vmin.f32 %v581, 1.0
        %v598 = vmin.f32 %v582, 1.0
        %v599 = vmin.f32 %v583, 1.0
        %v600 = vmin.f32 %v584, 1.0
        %s601 = scalar_lea.vmem %s284, 2 [#allocation2]
        %v602 = vld [vmem:[%s601] ss:$8 sm:$0x3]
        %s603 = scalar_lea.vmem %s284, 5 [#allocation2]
        %v604 = vld [vmem:[%s603] ss:$8 sm:$0x3]
        %v606 = vlaneseq
        %v607 = vshrl.u32 %v606, 7
        %v608 = vsub.s32 0, %v607
        %v609 = vrot.slane %v604, %v608
        %v610 = vlaneseq
        %v611 = vshrl.u32 %v610, 7
        %v612 = vsub.s32 1, %v611
        %v613 = vrot.slane %v604, %v612
        %v616 = vmul.f32 %v609, %v406
        %v617 = vmul.f32 %v613, %v407
        %v618 = vmul.f32 %v609, %v408
        %v619 = vmul.f32 %v613, %v409
        %v620 = vmul.f32 %v609, %v410
        %v621 = vmul.f32 %v613, %v411
        %v622 = vmul.f32 %v609, %v412
        %v623 = vmul.f32 %v613, %v413
        %v624 = vmul.f32 %v609, %v414
        %v625 = vmul.f32 %v613, %v415
        %v626 = vmul.f32 %v609, %v416
        %v627 = vmul.f32 %v613, %v417
        %v628 = vmul.f32 %v609, %v418
        %v629 = vmul.f32 %v613, %v419
        %v630 = vmul.f32 %v609, %v420
        %v631 = vmul.f32 %v613, %v421
        %v633 = vlaneseq
        %v634 = vshrl.u32 %v633, 7
        %v635 = vsub.s32 0, %v634
        %v636 = vrot.slane %v602, %v635
        %v637 = vlaneseq
        %v638 = vshrl.u32 %v637, 7
        %v639 = vsub.s32 1, %v638
        %v640 = vrot.slane %v602, %v639
        %v643 = vadd.f32 %v636, %v616
        %v644 = vadd.f32 %v640, %v617
        %v645 = vadd.f32 %v636, %v618
        %v646 = vadd.f32 %v640, %v619
        %v647 = vadd.f32 %v636, %v620
        %v648 = vadd.f32 %v640, %v621
        %v649 = vadd.f32 %v636, %v622
        %v650 = vadd.f32 %v640, %v623
        %v651 = vadd.f32 %v636, %v624
        %v652 = vadd.f32 %v640, %v625
        %v653 = vadd.f32 %v636, %v626
        %v654 = vadd.f32 %v640, %v627
        %v655 = vadd.f32 %v636, %v628
        %v656 = vadd.f32 %v640, %v629
        %v657 = vadd.f32 %v636, %v630
        %v658 = vadd.f32 %v640, %v631
        %v659 = vmax.f32 %v643, -1.0
        %v660 = vmax.f32 %v644, -1.0
        %v661 = vmax.f32 %v645, -1.0
        %v662 = vmax.f32 %v646, -1.0
        %v663 = vmax.f32 %v647, -1.0
        %v664 = vmax.f32 %v648, -1.0
        %v665 = vmax.f32 %v649, -1.0
        %v666 = vmax.f32 %v650, -1.0
        %v667 = vmax.f32 %v651, -1.0
        %v668 = vmax.f32 %v652, -1.0
        %v669 = vmax.f32 %v653, -1.0
        %v670 = vmax.f32 %v654, -1.0
        %v671 = vmax.f32 %v655, -1.0
        %v672 = vmax.f32 %v656, -1.0
        %v673 = vmax.f32 %v657, -1.0
        %v674 = vmax.f32 %v658, -1.0
        %v675 = vmin.f32 %v659, 1.0
        %v676 = vmin.f32 %v660, 1.0
        %v677 = vmin.f32 %v661, 1.0
        %v678 = vmin.f32 %v662, 1.0
        %v679 = vmin.f32 %v663, 1.0
        %v680 = vmin.f32 %v664, 1.0
        %v681 = vmin.f32 %v665, 1.0
        %v682 = vmin.f32 %v666, 1.0
        %v683 = vmin.f32 %v667, 1.0
        %v684 = vmin.f32 %v668, 1.0
        %v685 = vmin.f32 %v669, 1.0
        %v686 = vmin.f32 %v670, 1.0
        %v687 = vmin.f32 %v671, 1.0
        %v688 = vmin.f32 %v672, 1.0
        %v689 = vmin.f32 %v673, 1.0
        %v690 = vmin.f32 %v674, 1.0
        %v691 = vld [vmem:[#allocation6] sm:$0xff]
        %v692 = vld [vmem:[#allocation6 + $0x8] sm:$0xff]
        %v693 = vld [vmem:[#allocation6 + $0x10] sm:$0xff]
        %v694 = vld [vmem:[#allocation6 + $0x18] sm:$0xff]
        %v695 = vld [vmem:[#allocation6 + $0x20] sm:$0xff]
        %v696 = vld [vmem:[#allocation6 + $0x28] sm:$0xff]
        %v697 = vld [vmem:[#allocation6 + $0x30] sm:$0xff]
        %v698 = vld [vmem:[#allocation6 + $0x38] sm:$0xff]
        %v699 = vld [vmem:[#allocation6 + $0x40] sm:$0xff]
        %v700 = vld [vmem:[#allocation6 + $0x48] sm:$0xff]
        %v701 = vld [vmem:[#allocation6 + $0x50] sm:$0xff]
        %v702 = vld [vmem:[#allocation6 + $0x58] sm:$0xff]
        %v703 = vld [vmem:[#allocation6 + $0x60] sm:$0xff]
        %v704 = vld [vmem:[#allocation6 + $0x68] sm:$0xff]
        %v705 = vld [vmem:[#allocation6 + $0x70] sm:$0xff]
        %v706 = vld [vmem:[#allocation6 + $0x78] sm:$0xff]
        %v707 = vld [vmem:[#allocation6 + $0x80] sm:$0xff]
        %v708 = vld [vmem:[#allocation6 + $0x88] sm:$0xff]
        %v709 = vld [vmem:[#allocation6 + $0x90] sm:$0xff]
        %v710 = vld [vmem:[#allocation6 + $0x98] sm:$0xff]
        %v711 = vld [vmem:[#allocation6 + $0xa0] sm:$0xff]
        %v712 = vld [vmem:[#allocation6 + $0xa8] sm:$0xff]
        %v713 = vld [vmem:[#allocation6 + $0xb0] sm:$0xff]
        %v714 = vld [vmem:[#allocation6 + $0xb8] sm:$0xff]
        %v715 = vld [vmem:[#allocation6 + $0xc0] sm:$0xff]
        %v716 = vld [vmem:[#allocation6 + $0xc8] sm:$0xff]
        %v717 = vld [vmem:[#allocation6 + $0xd0] sm:$0xff]
        %v718 = vld [vmem:[#allocation6 + $0xd8] sm:$0xff]
        %v719 = vld [vmem:[#allocation6 + $0xe0] sm:$0xff]
        %v720 = vld [vmem:[#allocation6 + $0xe8] sm:$0xff]
        %v721 = vld [vmem:[#allocation6 + $0xf0] sm:$0xff]
        %v722 = vld [vmem:[#allocation6 + $0xf8] sm:$0xff]
        %v723 = vld [vmem:[#allocation6 + $0x100] sm:$0xff]
        %v724 = vld [vmem:[#allocation6 + $0x108] sm:$0xff]
        %v725 = vld [vmem:[#allocation6 + $0x110] sm:$0xff]
        %v726 = vld [vmem:[#allocation6 + $0x118] sm:$0xff]
        %v727 = vld [vmem:[#allocation6 + $0x120] sm:$0xff]
        %v728 = vld [vmem:[#allocation6 + $0x128] sm:$0xff]
        %v729 = vld [vmem:[#allocation6 + $0x130] sm:$0xff]
        %v730 = vld [vmem:[#allocation6 + $0x138] sm:$0xff]
        %v731 = vld [vmem:[#allocation6 + $0x140] sm:$0xff]
        %v732 = vld [vmem:[#allocation6 + $0x148] sm:$0xff]
        %v733 = vld [vmem:[#allocation6 + $0x150] sm:$0xff]
        %v734 = vld [vmem:[#allocation6 + $0x158] sm:$0xff]
        %v735 = vld [vmem:[#allocation6 + $0x160] sm:$0xff]
        %v736 = vld [vmem:[#allocation6 + $0x168] sm:$0xff]
        %v737 = vld [vmem:[#allocation6 + $0x170] sm:$0xff]
        %v738 = vld [vmem:[#allocation6 + $0x178] sm:$0xff]
        %v739 = vld [vmem:[#allocation6 + $0x180] sm:$0xff]
        %v740 = vld [vmem:[#allocation6 + $0x188] sm:$0xff]
        %v741 = vld [vmem:[#allocation6 + $0x190] sm:$0xff]
        %v742 = vld [vmem:[#allocation6 + $0x198] sm:$0xff]
        %v743 = vld [vmem:[#allocation6 + $0x1a0] sm:$0xff]
        %v744 = vld [vmem:[#allocation6 + $0x1a8] sm:$0xff]
        %v745 = vld [vmem:[#allocation6 + $0x1b0] sm:$0xff]
        %v746 = vld [vmem:[#allocation6 + $0x1b8] sm:$0xff]
        %v747 = vld [vmem:[#allocation6 + $0x1c0] sm:$0xff]
        %v748 = vld [vmem:[#allocation6 + $0x1c8] sm:$0xff]
        %v749 = vld [vmem:[#allocation6 + $0x1d0] sm:$0xff]
        %v750 = vld [vmem:[#allocation6 + $0x1d8] sm:$0xff]
        %v751 = vld [vmem:[#allocation6 + $0x1e0] sm:$0xff]
        %v752 = vld [vmem:[#allocation6 + $0x1e8] sm:$0xff]
        %v753 = vld [vmem:[#allocation6 + $0x1f0] sm:$0xff]
        %v754 = vld [vmem:[#allocation6 + $0x1f8] sm:$0xff]
        %v755 = vld [vmem:[#allocation6 + $0x200] sm:$0xff]
        %v756 = vld [vmem:[#allocation6 + $0x208] sm:$0xff]
        %v757 = vld [vmem:[#allocation6 + $0x210] sm:$0xff]
        %v758 = vld [vmem:[#allocation6 + $0x218] sm:$0xff]
        %v759 = vld [vmem:[#allocation6 + $0x220] sm:$0xff]
        %v760 = vld [vmem:[#allocation6 + $0x228] sm:$0xff]
        %v761 = vld [vmem:[#allocation6 + $0x230] sm:$0xff]
        %v762 = vld [vmem:[#allocation6 + $0x238] sm:$0xff]
        %v763 = vld [vmem:[#allocation6 + $0x240] sm:$0xff]
        %v764 = vld [vmem:[#allocation6 + $0x248] sm:$0xff]
        %v765 = vld [vmem:[#allocation6 + $0x250] sm:$0xff]
        %v766 = vld [vmem:[#allocation6 + $0x258] sm:$0xff]
        %v767 = vld [vmem:[#allocation6 + $0x260] sm:$0xff]
        %v768 = vld [vmem:[#allocation6 + $0x268] sm:$0xff]
        %v769 = vld [vmem:[#allocation6 + $0x270] sm:$0xff]
        %v770 = vld [vmem:[#allocation6 + $0x278] sm:$0xff]
        %v771 = vld [vmem:[#allocation6 + $0x280] sm:$0xff]
        %v772 = vld [vmem:[#allocation6 + $0x288] sm:$0xff]
        %v773 = vld [vmem:[#allocation6 + $0x290] sm:$0xff]
        %v774 = vld [vmem:[#allocation6 + $0x298] sm:$0xff]
        %v775 = vld [vmem:[#allocation6 + $0x2a0] sm:$0xff]
        %v776 = vld [vmem:[#allocation6 + $0x2a8] sm:$0xff]
        %v777 = vld [vmem:[#allocation6 + $0x2b0] sm:$0xff]
        %v778 = vld [vmem:[#allocation6 + $0x2b8] sm:$0xff]
        %v779 = vld [vmem:[#allocation6 + $0x2c0] sm:$0xff]
        %v780 = vld [vmem:[#allocation6 + $0x2c8] sm:$0xff]
        %v781 = vld [vmem:[#allocation6 + $0x2d0] sm:$0xff]
        %v782 = vld [vmem:[#allocation6 + $0x2d8] sm:$0xff]
        %v783 = vld [vmem:[#allocation6 + $0x2e0] sm:$0xff]
        %v784 = vld [vmem:[#allocation6 + $0x2e8] sm:$0xff]
        %v785 = vld [vmem:[#allocation6 + $0x2f0] sm:$0xff]
        %v786 = vld [vmem:[#allocation6 + $0x2f8] sm:$0xff]
        %v787 = vld [vmem:[#allocation6 + $0x300] sm:$0xff]
        %v788 = vld [vmem:[#allocation6 + $0x308] sm:$0xff]
        %v789 = vld [vmem:[#allocation6 + $0x310] sm:$0xff]
        %v790 = vld [vmem:[#allocation6 + $0x318] sm:$0xff]
        %v791 = vld [vmem:[#allocation6 + $0x320] sm:$0xff]
        %v792 = vld [vmem:[#allocation6 + $0x328] sm:$0xff]
        %v793 = vld [vmem:[#allocation6 + $0x330] sm:$0xff]
        %v794 = vld [vmem:[#allocation6 + $0x338] sm:$0xff]
        %v795 = vld [vmem:[#allocation6 + $0x340] sm:$0xff]
        %v796 = vld [vmem:[#allocation6 + $0x348] sm:$0xff]
        %v797 = vld [vmem:[#allocation6 + $0x350] sm:$0xff]
        %v798 = vld [vmem:[#allocation6 + $0x358] sm:$0xff]
        %v799 = vld [vmem:[#allocation6 + $0x360] sm:$0xff]
        %v800 = vld [vmem:[#allocation6 + $0x368] sm:$0xff]
        %v801 = vld [vmem:[#allocation6 + $0x370] sm:$0xff]
        %v802 = vld [vmem:[#allocation6 + $0x378] sm:$0xff]
        %v803 = vld [vmem:[#allocation6 + $0x380] sm:$0xff]
        %v804 = vld [vmem:[#allocation6 + $0x388] sm:$0xff]
        %v805 = vld [vmem:[#allocation6 + $0x390] sm:$0xff]
        %v806 = vld [vmem:[#allocation6 + $0x398] sm:$0xff]
        %v807 = vld [vmem:[#allocation6 + $0x3a0] sm:$0xff]
        %v808 = vld [vmem:[#allocation6 + $0x3a8] sm:$0xff]
        %v809 = vld [vmem:[#allocation6 + $0x3b0] sm:$0xff]
        %v810 = vld [vmem:[#allocation6 + $0x3b8] sm:$0xff]
        %v811 = vld [vmem:[#allocation6 + $0x3c0] sm:$0xff]
        %v812 = vld [vmem:[#allocation6 + $0x3c8] sm:$0xff]
        %v813 = vld [vmem:[#allocation6 + $0x3d0] sm:$0xff]
        %v814 = vld [vmem:[#allocation6 + $0x3d8] sm:$0xff]
        %v815 = vld [vmem:[#allocation6 + $0x3e0] sm:$0xff]
        %v816 = vld [vmem:[#allocation6 + $0x3e8] sm:$0xff]
        %v817 = vld [vmem:[#allocation6 + $0x3f0] sm:$0xff]
        %v818 = vld [vmem:[#allocation6 + $0x3f8] sm:$0xff]
        %v819 = vld [vmem:[#allocation6 + $0x400] sm:$0xff]
        %v820 = vld [vmem:[#allocation6 + $0x408] sm:$0xff]
        %v821 = vld [vmem:[#allocation6 + $0x410] sm:$0xff]
        %v822 = vld [vmem:[#allocation6 + $0x418] sm:$0xff]
        %v823 = vld [vmem:[#allocation6 + $0x420] sm:$0xff]
        %v824 = vld [vmem:[#allocation6 + $0x428] sm:$0xff]
        %v825 = vld [vmem:[#allocation6 + $0x430] sm:$0xff]
        %v826 = vld [vmem:[#allocation6 + $0x438] sm:$0xff]
        %v827 = vld [vmem:[#allocation6 + $0x440] sm:$0xff]
        %v828 = vld [vmem:[#allocation6 + $0x448] sm:$0xff]
        %v829 = vld [vmem:[#allocation6 + $0x450] sm:$0xff]
        %v830 = vld [vmem:[#allocation6 + $0x458] sm:$0xff]
        %v831 = vld [vmem:[#allocation6 + $0x460] sm:$0xff]
        %v832 = vld [vmem:[#allocation6 + $0x468] sm:$0xff]
        %v833 = vld [vmem:[#allocation6 + $0x470] sm:$0xff]
        %v834 = vld [vmem:[#allocation6 + $0x478] sm:$0xff]
        %v835 = vld [vmem:[#allocation6 + $0x480] sm:$0xff]
        %v836 = vld [vmem:[#allocation6 + $0x488] sm:$0xff]
        %v837 = vld [vmem:[#allocation6 + $0x490] sm:$0xff]
        %v838 = vld [vmem:[#allocation6 + $0x498] sm:$0xff]
        %v839 = vld [vmem:[#allocation6 + $0x4a0] sm:$0xff]
        %v840 = vld [vmem:[#allocation6 + $0x4a8] sm:$0xff]
        %v841 = vld [vmem:[#allocation6 + $0x4b0] sm:$0xff]
        %v842 = vld [vmem:[#allocation6 + $0x4b8] sm:$0xff]
        %v843 = vld [vmem:[#allocation6 + $0x4c0] sm:$0xff]
        %v844 = vld [vmem:[#allocation6 + $0x4c8] sm:$0xff]
        %v845 = vld [vmem:[#allocation6 + $0x4d0] sm:$0xff]
        %v846 = vld [vmem:[#allocation6 + $0x4d8] sm:$0xff]
        %v847 = vld [vmem:[#allocation6 + $0x4e0] sm:$0xff]
        %v848 = vld [vmem:[#allocation6 + $0x4e8] sm:$0xff]
        %v849 = vld [vmem:[#allocation6 + $0x4f0] sm:$0xff]
        %v850 = vld [vmem:[#allocation6 + $0x4f8] sm:$0xff]
        %v851 = vld [vmem:[#allocation6 + $0x500] sm:$0xff]
        %v852 = vld [vmem:[#allocation6 + $0x508] sm:$0xff]
        %v853 = vld [vmem:[#allocation6 + $0x510] sm:$0xff]
        %v854 = vld [vmem:[#allocation6 + $0x518] sm:$0xff]
        %v855 = vld [vmem:[#allocation6 + $0x520] sm:$0xff]
        %v856 = vld [vmem:[#allocation6 + $0x528] sm:$0xff]
        %v857 = vld [vmem:[#allocation6 + $0x530] sm:$0xff]
        %v858 = vld [vmem:[#allocation6 + $0x538] sm:$0xff]
        %v859 = vld [vmem:[#allocation6 + $0x540] sm:$0xff]
        %v860 = vld [vmem:[#allocation6 + $0x548] sm:$0xff]
        %v861 = vld [vmem:[#allocation6 + $0x550] sm:$0xff]
        %v862 = vld [vmem:[#allocation6 + $0x558] sm:$0xff]
        %v863 = vld [vmem:[#allocation6 + $0x560] sm:$0xff]
        %v864 = vld [vmem:[#allocation6 + $0x568] sm:$0xff]
        %v865 = vld [vmem:[#allocation6 + $0x570] sm:$0xff]
        %v866 = vld [vmem:[#allocation6 + $0x578] sm:$0xff]
        %v867 = vld [vmem:[#allocation6 + $0x580] sm:$0xff]
        %v868 = vld [vmem:[#allocation6 + $0x588] sm:$0xff]
        %v869 = vld [vmem:[#allocation6 + $0x590] sm:$0xff]
        %v870 = vld [vmem:[#allocation6 + $0x598] sm:$0xff]
        %v871 = vld [vmem:[#allocation6 + $0x5a0] sm:$0xff]
        %v872 = vld [vmem:[#allocation6 + $0x5a8] sm:$0xff]
        %v873 = vld [vmem:[#allocation6 + $0x5b0] sm:$0xff]
        %v874 = vld [vmem:[#allocation6 + $0x5b8] sm:$0xff]
        %v875 = vld [vmem:[#allocation6 + $0x5c0] sm:$0xff]
        %v876 = vld [vmem:[#allocation6 + $0x5c8] sm:$0xff]
        %v877 = vld [vmem:[#allocation6 + $0x5d0] sm:$0xff]
        %v878 = vld [vmem:[#allocation6 + $0x5d8] sm:$0xff]
        %v879 = vld [vmem:[#allocation6 + $0x5e0] sm:$0xff]
        %v880 = vld [vmem:[#allocation6 + $0x5e8] sm:$0xff]
        %v881 = vld [vmem:[#allocation6 + $0x5f0] sm:$0xff]
        %v882 = vld [vmem:[#allocation6 + $0x5f8] sm:$0xff]
        %v883 = vld [vmem:[#allocation6 + $0x600] sm:$0xff]
        %v884 = vld [vmem:[#allocation6 + $0x608] sm:$0xff]
        %v885 = vld [vmem:[#allocation6 + $0x610] sm:$0xff]
        %v886 = vld [vmem:[#allocation6 + $0x618] sm:$0xff]
        %v887 = vld [vmem:[#allocation6 + $0x620] sm:$0xff]
        %v888 = vld [vmem:[#allocation6 + $0x628] sm:$0xff]
        %v889 = vld [vmem:[#allocation6 + $0x630] sm:$0xff]
        %v890 = vld [vmem:[#allocation6 + $0x638] sm:$0xff]
        %v891 = vld [vmem:[#allocation6 + $0x640] sm:$0xff]
        %v892 = vld [vmem:[#allocation6 + $0x648] sm:$0xff]
        %v893 = vld [vmem:[#allocation6 + $0x650] sm:$0xff]
        %v894 = vld [vmem:[#allocation6 + $0x658] sm:$0xff]
        %v895 = vld [vmem:[#allocation6 + $0x660] sm:$0xff]
        %v896 = vld [vmem:[#allocation6 + $0x668] sm:$0xff]
        %v897 = vld [vmem:[#allocation6 + $0x670] sm:$0xff]
        %v898 = vld [vmem:[#allocation6 + $0x678] sm:$0xff]
        %v899 = vld [vmem:[#allocation6 + $0x680] sm:$0xff]
        %v900 = vld [vmem:[#allocation6 + $0x688] sm:$0xff]
        %v901 = vld [vmem:[#allocation6 + $0x690] sm:$0xff]
        %v902 = vld [vmem:[#allocation6 + $0x698] sm:$0xff]
        %v903 = vld [vmem:[#allocation6 + $0x6a0] sm:$0xff]
        %v904 = vld [vmem:[#allocation6 + $0x6a8] sm:$0xff]
        %v905 = vld [vmem:[#allocation6 + $0x6b0] sm:$0xff]
        %v906 = vld [vmem:[#allocation6 + $0x6b8] sm:$0xff]
        %v907 = vld [vmem:[#allocation6 + $0x6c0] sm:$0xff]
        %v908 = vld [vmem:[#allocation6 + $0x6c8] sm:$0xff]
        %v909 = vld [vmem:[#allocation6 + $0x6d0] sm:$0xff]
        %v910 = vld [vmem:[#allocation6 + $0x6d8] sm:$0xff]
        %v911 = vld [vmem:[#allocation6 + $0x6e0] sm:$0xff]
        %v912 = vld [vmem:[#allocation6 + $0x6e8] sm:$0xff]
        %v913 = vld [vmem:[#allocation6 + $0x6f0] sm:$0xff]
        %v914 = vld [vmem:[#allocation6 + $0x6f8] sm:$0xff]
        %v915 = vld [vmem:[#allocation6 + $0x700] sm:$0xff]
        %v916 = vld [vmem:[#allocation6 + $0x708] sm:$0xff]
        %v917 = vld [vmem:[#allocation6 + $0x710] sm:$0xff]
        %v918 = vld [vmem:[#allocation6 + $0x718] sm:$0xff]
        %v919 = vld [vmem:[#allocation6 + $0x720] sm:$0xff]
        %v920 = vld [vmem:[#allocation6 + $0x728] sm:$0xff]
        %v921 = vld [vmem:[#allocation6 + $0x730] sm:$0xff]
        %v922 = vld [vmem:[#allocation6 + $0x738] sm:$0xff]
        %v923 = vld [vmem:[#allocation6 + $0x740] sm:$0xff]
        %v924 = vld [vmem:[#allocation6 + $0x748] sm:$0xff]
        %v925 = vld [vmem:[#allocation6 + $0x750] sm:$0xff]
        %v926 = vld [vmem:[#allocation6 + $0x758] sm:$0xff]
        %v927 = vld [vmem:[#allocation6 + $0x760] sm:$0xff]
        %v928 = vld [vmem:[#allocation6 + $0x768] sm:$0xff]
        %v929 = vld [vmem:[#allocation6 + $0x770] sm:$0xff]
        %v930 = vld [vmem:[#allocation6 + $0x778] sm:$0xff]
        %v931 = vld [vmem:[#allocation6 + $0x780] sm:$0xff]
        %v932 = vld [vmem:[#allocation6 + $0x788] sm:$0xff]
        %v933 = vld [vmem:[#allocation6 + $0x790] sm:$0xff]
        %v934 = vld [vmem:[#allocation6 + $0x798] sm:$0xff]
        %v935 = vld [vmem:[#allocation6 + $0x7a0] sm:$0xff]
        %v936 = vld [vmem:[#allocation6 + $0x7a8] sm:$0xff]
        %v937 = vld [vmem:[#allocation6 + $0x7b0] sm:$0xff]
        %v938 = vld [vmem:[#allocation6 + $0x7b8] sm:$0xff]
        %v939 = vld [vmem:[#allocation6 + $0x7c0] sm:$0xff]
        %v940 = vld [vmem:[#allocation6 + $0x7c8] sm:$0xff]
        %v941 = vld [vmem:[#allocation6 + $0x7d0] sm:$0xff]
        %v942 = vld [vmem:[#allocation6 + $0x7d8] sm:$0xff]
        %v943 = vld [vmem:[#allocation6 + $0x7e0] sm:$0xff]
        %v944 = vld [vmem:[#allocation6 + $0x7e8] sm:$0xff]
        %v945 = vld [vmem:[#allocation6 + $0x7f0] sm:$0xff]
        %v946 = vld [vmem:[#allocation6 + $0x7f8] sm:$0xff]
        %v947 = vld [vmem:[#allocation6 + $0x800] sm:$0xff]
        %v948 = vld [vmem:[#allocation6 + $0x808] sm:$0xff]
        %v949 = vld [vmem:[#allocation6 + $0x810] sm:$0xff]
        %v950 = vld [vmem:[#allocation6 + $0x818] sm:$0xff]
        %v951 = vld [vmem:[#allocation6 + $0x820] sm:$0xff]
        %v952 = vld [vmem:[#allocation6 + $0x828] sm:$0xff]
        %v953 = vld [vmem:[#allocation6 + $0x830] sm:$0xff]
        %v954 = vld [vmem:[#allocation6 + $0x838] sm:$0xff]
        %v955 = vld [vmem:[#allocation6 + $0x840] sm:$0xff]
        %v956 = vld [vmem:[#allocation6 + $0x848] sm:$0xff]
        %v957 = vld [vmem:[#allocation6 + $0x850] sm:$0xff]
        %v958 = vld [vmem:[#allocation6 + $0x858] sm:$0xff]
        %v959 = vld [vmem:[#allocation6 + $0x860] sm:$0xff]
        %v960 = vld [vmem:[#allocation6 + $0x868] sm:$0xff]
        %v961 = vld [vmem:[#allocation6 + $0x870] sm:$0xff]
        %v962 = vld [vmem:[#allocation6 + $0x878] sm:$0xff]
        %v963 = vld [vmem:[#allocation6 + $0x880] sm:$0xff]
        %v964 = vld [vmem:[#allocation6 + $0x888] sm:$0xff]
        %v965 = vld [vmem:[#allocation6 + $0x890] sm:$0xff]
        %v966 = vld [vmem:[#allocation6 + $0x898] sm:$0xff]
        %v967 = vld [vmem:[#allocation6 + $0x8a0] sm:$0xff]
        %v968 = vld [vmem:[#allocation6 + $0x8a8] sm:$0xff]
        %v969 = vld [vmem:[#allocation6 + $0x8b0] sm:$0xff]
        %v970 = vld [vmem:[#allocation6 + $0x8b8] sm:$0xff]
        %v971 = vld [vmem:[#allocation6 + $0x8c0] sm:$0xff]
        %v972 = vld [vmem:[#allocation6 + $0x8c8] sm:$0xff]
        %v973 = vld [vmem:[#allocation6 + $0x8d0] sm:$0xff]
        %v974 = vld [vmem:[#allocation6 + $0x8d8] sm:$0xff]
        %v975 = vld [vmem:[#allocation6 + $0x8e0] sm:$0xff]
        %v976 = vld [vmem:[#allocation6 + $0x8e8] sm:$0xff]
        %v977 = vld [vmem:[#allocation6 + $0x8f0] sm:$0xff]
        %v978 = vld [vmem:[#allocation6 + $0x8f8] sm:$0xff]
        %v979 = vld [vmem:[#allocation6 + $0x900] sm:$0xff]
        %v980 = vld [vmem:[#allocation6 + $0x908] sm:$0xff]
        %v981 = vld [vmem:[#allocation6 + $0x910] sm:$0xff]
        %v982 = vld [vmem:[#allocation6 + $0x918] sm:$0xff]
        %v983 = vld [vmem:[#allocation6 + $0x920] sm:$0xff]
        %v984 = vld [vmem:[#allocation6 + $0x928] sm:$0xff]
        %v985 = vld [vmem:[#allocation6 + $0x930] sm:$0xff]
        %v986 = vld [vmem:[#allocation6 + $0x938] sm:$0xff]
        %v987 = vld [vmem:[#allocation6 + $0x940] sm:$0xff]
        %v988 = vld [vmem:[#allocation6 + $0x948] sm:$0xff]
        %v989 = vld [vmem:[#allocation6 + $0x950] sm:$0xff]
        %v990 = vld [vmem:[#allocation6 + $0x958] sm:$0xff]
        %v991 = vld [vmem:[#allocation6 + $0x960] sm:$0xff]
        %v992 = vld [vmem:[#allocation6 + $0x968] sm:$0xff]
        %v993 = vld [vmem:[#allocation6 + $0x970] sm:$0xff]
        %v994 = vld [vmem:[#allocation6 + $0x978] sm:$0xff]
        %v995 = vld [vmem:[#allocation6 + $0x980] sm:$0xff]
        %v996 = vld [vmem:[#allocation6 + $0x988] sm:$0xff]
        %v997 = vld [vmem:[#allocation6 + $0x990] sm:$0xff]
        %v998 = vld [vmem:[#allocation6 + $0x998] sm:$0xff]
        %v999 = vld [vmem:[#allocation6 + $0x9a0] sm:$0xff]
        %v1000 = vld [vmem:[#allocation6 + $0x9a8] sm:$0xff]
        %v1001 = vld [vmem:[#allocation6 + $0x9b0] sm:$0xff]
        %v1002 = vld [vmem:[#allocation6 + $0x9b8] sm:$0xff]
        %v1003 = vld [vmem:[#allocation6 + $0x9c0] sm:$0xff]
        %v1004 = vld [vmem:[#allocation6 + $0x9c8] sm:$0xff]
        %v1005 = vld [vmem:[#allocation6 + $0x9d0] sm:$0xff]
        %v1006 = vld [vmem:[#allocation6 + $0x9d8] sm:$0xff]
        %v1007 = vld [vmem:[#allocation6 + $0x9e0] sm:$0xff]
        %v1008 = vld [vmem:[#allocation6 + $0x9e8] sm:$0xff]
        %v1009 = vld [vmem:[#allocation6 + $0x9f0] sm:$0xff]
        %v1010 = vld [vmem:[#allocation6 + $0x9f8] sm:$0xff]
        %v1011 = vld [vmem:[#allocation6 + $0xa00] sm:$0xff]
        %v1012 = vld [vmem:[#allocation6 + $0xa08] sm:$0xff]
        %v1013 = vld [vmem:[#allocation6 + $0xa10] sm:$0xff]
        %v1014 = vld [vmem:[#allocation6 + $0xa18] sm:$0xff]
        %v1015 = vld [vmem:[#allocation6 + $0xa20] sm:$0xff]
        %v1016 = vld [vmem:[#allocation6 + $0xa28] sm:$0xff]
        %v1017 = vld [vmem:[#allocation6 + $0xa30] sm:$0xff]
        %v1018 = vld [vmem:[#allocation6 + $0xa38] sm:$0xff]
        %v1019 = vld [vmem:[#allocation6 + $0xa40] sm:$0xff]
        %v1020 = vld [vmem:[#allocation6 + $0xa48] sm:$0xff]
        %v1021 = vld [vmem:[#allocation6 + $0xa50] sm:$0xff]
        %v1022 = vld [vmem:[#allocation6 + $0xa58] sm:$0xff]
        %v1023 = vld [vmem:[#allocation6 + $0xa60] sm:$0xff]
        %v1024 = vld [vmem:[#allocation6 + $0xa68] sm:$0xff]
        %v1025 = vld [vmem:[#allocation6 + $0xa70] sm:$0xff]
        %v1026 = vld [vmem:[#allocation6 + $0xa78] sm:$0xff]
        %v1027 = vld [vmem:[#allocation6 + $0xa80] sm:$0xff]
        %v1028 = vld [vmem:[#allocation6 + $0xa88] sm:$0xff]
        %v1029 = vld [vmem:[#allocation6 + $0xa90] sm:$0xff]
        %v1030 = vld [vmem:[#allocation6 + $0xa98] sm:$0xff]
        %v1031 = vld [vmem:[#allocation6 + $0xaa0] sm:$0xff]
        %v1032 = vld [vmem:[#allocation6 + $0xaa8] sm:$0xff]
        %v1033 = vld [vmem:[#allocation6 + $0xab0] sm:$0xff]
        %v1034 = vld [vmem:[#allocation6 + $0xab8] sm:$0xff]
        %v1035 = vld [vmem:[#allocation6 + $0xac0] sm:$0xff]
        %v1036 = vld [vmem:[#allocation6 + $0xac8] sm:$0xff]
        %v1037 = vld [vmem:[#allocation6 + $0xad0] sm:$0xff]
        %v1038 = vld [vmem:[#allocation6 + $0xad8] sm:$0xff]
        %v1039 = vld [vmem:[#allocation6 + $0xae0] sm:$0xff]
        %v1040 = vld [vmem:[#allocation6 + $0xae8] sm:$0xff]
        %v1041 = vld [vmem:[#allocation6 + $0xaf0] sm:$0xff]
        %v1042 = vld [vmem:[#allocation6 + $0xaf8] sm:$0xff]
        %v1043 = vld [vmem:[#allocation6 + $0xb00] sm:$0xff]
        %v1044 = vld [vmem:[#allocation6 + $0xb08] sm:$0xff]
        %v1045 = vld [vmem:[#allocation6 + $0xb10] sm:$0xff]
        %v1046 = vld [vmem:[#allocation6 + $0xb18] sm:$0xff]
        %v1047 = vld [vmem:[#allocation6 + $0xb20] sm:$0xff]
        %v1048 = vld [vmem:[#allocation6 + $0xb28] sm:$0xff]
        %v1049 = vld [vmem:[#allocation6 + $0xb30] sm:$0xff]
        %v1050 = vld [vmem:[#allocation6 + $0xb38] sm:$0xff]
        %v1051 = vld [vmem:[#allocation6 + $0xb40] sm:$0xff]
        %v1052 = vld [vmem:[#allocation6 + $0xb48] sm:$0xff]
        %v1053 = vld [vmem:[#allocation6 + $0xb50] sm:$0xff]
        %v1054 = vld [vmem:[#allocation6 + $0xb58] sm:$0xff]
        %v1055 = vld [vmem:[#allocation6 + $0xb60] sm:$0xff]
        %v1056 = vld [vmem:[#allocation6 + $0xb68] sm:$0xff]
        %v1057 = vld [vmem:[#allocation6 + $0xb70] sm:$0xff]
        %v1058 = vld [vmem:[#allocation6 + $0xb78] sm:$0xff]
        %v1059 = vld [vmem:[#allocation6 + $0xb80] sm:$0xff]
        %v1060 = vld [vmem:[#allocation6 + $0xb88] sm:$0xff]
        %v1061 = vld [vmem:[#allocation6 + $0xb90] sm:$0xff]
        %v1062 = vld [vmem:[#allocation6 + $0xb98] sm:$0xff]
        %v1063 = vld [vmem:[#allocation6 + $0xba0] sm:$0xff]
        %v1064 = vld [vmem:[#allocation6 + $0xba8] sm:$0xff]
        %v1065 = vld [vmem:[#allocation6 + $0xbb0] sm:$0xff]
        %v1066 = vld [vmem:[#allocation6 + $0xbb8] sm:$0xff]
        %v1067 = vld [vmem:[#allocation6 + $0xbc0] sm:$0xff]
        %v1068 = vld [vmem:[#allocation6 + $0xbc8] sm:$0xff]
        %v1069 = vld [vmem:[#allocation6 + $0xbd0] sm:$0xff]
        %v1070 = vld [vmem:[#allocation6 + $0xbd8] sm:$0xff]
        %v1071 = vld [vmem:[#allocation6 + $0xbe0] sm:$0xff]
        %v1072 = vld [vmem:[#allocation6 + $0xbe8] sm:$0xff]
        %v1073 = vld [vmem:[#allocation6 + $0xbf0] sm:$0xff]
        %v1074 = vld [vmem:[#allocation6 + $0xbf8] sm:$0xff]
        %v1075 = vld [vmem:[#allocation6 + $0xc00] sm:$0xff]
        %v1076 = vld [vmem:[#allocation6 + $0xc08] sm:$0xff]
        %v1077 = vld [vmem:[#allocation6 + $0xc10] sm:$0xff]
        %v1078 = vld [vmem:[#allocation6 + $0xc18] sm:$0xff]
        %v1079 = vld [vmem:[#allocation6 + $0xc20] sm:$0xff]
        %v1080 = vld [vmem:[#allocation6 + $0xc28] sm:$0xff]
        %v1081 = vld [vmem:[#allocation6 + $0xc30] sm:$0xff]
        %v1082 = vld [vmem:[#allocation6 + $0xc38] sm:$0xff]
        %v1083 = vld [vmem:[#allocation6 + $0xc40] sm:$0xff]
        %v1084 = vld [vmem:[#allocation6 + $0xc48] sm:$0xff]
        %v1085 = vld [vmem:[#allocation6 + $0xc50] sm:$0xff]
        %v1086 = vld [vmem:[#allocation6 + $0xc58] sm:$0xff]
        %v1087 = vld [vmem:[#allocation6 + $0xc60] sm:$0xff]
        %v1088 = vld [vmem:[#allocation6 + $0xc68] sm:$0xff]
        %v1089 = vld [vmem:[#allocation6 + $0xc70] sm:$0xff]
        %v1090 = vld [vmem:[#allocation6 + $0xc78] sm:$0xff]
        %v1091 = vld [vmem:[#allocation6 + $0xc80] sm:$0xff]
        %v1092 = vld [vmem:[#allocation6 + $0xc88] sm:$0xff]
        %v1093 = vld [vmem:[#allocation6 + $0xc90] sm:$0xff]
        %v1094 = vld [vmem:[#allocation6 + $0xc98] sm:$0xff]
        %v1095 = vld [vmem:[#allocation6 + $0xca0] sm:$0xff]
        %v1096 = vld [vmem:[#allocation6 + $0xca8] sm:$0xff]
        %v1097 = vld [vmem:[#allocation6 + $0xcb0] sm:$0xff]
        %v1098 = vld [vmem:[#allocation6 + $0xcb8] sm:$0xff]
        %v1099 = vld [vmem:[#allocation6 + $0xcc0] sm:$0xff]
        %v1100 = vld [vmem:[#allocation6 + $0xcc8] sm:$0xff]
        %v1101 = vld [vmem:[#allocation6 + $0xcd0] sm:$0xff]
        %v1102 = vld [vmem:[#allocation6 + $0xcd8] sm:$0xff]
        %v1103 = vld [vmem:[#allocation6 + $0xce0] sm:$0xff]
        %v1104 = vld [vmem:[#allocation6 + $0xce8] sm:$0xff]
        %v1105 = vld [vmem:[#allocation6 + $0xcf0] sm:$0xff]
        %v1106 = vld [vmem:[#allocation6 + $0xcf8] sm:$0xff]
        %v1107 = vld [vmem:[#allocation6 + $0xd00] sm:$0xff]
        %v1108 = vld [vmem:[#allocation6 + $0xd08] sm:$0xff]
        %v1109 = vld [vmem:[#allocation6 + $0xd10] sm:$0xff]
        %v1110 = vld [vmem:[#allocation6 + $0xd18] sm:$0xff]
        %v1111 = vld [vmem:[#allocation6 + $0xd20] sm:$0xff]
        %v1112 = vld [vmem:[#allocation6 + $0xd28] sm:$0xff]
        %v1113 = vld [vmem:[#allocation6 + $0xd30] sm:$0xff]
        %v1114 = vld [vmem:[#allocation6 + $0xd38] sm:$0xff]
        %v1115 = vld [vmem:[#allocation6 + $0xd40] sm:$0xff]
        %v1116 = vld [vmem:[#allocation6 + $0xd48] sm:$0xff]
        %v1117 = vld [vmem:[#allocation6 + $0xd50] sm:$0xff]
        %v1118 = vld [vmem:[#allocation6 + $0xd58] sm:$0xff]
        %v1119 = vld [vmem:[#allocation6 + $0xd60] sm:$0xff]
        %v1120 = vld [vmem:[#allocation6 + $0xd68] sm:$0xff]
        %v1121 = vld [vmem:[#allocation6 + $0xd70] sm:$0xff]
        %v1122 = vld [vmem:[#allocation6 + $0xd78] sm:$0xff]
        %v1123 = vld [vmem:[#allocation6 + $0xd80] sm:$0xff]
        %v1124 = vld [vmem:[#allocation6 + $0xd88] sm:$0xff]
        %v1125 = vld [vmem:[#allocation6 + $0xd90] sm:$0xff]
        %v1126 = vld [vmem:[#allocation6 + $0xd98] sm:$0xff]
        %v1127 = vld [vmem:[#allocation6 + $0xda0] sm:$0xff]
        %v1128 = vld [vmem:[#allocation6 + $0xda8] sm:$0xff]
        %v1129 = vld [vmem:[#allocation6 + $0xdb0] sm:$0xff]
        %v1130 = vld [vmem:[#allocation6 + $0xdb8] sm:$0xff]
        %v1131 = vld [vmem:[#allocation6 + $0xdc0] sm:$0xff]
        %v1132 = vld [vmem:[#allocation6 + $0xdc8] sm:$0xff]
        %v1133 = vld [vmem:[#allocation6 + $0xdd0] sm:$0xff]
        %v1134 = vld [vmem:[#allocation6 + $0xdd8] sm:$0xff]
        %v1135 = vld [vmem:[#allocation6 + $0xde0] sm:$0xff]
        %v1136 = vld [vmem:[#allocation6 + $0xde8] sm:$0xff]
        %v1137 = vld [vmem:[#allocation6 + $0xdf0] sm:$0xff]
        %v1138 = vld [vmem:[#allocation6 + $0xdf8] sm:$0xff]
        %v1139 = vld [vmem:[#allocation6 + $0xe00] sm:$0xff]
        %v1140 = vld [vmem:[#allocation6 + $0xe08] sm:$0xff]
        %v1141 = vld [vmem:[#allocation6 + $0xe10] sm:$0xff]
        %v1142 = vld [vmem:[#allocation6 + $0xe18] sm:$0xff]
        %v1143 = vld [vmem:[#allocation6 + $0xe20] sm:$0xff]
        %v1144 = vld [vmem:[#allocation6 + $0xe28] sm:$0xff]
        %v1145 = vld [vmem:[#allocation6 + $0xe30] sm:$0xff]
        %v1146 = vld [vmem:[#allocation6 + $0xe38] sm:$0xff]
        %v1147 = vld [vmem:[#allocation6 + $0xe40] sm:$0xff]
        %v1148 = vld [vmem:[#allocation6 + $0xe48] sm:$0xff]
        %v1149 = vld [vmem:[#allocation6 + $0xe50] sm:$0xff]
        %v1150 = vld [vmem:[#allocation6 + $0xe58] sm:$0xff]
        %v1151 = vld [vmem:[#allocation6 + $0xe60] sm:$0xff]
        %v1152 = vld [vmem:[#allocation6 + $0xe68] sm:$0xff]
        %v1153 = vld [vmem:[#allocation6 + $0xe70] sm:$0xff]
        %v1154 = vld [vmem:[#allocation6 + $0xe78] sm:$0xff]
        %v1155 = vld [vmem:[#allocation6 + $0xe80] sm:$0xff]
        %v1156 = vld [vmem:[#allocation6 + $0xe88] sm:$0xff]
        %v1157 = vld [vmem:[#allocation6 + $0xe90] sm:$0xff]
        %v1158 = vld [vmem:[#allocation6 + $0xe98] sm:$0xff]
        %v1159 = vld [vmem:[#allocation6 + $0xea0] sm:$0xff]
        %v1160 = vld [vmem:[#allocation6 + $0xea8] sm:$0xff]
        %v1161 = vld [vmem:[#allocation6 + $0xeb0] sm:$0xff]
        %v1162 = vld [vmem:[#allocation6 + $0xeb8] sm:$0xff]
        %v1163 = vld [vmem:[#allocation6 + $0xec0] sm:$0xff]
        %v1164 = vld [vmem:[#allocation6 + $0xec8] sm:$0xff]
        %v1165 = vld [vmem:[#allocation6 + $0xed0] sm:$0xff]
        %v1166 = vld [vmem:[#allocation6 + $0xed8] sm:$0xff]
        %v1167 = vld [vmem:[#allocation6 + $0xee0] sm:$0xff]
        %v1168 = vld [vmem:[#allocation6 + $0xee8] sm:$0xff]
        %v1169 = vld [vmem:[#allocation6 + $0xef0] sm:$0xff]
        %v1170 = vld [vmem:[#allocation6 + $0xef8] sm:$0xff]
        %v1171 = vld [vmem:[#allocation6 + $0xf00] sm:$0xff]
        %v1172 = vld [vmem:[#allocation6 + $0xf08] sm:$0xff]
        %v1173 = vld [vmem:[#allocation6 + $0xf10] sm:$0xff]
        %v1174 = vld [vmem:[#allocation6 + $0xf18] sm:$0xff]
        %v1175 = vld [vmem:[#allocation6 + $0xf20] sm:$0xff]
        %v1176 = vld [vmem:[#allocation6 + $0xf28] sm:$0xff]
        %v1177 = vld [vmem:[#allocation6 + $0xf30] sm:$0xff]
        %v1178 = vld [vmem:[#allocation6 + $0xf38] sm:$0xff]
        %v1179 = vld [vmem:[#allocation6 + $0xf40] sm:$0xff]
        %v1180 = vld [vmem:[#allocation6 + $0xf48] sm:$0xff]
        %v1181 = vld [vmem:[#allocation6 + $0xf50] sm:$0xff]
        %v1182 = vld [vmem:[#allocation6 + $0xf58] sm:$0xff]
        %v1183 = vld [vmem:[#allocation6 + $0xf60] sm:$0xff]
        %v1184 = vld [vmem:[#allocation6 + $0xf68] sm:$0xff]
        %v1185 = vld [vmem:[#allocation6 + $0xf70] sm:$0xff]
        %v1186 = vld [vmem:[#allocation6 + $0xf78] sm:$0xff]
        %v1187 = vld [vmem:[#allocation6 + $0xf80] sm:$0xff]
        %v1188 = vld [vmem:[#allocation6 + $0xf88] sm:$0xff]
        %v1189 = vld [vmem:[#allocation6 + $0xf90] sm:$0xff]
        %v1190 = vld [vmem:[#allocation6 + $0xf98] sm:$0xff]
        %v1191 = vld [vmem:[#allocation6 + $0xfa0] sm:$0xff]
        %v1192 = vld [vmem:[#allocation6 + $0xfa8] sm:$0xff]
        %v1193 = vld [vmem:[#allocation6 + $0xfb0] sm:$0xff]
        %v1194 = vld [vmem:[#allocation6 + $0xfb8] sm:$0xff]
        %v1195 = vld [vmem:[#allocation6 + $0xfc0] sm:$0xff]
        %v1196 = vld [vmem:[#allocation6 + $0xfc8] sm:$0xff]
        %v1197 = vld [vmem:[#allocation6 + $0xfd0] sm:$0xff]
        %v1198 = vld [vmem:[#allocation6 + $0xfd8] sm:$0xff]
        %v1199 = vld [vmem:[#allocation6 + $0xfe0] sm:$0xff]
        %v1200 = vld [vmem:[#allocation6 + $0xfe8] sm:$0xff]
        %v1201 = vld [vmem:[#allocation6 + $0xff0] sm:$0xff]
        %v1202 = vld [vmem:[#allocation6 + $0xff8] sm:$0xff]
        %1203 = vmatprep.subr.mxu0 %v496
        %1204 = vmatpush1.msra.mxu0 %v495
        %1205 = vmatprep.subr.mxu0 %v498
        %1206 = vmatpush1.msra.mxu0 %v497
        %1207 = vmatprep.subr.mxu0 %v500
        %1208 = vmatpush1.msra.mxu0 %v499
        %1209 = vmatprep.subr.mxu0 %v502
        %1210 = vmatpush1.msra.mxu0 %v501
        %1211 = vmatprep.subr.mxu0 %v504
        %1212 = vmatpush1.msra.mxu0 %v503
        %1213 = vmatprep.subr.mxu0 %v506
        %1214 = vmatpush1.msra.mxu0 %v505
        %1215 = vmatprep.subr.mxu0 %v508
        %1216 = vmatpush1.msra.mxu0 %v507
        %1217 = vmatprep.subr.mxu0 %v510
        %1218 = vmatpush1.msra.mxu0 %v509
        %1219 = vmatprep.subr.mxu0 %v586
        %1220 = vmatpush1.msra.mxu0 %v585
        %1221 = vmatprep.subr.mxu0 %v588
        %1222 = vmatpush1.msra.mxu0 %v587
        %1223 = vmatprep.subr.mxu0 %v590
        %1224 = vmatpush1.msra.mxu0 %v589
        %1225 = vmatprep.subr.mxu0 %v592
        %1226 = vmatpush1.msra.mxu0 %v591
        %1227 = vmatprep.subr.mxu0 %v594
        %1228 = vmatpush1.msra.mxu0 %v593
        %1229 = vmatprep.subr.mxu0 %v596
        %1230 = vmatpush1.msra.mxu0 %v595
        %1231 = vmatprep.subr.mxu0 %v598
        %1232 = vmatpush1.msra.mxu0 %v597
        %1233 = vmatprep.subr.mxu0 %v600
        %1234 = vmatpush1.msra.mxu0 %v599
        %1235 = vmatprep.subr.mxu0 %v676
        %1236 = vmatpush1.msra.mxu0 %v675
        %1237 = vmatprep.subr.mxu0 %v678
        %1238 = vmatpush1.msra.mxu0 %v677
        %1239 = vmatprep.subr.mxu0 %v680
        %1240 = vmatpush1.msra.mxu0 %v679
        %1241 = vmatprep.subr.mxu0 %v682
        %1242 = vmatpush1.msra.mxu0 %v681
        %1243 = vmatprep.subr.mxu0 %v684
        %1244 = vmatpush1.msra.mxu0 %v683
        %1245 = vmatprep.subr.mxu0 %v686
        %1246 = vmatpush1.msra.mxu0 %v685
        %1247 = vmatprep.subr.mxu0 %v688
        %1248 = vmatpush1.msra.mxu0 %v687
        %1249 = vmatprep.subr.mxu0 %v690
        %1250 = vmatpush1.msra.mxu0 %v689
        %1251 = vmatprep.subr.mxu0 1.0
        %1252 = vmatpush1.msra.mxu0 1.0
        %1253 = vmatprep.subr.mxu0 1.0
        %1254 = vmatpush1.msra.mxu0 1.0
        %1255 = vmatprep.subr.mxu0 1.0
        %1256 = vmatpush1.msra.mxu0 1.0
        %1257 = vmatprep.subr.mxu0 1.0
        %1258 = vmatpush1.msra.mxu0 1.0
        %1259 = vmatprep.subr.mxu0 1.0
        %1260 = vmatpush1.msra.mxu0 1.0
        %1261 = vmatprep.subr.mxu0 1.0
        %1262 = vmatpush1.msra.mxu0 1.0
        %1263 = vmatprep.subr.mxu0 1.0
        %1264 = vmatpush1.msra.mxu0 1.0
        %1265 = vmatprep.subr.mxu0 1.0
        %1266 = vmatpush1.msra.mxu0 1.0
        %1267 = vmatprep.mubr.f32.mxu0 %v692
        %1268 = vmatmul.mubr.f32.gmra.mrb[0].mxu0 %v691
        %v1269 = vpop.f32.mrb[0].mxu0
        %v1270 = vadd.f32 0.0, %v1269
        %v1271 = vpop.f32.mrb[0].mxu0
        %v1272 = vadd.f32 0.0, %v1271
        %1273 = vmatprep.mubr.f32.mxu0 %v694
        %1274 = vmatmul.mubr.f32.gmra.mrb[0].mxu0 %v693
        %v1275 = vpop.f32.mrb[0].mxu0
        %v1276 = vadd.f32 0.0, %v1275
        %v1277 = vpop.f32.mrb[0].mxu0
        %v1278 = vadd.f32 0.0, %v1277
        %1279 = vmatprep.mubr.f32.mxu0 %v696
        %1280 = vmatmul.mubr.f32.gmra.mrb[0].mxu0 %v695
        %v1281 = vpop.f32.mrb[0].mxu0
        %v1282 = vadd.f32 0.0, %v1281
        %v1283 = vpop.f32.mrb[0].mxu0
        %v1284 = vadd.f32 0.0, %v1283
        %1285 = vmatprep.mubr.f32.mxu0 %v698
        %1286 = vmatmul.mubr.f32.gmra.mrb[0].mxu0 %v697
        %v1287 = vpop.f32.mrb[0].mxu0
        %v1288 = vadd.f32 0.0, %v1287
        %v1289 = vpop.f32.mrb[0].mxu0
        %v1290 = vadd.f32 0.0, %v1289
        %1291 = vmatprep.mubr.f32.mxu0 %v700
        %1292 = vmatmul.mubr.f32.gmra.mrb[0].mxu0 %v699
        %v1293 = vpop.f32.mrb[0].mxu0
        %v1294 = vadd.f32 0.0, %v1293
        %v1295 = vpop.f32.mrb[0].mxu0
        %v1296 = vadd.f32 0.0, %v1295
        %1297 = vmatprep.mubr.f32.mxu0 %v702
        %1298 = vmatmul.mubr.f32.gmra.mrb[0].mxu0 %v701
        %v1299 = vpop.f32.mrb[0].mxu0
        %v1300 = vadd.f32 0.0, %v1299
        %v1301 = vpop.f32.mrb[0].mxu0
        %v1302 = vadd.f32 0.0, %v1301
        %1303 = vmatprep.mubr.f32.mxu0 %v704
        %1304 = vmatmul.mubr.f32.gmra.mrb[0].mxu0 %v703
        %v1305 = vpop.f32.mrb[0].mxu0
        %v1306 = vadd.f32 0.0, %v1305
        %v1307 = vpop.f32.mrb[0].mxu0
        %v1308 = vadd.f32 0.0, %v1307
        %1309 = vmatprep.mubr.f32.mxu0 %v706
        %1310 = vmatmul.mubr.f32.gmra.mrb[0].mxu0 %v705
        %v1311 = vpop.f32.mrb[0].mxu0
        %v1312 = vadd.f32 0.0, %v1311
        %v1313 = vpop.f32.mrb[0].mxu0
        %v1314 = vadd.f32 0.0, %v1313
        %1315 = vmatprep.mubr.f32.mxu0 %v708
        %1316 = vmatmul.mubr.f32.gmra.mrb[0].mxu0 %v707
        %v1317 = vpop.f32.mrb[0].mxu0
        %v1318 = vadd.f32 0.0, %v1317
        %v1319 = vpop.f32.mrb[0].mxu0
        %v1320 = vadd.f32 0.0, %v1319
        %1321 = vmatprep.mubr.f32.mxu0 %v710
        %1322 = vmatmul.mubr.f32.gmra.mrb[0].mxu0 %v709
        %v1323 = vpop.f32.mrb[0].mxu0
        %v1324 = vadd.f32 0.0, %v1323
        %v1325 = vpop.f32.mrb[0].mxu0
        %v1326 = vadd.f32 0.0, %v1325
        %1327 = vmatprep.mubr.f32.mxu0 %v712
        %1328 = vmatmul.mubr.f32.gmra.mrb[0].mxu0 %v711
        %v1329 = vpop.f32.mrb[0].mxu0
        %v1330 = vadd.f32 0.0, %v1329
        %v1331 = vpop.f32.mrb[0].mxu0
        %v1332 = vadd.f32 0.0, %v1331
        %1333 = vmatprep.mubr.f32.mxu0 %v714
        %1334 = vmatmul.mubr.f32.gmra.mrb[0].mxu0 %v713
        %v1335 = vpop.f32.mrb[0].mxu0
        %v1336 = vadd.f32 0.0, %v1335
        %v1337 = vpop.f32.mrb[0].mxu0
        %v1338 = vadd.f32 0.0, %v1337
        %1339 = vmatprep.mubr.f32.mxu0 %v716
        %1340 = vmatmul.mubr.f32.gmra.mrb[0].mxu0 %v715
        %v1341 = vpop.f32.mrb[0].mxu0
        %v1342 = vadd.f32 0.0, %v1341
        %v1343 = vpop.f32.mrb[0].mxu0
        %v1344 = vadd.f32 0.0, %v1343
        %1345 = vmatprep.mubr.f32.mxu0 %v718
        %1346 = vmatmul.mubr.f32.gmra.mrb[0].mxu0 %v717
        %v1347 = vpop.f32.mrb[0].mxu0
        %v1348 = vadd.f32 0.0, %v1347
        %v1349 = vpop.f32.mrb[0].mxu0
        %v1350 = vadd.f32 0.0, %v1349
        %1351 = vmatprep.mubr.f32.mxu0 %v720
        %1352 = vmatmul.mubr.f32.gmra.mrb[0].mxu0 %v719
        %v1353 = vpop.f32.mrb[0].mxu0
        %v1354 = vadd.f32 0.0, %v1353
        %v1355 = vpop.f32.mrb[0].mxu0
        %v1356 = vadd.f32 0.0, %v1355
        %1357 = vmatprep.mubr.f32.mxu0 %v722
        %1358 = vmatmul.mubr.f32.gmra.mrb[0].mxu0 %v721
        %v1359 = vpop.f32.mrb[0].mxu0
        %v1360 = vadd.f32 0.0, %v1359
        %v1361 = vpop.f32.mrb[0].mxu0
        %v1362 = vadd.f32 0.0, %v1361
        %1363 = vmatprep.mubr.f32.mxu0 %v724
        %1364 = vmatmul.mubr.f32.gmra.mrb[0].mxu0 %v723
        %v1365 = vpop.f32.mrb[0].mxu0
        %v1366 = vadd.f32 0.0, %v1365
        %v1367 = vpop.f32.mrb[0].mxu0
        %v1368 = vadd.f32 0.0, %v1367
        %1369 = vmatprep.mubr.f32.mxu0 %v726
        %1370 = vmatmul.mubr.f32.gmra.mrb[0].mxu0 %v725
        %v1371 = vpop.f32.mrb[0].mxu0
        %v1372 = vadd.f32 0.0, %v1371
        %v1373 = vpop.f32.mrb[0].mxu0
        %v1374 = vadd.f32 0.0, %v1373
        %1375 = vmatprep.mubr.f32.mxu0 %v728
        %1376 = vmatmul.mubr.f32.gmra.mrb[0].mxu0 %v727
        %v1377 = vpop.f32.mrb[0].mxu0
        %v1378 = vadd.f32 0.0, %v1377
        %v1379 = vpop.f32.mrb[0].mxu0
        %v1380 = vadd.f32 0.0, %v1379
        %1381 = vmatprep.mubr.f32.mxu0 %v730
        %1382 = vmatmul.mubr.f32.gmra.mrb[0].mxu0 %v729
        %v1383 = vpop.f32.mrb[0].mxu0
        %v1384 = vadd.f32 0.0, %v1383
        %v1385 = vpop.f32.mrb[0].mxu0
        %v1386 = vadd.f32 0.0, %v1385
        %1387 = vmatprep.mubr.f32.mxu0 %v732
        %1388 = vmatmul.mubr.f32.gmra.mrb[0].mxu0 %v731
        %v1389 = vpop.f32.mrb[0].mxu0
        %v1390 = vadd.f32 0.0, %v1389
        %v1391 = vpop.f32.mrb[0].mxu0
        %v1392 = vadd.f32 0.0, %v1391
        %1393 = vmatprep.mubr.f32.mxu0 %v734
        %1394 = vmatmul.mubr.f32.gmra.mrb[0].mxu0 %v733
        %v1395 = vpop.f32.mrb[0].mxu0
        %v1396 = vadd.f32 0.0, %v1395
        %v1397 = vpop.f32.mrb[0].mxu0
        %v1398 = vadd.f32 0.0, %v1397
        %1399 = vmatprep.mubr.f32.mxu0 %v736
        %1400 = vmatmul.mubr.f32.gmra.mrb[0].mxu0 %v735
        %v1401 = vpop.f32.mrb[0].mxu0
        %v1402 = vadd.f32 0.0, %v1401
        %v1403 = vpop.f32.mrb[0].mxu0
        %v1404 = vadd.f32 0.0, %v1403
        %1405 = vmatprep.mubr.f32.mxu0 %v738
        %1406 = vmatmul.mubr.f32.gmra.mrb[0].mxu0 %v737
        %v1407 = vpop.f32.mrb[0].mxu0
        %v1408 = vadd.f32 0.0, %v1407
        %v1409 = vpop.f32.mrb[0].mxu0
        %v1410 = vadd.f32 0.0, %v1409
        %1411 = vmatprep.mubr.f32.mxu0 %v740
        %1412 = vmatmul.mubr.f32.gmra.mrb[0].mxu0 %v739
        %v1413 = vpop.f32.mrb[0].mxu0
        %v1414 = vadd.f32 0.0, %v1413
        %v1415 = vpop.f32.mrb[0].mxu0
        %v1416 = vadd.f32 0.0, %v1415
        %1417 = vmatprep.mubr.f32.mxu0 %v742
        %1418 = vmatmul.mubr.f32.gmra.mrb[0].mxu0 %v741
        %v1419 = vpop.f32.mrb[0].mxu0
        %v1420 = vadd.f32 0.0, %v1419
        %v1421 = vpop.f32.mrb[0].mxu0
        %v1422 = vadd.f32 0.0, %v1421
        %1423 = vmatprep.mubr.f32.mxu0 %v744
        %1424 = vmatmul.mubr.f32.gmra.mrb[0].mxu0 %v743
        %v1425 = vpop.f32.mrb[0].mxu0
        %v1426 = vadd.f32 0.0, %v1425
        %v1427 = vpop.f32.mrb[0].mxu0
        %v1428 = vadd.f32 0.0, %v1427
        %1429 = vmatprep.mubr.f32.mxu0 %v746
        %1430 = vmatmul.mubr.f32.gmra.mrb[0].mxu0 %v745
        %v1431 = vpop.f32.mrb[0].mxu0
        %v1432 = vadd.f32 0.0, %v1431
        %v1433 = vpop.f32.mrb[0].mxu0
        %v1434 = vadd.f32 0.0, %v1433
        %1435 = vmatprep.mubr.f32.mxu0 %v748
        %1436 = vmatmul.mubr.f32.gmra.mrb[0].mxu0 %v747
        %v1437 = vpop.f32.mrb[0].mxu0
        %v1438 = vadd.f32 0.0, %v1437
        %v1439 = vpop.f32.mrb[0].mxu0
        %v1440 = vadd.f32 0.0, %v1439
        %1441 = vmatprep.mubr.f32.mxu0 %v750
        %1442 = vmatmul.mubr.f32.gmra.mrb[0].mxu0 %v749
        %v1443 = vpop.f32.mrb[0].mxu0
        %v1444 = vadd.f32 0.0, %v1443
        %v1445 = vpop.f32.mrb[0].mxu0
        %v1446 = vadd.f32 0.0, %v1445
        %1447 = vmatprep.mubr.f32.mxu0 %v752
        %1448 = vmatmul.mubr.f32.gmra.mrb[0].mxu0 %v751
        %v1449 = vpop.f32.mrb[0].mxu0
        %v1450 = vadd.f32 0.0, %v1449
        %v1451 = vpop.f32.mrb[0].mxu0
        %v1452 = vadd.f32 0.0, %v1451
        %1453 = vmatprep.mubr.f32.mxu0 %v754
        %1454 = vmatmul.mubr.f32.gmra.mrb[0].mxu0 %v753
        %v1455 = vpop.f32.mrb[0].mxu0
        %v1456 = vadd.f32 0.0, %v1455
        %v1457 = vpop.f32.mrb[0].mxu0
        %v1458 = vadd.f32 0.0, %v1457
        %1459 = vmatprep.mubr.f32.mxu0 %v756
        %1460 = vmatmul.mubr.f32.gmra.mrb[0].mxu0 %v755
        %v1461 = vpop.f32.mrb[0].mxu0
        %v1462 = vadd.f32 0.0, %v1461
        %v1463 = vpop.f32.mrb[0].mxu0
        %v1464 = vadd.f32 0.0, %v1463
        %1465 = vmatprep.mubr.f32.mxu0 %v758
        %1466 = vmatmul.mubr.f32.gmra.mrb[0].mxu0 %v757
        %v1467 = vpop.f32.mrb[0].mxu0
        %v1468 = vadd.f32 0.0, %v1467
        %v1469 = vpop.f32.mrb[0].mxu0
        %v1470 = vadd.f32 0.0, %v1469
        %1471 = vmatprep.mubr.f32.mxu0 %v760
        %1472 = vmatmul.mubr.f32.gmra.mrb[0].mxu0 %v759
        %v1473 = vpop.f32.mrb[0].mxu0
        %v1474 = vadd.f32 0.0, %v1473
        %v1475 = vpop.f32.mrb[0].mxu0
        %v1476 = vadd.f32 0.0, %v1475
        %1477 = vmatprep.mubr.f32.mxu0 %v762
        %1478 = vmatmul.mubr.f32.gmra.mrb[0].mxu0 %v761
        %v1479 = vpop.f32.mrb[0].mxu0
        %v1480 = vadd.f32 0.0, %v1479
        %v1481 = vpop.f32.mrb[0].mxu0
        %v1482 = vadd.f32 0.0, %v1481
        %1483 = vmatprep.mubr.f32.mxu0 %v764
        %1484 = vmatmul.mubr.f32.gmra.mrb[0].mxu0 %v763
        %v1485 = vpop.f32.mrb[0].mxu0
        %v1486 = vadd.f32 0.0, %v1485
        %v1487 = vpop.f32.mrb[0].mxu0
        %v1488 = vadd.f32 0.0, %v1487
        %1489 = vmatprep.mubr.f32.mxu0 %v766
        %1490 = vmatmul.mubr.f32.gmra.mrb[0].mxu0 %v765
        %v1491 = vpop.f32.mrb[0].mxu0
        %v1492 = vadd.f32 0.0, %v1491
        %v1493 = vpop.f32.mrb[0].mxu0
        %v1494 = vadd.f32 0.0, %v1493
        %1495 = vmatprep.mubr.f32.mxu0 %v768
        %1496 = vmatmul.mubr.f32.gmra.mrb[0].mxu0 %v767
        %v1497 = vpop.f32.mrb[0].mxu0
        %v1498 = vadd.f32 0.0, %v1497
        %v1499 = vpop.f32.mrb[0].mxu0
        %v1500 = vadd.f32 0.0, %v1499
        %1501 = vmatprep.mubr.f32.mxu0 %v770
        %1502 = vmatmul.mubr.f32.gmra.mrb[0].mxu0 %v769
        %v1503 = vpop.f32.mrb[0].mxu0
        %v1504 = vadd.f32 0.0, %v1503
        %v1505 = vpop.f32.mrb[0].mxu0
        %v1506 = vadd.f32 0.0, %v1505
        %1507 = vmatprep.mubr.f32.mxu0 %v772
        %1508 = vmatmul.mubr.f32.gmra.mrb[0].mxu0 %v771
        %v1509 = vpop.f32.mrb[0].mxu0
        %v1510 = vadd.f32 0.0, %v1509
        %v1511 = vpop.f32.mrb[0].mxu0
        %v1512 = vadd.f32 0.0, %v1511
        %1513 = vmatprep.mubr.f32.mxu0 %v774
        %1514 = vmatmul.mubr.f32.gmra.mrb[0].mxu0 %v773
        %v1515 = vpop.f32.mrb[0].mxu0
        %v1516 = vadd.f32 0.0, %v1515
        %v1517 = vpop.f32.mrb[0].mxu0
        %v1518 = vadd.f32 0.0, %v1517
        %1519 = vmatprep.mubr.f32.mxu0 %v776
        %1520 = vmatmul.mubr.f32.gmra.mrb[0].mxu0 %v775
        %v1521 = vpop.f32.mrb[0].mxu0
        %v1522 = vadd.f32 0.0, %v1521
        %v1523 = vpop.f32.mrb[0].mxu0
        %v1524 = vadd.f32 0.0, %v1523
        %1525 = vmatprep.mubr.f32.mxu0 %v778
        %1526 = vmatmul.mubr.f32.gmra.mrb[0].mxu0 %v777
        %v1527 = vpop.f32.mrb[0].mxu0
        %v1528 = vadd.f32 0.0, %v1527
        %v1529 = vpop.f32.mrb[0].mxu0
        %v1530 = vadd.f32 0.0, %v1529
        %1531 = vmatprep.mubr.f32.mxu0 %v780
        %1532 = vmatmul.mubr.f32.gmra.mrb[0].mxu0 %v779
        %v1533 = vpop.f32.mrb[0].mxu0
        %v1534 = vadd.f32 0.0, %v1533
        %v1535 = vpop.f32.mrb[0].mxu0
        %v1536 = vadd.f32 0.0, %v1535
        %1537 = vmatprep.mubr.f32.mxu0 %v782
        %1538 = vmatmul.mubr.f32.gmra.mrb[0].mxu0 %v781
        %v1539 = vpop.f32.mrb[0].mxu0
        %v1540 = vadd.f32 0.0, %v1539
        %v1541 = vpop.f32.mrb[0].mxu0
        %v1542 = vadd.f32 0.0, %v1541
        %1543 = vmatprep.mubr.f32.mxu0 %v784
        %1544 = vmatmul.mubr.f32.gmra.mrb[0].mxu0 %v783
        %v1545 = vpop.f32.mrb[0].mxu0
        %v1546 = vadd.f32 0.0, %v1545
        %v1547 = vpop.f32.mrb[0].mxu0
        %v1548 = vadd.f32 0.0, %v1547
        %1549 = vmatprep.mubr.f32.mxu0 %v786
        %1550 = vmatmul.mubr.f32.gmra.mrb[0].mxu0 %v785
        %v1551 = vpop.f32.mrb[0].mxu0
        %v1552 = vadd.f32 0.0, %v1551
        %v1553 = vpop.f32.mrb[0].mxu0
        %v1554 = vadd.f32 0.0, %v1553
        %1555 = vmatprep.mubr.f32.mxu0 %v788
        %1556 = vmatmul.mubr.f32.gmra.mrb[0].mxu0 %v787
        %v1557 = vpop.f32.mrb[0].mxu0
        %v1558 = vadd.f32 0.0, %v1557
        %v1559 = vpop.f32.mrb[0].mxu0
        %v1560 = vadd.f32 0.0, %v1559
        %1561 = vmatprep.mubr.f32.mxu0 %v790
        %1562 = vmatmul.mubr.f32.gmra.mrb[0].mxu0 %v789
        %v1563 = vpop.f32.mrb[0].mxu0
        %v1564 = vadd.f32 0.0, %v1563
        %v1565 = vpop.f32.mrb[0].mxu0
        %v1566 = vadd.f32 0.0, %v1565
        %1567 = vmatprep.mubr.f32.mxu0 %v792
        %1568 = vmatmul.mubr.f32.gmra.mrb[0].mxu0 %v791
        %v1569 = vpop.f32.mrb[0].mxu0
        %v1570 = vadd.f32 0.0, %v1569
        %v1571 = vpop.f32.mrb[0].mxu0
        %v1572 = vadd.f32 0.0, %v1571
        %1573 = vmatprep.mubr.f32.mxu0 %v794
        %1574 = vmatmul.mubr.f32.gmra.mrb[0].mxu0 %v793
        %v1575 = vpop.f32.mrb[0].mxu0
        %v1576 = vadd.f32 0.0, %v1575
        %v1577 = vpop.f32.mrb[0].mxu0
        %v1578 = vadd.f32 0.0, %v1577
        %1579 = vmatprep.mubr.f32.mxu0 %v796
        %1580 = vmatmul.mubr.f32.gmra.mrb[0].mxu0 %v795
        %v1581 = vpop.f32.mrb[0].mxu0
        %v1582 = vadd.f32 0.0, %v1581
        %v1583 = vpop.f32.mrb[0].mxu0
        %v1584 = vadd.f32 0.0, %v1583
        %1585 = vmatprep.mubr.f32.mxu0 %v798
        %1586 = vmatmul.mubr.f32.gmra.mrb[0].mxu0 %v797
        %v1587 = vpop.f32.mrb[0].mxu0
        %v1588 = vadd.f32 0.0, %v1587
        %v1589 = vpop.f32.mrb[0].mxu0
        %v1590 = vadd.f32 0.0, %v1589
        %1591 = vmatprep.mubr.f32.mxu0 %v800
        %1592 = vmatmul.mubr.f32.gmra.mrb[0].mxu0 %v799
        %v1593 = vpop.f32.mrb[0].mxu0
        %v1594 = vadd.f32 0.0, %v1593
        %v1595 = vpop.f32.mrb[0].mxu0
        %v1596 = vadd.f32 0.0, %v1595
        %1597 = vmatprep.mubr.f32.mxu0 %v802
        %1598 = vmatmul.mubr.f32.gmra.mrb[0].mxu0 %v801
        %v1599 = vpop.f32.mrb[0].mxu0
        %v1600 = vadd.f32 0.0, %v1599
        %v1601 = vpop.f32.mrb[0].mxu0
        %v1602 = vadd.f32 0.0, %v1601
        %1603 = vmatprep.mubr.f32.mxu0 %v804
        %1604 = vmatmul.mubr.f32.gmra.mrb[0].mxu0 %v803
        %v1605 = vpop.f32.mrb[0].mxu0
        %v1606 = vadd.f32 0.0, %v1605
        %v1607 = vpop.f32.mrb[0].mxu0
        %v1608 = vadd.f32 0.0, %v1607
        %1609 = vmatprep.mubr.f32.mxu0 %v806
        %1610 = vmatmul.mubr.f32.gmra.mrb[0].mxu0 %v805
        %v1611 = vpop.f32.mrb[0].mxu0
        %v1612 = vadd.f32 0.0, %v1611
        %v1613 = vpop.f32.mrb[0].mxu0
        %v1614 = vadd.f32 0.0, %v1613
        %1615 = vmatprep.mubr.f32.mxu0 %v808
        %1616 = vmatmul.mubr.f32.gmra.mrb[0].mxu0 %v807
        %v1617 = vpop.f32.mrb[0].mxu0
        %v1618 = vadd.f32 0.0, %v1617
        %v1619 = vpop.f32.mrb[0].mxu0
        %v1620 = vadd.f32 0.0, %v1619
        %1621 = vmatprep.mubr.f32.mxu0 %v810
        %1622 = vmatmul.mubr.f32.gmra.mrb[0].mxu0 %v809
        %v1623 = vpop.f32.mrb[0].mxu0
        %v1624 = vadd.f32 0.0, %v1623
        %v1625 = vpop.f32.mrb[0].mxu0
        %v1626 = vadd.f32 0.0, %v1625
        %1627 = vmatprep.mubr.f32.mxu0 %v812
        %1628 = vmatmul.mubr.f32.gmra.mrb[0].mxu0 %v811
        %v1629 = vpop.f32.mrb[0].mxu0
        %v1630 = vadd.f32 0.0, %v1629
        %v1631 = vpop.f32.mrb[0].mxu0
        %v1632 = vadd.f32 0.0, %v1631
        %1633 = vmatprep.mubr.f32.mxu0 %v814
        %1634 = vmatmul.mubr.f32.gmra.mrb[0].mxu0 %v813
        %v1635 = vpop.f32.mrb[0].mxu0
        %v1636 = vadd.f32 0.0, %v1635
        %v1637 = vpop.f32.mrb[0].mxu0
        %v1638 = vadd.f32 0.0, %v1637
        %1639 = vmatprep.mubr.f32.mxu0 %v816
        %1640 = vmatmul.mubr.f32.gmra.mrb[0].mxu0 %v815
        %v1641 = vpop.f32.mrb[0].mxu0
        %v1642 = vadd.f32 0.0, %v1641
        %v1643 = vpop.f32.mrb[0].mxu0
        %v1644 = vadd.f32 0.0, %v1643
        %1645 = vmatprep.mubr.f32.mxu0 %v818
        %1646 = vmatmul.mubr.f32.gmra.mrb[0].mxu0 %v817
        %v1647 = vpop.f32.mrb[0].mxu0
        %v1648 = vadd.f32 0.0, %v1647
        %v1649 = vpop.f32.mrb[0].mxu0
        %v1650 = vadd.f32 0.0, %v1649
        %1651 = vmatprep.mubr.f32.mxu0 %v820
        %1652 = vmatmul.mubr.f32.gmra.mrb[0].mxu0 %v819
        %v1653 = vpop.f32.mrb[0].mxu0
        %v1654 = vadd.f32 0.0, %v1653
        %v1655 = vpop.f32.mrb[0].mxu0
        %v1656 = vadd.f32 0.0, %v1655
        %1657 = vmatprep.mubr.f32.mxu0 %v822
        %1658 = vmatmul.mubr.f32.gmra.mrb[0].mxu0 %v821
        %v1659 = vpop.f32.mrb[0].mxu0
        %v1660 = vadd.f32 0.0, %v1659
        %v1661 = vpop.f32.mrb[0].mxu0
        %v1662 = vadd.f32 0.0, %v1661
        %1663 = vmatprep.mubr.f32.mxu0 %v824
        %1664 = vmatmul.mubr.f32.gmra.mrb[0].mxu0 %v823
        %v1665 = vpop.f32.mrb[0].mxu0
        %v1666 = vadd.f32 0.0, %v1665
        %v1667 = vpop.f32.mrb[0].mxu0
        %v1668 = vadd.f32 0.0, %v1667
        %1669 = vmatprep.mubr.f32.mxu0 %v826
        %1670 = vmatmul.mubr.f32.gmra.mrb[0].mxu0 %v825
        %v1671 = vpop.f32.mrb[0].mxu0
        %v1672 = vadd.f32 0.0, %v1671
        %v1673 = vpop.f32.mrb[0].mxu0
        %v1674 = vadd.f32 0.0, %v1673
        %1675 = vmatprep.mubr.f32.mxu0 %v828
        %1676 = vmatmul.mubr.f32.gmra.mrb[0].mxu0 %v827
        %v1677 = vpop.f32.mrb[0].mxu0
        %v1678 = vadd.f32 0.0, %v1677
        %v1679 = vpop.f32.mrb[0].mxu0
        %v1680 = vadd.f32 0.0, %v1679
        %1681 = vmatprep.mubr.f32.mxu0 %v830
        %1682 = vmatmul.mubr.f32.gmra.mrb[0].mxu0 %v829
        %v1683 = vpop.f32.mrb[0].mxu0
        %v1684 = vadd.f32 0.0, %v1683
        %v1685 = vpop.f32.mrb[0].mxu0
        %v1686 = vadd.f32 0.0, %v1685
        %1687 = vmatprep.mubr.f32.mxu0 %v832
        %1688 = vmatmul.mubr.f32.gmra.mrb[0].mxu0 %v831
        %v1689 = vpop.f32.mrb[0].mxu0
        %v1690 = vadd.f32 0.0, %v1689
        %v1691 = vpop.f32.mrb[0].mxu0
        %v1692 = vadd.f32 0.0, %v1691
        %1693 = vmatprep.mubr.f32.mxu0 %v834
        %1694 = vmatmul.mubr.f32.gmra.mrb[0].mxu0 %v833
        %v1695 = vpop.f32.mrb[0].mxu0
        %v1696 = vadd.f32 0.0, %v1695
        %v1697 = vpop.f32.mrb[0].mxu0
        %v1698 = vadd.f32 0.0, %v1697
        %1699 = vmatprep.mubr.f32.mxu0 %v836
        %1700 = vmatmul.mubr.f32.gmra.mrb[0].mxu0 %v835
        %v1701 = vpop.f32.mrb[0].mxu0
        %v1702 = vadd.f32 0.0, %v1701
        %v1703 = vpop.f32.mrb[0].mxu0
        %v1704 = vadd.f32 0.0, %v1703
        %1705 = vmatprep.mubr.f32.mxu0 %v838
        %1706 = vmatmul.mubr.f32.gmra.mrb[0].mxu0 %v837
        %v1707 = vpop.f32.mrb[0].mxu0
        %v1708 = vadd.f32 0.0, %v1707
        %v1709 = vpop.f32.mrb[0].mxu0
        %v1710 = vadd.f32 0.0, %v1709
        %1711 = vmatprep.mubr.f32.mxu0 %v840
        %1712 = vmatmul.mubr.f32.gmra.mrb[0].mxu0 %v839
        %v1713 = vpop.f32.mrb[0].mxu0
        %v1714 = vadd.f32 0.0, %v1713
        %v1715 = vpop.f32.mrb[0].mxu0
        %v1716 = vadd.f32 0.0, %v1715
        %1717 = vmatprep.mubr.f32.mxu0 %v842
        %1718 = vmatmul.mubr.f32.gmra.mrb[0].mxu0 %v841
        %v1719 = vpop.f32.mrb[0].mxu0
        %v1720 = vadd.f32 0.0, %v1719
        %v1721 = vpop.f32.mrb[0].mxu0
        %v1722 = vadd.f32 0.0, %v1721
        %1723 = vmatprep.mubr.f32.mxu0 %v844
        %1724 = vmatmul.mubr.f32.gmra.mrb[0].mxu0 %v843
        %v1725 = vpop.f32.mrb[0].mxu0
        %v1726 = vadd.f32 0.0, %v1725
        %v1727 = vpop.f32.mrb[0].mxu0
        %v1728 = vadd.f32 0.0, %v1727
        %1729 = vmatprep.mubr.f32.mxu0 %v846
        %1730 = vmatmul.mubr.f32.gmra.mrb[0].mxu0 %v845
        %v1731 = vpop.f32.mrb[0].mxu0
        %v1732 = vadd.f32 0.0, %v1731
        %v1733 = vpop.f32.mrb[0].mxu0
        %v1734 = vadd.f32 0.0, %v1733
        %1735 = vmatprep.mubr.f32.mxu0 %v848
        %1736 = vmatmul.mubr.f32.gmra.mrb[0].mxu0 %v847
        %v1737 = vpop.f32.mrb[0].mxu0
        %v1738 = vadd.f32 0.0, %v1737
        %v1739 = vpop.f32.mrb[0].mxu0
        %v1740 = vadd.f32 0.0, %v1739
        %1741 = vmatprep.mubr.f32.mxu0 %v850
        %1742 = vmatmul.mubr.f32.gmra.mrb[0].mxu0 %v849
        %v1743 = vpop.f32.mrb[0].mxu0
        %v1744 = vadd.f32 0.0, %v1743
        %v1745 = vpop.f32.mrb[0].mxu0
        %v1746 = vadd.f32 0.0, %v1745
        %1747 = vmatprep.mubr.f32.mxu0 %v852
        %1748 = vmatmul.mubr.f32.gmra.mrb[0].mxu0 %v851
        %v1749 = vpop.f32.mrb[0].mxu0
        %v1750 = vadd.f32 0.0, %v1749
        %v1751 = vpop.f32.mrb[0].mxu0
        %v1752 = vadd.f32 0.0, %v1751
        %1753 = vmatprep.mubr.f32.mxu0 %v854
        %1754 = vmatmul.mubr.f32.gmra.mrb[0].mxu0 %v853
        %v1755 = vpop.f32.mrb[0].mxu0
        %v1756 = vadd.f32 0.0, %v1755
        %v1757 = vpop.f32.mrb[0].mxu0
        %v1758 = vadd.f32 0.0, %v1757
        %1759 = vmatprep.mubr.f32.mxu0 %v856
        %1760 = vmatmul.mubr.f32.gmra.mrb[0].mxu0 %v855
        %v1761 = vpop.f32.mrb[0].mxu0
        %v1762 = vadd.f32 0.0, %v1761
        %v1763 = vpop.f32.mrb[0].mxu0
        %v1764 = vadd.f32 0.0, %v1763
        %1765 = vmatprep.mubr.f32.mxu0 %v858
        %1766 = vmatmul.mubr.f32.gmra.mrb[0].mxu0 %v857
        %v1767 = vpop.f32.mrb[0].mxu0
        %v1768 = vadd.f32 0.0, %v1767
        %v1769 = vpop.f32.mrb[0].mxu0
        %v1770 = vadd.f32 0.0, %v1769
        %1771 = vmatprep.mubr.f32.mxu0 %v860
        %1772 = vmatmul.mubr.f32.gmra.mrb[0].mxu0 %v859
        %v1773 = vpop.f32.mrb[0].mxu0
        %v1774 = vadd.f32 0.0, %v1773
        %v1775 = vpop.f32.mrb[0].mxu0
        %v1776 = vadd.f32 0.0, %v1775
        %1777 = vmatprep.mubr.f32.mxu0 %v862
        %1778 = vmatmul.mubr.f32.gmra.mrb[0].mxu0 %v861
        %v1779 = vpop.f32.mrb[0].mxu0
        %v1780 = vadd.f32 0.0, %v1779
        %v1781 = vpop.f32.mrb[0].mxu0
        %v1782 = vadd.f32 0.0, %v1781
        %1783 = vmatprep.mubr.f32.mxu0 %v864
        %1784 = vmatmul.mubr.f32.gmra.mrb[0].mxu0 %v863
        %v1785 = vpop.f32.mrb[0].mxu0
        %v1786 = vadd.f32 0.0, %v1785
        %v1787 = vpop.f32.mrb[0].mxu0
        %v1788 = vadd.f32 0.0, %v1787
        %1789 = vmatprep.mubr.f32.mxu0 %v866
        %1790 = vmatmul.mubr.f32.gmra.mrb[0].mxu0 %v865
        %v1791 = vpop.f32.mrb[0].mxu0
        %v1792 = vadd.f32 0.0, %v1791
        %v1793 = vpop.f32.mrb[0].mxu0
        %v1794 = vadd.f32 0.0, %v1793
        %1795 = vmatprep.mubr.f32.mxu0 %v868
        %1796 = vmatmul.mubr.f32.gmra.mrb[0].mxu0 %v867
        %v1797 = vpop.f32.mrb[0].mxu0
        %v1798 = vadd.f32 0.0, %v1797
        %v1799 = vpop.f32.mrb[0].mxu0
        %v1800 = vadd.f32 0.0, %v1799
        %1801 = vmatprep.mubr.f32.mxu0 %v870
        %1802 = vmatmul.mubr.f32.gmra.mrb[0].mxu0 %v869
        %v1803 = vpop.f32.mrb[0].mxu0
        %v1804 = vadd.f32 0.0, %v1803
        %v1805 = vpop.f32.mrb[0].mxu0
        %v1806 = vadd.f32 0.0, %v1805
        %1807 = vmatprep.mubr.f32.mxu0 %v872
        %1808 = vmatmul.mubr.f32.gmra.mrb[0].mxu0 %v871
        %v1809 = vpop.f32.mrb[0].mxu0
        %v1810 = vadd.f32 0.0, %v1809
        %v1811 = vpop.f32.mrb[0].mxu0
        %v1812 = vadd.f32 0.0, %v1811
        %1813 = vmatprep.mubr.f32.mxu0 %v874
        %1814 = vmatmul.mubr.f32.gmra.mrb[0].mxu0 %v873
        %v1815 = vpop.f32.mrb[0].mxu0
        %v1816 = vadd.f32 0.0, %v1815
        %v1817 = vpop.f32.mrb[0].mxu0
        %v1818 = vadd.f32 0.0, %v1817
        %1819 = vmatprep.mubr.f32.mxu0 %v876
        %1820 = vmatmul.mubr.f32.gmra.mrb[0].mxu0 %v875
        %v1821 = vpop.f32.mrb[0].mxu0
        %v1822 = vadd.f32 0.0, %v1821
        %v1823 = vpop.f32.mrb[0].mxu0
        %v1824 = vadd.f32 0.0, %v1823
        %1825 = vmatprep.mubr.f32.mxu0 %v878
        %1826 = vmatmul.mubr.f32.gmra.mrb[0].mxu0 %v877
        %v1827 = vpop.f32.mrb[0].mxu0
        %v1828 = vadd.f32 0.0, %v1827
        %v1829 = vpop.f32.mrb[0].mxu0
        %v1830 = vadd.f32 0.0, %v1829
        %1831 = vmatprep.mubr.f32.mxu0 %v880
        %1832 = vmatmul.mubr.f32.gmra.mrb[0].mxu0 %v879
        %v1833 = vpop.f32.mrb[0].mxu0
        %v1834 = vadd.f32 0.0, %v1833
        %v1835 = vpop.f32.mrb[0].mxu0
        %v1836 = vadd.f32 0.0, %v1835
        %1837 = vmatprep.mubr.f32.mxu0 %v882
        %1838 = vmatmul.mubr.f32.gmra.mrb[0].mxu0 %v881
        %v1839 = vpop.f32.mrb[0].mxu0
        %v1840 = vadd.f32 0.0, %v1839
        %v1841 = vpop.f32.mrb[0].mxu0
        %v1842 = vadd.f32 0.0, %v1841
        %1843 = vmatprep.mubr.f32.mxu0 %v884
        %1844 = vmatmul.mubr.f32.gmra.mrb[0].mxu0 %v883
        %v1845 = vpop.f32.mrb[0].mxu0
        %v1846 = vadd.f32 0.0, %v1845
        %v1847 = vpop.f32.mrb[0].mxu0
        %v1848 = vadd.f32 0.0, %v1847
        %1849 = vmatprep.mubr.f32.mxu0 %v886
        %1850 = vmatmul.mubr.f32.gmra.mrb[0].mxu0 %v885
        %v1851 = vpop.f32.mrb[0].mxu0
        %v1852 = vadd.f32 0.0, %v1851
        %v1853 = vpop.f32.mrb[0].mxu0
        %v1854 = vadd.f32 0.0, %v1853
        %1855 = vmatprep.mubr.f32.mxu0 %v888
        %1856 = vmatmul.mubr.f32.gmra.mrb[0].mxu0 %v887
        %v1857 = vpop.f32.mrb[0].mxu0
        %v1858 = vadd.f32 0.0, %v1857
        %v1859 = vpop.f32.mrb[0].mxu0
        %v1860 = vadd.f32 0.0, %v1859
        %1861 = vmatprep.mubr.f32.mxu0 %v890
        %1862 = vmatmul.mubr.f32.gmra.mrb[0].mxu0 %v889
        %v1863 = vpop.f32.mrb[0].mxu0
        %v1864 = vadd.f32 0.0, %v1863
        %v1865 = vpop.f32.mrb[0].mxu0
        %v1866 = vadd.f32 0.0, %v1865
        %1867 = vmatprep.mubr.f32.mxu0 %v892
        %1868 = vmatmul.mubr.f32.gmra.mrb[0].mxu0 %v891
        %v1869 = vpop.f32.mrb[0].mxu0
        %v1870 = vadd.f32 0.0, %v1869
        %v1871 = vpop.f32.mrb[0].mxu0
        %v1872 = vadd.f32 0.0, %v1871
        %1873 = vmatprep.mubr.f32.mxu0 %v894
        %1874 = vmatmul.mubr.f32.gmra.mrb[0].mxu0 %v893
        %v1875 = vpop.f32.mrb[0].mxu0
        %v1876 = vadd.f32 0.0, %v1875
        %v1877 = vpop.f32.mrb[0].mxu0
        %v1878 = vadd.f32 0.0, %v1877
        %1879 = vmatprep.mubr.f32.mxu0 %v896
        %1880 = vmatmul.mubr.f32.gmra.mrb[0].mxu0 %v895
        %v1881 = vpop.f32.mrb[0].mxu0
        %v1882 = vadd.f32 0.0, %v1881
        %v1883 = vpop.f32.mrb[0].mxu0
        %v1884 = vadd.f32 0.0, %v1883
        %1885 = vmatprep.mubr.f32.mxu0 %v898
        %1886 = vmatmul.mubr.f32.gmra.mrb[0].mxu0 %v897
        %v1887 = vpop.f32.mrb[0].mxu0
        %v1888 = vadd.f32 0.0, %v1887
        %v1889 = vpop.f32.mrb[0].mxu0
        %v1890 = vadd.f32 0.0, %v1889
        %1891 = vmatprep.mubr.f32.mxu0 %v900
        %1892 = vmatmul.mubr.f32.gmra.mrb[0].mxu0 %v899
        %v1893 = vpop.f32.mrb[0].mxu0
        %v1894 = vadd.f32 0.0, %v1893
        %v1895 = vpop.f32.mrb[0].mxu0
        %v1896 = vadd.f32 0.0, %v1895
        %1897 = vmatprep.mubr.f32.mxu0 %v902
        %1898 = vmatmul.mubr.f32.gmra.mrb[0].mxu0 %v901
        %v1899 = vpop.f32.mrb[0].mxu0
        %v1900 = vadd.f32 0.0, %v1899
        %v1901 = vpop.f32.mrb[0].mxu0
        %v1902 = vadd.f32 0.0, %v1901
        %1903 = vmatprep.mubr.f32.mxu0 %v904
        %1904 = vmatmul.mubr.f32.gmra.mrb[0].mxu0 %v903
        %v1905 = vpop.f32.mrb[0].mxu0
        %v1906 = vadd.f32 0.0, %v1905
        %v1907 = vpop.f32.mrb[0].mxu0
        %v1908 = vadd.f32 0.0, %v1907
        %1909 = vmatprep.mubr.f32.mxu0 %v906
        %1910 = vmatmul.mubr.f32.gmra.mrb[0].mxu0 %v905
        %v1911 = vpop.f32.mrb[0].mxu0
        %v1912 = vadd.f32 0.0, %v1911
        %v1913 = vpop.f32.mrb[0].mxu0
        %v1914 = vadd.f32 0.0, %v1913
        %1915 = vmatprep.mubr.f32.mxu0 %v908
        %1916 = vmatmul.mubr.f32.gmra.mrb[0].mxu0 %v907
        %v1917 = vpop.f32.mrb[0].mxu0
        %v1918 = vadd.f32 0.0, %v1917
        %v1919 = vpop.f32.mrb[0].mxu0
        %v1920 = vadd.f32 0.0, %v1919
        %1921 = vmatprep.mubr.f32.mxu0 %v910
        %1922 = vmatmul.mubr.f32.gmra.mrb[0].mxu0 %v909
        %v1923 = vpop.f32.mrb[0].mxu0
        %v1924 = vadd.f32 0.0, %v1923
        %v1925 = vpop.f32.mrb[0].mxu0
        %v1926 = vadd.f32 0.0, %v1925
        %1927 = vmatprep.mubr.f32.mxu0 %v912
        %1928 = vmatmul.mubr.f32.gmra.mrb[0].mxu0 %v911
        %v1929 = vpop.f32.mrb[0].mxu0
        %v1930 = vadd.f32 0.0, %v1929
        %v1931 = vpop.f32.mrb[0].mxu0
        %v1932 = vadd.f32 0.0, %v1931
        %1933 = vmatprep.mubr.f32.mxu0 %v914
        %1934 = vmatmul.mubr.f32.gmra.mrb[0].mxu0 %v913
        %v1935 = vpop.f32.mrb[0].mxu0
        %v1936 = vadd.f32 0.0, %v1935
        %v1937 = vpop.f32.mrb[0].mxu0
        %v1938 = vadd.f32 0.0, %v1937
        %1939 = vmatprep.mubr.f32.mxu0 %v916
        %1940 = vmatmul.mubr.f32.gmra.mrb[0].mxu0 %v915
        %v1941 = vpop.f32.mrb[0].mxu0
        %v1942 = vadd.f32 0.0, %v1941
        %v1943 = vpop.f32.mrb[0].mxu0
        %v1944 = vadd.f32 0.0, %v1943
        %1945 = vmatprep.mubr.f32.mxu0 %v918
        %1946 = vmatmul.mubr.f32.gmra.mrb[0].mxu0 %v917
        %v1947 = vpop.f32.mrb[0].mxu0
        %v1948 = vadd.f32 0.0, %v1947
        %v1949 = vpop.f32.mrb[0].mxu0
        %v1950 = vadd.f32 0.0, %v1949
        %1951 = vmatprep.mubr.f32.mxu0 %v920
        %1952 = vmatmul.mubr.f32.gmra.mrb[0].mxu0 %v919
        %v1953 = vpop.f32.mrb[0].mxu0
        %v1954 = vadd.f32 0.0, %v1953
        %v1955 = vpop.f32.mrb[0].mxu0
        %v1956 = vadd.f32 0.0, %v1955
        %1957 = vmatprep.mubr.f32.mxu0 %v922
        %1958 = vmatmul.mubr.f32.gmra.mrb[0].mxu0 %v921
        %v1959 = vpop.f32.mrb[0].mxu0
        %v1960 = vadd.f32 0.0, %v1959
        %v1961 = vpop.f32.mrb[0].mxu0
        %v1962 = vadd.f32 0.0, %v1961
        %1963 = vmatprep.mubr.f32.mxu0 %v924
        %1964 = vmatmul.mubr.f32.gmra.mrb[0].mxu0 %v923
        %v1965 = vpop.f32.mrb[0].mxu0
        %v1966 = vadd.f32 0.0, %v1965
        %v1967 = vpop.f32.mrb[0].mxu0
        %v1968 = vadd.f32 0.0, %v1967
        %1969 = vmatprep.mubr.f32.mxu0 %v926
        %1970 = vmatmul.mubr.f32.gmra.mrb[0].mxu0 %v925
        %v1971 = vpop.f32.mrb[0].mxu0
        %v1972 = vadd.f32 0.0, %v1971
        %v1973 = vpop.f32.mrb[0].mxu0
        %v1974 = vadd.f32 0.0, %v1973
        %1975 = vmatprep.mubr.f32.mxu0 %v928
        %1976 = vmatmul.mubr.f32.gmra.mrb[0].mxu0 %v927
        %v1977 = vpop.f32.mrb[0].mxu0
        %v1978 = vadd.f32 0.0, %v1977
        %v1979 = vpop.f32.mrb[0].mxu0
        %v1980 = vadd.f32 0.0, %v1979
        %1981 = vmatprep.mubr.f32.mxu0 %v930
        %1982 = vmatmul.mubr.f32.gmra.mrb[0].mxu0 %v929
        %v1983 = vpop.f32.mrb[0].mxu0
        %v1984 = vadd.f32 0.0, %v1983
        %v1985 = vpop.f32.mrb[0].mxu0
        %v1986 = vadd.f32 0.0, %v1985
        %1987 = vmatprep.mubr.f32.mxu0 %v932
        %1988 = vmatmul.mubr.f32.gmra.mrb[0].mxu0 %v931
        %v1989 = vpop.f32.mrb[0].mxu0
        %v1990 = vadd.f32 0.0, %v1989
        %v1991 = vpop.f32.mrb[0].mxu0
        %v1992 = vadd.f32 0.0, %v1991
        %1993 = vmatprep.mubr.f32.mxu0 %v934
        %1994 = vmatmul.mubr.f32.gmra.mrb[0].mxu0 %v933
        %v1995 = vpop.f32.mrb[0].mxu0
        %v1996 = vadd.f32 0.0, %v1995
        %v1997 = vpop.f32.mrb[0].mxu0
        %v1998 = vadd.f32 0.0, %v1997
        %1999 = vmatprep.mubr.f32.mxu0 %v936
        %2000 = vmatmul.mubr.f32.gmra.mrb[0].mxu0 %v935
        %v2001 = vpop.f32.mrb[0].mxu0
        %v2002 = vadd.f32 0.0, %v2001
        %v2003 = vpop.f32.mrb[0].mxu0
        %v2004 = vadd.f32 0.0, %v2003
        %2005 = vmatprep.mubr.f32.mxu0 %v938
        %2006 = vmatmul.mubr.f32.gmra.mrb[0].mxu0 %v937
        %v2007 = vpop.f32.mrb[0].mxu0
        %v2008 = vadd.f32 0.0, %v2007
        %v2009 = vpop.f32.mrb[0].mxu0
        %v2010 = vadd.f32 0.0, %v2009
        %2011 = vmatprep.mubr.f32.mxu0 %v940
        %2012 = vmatmul.mubr.f32.gmra.mrb[0].mxu0 %v939
        %v2013 = vpop.f32.mrb[0].mxu0
        %v2014 = vadd.f32 0.0, %v2013
        %v2015 = vpop.f32.mrb[0].mxu0
        %v2016 = vadd.f32 0.0, %v2015
        %2017 = vmatprep.mubr.f32.mxu0 %v942
        %2018 = vmatmul.mubr.f32.gmra.mrb[0].mxu0 %v941
        %v2019 = vpop.f32.mrb[0].mxu0
        %v2020 = vadd.f32 0.0, %v2019
        %v2021 = vpop.f32.mrb[0].mxu0
        %v2022 = vadd.f32 0.0, %v2021
        %2023 = vmatprep.mubr.f32.mxu0 %v944
        %2024 = vmatmul.mubr.f32.gmra.mrb[0].mxu0 %v943
        %v2025 = vpop.f32.mrb[0].mxu0
        %v2026 = vadd.f32 0.0, %v2025
        %v2027 = vpop.f32.mrb[0].mxu0
        %v2028 = vadd.f32 0.0, %v2027
        %2029 = vmatprep.mubr.f32.mxu0 %v946
        %2030 = vmatmul.mubr.f32.gmra.mrb[0].mxu0 %v945
        %v2031 = vpop.f32.mrb[0].mxu0
        %v2032 = vadd.f32 0.0, %v2031
        %v2033 = vpop.f32.mrb[0].mxu0
        %v2034 = vadd.f32 0.0, %v2033
        %2035 = vmatprep.mubr.f32.mxu0 %v948
        %2036 = vmatmul.mubr.f32.gmra.mrb[0].mxu0 %v947
        %v2037 = vpop.f32.mrb[0].mxu0
        %v2038 = vadd.f32 0.0, %v2037
        %v2039 = vpop.f32.mrb[0].mxu0
        %v2040 = vadd.f32 0.0, %v2039
        %2041 = vmatprep.mubr.f32.mxu0 %v950
        %2042 = vmatmul.mubr.f32.gmra.mrb[0].mxu0 %v949
        %v2043 = vpop.f32.mrb[0].mxu0
        %v2044 = vadd.f32 0.0, %v2043
        %v2045 = vpop.f32.mrb[0].mxu0
        %v2046 = vadd.f32 0.0, %v2045
        %2047 = vmatprep.mubr.f32.mxu0 %v952
        %2048 = vmatmul.mubr.f32.gmra.mrb[0].mxu0 %v951
        %v2049 = vpop.f32.mrb[0].mxu0
        %v2050 = vadd.f32 0.0, %v2049
        %v2051 = vpop.f32.mrb[0].mxu0
        %v2052 = vadd.f32 0.0, %v2051
        %2053 = vmatprep.mubr.f32.mxu0 %v954
        %2054 = vmatmul.mubr.f32.gmra.mrb[0].mxu0 %v953
        %v2055 = vpop.f32.mrb[0].mxu0
        %v2056 = vadd.f32 0.0, %v2055
        %v2057 = vpop.f32.mrb[0].mxu0
        %v2058 = vadd.f32 0.0, %v2057
        %2059 = vmatprep.mubr.f32.mxu0 %v956
        %2060 = vmatmul.mubr.f32.gmra.mrb[0].mxu0 %v955
        %v2061 = vpop.f32.mrb[0].mxu0
        %v2062 = vadd.f32 0.0, %v2061
        %v2063 = vpop.f32.mrb[0].mxu0
        %v2064 = vadd.f32 0.0, %v2063
        %2065 = vmatprep.mubr.f32.mxu0 %v958
        %2066 = vmatmul.mubr.f32.gmra.mrb[0].mxu0 %v957
        %v2067 = vpop.f32.mrb[0].mxu0
        %v2068 = vadd.f32 0.0, %v2067
        %v2069 = vpop.f32.mrb[0].mxu0
        %v2070 = vadd.f32 0.0, %v2069
        %2071 = vmatprep.mubr.f32.mxu0 %v960
        %2072 = vmatmul.mubr.f32.gmra.mrb[0].mxu0 %v959
        %v2073 = vpop.f32.mrb[0].mxu0
        %v2074 = vadd.f32 0.0, %v2073
        %v2075 = vpop.f32.mrb[0].mxu0
        %v2076 = vadd.f32 0.0, %v2075
        %2077 = vmatprep.mubr.f32.mxu0 %v962
        %2078 = vmatmul.mubr.f32.gmra.mrb[0].mxu0 %v961
        %v2079 = vpop.f32.mrb[0].mxu0
        %v2080 = vadd.f32 0.0, %v2079
        %v2081 = vpop.f32.mrb[0].mxu0
        %v2082 = vadd.f32 0.0, %v2081
        %2083 = vmatprep.mubr.f32.mxu0 %v964
        %2084 = vmatmul.mubr.f32.gmra.mrb[0].mxu0 %v963
        %v2085 = vpop.f32.mrb[0].mxu0
        %v2086 = vadd.f32 0.0, %v2085
        %v2087 = vpop.f32.mrb[0].mxu0
        %v2088 = vadd.f32 0.0, %v2087
        %2089 = vmatprep.mubr.f32.mxu0 %v966
        %2090 = vmatmul.mubr.f32.gmra.mrb[0].mxu0 %v965
        %v2091 = vpop.f32.mrb[0].mxu0
        %v2092 = vadd.f32 0.0, %v2091
        %v2093 = vpop.f32.mrb[0].mxu0
        %v2094 = vadd.f32 0.0, %v2093
        %2095 = vmatprep.mubr.f32.mxu0 %v968
        %2096 = vmatmul.mubr.f32.gmra.mrb[0].mxu0 %v967
        %v2097 = vpop.f32.mrb[0].mxu0
        %v2098 = vadd.f32 0.0, %v2097
        %v2099 = vpop.f32.mrb[0].mxu0
        %v2100 = vadd.f32 0.0, %v2099
        %2101 = vmatprep.mubr.f32.mxu0 %v970
        %2102 = vmatmul.mubr.f32.gmra.mrb[0].mxu0 %v969
        %v2103 = vpop.f32.mrb[0].mxu0
        %v2104 = vadd.f32 0.0, %v2103
        %v2105 = vpop.f32.mrb[0].mxu0
        %v2106 = vadd.f32 0.0, %v2105
        %2107 = vmatprep.mubr.f32.mxu0 %v972
        %2108 = vmatmul.mubr.f32.gmra.mrb[0].mxu0 %v971
        %v2109 = vpop.f32.mrb[0].mxu0
        %v2110 = vadd.f32 0.0, %v2109
        %v2111 = vpop.f32.mrb[0].mxu0
        %v2112 = vadd.f32 0.0, %v2111
        %2113 = vmatprep.mubr.f32.mxu0 %v974
        %2114 = vmatmul.mubr.f32.gmra.mrb[0].mxu0 %v973
        %v2115 = vpop.f32.mrb[0].mxu0
        %v2116 = vadd.f32 0.0, %v2115
        %v2117 = vpop.f32.mrb[0].mxu0
        %v2118 = vadd.f32 0.0, %v2117
        %2119 = vmatprep.mubr.f32.mxu0 %v976
        %2120 = vmatmul.mubr.f32.gmra.mrb[0].mxu0 %v975
        %v2121 = vpop.f32.mrb[0].mxu0
        %v2122 = vadd.f32 0.0, %v2121
        %v2123 = vpop.f32.mrb[0].mxu0
        %v2124 = vadd.f32 0.0, %v2123
        %2125 = vmatprep.mubr.f32.mxu0 %v978
        %2126 = vmatmul.mubr.f32.gmra.mrb[0].mxu0 %v977
        %v2127 = vpop.f32.mrb[0].mxu0
        %v2128 = vadd.f32 0.0, %v2127
        %v2129 = vpop.f32.mrb[0].mxu0
        %v2130 = vadd.f32 0.0, %v2129
        %2131 = vmatprep.mubr.f32.mxu0 %v980
        %2132 = vmatmul.mubr.f32.gmra.mrb[0].mxu0 %v979
        %v2133 = vpop.f32.mrb[0].mxu0
        %v2134 = vadd.f32 0.0, %v2133
        %v2135 = vpop.f32.mrb[0].mxu0
        %v2136 = vadd.f32 0.0, %v2135
        %2137 = vmatprep.mubr.f32.mxu0 %v982
        %2138 = vmatmul.mubr.f32.gmra.mrb[0].mxu0 %v981
        %v2139 = vpop.f32.mrb[0].mxu0
        %v2140 = vadd.f32 0.0, %v2139
        %v2141 = vpop.f32.mrb[0].mxu0
        %v2142 = vadd.f32 0.0, %v2141
        %2143 = vmatprep.mubr.f32.mxu0 %v984
        %2144 = vmatmul.mubr.f32.gmra.mrb[0].mxu0 %v983
        %v2145 = vpop.f32.mrb[0].mxu0
        %v2146 = vadd.f32 0.0, %v2145
        %v2147 = vpop.f32.mrb[0].mxu0
        %v2148 = vadd.f32 0.0, %v2147
        %2149 = vmatprep.mubr.f32.mxu0 %v986
        %2150 = vmatmul.mubr.f32.gmra.mrb[0].mxu0 %v985
        %v2151 = vpop.f32.mrb[0].mxu0
        %v2152 = vadd.f32 0.0, %v2151
        %v2153 = vpop.f32.mrb[0].mxu0
        %v2154 = vadd.f32 0.0, %v2153
        %2155 = vmatprep.mubr.f32.mxu0 %v988
        %2156 = vmatmul.mubr.f32.gmra.mrb[0].mxu0 %v987
        %v2157 = vpop.f32.mrb[0].mxu0
        %v2158 = vadd.f32 0.0, %v2157
        %v2159 = vpop.f32.mrb[0].mxu0
        %v2160 = vadd.f32 0.0, %v2159
        %2161 = vmatprep.mubr.f32.mxu0 %v990
        %2162 = vmatmul.mubr.f32.gmra.mrb[0].mxu0 %v989
        %v2163 = vpop.f32.mrb[0].mxu0
        %v2164 = vadd.f32 0.0, %v2163
        %v2165 = vpop.f32.mrb[0].mxu0
        %v2166 = vadd.f32 0.0, %v2165
        %2167 = vmatprep.mubr.f32.mxu0 %v992
        %2168 = vmatmul.mubr.f32.gmra.mrb[0].mxu0 %v991
        %v2169 = vpop.f32.mrb[0].mxu0
        %v2170 = vadd.f32 0.0, %v2169
        %v2171 = vpop.f32.mrb[0].mxu0
        %v2172 = vadd.f32 0.0, %v2171
        %2173 = vmatprep.mubr.f32.mxu0 %v994
        %2174 = vmatmul.mubr.f32.gmra.mrb[0].mxu0 %v993
        %v2175 = vpop.f32.mrb[0].mxu0
        %v2176 = vadd.f32 0.0, %v2175
        %v2177 = vpop.f32.mrb[0].mxu0
        %v2178 = vadd.f32 0.0, %v2177
        %2179 = vmatprep.mubr.f32.mxu0 %v996
        %2180 = vmatmul.mubr.f32.gmra.mrb[0].mxu0 %v995
        %v2181 = vpop.f32.mrb[0].mxu0
        %v2182 = vadd.f32 0.0, %v2181
        %v2183 = vpop.f32.mrb[0].mxu0
        %v2184 = vadd.f32 0.0, %v2183
        %2185 = vmatprep.mubr.f32.mxu0 %v998
        %2186 = vmatmul.mubr.f32.gmra.mrb[0].mxu0 %v997
        %v2187 = vpop.f32.mrb[0].mxu0
        %v2188 = vadd.f32 0.0, %v2187
        %v2189 = vpop.f32.mrb[0].mxu0
        %v2190 = vadd.f32 0.0, %v2189
        %2191 = vmatprep.mubr.f32.mxu0 %v1000
        %2192 = vmatmul.mubr.f32.gmra.mrb[0].mxu0 %v999
        %v2193 = vpop.f32.mrb[0].mxu0
        %v2194 = vadd.f32 0.0, %v2193
        %v2195 = vpop.f32.mrb[0].mxu0
        %v2196 = vadd.f32 0.0, %v2195
        %2197 = vmatprep.mubr.f32.mxu0 %v1002
        %2198 = vmatmul.mubr.f32.gmra.mrb[0].mxu0 %v1001
        %v2199 = vpop.f32.mrb[0].mxu0
        %v2200 = vadd.f32 0.0, %v2199
        %v2201 = vpop.f32.mrb[0].mxu0
        %v2202 = vadd.f32 0.0, %v2201
        %2203 = vmatprep.mubr.f32.mxu0 %v1004
        %2204 = vmatmul.mubr.f32.gmra.mrb[0].mxu0 %v1003
        %v2205 = vpop.f32.mrb[0].mxu0
        %v2206 = vadd.f32 0.0, %v2205
        %v2207 = vpop.f32.mrb[0].mxu0
        %v2208 = vadd.f32 0.0, %v2207
        %2209 = vmatprep.mubr.f32.mxu0 %v1006
        %2210 = vmatmul.mubr.f32.gmra.mrb[0].mxu0 %v1005
        %v2211 = vpop.f32.mrb[0].mxu0
        %v2212 = vadd.f32 0.0, %v2211
        %v2213 = vpop.f32.mrb[0].mxu0
        %v2214 = vadd.f32 0.0, %v2213
        %2215 = vmatprep.mubr.f32.mxu0 %v1008
        %2216 = vmatmul.mubr.f32.gmra.mrb[0].mxu0 %v1007
        %v2217 = vpop.f32.mrb[0].mxu0
        %v2218 = vadd.f32 0.0, %v2217
        %v2219 = vpop.f32.mrb[0].mxu0
        %v2220 = vadd.f32 0.0, %v2219
        %2221 = vmatprep.mubr.f32.mxu0 %v1010
        %2222 = vmatmul.mubr.f32.gmra.mrb[0].mxu0 %v1009
        %v2223 = vpop.f32.mrb[0].mxu0
        %v2224 = vadd.f32 0.0, %v2223
        %v2225 = vpop.f32.mrb[0].mxu0
        %v2226 = vadd.f32 0.0, %v2225
        %2227 = vmatprep.mubr.f32.mxu0 %v1012
        %2228 = vmatmul.mubr.f32.gmra.mrb[0].mxu0 %v1011
        %v2229 = vpop.f32.mrb[0].mxu0
        %v2230 = vadd.f32 0.0, %v2229
        %v2231 = vpop.f32.mrb[0].mxu0
        %v2232 = vadd.f32 0.0, %v2231
        %2233 = vmatprep.mubr.f32.mxu0 %v1014
        %2234 = vmatmul.mubr.f32.gmra.mrb[0].mxu0 %v1013
        %v2235 = vpop.f32.mrb[0].mxu0
        %v2236 = vadd.f32 0.0, %v2235
        %v2237 = vpop.f32.mrb[0].mxu0
        %v2238 = vadd.f32 0.0, %v2237
        %2239 = vmatprep.mubr.f32.mxu0 %v1016
        %2240 = vmatmul.mubr.f32.gmra.mrb[0].mxu0 %v1015
        %v2241 = vpop.f32.mrb[0].mxu0
        %v2242 = vadd.f32 0.0, %v2241
        %v2243 = vpop.f32.mrb[0].mxu0
        %v2244 = vadd.f32 0.0, %v2243
        %2245 = vmatprep.mubr.f32.mxu0 %v1018
        %2246 = vmatmul.mubr.f32.gmra.mrb[0].mxu0 %v1017
        %v2247 = vpop.f32.mrb[0].mxu0
        %v2248 = vadd.f32 0.0, %v2247
        %v2249 = vpop.f32.mrb[0].mxu0
        %v2250 = vadd.f32 0.0, %v2249
        %2251 = vmatprep.mubr.f32.mxu0 %v1020
        %2252 = vmatmul.mubr.f32.gmra.mrb[0].mxu0 %v1019
        %v2253 = vpop.f32.mrb[0].mxu0
        %v2254 = vadd.f32 0.0, %v2253
        %v2255 = vpop.f32.mrb[0].mxu0
        %v2256 = vadd.f32 0.0, %v2255
        %2257 = vmatprep.mubr.f32.mxu0 %v1022
        %2258 = vmatmul.mubr.f32.gmra.mrb[0].mxu0 %v1021
        %v2259 = vpop.f32.mrb[0].mxu0
        %v2260 = vadd.f32 0.0, %v2259
        %v2261 = vpop.f32.mrb[0].mxu0
        %v2262 = vadd.f32 0.0, %v2261
        %2263 = vmatprep.mubr.f32.mxu0 %v1024
        %2264 = vmatmul.mubr.f32.gmra.mrb[0].mxu0 %v1023
        %v2265 = vpop.f32.mrb[0].mxu0
        %v2266 = vadd.f32 0.0, %v2265
        %v2267 = vpop.f32.mrb[0].mxu0
        %v2268 = vadd.f32 0.0, %v2267
        %2269 = vmatprep.mubr.f32.mxu0 %v1026
        %2270 = vmatmul.mubr.f32.gmra.mrb[0].mxu0 %v1025
        %v2271 = vpop.f32.mrb[0].mxu0
        %v2272 = vadd.f32 0.0, %v2271
        %v2273 = vpop.f32.mrb[0].mxu0
        %v2274 = vadd.f32 0.0, %v2273
        %2275 = vmatprep.mubr.f32.mxu0 %v1028
        %2276 = vmatmul.mubr.f32.gmra.mrb[0].mxu0 %v1027
        %v2277 = vpop.f32.mrb[0].mxu0
        %v2278 = vadd.f32 0.0, %v2277
        %v2279 = vpop.f32.mrb[0].mxu0
        %v2280 = vadd.f32 0.0, %v2279
        %2281 = vmatprep.mubr.f32.mxu0 %v1030
        %2282 = vmatmul.mubr.f32.gmra.mrb[0].mxu0 %v1029
        %v2283 = vpop.f32.mrb[0].mxu0
        %v2284 = vadd.f32 0.0, %v2283
        %v2285 = vpop.f32.mrb[0].mxu0
        %v2286 = vadd.f32 0.0, %v2285
        %2287 = vmatprep.mubr.f32.mxu0 %v1032
        %2288 = vmatmul.mubr.f32.gmra.mrb[0].mxu0 %v1031
        %v2289 = vpop.f32.mrb[0].mxu0
        %v2290 = vadd.f32 0.0, %v2289
        %v2291 = vpop.f32.mrb[0].mxu0
        %v2292 = vadd.f32 0.0, %v2291
        %2293 = vmatprep.mubr.f32.mxu0 %v1034
        %2294 = vmatmul.mubr.f32.gmra.mrb[0].mxu0 %v1033
        %v2295 = vpop.f32.mrb[0].mxu0
        %v2296 = vadd.f32 0.0, %v2295
        %v2297 = vpop.f32.mrb[0].mxu0
        %v2298 = vadd.f32 0.0, %v2297
        %2299 = vmatprep.mubr.f32.mxu0 %v1036
        %2300 = vmatmul.mubr.f32.gmra.mrb[0].mxu0 %v1035
        %v2301 = vpop.f32.mrb[0].mxu0
        %v2302 = vadd.f32 0.0, %v2301
        %v2303 = vpop.f32.mrb[0].mxu0
        %v2304 = vadd.f32 0.0, %v2303
        %2305 = vmatprep.mubr.f32.mxu0 %v1038
        %2306 = vmatmul.mubr.f32.gmra.mrb[0].mxu0 %v1037
        %v2307 = vpop.f32.mrb[0].mxu0
        %v2308 = vadd.f32 0.0, %v2307
        %v2309 = vpop.f32.mrb[0].mxu0
        %v2310 = vadd.f32 0.0, %v2309
        %2311 = vmatprep.mubr.f32.mxu0 %v1040
        %2312 = vmatmul.mubr.f32.gmra.mrb[0].mxu0 %v1039
        %v2313 = vpop.f32.mrb[0].mxu0
        %v2314 = vadd.f32 0.0, %v2313
        %v2315 = vpop.f32.mrb[0].mxu0
        %v2316 = vadd.f32 0.0, %v2315
        %2317 = vmatprep.mubr.f32.mxu0 %v1042
        %2318 = vmatmul.mubr.f32.gmra.mrb[0].mxu0 %v1041
        %v2319 = vpop.f32.mrb[0].mxu0
        %v2320 = vadd.f32 0.0, %v2319
        %v2321 = vpop.f32.mrb[0].mxu0
        %v2322 = vadd.f32 0.0, %v2321
        %2323 = vmatprep.mubr.f32.mxu0 %v1044
        %2324 = vmatmul.mubr.f32.gmra.mrb[0].mxu0 %v1043
        %v2325 = vpop.f32.mrb[0].mxu0
        %v2326 = vadd.f32 0.0, %v2325
        %v2327 = vpop.f32.mrb[0].mxu0
        %v2328 = vadd.f32 0.0, %v2327
        %2329 = vmatprep.mubr.f32.mxu0 %v1046
        %2330 = vmatmul.mubr.f32.gmra.mrb[0].mxu0 %v1045
        %v2331 = vpop.f32.mrb[0].mxu0
        %v2332 = vadd.f32 0.0, %v2331
        %v2333 = vpop.f32.mrb[0].mxu0
        %v2334 = vadd.f32 0.0, %v2333
        %2335 = vmatprep.mubr.f32.mxu0 %v1048
        %2336 = vmatmul.mubr.f32.gmra.mrb[0].mxu0 %v1047
        %v2337 = vpop.f32.mrb[0].mxu0
        %v2338 = vadd.f32 0.0, %v2337
        %v2339 = vpop.f32.mrb[0].mxu0
        %v2340 = vadd.f32 0.0, %v2339
        %2341 = vmatprep.mubr.f32.mxu0 %v1050
        %2342 = vmatmul.mubr.f32.gmra.mrb[0].mxu0 %v1049
        %v2343 = vpop.f32.mrb[0].mxu0
        %v2344 = vadd.f32 0.0, %v2343
        %v2345 = vpop.f32.mrb[0].mxu0
        %v2346 = vadd.f32 0.0, %v2345
        %2347 = vmatprep.mubr.f32.mxu0 %v1052
        %2348 = vmatmul.mubr.f32.gmra.mrb[0].mxu0 %v1051
        %v2349 = vpop.f32.mrb[0].mxu0
        %v2350 = vadd.f32 0.0, %v2349
        %v2351 = vpop.f32.mrb[0].mxu0
        %v2352 = vadd.f32 0.0, %v2351
        %2353 = vmatprep.mubr.f32.mxu0 %v1054
        %2354 = vmatmul.mubr.f32.gmra.mrb[0].mxu0 %v1053
        %v2355 = vpop.f32.mrb[0].mxu0
        %v2356 = vadd.f32 0.0, %v2355
        %v2357 = vpop.f32.mrb[0].mxu0
        %v2358 = vadd.f32 0.0, %v2357
        %2359 = vmatprep.mubr.f32.mxu0 %v1056
        %2360 = vmatmul.mubr.f32.gmra.mrb[0].mxu0 %v1055
        %v2361 = vpop.f32.mrb[0].mxu0
        %v2362 = vadd.f32 0.0, %v2361
        %v2363 = vpop.f32.mrb[0].mxu0
        %v2364 = vadd.f32 0.0, %v2363
        %2365 = vmatprep.mubr.f32.mxu0 %v1058
        %2366 = vmatmul.mubr.f32.gmra.mrb[0].mxu0 %v1057
        %v2367 = vpop.f32.mrb[0].mxu0
        %v2368 = vadd.f32 0.0, %v2367
        %v2369 = vpop.f32.mrb[0].mxu0
        %v2370 = vadd.f32 0.0, %v2369
        %2371 = vmatprep.mubr.f32.mxu0 %v1060
        %2372 = vmatmul.mubr.f32.gmra.mrb[0].mxu0 %v1059
        %v2373 = vpop.f32.mrb[0].mxu0
        %v2374 = vadd.f32 0.0, %v2373
        %v2375 = vpop.f32.mrb[0].mxu0
        %v2376 = vadd.f32 0.0, %v2375
        %2377 = vmatprep.mubr.f32.mxu0 %v1062
        %2378 = vmatmul.mubr.f32.gmra.mrb[0].mxu0 %v1061
        %v2379 = vpop.f32.mrb[0].mxu0
        %v2380 = vadd.f32 0.0, %v2379
        %v2381 = vpop.f32.mrb[0].mxu0
        %v2382 = vadd.f32 0.0, %v2381
        %2383 = vmatprep.mubr.f32.mxu0 %v1064
        %2384 = vmatmul.mubr.f32.gmra.mrb[0].mxu0 %v1063
        %v2385 = vpop.f32.mrb[0].mxu0
        %v2386 = vadd.f32 0.0, %v2385
        %v2387 = vpop.f32.mrb[0].mxu0
        %v2388 = vadd.f32 0.0, %v2387
        %2389 = vmatprep.mubr.f32.mxu0 %v1066
        %2390 = vmatmul.mubr.f32.gmra.mrb[0].mxu0 %v1065
        %v2391 = vpop.f32.mrb[0].mxu0
        %v2392 = vadd.f32 0.0, %v2391
        %v2393 = vpop.f32.mrb[0].mxu0
        %v2394 = vadd.f32 0.0, %v2393
        %2395 = vmatprep.mubr.f32.mxu0 %v1068
        %2396 = vmatmul.mubr.f32.gmra.mrb[0].mxu0 %v1067
        %v2397 = vpop.f32.mrb[0].mxu0
        %v2398 = vadd.f32 0.0, %v2397
        %v2399 = vpop.f32.mrb[0].mxu0
        %v2400 = vadd.f32 0.0, %v2399
        %2401 = vmatprep.mubr.f32.mxu0 %v1070
        %2402 = vmatmul.mubr.f32.gmra.mrb[0].mxu0 %v1069
        %v2403 = vpop.f32.mrb[0].mxu0
        %v2404 = vadd.f32 0.0, %v2403
        %v2405 = vpop.f32.mrb[0].mxu0
        %v2406 = vadd.f32 0.0, %v2405
        %2407 = vmatprep.mubr.f32.mxu0 %v1072
        %2408 = vmatmul.mubr.f32.gmra.mrb[0].mxu0 %v1071
        %v2409 = vpop.f32.mrb[0].mxu0
        %v2410 = vadd.f32 0.0, %v2409
        %v2411 = vpop.f32.mrb[0].mxu0
        %v2412 = vadd.f32 0.0, %v2411
        %2413 = vmatprep.mubr.f32.mxu0 %v1074
        %2414 = vmatmul.mubr.f32.gmra.mrb[0].mxu0 %v1073
        %v2415 = vpop.f32.mrb[0].mxu0
        %v2416 = vadd.f32 0.0, %v2415
        %v2417 = vpop.f32.mrb[0].mxu0
        %v2418 = vadd.f32 0.0, %v2417
        %2419 = vmatprep.mubr.f32.mxu0 %v1076
        %2420 = vmatmul.mubr.f32.gmra.mrb[0].mxu0 %v1075
        %v2421 = vpop.f32.mrb[0].mxu0
        %v2422 = vadd.f32 0.0, %v2421
        %v2423 = vpop.f32.mrb[0].mxu0
        %v2424 = vadd.f32 0.0, %v2423
        %2425 = vmatprep.mubr.f32.mxu0 %v1078
        %2426 = vmatmul.mubr.f32.gmra.mrb[0].mxu0 %v1077
        %v2427 = vpop.f32.mrb[0].mxu0
        %v2428 = vadd.f32 0.0, %v2427
        %v2429 = vpop.f32.mrb[0].mxu0
        %v2430 = vadd.f32 0.0, %v2429
        %2431 = vmatprep.mubr.f32.mxu0 %v1080
        %2432 = vmatmul.mubr.f32.gmra.mrb[0].mxu0 %v1079
        %v2433 = vpop.f32.mrb[0].mxu0
        %v2434 = vadd.f32 0.0, %v2433
        %v2435 = vpop.f32.mrb[0].mxu0
        %v2436 = vadd.f32 0.0, %v2435
        %2437 = vmatprep.mubr.f32.mxu0 %v1082
        %2438 = vmatmul.mubr.f32.gmra.mrb[0].mxu0 %v1081
        %v2439 = vpop.f32.mrb[0].mxu0
        %v2440 = vadd.f32 0.0, %v2439
        %v2441 = vpop.f32.mrb[0].mxu0
        %v2442 = vadd.f32 0.0, %v2441
        %2443 = vmatprep.mubr.f32.mxu0 %v1084
        %2444 = vmatmul.mubr.f32.gmra.mrb[0].mxu0 %v1083
        %v2445 = vpop.f32.mrb[0].mxu0
        %v2446 = vadd.f32 0.0, %v2445
        %v2447 = vpop.f32.mrb[0].mxu0
        %v2448 = vadd.f32 0.0, %v2447
        %2449 = vmatprep.mubr.f32.mxu0 %v1086
        %2450 = vmatmul.mubr.f32.gmra.mrb[0].mxu0 %v1085
        %v2451 = vpop.f32.mrb[0].mxu0
        %v2452 = vadd.f32 0.0, %v2451
        %v2453 = vpop.f32.mrb[0].mxu0
        %v2454 = vadd.f32 0.0, %v2453
        %2455 = vmatprep.mubr.f32.mxu0 %v1088
        %2456 = vmatmul.mubr.f32.gmra.mrb[0].mxu0 %v1087
        %v2457 = vpop.f32.mrb[0].mxu0
        %v2458 = vadd.f32 0.0, %v2457
        %v2459 = vpop.f32.mrb[0].mxu0
        %v2460 = vadd.f32 0.0, %v2459
        %2461 = vmatprep.mubr.f32.mxu0 %v1090
        %2462 = vmatmul.mubr.f32.gmra.mrb[0].mxu0 %v1089
        %v2463 = vpop.f32.mrb[0].mxu0
        %v2464 = vadd.f32 0.0, %v2463
        %v2465 = vpop.f32.mrb[0].mxu0
        %v2466 = vadd.f32 0.0, %v2465
        %2467 = vmatprep.mubr.f32.mxu0 %v1092
        %2468 = vmatmul.mubr.f32.gmra.mrb[0].mxu0 %v1091
        %v2469 = vpop.f32.mrb[0].mxu0
        %v2470 = vadd.f32 0.0, %v2469
        %v2471 = vpop.f32.mrb[0].mxu0
        %v2472 = vadd.f32 0.0, %v2471
        %2473 = vmatprep.mubr.f32.mxu0 %v1094
        %2474 = vmatmul.mubr.f32.gmra.mrb[0].mxu0 %v1093
        %v2475 = vpop.f32.mrb[0].mxu0
        %v2476 = vadd.f32 0.0, %v2475
        %v2477 = vpop.f32.mrb[0].mxu0
        %v2478 = vadd.f32 0.0, %v2477
        %2479 = vmatprep.mubr.f32.mxu0 %v1096
        %2480 = vmatmul.mubr.f32.gmra.mrb[0].mxu0 %v1095
        %v2481 = vpop.f32.mrb[0].mxu0
        %v2482 = vadd.f32 0.0, %v2481
        %v2483 = vpop.f32.mrb[0].mxu0
        %v2484 = vadd.f32 0.0, %v2483
        %2485 = vmatprep.mubr.f32.mxu0 %v1098
        %2486 = vmatmul.mubr.f32.gmra.mrb[0].mxu0 %v1097
        %v2487 = vpop.f32.mrb[0].mxu0
        %v2488 = vadd.f32 0.0, %v2487
        %v2489 = vpop.f32.mrb[0].mxu0
        %v2490 = vadd.f32 0.0, %v2489
        %2491 = vmatprep.mubr.f32.mxu0 %v1100
        %2492 = vmatmul.mubr.f32.gmra.mrb[0].mxu0 %v1099
        %v2493 = vpop.f32.mrb[0].mxu0
        %v2494 = vadd.f32 0.0, %v2493
        %v2495 = vpop.f32.mrb[0].mxu0
        %v2496 = vadd.f32 0.0, %v2495
        %2497 = vmatprep.mubr.f32.mxu0 %v1102
        %2498 = vmatmul.mubr.f32.gmra.mrb[0].mxu0 %v1101
        %v2499 = vpop.f32.mrb[0].mxu0
        %v2500 = vadd.f32 0.0, %v2499
        %v2501 = vpop.f32.mrb[0].mxu0
        %v2502 = vadd.f32 0.0, %v2501
        %2503 = vmatprep.mubr.f32.mxu0 %v1104
        %2504 = vmatmul.mubr.f32.gmra.mrb[0].mxu0 %v1103
        %v2505 = vpop.f32.mrb[0].mxu0
        %v2506 = vadd.f32 0.0, %v2505
        %v2507 = vpop.f32.mrb[0].mxu0
        %v2508 = vadd.f32 0.0, %v2507
        %2509 = vmatprep.mubr.f32.mxu0 %v1106
        %2510 = vmatmul.mubr.f32.gmra.mrb[0].mxu0 %v1105
        %v2511 = vpop.f32.mrb[0].mxu0
        %v2512 = vadd.f32 0.0, %v2511
        %v2513 = vpop.f32.mrb[0].mxu0
        %v2514 = vadd.f32 0.0, %v2513
        %2515 = vmatprep.mubr.f32.mxu0 %v1108
        %2516 = vmatmul.mubr.f32.gmra.mrb[0].mxu0 %v1107
        %v2517 = vpop.f32.mrb[0].mxu0
        %v2518 = vadd.f32 0.0, %v2517
        %v2519 = vpop.f32.mrb[0].mxu0
        %v2520 = vadd.f32 0.0, %v2519
        %2521 = vmatprep.mubr.f32.mxu0 %v1110
        %2522 = vmatmul.mubr.f32.gmra.mrb[0].mxu0 %v1109
        %v2523 = vpop.f32.mrb[0].mxu0
        %v2524 = vadd.f32 0.0, %v2523
        %v2525 = vpop.f32.mrb[0].mxu0
        %v2526 = vadd.f32 0.0, %v2525
        %2527 = vmatprep.mubr.f32.mxu0 %v1112
        %2528 = vmatmul.mubr.f32.gmra.mrb[0].mxu0 %v1111
        %v2529 = vpop.f32.mrb[0].mxu0
        %v2530 = vadd.f32 0.0, %v2529
        %v2531 = vpop.f32.mrb[0].mxu0
        %v2532 = vadd.f32 0.0, %v2531
        %2533 = vmatprep.mubr.f32.mxu0 %v1114
        %2534 = vmatmul.mubr.f32.gmra.mrb[0].mxu0 %v1113
        %v2535 = vpop.f32.mrb[0].mxu0
        %v2536 = vadd.f32 0.0, %v2535
        %v2537 = vpop.f32.mrb[0].mxu0
        %v2538 = vadd.f32 0.0, %v2537
        %2539 = vmatprep.mubr.f32.mxu0 %v1116
        %2540 = vmatmul.mubr.f32.gmra.mrb[0].mxu0 %v1115
        %v2541 = vpop.f32.mrb[0].mxu0
        %v2542 = vadd.f32 0.0, %v2541
        %v2543 = vpop.f32.mrb[0].mxu0
        %v2544 = vadd.f32 0.0, %v2543
        %2545 = vmatprep.mubr.f32.mxu0 %v1118
        %2546 = vmatmul.mubr.f32.gmra.mrb[0].mxu0 %v1117
        %v2547 = vpop.f32.mrb[0].mxu0
        %v2548 = vadd.f32 0.0, %v2547
        %v2549 = vpop.f32.mrb[0].mxu0
        %v2550 = vadd.f32 0.0, %v2549
        %2551 = vmatprep.mubr.f32.mxu0 %v1120
        %2552 = vmatmul.mubr.f32.gmra.mrb[0].mxu0 %v1119
        %v2553 = vpop.f32.mrb[0].mxu0
        %v2554 = vadd.f32 0.0, %v2553
        %v2555 = vpop.f32.mrb[0].mxu0
        %v2556 = vadd.f32 0.0, %v2555
        %2557 = vmatprep.mubr.f32.mxu0 %v1122
        %2558 = vmatmul.mubr.f32.gmra.mrb[0].mxu0 %v1121
        %v2559 = vpop.f32.mrb[0].mxu0
        %v2560 = vadd.f32 0.0, %v2559
        %v2561 = vpop.f32.mrb[0].mxu0
        %v2562 = vadd.f32 0.0, %v2561
        %2563 = vmatprep.mubr.f32.mxu0 %v1124
        %2564 = vmatmul.mubr.f32.gmra.mrb[0].mxu0 %v1123
        %v2565 = vpop.f32.mrb[0].mxu0
        %v2566 = vadd.f32 0.0, %v2565
        %v2567 = vpop.f32.mrb[0].mxu0
        %v2568 = vadd.f32 0.0, %v2567
        %2569 = vmatprep.mubr.f32.mxu0 %v1126
        %2570 = vmatmul.mubr.f32.gmra.mrb[0].mxu0 %v1125
        %v2571 = vpop.f32.mrb[0].mxu0
        %v2572 = vadd.f32 0.0, %v2571
        %v2573 = vpop.f32.mrb[0].mxu0
        %v2574 = vadd.f32 0.0, %v2573
        %2575 = vmatprep.mubr.f32.mxu0 %v1128
        %2576 = vmatmul.mubr.f32.gmra.mrb[0].mxu0 %v1127
        %v2577 = vpop.f32.mrb[0].mxu0
        %v2578 = vadd.f32 0.0, %v2577
        %v2579 = vpop.f32.mrb[0].mxu0
        %v2580 = vadd.f32 0.0, %v2579
        %2581 = vmatprep.mubr.f32.mxu0 %v1130
        %2582 = vmatmul.mubr.f32.gmra.mrb[0].mxu0 %v1129
        %v2583 = vpop.f32.mrb[0].mxu0
        %v2584 = vadd.f32 0.0, %v2583
        %v2585 = vpop.f32.mrb[0].mxu0
        %v2586 = vadd.f32 0.0, %v2585
        %2587 = vmatprep.mubr.f32.mxu0 %v1132
        %2588 = vmatmul.mubr.f32.gmra.mrb[0].mxu0 %v1131
        %v2589 = vpop.f32.mrb[0].mxu0
        %v2590 = vadd.f32 0.0, %v2589
        %v2591 = vpop.f32.mrb[0].mxu0
        %v2592 = vadd.f32 0.0, %v2591
        %2593 = vmatprep.mubr.f32.mxu0 %v1134
        %2594 = vmatmul.mubr.f32.gmra.mrb[0].mxu0 %v1133
        %v2595 = vpop.f32.mrb[0].mxu0
        %v2596 = vadd.f32 0.0, %v2595
        %v2597 = vpop.f32.mrb[0].mxu0
        %v2598 = vadd.f32 0.0, %v2597
        %2599 = vmatprep.mubr.f32.mxu0 %v1136
        %2600 = vmatmul.mubr.f32.gmra.mrb[0].mxu0 %v1135
        %v2601 = vpop.f32.mrb[0].mxu0
        %v2602 = vadd.f32 0.0, %v2601
        %v2603 = vpop.f32.mrb[0].mxu0
        %v2604 = vadd.f32 0.0, %v2603
        %2605 = vmatprep.mubr.f32.mxu0 %v1138
        %2606 = vmatmul.mubr.f32.gmra.mrb[0].mxu0 %v1137
        %v2607 = vpop.f32.mrb[0].mxu0
        %v2608 = vadd.f32 0.0, %v2607
        %v2609 = vpop.f32.mrb[0].mxu0
        %v2610 = vadd.f32 0.0, %v2609
        %2611 = vmatprep.mubr.f32.mxu0 %v1140
        %2612 = vmatmul.mubr.f32.gmra.mrb[0].mxu0 %v1139
        %v2613 = vpop.f32.mrb[0].mxu0
        %v2614 = vadd.f32 0.0, %v2613
        %v2615 = vpop.f32.mrb[0].mxu0
        %v2616 = vadd.f32 0.0, %v2615
        %2617 = vmatprep.mubr.f32.mxu0 %v1142
        %2618 = vmatmul.mubr.f32.gmra.mrb[0].mxu0 %v1141
        %v2619 = vpop.f32.mrb[0].mxu0
        %v2620 = vadd.f32 0.0, %v2619
        %v2621 = vpop.f32.mrb[0].mxu0
        %v2622 = vadd.f32 0.0, %v2621
        %2623 = vmatprep.mubr.f32.mxu0 %v1144
        %2624 = vmatmul.mubr.f32.gmra.mrb[0].mxu0 %v1143
        %v2625 = vpop.f32.mrb[0].mxu0
        %v2626 = vadd.f32 0.0, %v2625
        %v2627 = vpop.f32.mrb[0].mxu0
        %v2628 = vadd.f32 0.0, %v2627
        %2629 = vmatprep.mubr.f32.mxu0 %v1146
        %2630 = vmatmul.mubr.f32.gmra.mrb[0].mxu0 %v1145
        %v2631 = vpop.f32.mrb[0].mxu0
        %v2632 = vadd.f32 0.0, %v2631
        %v2633 = vpop.f32.mrb[0].mxu0
        %v2634 = vadd.f32 0.0, %v2633
        %2635 = vmatprep.mubr.f32.mxu0 %v1148
        %2636 = vmatmul.mubr.f32.gmra.mrb[0].mxu0 %v1147
        %v2637 = vpop.f32.mrb[0].mxu0
        %v2638 = vadd.f32 0.0, %v2637
        %v2639 = vpop.f32.mrb[0].mxu0
        %v2640 = vadd.f32 0.0, %v2639
        %2641 = vmatprep.mubr.f32.mxu0 %v1150
        %2642 = vmatmul.mubr.f32.gmra.mrb[0].mxu0 %v1149
        %v2643 = vpop.f32.mrb[0].mxu0
        %v2644 = vadd.f32 0.0, %v2643
        %v2645 = vpop.f32.mrb[0].mxu0
        %v2646 = vadd.f32 0.0, %v2645
        %2647 = vmatprep.mubr.f32.mxu0 %v1152
        %2648 = vmatmul.mubr.f32.gmra.mrb[0].mxu0 %v1151
        %v2649 = vpop.f32.mrb[0].mxu0
        %v2650 = vadd.f32 0.0, %v2649
        %v2651 = vpop.f32.mrb[0].mxu0
        %v2652 = vadd.f32 0.0, %v2651
        %2653 = vmatprep.mubr.f32.mxu0 %v1154
        %2654 = vmatmul.mubr.f32.gmra.mrb[0].mxu0 %v1153
        %v2655 = vpop.f32.mrb[0].mxu0
        %v2656 = vadd.f32 0.0, %v2655
        %v2657 = vpop.f32.mrb[0].mxu0
        %v2658 = vadd.f32 0.0, %v2657
        %2659 = vmatprep.mubr.f32.mxu0 %v1156
        %2660 = vmatmul.mubr.f32.gmra.mrb[0].mxu0 %v1155
        %v2661 = vpop.f32.mrb[0].mxu0
        %v2662 = vadd.f32 0.0, %v2661
        %v2663 = vpop.f32.mrb[0].mxu0
        %v2664 = vadd.f32 0.0, %v2663
        %2665 = vmatprep.mubr.f32.mxu0 %v1158
        %2666 = vmatmul.mubr.f32.gmra.mrb[0].mxu0 %v1157
        %v2667 = vpop.f32.mrb[0].mxu0
        %v2668 = vadd.f32 0.0, %v2667
        %v2669 = vpop.f32.mrb[0].mxu0
        %v2670 = vadd.f32 0.0, %v2669
        %2671 = vmatprep.mubr.f32.mxu0 %v1160
        %2672 = vmatmul.mubr.f32.gmra.mrb[0].mxu0 %v1159
        %v2673 = vpop.f32.mrb[0].mxu0
        %v2674 = vadd.f32 0.0, %v2673
        %v2675 = vpop.f32.mrb[0].mxu0
        %v2676 = vadd.f32 0.0, %v2675
        %2677 = vmatprep.mubr.f32.mxu0 %v1162
        %2678 = vmatmul.mubr.f32.gmra.mrb[0].mxu0 %v1161
        %v2679 = vpop.f32.mrb[0].mxu0
        %v2680 = vadd.f32 0.0, %v2679
        %v2681 = vpop.f32.mrb[0].mxu0
        %v2682 = vadd.f32 0.0, %v2681
        %2683 = vmatprep.mubr.f32.mxu0 %v1164
        %2684 = vmatmul.mubr.f32.gmra.mrb[0].mxu0 %v1163
        %v2685 = vpop.f32.mrb[0].mxu0
        %v2686 = vadd.f32 0.0, %v2685
        %v2687 = vpop.f32.mrb[0].mxu0
        %v2688 = vadd.f32 0.0, %v2687
        %2689 = vmatprep.mubr.f32.mxu0 %v1166
        %2690 = vmatmul.mubr.f32.gmra.mrb[0].mxu0 %v1165
        %v2691 = vpop.f32.mrb[0].mxu0
        %v2692 = vadd.f32 0.0, %v2691
        %v2693 = vpop.f32.mrb[0].mxu0
        %v2694 = vadd.f32 0.0, %v2693
        %2695 = vmatprep.mubr.f32.mxu0 %v1168
        %2696 = vmatmul.mubr.f32.gmra.mrb[0].mxu0 %v1167
        %v2697 = vpop.f32.mrb[0].mxu0
        %v2698 = vadd.f32 0.0, %v2697
        %v2699 = vpop.f32.mrb[0].mxu0
        %v2700 = vadd.f32 0.0, %v2699
        %2701 = vmatprep.mubr.f32.mxu0 %v1170
        %2702 = vmatmul.mubr.f32.gmra.mrb[0].mxu0 %v1169
        %v2703 = vpop.f32.mrb[0].mxu0
        %v2704 = vadd.f32 0.0, %v2703
        %v2705 = vpop.f32.mrb[0].mxu0
        %v2706 = vadd.f32 0.0, %v2705
        %2707 = vmatprep.mubr.f32.mxu0 %v1172
        %2708 = vmatmul.mubr.f32.gmra.mrb[0].mxu0 %v1171
        %v2709 = vpop.f32.mrb[0].mxu0
        %v2710 = vadd.f32 0.0, %v2709
        %v2711 = vpop.f32.mrb[0].mxu0
        %v2712 = vadd.f32 0.0, %v2711
        %2713 = vmatprep.mubr.f32.mxu0 %v1174
        %2714 = vmatmul.mubr.f32.gmra.mrb[0].mxu0 %v1173
        %v2715 = vpop.f32.mrb[0].mxu0
        %v2716 = vadd.f32 0.0, %v2715
        %v2717 = vpop.f32.mrb[0].mxu0
        %v2718 = vadd.f32 0.0, %v2717
        %2719 = vmatprep.mubr.f32.mxu0 %v1176
        %2720 = vmatmul.mubr.f32.gmra.mrb[0].mxu0 %v1175
        %v2721 = vpop.f32.mrb[0].mxu0
        %v2722 = vadd.f32 0.0, %v2721
        %v2723 = vpop.f32.mrb[0].mxu0
        %v2724 = vadd.f32 0.0, %v2723
        %2725 = vmatprep.mubr.f32.mxu0 %v1178
        %2726 = vmatmul.mubr.f32.gmra.mrb[0].mxu0 %v1177
        %v2727 = vpop.f32.mrb[0].mxu0
        %v2728 = vadd.f32 0.0, %v2727
        %v2729 = vpop.f32.mrb[0].mxu0
        %v2730 = vadd.f32 0.0, %v2729
        %2731 = vmatprep.mubr.f32.mxu0 %v1180
        %2732 = vmatmul.mubr.f32.gmra.mrb[0].mxu0 %v1179
        %v2733 = vpop.f32.mrb[0].mxu0
        %v2734 = vadd.f32 0.0, %v2733
        %v2735 = vpop.f32.mrb[0].mxu0
        %v2736 = vadd.f32 0.0, %v2735
        %2737 = vmatprep.mubr.f32.mxu0 %v1182
        %2738 = vmatmul.mubr.f32.gmra.mrb[0].mxu0 %v1181
        %v2739 = vpop.f32.mrb[0].mxu0
        %v2740 = vadd.f32 0.0, %v2739
        %v2741 = vpop.f32.mrb[0].mxu0
        %v2742 = vadd.f32 0.0, %v2741
        %2743 = vmatprep.mubr.f32.mxu0 %v1184
        %2744 = vmatmul.mubr.f32.gmra.mrb[0].mxu0 %v1183
        %v2745 = vpop.f32.mrb[0].mxu0
        %v2746 = vadd.f32 0.0, %v2745
        %v2747 = vpop.f32.mrb[0].mxu0
        %v2748 = vadd.f32 0.0, %v2747
        %2749 = vmatprep.mubr.f32.mxu0 %v1186
        %2750 = vmatmul.mubr.f32.gmra.mrb[0].mxu0 %v1185
        %v2751 = vpop.f32.mrb[0].mxu0
        %v2752 = vadd.f32 0.0, %v2751
        %v2753 = vpop.f32.mrb[0].mxu0
        %v2754 = vadd.f32 0.0, %v2753
        %2755 = vmatprep.mubr.f32.mxu0 %v1188
        %2756 = vmatmul.mubr.f32.gmra.mrb[0].mxu0 %v1187
        %v2757 = vpop.f32.mrb[0].mxu0
        %v2758 = vadd.f32 0.0, %v2757
        %v2759 = vpop.f32.mrb[0].mxu0
        %v2760 = vadd.f32 0.0, %v2759
        %2761 = vmatprep.mubr.f32.mxu0 %v1190
        %2762 = vmatmul.mubr.f32.gmra.mrb[0].mxu0 %v1189
        %v2763 = vpop.f32.mrb[0].mxu0
        %v2764 = vadd.f32 0.0, %v2763
        %v2765 = vpop.f32.mrb[0].mxu0
        %v2766 = vadd.f32 0.0, %v2765
        %2767 = vmatprep.mubr.f32.mxu0 %v1192
        %2768 = vmatmul.mubr.f32.gmra.mrb[0].mxu0 %v1191
        %v2769 = vpop.f32.mrb[0].mxu0
        %v2770 = vadd.f32 0.0, %v2769
        %v2771 = vpop.f32.mrb[0].mxu0
        %v2772 = vadd.f32 0.0, %v2771
        %2773 = vmatprep.mubr.f32.mxu0 %v1194
        %2774 = vmatmul.mubr.f32.gmra.mrb[0].mxu0 %v1193
        %v2775 = vpop.f32.mrb[0].mxu0
        %v2776 = vadd.f32 0.0, %v2775
        %v2777 = vpop.f32.mrb[0].mxu0
        %v2778 = vadd.f32 0.0, %v2777
        %2779 = vmatprep.mubr.f32.mxu0 %v1196
        %2780 = vmatmul.mubr.f32.gmra.mrb[0].mxu0 %v1195
        %v2781 = vpop.f32.mrb[0].mxu0
        %v2782 = vadd.f32 0.0, %v2781
        %v2783 = vpop.f32.mrb[0].mxu0
        %v2784 = vadd.f32 0.0, %v2783
        %2785 = vmatprep.mubr.f32.mxu0 %v1198
        %2786 = vmatmul.mubr.f32.gmra.mrb[0].mxu0 %v1197
        %v2787 = vpop.f32.mrb[0].mxu0
        %v2788 = vadd.f32 0.0, %v2787
        %v2789 = vpop.f32.mrb[0].mxu0
        %v2790 = vadd.f32 0.0, %v2789
        %2791 = vmatprep.mubr.f32.mxu0 %v1200
        %2792 = vmatmul.mubr.f32.gmra.mrb[0].mxu0 %v1199
        %v2793 = vpop.f32.mrb[0].mxu0
        %v2794 = vadd.f32 0.0, %v2793
        %v2795 = vpop.f32.mrb[0].mxu0
        %v2796 = vadd.f32 0.0, %v2795
        %2797 = vmatprep.mubr.f32.mxu0 %v1202
        %2798 = vmatmul.mubr.f32.gmra.mrb[0].mxu0 %v1201
        %v2799 = vpop.f32.mrb[0].mxu0
        %v2800 = vadd.f32 0.0, %v2799
        %v2801 = vpop.f32.mrb[0].mxu0
        %v2802 = vadd.f32 0.0, %v2801
        %2803 = vdwg.mxu0
        %v2804 = vmax.f32 %v1270, 0.0
        %v2805 = vmax.f32 %v1272, 0.0
        %v2806 = vmax.f32 %v1276, 0.0
        %v2807 = vmax.f32 %v1278, 0.0
        %v2808 = vmax.f32 %v1282, 0.0
        %v2809 = vmax.f32 %v1284, 0.0
        %v2810 = vmax.f32 %v1288, 0.0
        %v2811 = vmax.f32 %v1290, 0.0
        %v2812 = vmax.f32 %v1294, 0.0
        %v2813 = vmax.f32 %v1296, 0.0
        %v2814 = vmax.f32 %v1300, 0.0
        %v2815 = vmax.f32 %v1302, 0.0
        %v2816 = vmax.f32 %v1306, 0.0
        %v2817 = vmax.f32 %v1308, 0.0
        %v2818 = vmax.f32 %v1312, 0.0
        %v2819 = vmax.f32 %v1314, 0.0
        %v2820 = vmax.f32 %v1318, 0.0
        %v2821 = vmax.f32 %v1320, 0.0
        %v2822 = vmax.f32 %v1324, 0.0
        %v2823 = vmax.f32 %v1326, 0.0
        %v2824 = vmax.f32 %v1330, 0.0
        %v2825 = vmax.f32 %v1332, 0.0
        %v2826 = vmax.f32 %v1336, 0.0
        %v2827 = vmax.f32 %v1338, 0.0
        %v2828 = vmax.f32 %v1342, 0.0
        %v2829 = vmax.f32 %v1344, 0.0
        %v2830 = vmax.f32 %v1348, 0.0
        %v2831 = vmax.f32 %v1350, 0.0
        %v2832 = vmax.f32 %v1354, 0.0
        %v2833 = vmax.f32 %v1356, 0.0
        %v2834 = vmax.f32 %v1360, 0.0
        %v2835 = vmax.f32 %v1362, 0.0
        %v2836 = vmax.f32 %v1366, 0.0
        %v2837 = vmax.f32 %v1368, 0.0
        %v2838 = vmax.f32 %v1372, 0.0
        %v2839 = vmax.f32 %v1374, 0.0
        %v2840 = vmax.f32 %v1378, 0.0
        %v2841 = vmax.f32 %v1380, 0.0
        %v2842 = vmax.f32 %v1384, 0.0
        %v2843 = vmax.f32 %v1386, 0.0
        %v2844 = vmax.f32 %v1390, 0.0
        %v2845 = vmax.f32 %v1392, 0.0
        %v2846 = vmax.f32 %v1396, 0.0
        %v2847 = vmax.f32 %v1398, 0.0
        %v2848 = vmax.f32 %v1402, 0.0
        %v2849 = vmax.f32 %v1404, 0.0
        %v2850 = vmax.f32 %v1408, 0.0
        %v2851 = vmax.f32 %v1410, 0.0
        %v2852 = vmax.f32 %v1414, 0.0
        %v2853 = vmax.f32 %v1416, 0.0
        %v2854 = vmax.f32 %v1420, 0.0
        %v2855 = vmax.f32 %v1422, 0.0
        %v2856 = vmax.f32 %v1426, 0.0
        %v2857 = vmax.f32 %v1428, 0.0
        %v2858 = vmax.f32 %v1432, 0.0
        %v2859 = vmax.f32 %v1434, 0.0
        %v2860 = vmax.f32 %v1438, 0.0
        %v2861 = vmax.f32 %v1440, 0.0
        %v2862 = vmax.f32 %v1444, 0.0
        %v2863 = vmax.f32 %v1446, 0.0
        %v2864 = vmax.f32 %v1450, 0.0
        %v2865 = vmax.f32 %v1452, 0.0
        %v2866 = vmax.f32 %v1456, 0.0
        %v2867 = vmax.f32 %v1458, 0.0
        %v2868 = vmax.f32 %v1462, 0.0
        %v2869 = vmax.f32 %v1464, 0.0
        %v2870 = vmax.f32 %v1468, 0.0
        %v2871 = vmax.f32 %v1470, 0.0
        %v2872 = vmax.f32 %v1474, 0.0
        %v2873 = vmax.f32 %v1476, 0.0
        %v2874 = vmax.f32 %v1480, 0.0
        %v2875 = vmax.f32 %v1482, 0.0
        %v2876 = vmax.f32 %v1486, 0.0
        %v2877 = vmax.f32 %v1488, 0.0
        %v2878 = vmax.f32 %v1492, 0.0
        %v2879 = vmax.f32 %v1494, 0.0
        %v2880 = vmax.f32 %v1498, 0.0
        %v2881 = vmax.f32 %v1500, 0.0
        %v2882 = vmax.f32 %v1504, 0.0
        %v2883 = vmax.f32 %v1506, 0.0
        %v2884 = vmax.f32 %v1510, 0.0
        %v2885 = vmax.f32 %v1512, 0.0
        %v2886 = vmax.f32 %v1516, 0.0
        %v2887 = vmax.f32 %v1518, 0.0
        %v2888 = vmax.f32 %v1522, 0.0
        %v2889 = vmax.f32 %v1524, 0.0
        %v2890 = vmax.f32 %v1528, 0.0
        %v2891 = vmax.f32 %v1530, 0.0
        %v2892 = vmax.f32 %v1534, 0.0
        %v2893 = vmax.f32 %v1536, 0.0
        %v2894 = vmax.f32 %v1540, 0.0
        %v2895 = vmax.f32 %v1542, 0.0
        %v2896 = vmax.f32 %v1546, 0.0
        %v2897 = vmax.f32 %v1548, 0.0
        %v2898 = vmax.f32 %v1552, 0.0
        %v2899 = vmax.f32 %v1554, 0.0
        %v2900 = vmax.f32 %v1558, 0.0
        %v2901 = vmax.f32 %v1560, 0.0
        %v2902 = vmax.f32 %v1564, 0.0
        %v2903 = vmax.f32 %v1566, 0.0
        %v2904 = vmax.f32 %v1570, 0.0
        %v2905 = vmax.f32 %v1572, 0.0
        %v2906 = vmax.f32 %v1576, 0.0
        %v2907 = vmax.f32 %v1578, 0.0
        %v2908 = vmax.f32 %v1582, 0.0
        %v2909 = vmax.f32 %v1584, 0.0
        %v2910 = vmax.f32 %v1588, 0.0
        %v2911 = vmax.f32 %v1590, 0.0
        %v2912 = vmax.f32 %v1594, 0.0
        %v2913 = vmax.f32 %v1596, 0.0
        %v2914 = vmax.f32 %v1600, 0.0
        %v2915 = vmax.f32 %v1602, 0.0
        %v2916 = vmax.f32 %v1606, 0.0
        %v2917 = vmax.f32 %v1608, 0.0
        %v2918 = vmax.f32 %v1612, 0.0
        %v2919 = vmax.f32 %v1614, 0.0
        %v2920 = vmax.f32 %v1618, 0.0
        %v2921 = vmax.f32 %v1620, 0.0
        %v2922 = vmax.f32 %v1624, 0.0
        %v2923 = vmax.f32 %v1626, 0.0
        %v2924 = vmax.f32 %v1630, 0.0
        %v2925 = vmax.f32 %v1632, 0.0
        %v2926 = vmax.f32 %v1636, 0.0
        %v2927 = vmax.f32 %v1638, 0.0
        %v2928 = vmax.f32 %v1642, 0.0
        %v2929 = vmax.f32 %v1644, 0.0
        %v2930 = vmax.f32 %v1648, 0.0
        %v2931 = vmax.f32 %v1650, 0.0
        %v2932 = vmax.f32 %v1654, 0.0
        %v2933 = vmax.f32 %v1656, 0.0
        %v2934 = vmax.f32 %v1660, 0.0
        %v2935 = vmax.f32 %v1662, 0.0
        %v2936 = vmax.f32 %v1666, 0.0
        %v2937 = vmax.f32 %v1668, 0.0
        %v2938 = vmax.f32 %v1672, 0.0
        %v2939 = vmax.f32 %v1674, 0.0
        %v2940 = vmax.f32 %v1678, 0.0
        %v2941 = vmax.f32 %v1680, 0.0
        %v2942 = vmax.f32 %v1684, 0.0
        %v2943 = vmax.f32 %v1686, 0.0
        %v2944 = vmax.f32 %v1690, 0.0
        %v2945 = vmax.f32 %v1692, 0.0
        %v2946 = vmax.f32 %v1696, 0.0
        %v2947 = vmax.f32 %v1698, 0.0
        %v2948 = vmax.f32 %v1702, 0.0
        %v2949 = vmax.f32 %v1704, 0.0
        %v2950 = vmax.f32 %v1708, 0.0
        %v2951 = vmax.f32 %v1710, 0.0
        %v2952 = vmax.f32 %v1714, 0.0
        %v2953 = vmax.f32 %v1716, 0.0
        %v2954 = vmax.f32 %v1720, 0.0
        %v2955 = vmax.f32 %v1722, 0.0
        %v2956 = vmax.f32 %v1726, 0.0
        %v2957 = vmax.f32 %v1728, 0.0
        %v2958 = vmax.f32 %v1732, 0.0
        %v2959 = vmax.f32 %v1734, 0.0
        %v2960 = vmax.f32 %v1738, 0.0
        %v2961 = vmax.f32 %v1740, 0.0
        %v2962 = vmax.f32 %v1744, 0.0
        %v2963 = vmax.f32 %v1746, 0.0
        %v2964 = vmax.f32 %v1750, 0.0
        %v2965 = vmax.f32 %v1752, 0.0
        %v2966 = vmax.f32 %v1756, 0.0
        %v2967 = vmax.f32 %v1758, 0.0
        %v2968 = vmax.f32 %v1762, 0.0
        %v2969 = vmax.f32 %v1764, 0.0
        %v2970 = vmax.f32 %v1768, 0.0
        %v2971 = vmax.f32 %v1770, 0.0
        %v2972 = vmax.f32 %v1774, 0.0
        %v2973 = vmax.f32 %v1776, 0.0
        %v2974 = vmax.f32 %v1780, 0.0
        %v2975 = vmax.f32 %v1782, 0.0
        %v2976 = vmax.f32 %v1786, 0.0
        %v2977 = vmax.f32 %v1788, 0.0
        %v2978 = vmax.f32 %v1792, 0.0
        %v2979 = vmax.f32 %v1794, 0.0
        %v2980 = vmax.f32 %v1798, 0.0
        %v2981 = vmax.f32 %v1800, 0.0
        %v2982 = vmax.f32 %v1804, 0.0
        %v2983 = vmax.f32 %v1806, 0.0
        %v2984 = vmax.f32 %v1810, 0.0
        %v2985 = vmax.f32 %v1812, 0.0
        %v2986 = vmax.f32 %v1816, 0.0
        %v2987 = vmax.f32 %v1818, 0.0
        %v2988 = vmax.f32 %v1822, 0.0
        %v2989 = vmax.f32 %v1824, 0.0
        %v2990 = vmax.f32 %v1828, 0.0
        %v2991 = vmax.f32 %v1830, 0.0
        %v2992 = vmax.f32 %v1834, 0.0
        %v2993 = vmax.f32 %v1836, 0.0
        %v2994 = vmax.f32 %v1840, 0.0
        %v2995 = vmax.f32 %v1842, 0.0
        %v2996 = vmax.f32 %v1846, 0.0
        %v2997 = vmax.f32 %v1848, 0.0
        %v2998 = vmax.f32 %v1852, 0.0
        %v2999 = vmax.f32 %v1854, 0.0
        %v3000 = vmax.f32 %v1858, 0.0
        %v3001 = vmax.f32 %v1860, 0.0
        %v3002 = vmax.f32 %v1864, 0.0
        %v3003 = vmax.f32 %v1866, 0.0
        %v3004 = vmax.f32 %v1870, 0.0
        %v3005 = vmax.f32 %v1872, 0.0
        %v3006 = vmax.f32 %v1876, 0.0
        %v3007 = vmax.f32 %v1878, 0.0
        %v3008 = vmax.f32 %v1882, 0.0
        %v3009 = vmax.f32 %v1884, 0.0
        %v3010 = vmax.f32 %v1888, 0.0
        %v3011 = vmax.f32 %v1890, 0.0
        %v3012 = vmax.f32 %v1894, 0.0
        %v3013 = vmax.f32 %v1896, 0.0
        %v3014 = vmax.f32 %v1900, 0.0
        %v3015 = vmax.f32 %v1902, 0.0
        %v3016 = vmax.f32 %v1906, 0.0
        %v3017 = vmax.f32 %v1908, 0.0
        %v3018 = vmax.f32 %v1912, 0.0
        %v3019 = vmax.f32 %v1914, 0.0
        %v3020 = vmax.f32 %v1918, 0.0
        %v3021 = vmax.f32 %v1920, 0.0
        %v3022 = vmax.f32 %v1924, 0.0
        %v3023 = vmax.f32 %v1926, 0.0
        %v3024 = vmax.f32 %v1930, 0.0
        %v3025 = vmax.f32 %v1932, 0.0
        %v3026 = vmax.f32 %v1936, 0.0
        %v3027 = vmax.f32 %v1938, 0.0
        %v3028 = vmax.f32 %v1942, 0.0
        %v3029 = vmax.f32 %v1944, 0.0
        %v3030 = vmax.f32 %v1948, 0.0
        %v3031 = vmax.f32 %v1950, 0.0
        %v3032 = vmax.f32 %v1954, 0.0
        %v3033 = vmax.f32 %v1956, 0.0
        %v3034 = vmax.f32 %v1960, 0.0
        %v3035 = vmax.f32 %v1962, 0.0
        %v3036 = vmax.f32 %v1966, 0.0
        %v3037 = vmax.f32 %v1968, 0.0
        %v3038 = vmax.f32 %v1972, 0.0
        %v3039 = vmax.f32 %v1974, 0.0
        %v3040 = vmax.f32 %v1978, 0.0
        %v3041 = vmax.f32 %v1980, 0.0
        %v3042 = vmax.f32 %v1984, 0.0
        %v3043 = vmax.f32 %v1986, 0.0
        %v3044 = vmax.f32 %v1990, 0.0
        %v3045 = vmax.f32 %v1992, 0.0
        %v3046 = vmax.f32 %v1996, 0.0
        %v3047 = vmax.f32 %v1998, 0.0
        %v3048 = vmax.f32 %v2002, 0.0
        %v3049 = vmax.f32 %v2004, 0.0
        %v3050 = vmax.f32 %v2008, 0.0
        %v3051 = vmax.f32 %v2010, 0.0
        %v3052 = vmax.f32 %v2014, 0.0
        %v3053 = vmax.f32 %v2016, 0.0
        %v3054 = vmax.f32 %v2020, 0.0
        %v3055 = vmax.f32 %v2022, 0.0
        %v3056 = vmax.f32 %v2026, 0.0
        %v3057 = vmax.f32 %v2028, 0.0
        %v3058 = vmax.f32 %v2032, 0.0
        %v3059 = vmax.f32 %v2034, 0.0
        %v3060 = vmax.f32 %v2038, 0.0
        %v3061 = vmax.f32 %v2040, 0.0
        %v3062 = vmax.f32 %v2044, 0.0
        %v3063 = vmax.f32 %v2046, 0.0
        %v3064 = vmax.f32 %v2050, 0.0
        %v3065 = vmax.f32 %v2052, 0.0
        %v3066 = vmax.f32 %v2056, 0.0
        %v3067 = vmax.f32 %v2058, 0.0
        %v3068 = vmax.f32 %v2062, 0.0
        %v3069 = vmax.f32 %v2064, 0.0
        %v3070 = vmax.f32 %v2068, 0.0
        %v3071 = vmax.f32 %v2070, 0.0
        %v3072 = vmax.f32 %v2074, 0.0
        %v3073 = vmax.f32 %v2076, 0.0
        %v3074 = vmax.f32 %v2080, 0.0
        %v3075 = vmax.f32 %v2082, 0.0
        %v3076 = vmax.f32 %v2086, 0.0
        %v3077 = vmax.f32 %v2088, 0.0
        %v3078 = vmax.f32 %v2092, 0.0
        %v3079 = vmax.f32 %v2094, 0.0
        %v3080 = vmax.f32 %v2098, 0.0
        %v3081 = vmax.f32 %v2100, 0.0
        %v3082 = vmax.f32 %v2104, 0.0
        %v3083 = vmax.f32 %v2106, 0.0
        %v3084 = vmax.f32 %v2110, 0.0
        %v3085 = vmax.f32 %v2112, 0.0
        %v3086 = vmax.f32 %v2116, 0.0
        %v3087 = vmax.f32 %v2118, 0.0
        %v3088 = vmax.f32 %v2122, 0.0
        %v3089 = vmax.f32 %v2124, 0.0
        %v3090 = vmax.f32 %v2128, 0.0
        %v3091 = vmax.f32 %v2130, 0.0
        %v3092 = vmax.f32 %v2134, 0.0
        %v3093 = vmax.f32 %v2136, 0.0
        %v3094 = vmax.f32 %v2140, 0.0
        %v3095 = vmax.f32 %v2142, 0.0
        %v3096 = vmax.f32 %v2146, 0.0
        %v3097 = vmax.f32 %v2148, 0.0
        %v3098 = vmax.f32 %v2152, 0.0
        %v3099 = vmax.f32 %v2154, 0.0
        %v3100 = vmax.f32 %v2158, 0.0
        %v3101 = vmax.f32 %v2160, 0.0
        %v3102 = vmax.f32 %v2164, 0.0
        %v3103 = vmax.f32 %v2166, 0.0
        %v3104 = vmax.f32 %v2170, 0.0
        %v3105 = vmax.f32 %v2172, 0.0
        %v3106 = vmax.f32 %v2176, 0.0
        %v3107 = vmax.f32 %v2178, 0.0
        %v3108 = vmax.f32 %v2182, 0.0
        %v3109 = vmax.f32 %v2184, 0.0
        %v3110 = vmax.f32 %v2188, 0.0
        %v3111 = vmax.f32 %v2190, 0.0
        %v3112 = vmax.f32 %v2194, 0.0
        %v3113 = vmax.f32 %v2196, 0.0
        %v3114 = vmax.f32 %v2200, 0.0
        %v3115 = vmax.f32 %v2202, 0.0
        %v3116 = vmax.f32 %v2206, 0.0
        %v3117 = vmax.f32 %v2208, 0.0
        %v3118 = vmax.f32 %v2212, 0.0
        %v3119 = vmax.f32 %v2214, 0.0
        %v3120 = vmax.f32 %v2218, 0.0
        %v3121 = vmax.f32 %v2220, 0.0
        %v3122 = vmax.f32 %v2224, 0.0
        %v3123 = vmax.f32 %v2226, 0.0
        %v3124 = vmax.f32 %v2230, 0.0
        %v3125 = vmax.f32 %v2232, 0.0
        %v3126 = vmax.f32 %v2236, 0.0
        %v3127 = vmax.f32 %v2238, 0.0
        %v3128 = vmax.f32 %v2242, 0.0
        %v3129 = vmax.f32 %v2244, 0.0
        %v3130 = vmax.f32 %v2248, 0.0
        %v3131 = vmax.f32 %v2250, 0.0
        %v3132 = vmax.f32 %v2254, 0.0
        %v3133 = vmax.f32 %v2256, 0.0
        %v3134 = vmax.f32 %v2260, 0.0
        %v3135 = vmax.f32 %v2262, 0.0
        %v3136 = vmax.f32 %v2266, 0.0
        %v3137 = vmax.f32 %v2268, 0.0
        %v3138 = vmax.f32 %v2272, 0.0
        %v3139 = vmax.f32 %v2274, 0.0
        %v3140 = vmax.f32 %v2278, 0.0
        %v3141 = vmax.f32 %v2280, 0.0
        %v3142 = vmax.f32 %v2284, 0.0
        %v3143 = vmax.f32 %v2286, 0.0
        %v3144 = vmax.f32 %v2290, 0.0
        %v3145 = vmax.f32 %v2292, 0.0
        %v3146 = vmax.f32 %v2296, 0.0
        %v3147 = vmax.f32 %v2298, 0.0
        %v3148 = vmax.f32 %v2302, 0.0
        %v3149 = vmax.f32 %v2304, 0.0
        %v3150 = vmax.f32 %v2308, 0.0
        %v3151 = vmax.f32 %v2310, 0.0
        %v3152 = vmax.f32 %v2314, 0.0
        %v3153 = vmax.f32 %v2316, 0.0
        %v3154 = vmax.f32 %v2320, 0.0
        %v3155 = vmax.f32 %v2322, 0.0
        %v3156 = vmax.f32 %v2326, 0.0
        %v3157 = vmax.f32 %v2328, 0.0
        %v3158 = vmax.f32 %v2332, 0.0
        %v3159 = vmax.f32 %v2334, 0.0
        %v3160 = vmax.f32 %v2338, 0.0
        %v3161 = vmax.f32 %v2340, 0.0
        %v3162 = vmax.f32 %v2344, 0.0
        %v3163 = vmax.f32 %v2346, 0.0
        %v3164 = vmax.f32 %v2350, 0.0
        %v3165 = vmax.f32 %v2352, 0.0
        %v3166 = vmax.f32 %v2356, 0.0
        %v3167 = vmax.f32 %v2358, 0.0
        %v3168 = vmax.f32 %v2362, 0.0
        %v3169 = vmax.f32 %v2364, 0.0
        %v3170 = vmax.f32 %v2368, 0.0
        %v3171 = vmax.f32 %v2370, 0.0
        %v3172 = vmax.f32 %v2374, 0.0
        %v3173 = vmax.f32 %v2376, 0.0
        %v3174 = vmax.f32 %v2380, 0.0
        %v3175 = vmax.f32 %v2382, 0.0
        %v3176 = vmax.f32 %v2386, 0.0
        %v3177 = vmax.f32 %v2388, 0.0
        %v3178 = vmax.f32 %v2392, 0.0
        %v3179 = vmax.f32 %v2394, 0.0
        %v3180 = vmax.f32 %v2398, 0.0
        %v3181 = vmax.f32 %v2400, 0.0
        %v3182 = vmax.f32 %v2404, 0.0
        %v3183 = vmax.f32 %v2406, 0.0
        %v3184 = vmax.f32 %v2410, 0.0
        %v3185 = vmax.f32 %v2412, 0.0
        %v3186 = vmax.f32 %v2416, 0.0
        %v3187 = vmax.f32 %v2418, 0.0
        %v3188 = vmax.f32 %v2422, 0.0
        %v3189 = vmax.f32 %v2424, 0.0
        %v3190 = vmax.f32 %v2428, 0.0
        %v3191 = vmax.f32 %v2430, 0.0
        %v3192 = vmax.f32 %v2434, 0.0
        %v3193 = vmax.f32 %v2436, 0.0
        %v3194 = vmax.f32 %v2440, 0.0
        %v3195 = vmax.f32 %v2442, 0.0
        %v3196 = vmax.f32 %v2446, 0.0
        %v3197 = vmax.f32 %v2448, 0.0
        %v3198 = vmax.f32 %v2452, 0.0
        %v3199 = vmax.f32 %v2454, 0.0
        %v3200 = vmax.f32 %v2458, 0.0
        %v3201 = vmax.f32 %v2460, 0.0
        %v3202 = vmax.f32 %v2464, 0.0
        %v3203 = vmax.f32 %v2466, 0.0
        %v3204 = vmax.f32 %v2470, 0.0
        %v3205 = vmax.f32 %v2472, 0.0
        %v3206 = vmax.f32 %v2476, 0.0
        %v3207 = vmax.f32 %v2478, 0.0
        %v3208 = vmax.f32 %v2482, 0.0
        %v3209 = vmax.f32 %v2484, 0.0
        %v3210 = vmax.f32 %v2488, 0.0
        %v3211 = vmax.f32 %v2490, 0.0
        %v3212 = vmax.f32 %v2494, 0.0
        %v3213 = vmax.f32 %v2496, 0.0
        %v3214 = vmax.f32 %v2500, 0.0
        %v3215 = vmax.f32 %v2502, 0.0
        %v3216 = vmax.f32 %v2506, 0.0
        %v3217 = vmax.f32 %v2508, 0.0
        %v3218 = vmax.f32 %v2512, 0.0
        %v3219 = vmax.f32 %v2514, 0.0
        %v3220 = vmax.f32 %v2518, 0.0
        %v3221 = vmax.f32 %v2520, 0.0
        %v3222 = vmax.f32 %v2524, 0.0
        %v3223 = vmax.f32 %v2526, 0.0
        %v3224 = vmax.f32 %v2530, 0.0
        %v3225 = vmax.f32 %v2532, 0.0
        %v3226 = vmax.f32 %v2536, 0.0
        %v3227 = vmax.f32 %v2538, 0.0
        %v3228 = vmax.f32 %v2542, 0.0
        %v3229 = vmax.f32 %v2544, 0.0
        %v3230 = vmax.f32 %v2548, 0.0
        %v3231 = vmax.f32 %v2550, 0.0
        %v3232 = vmax.f32 %v2554, 0.0
        %v3233 = vmax.f32 %v2556, 0.0
        %v3234 = vmax.f32 %v2560, 0.0
        %v3235 = vmax.f32 %v2562, 0.0
        %v3236 = vmax.f32 %v2566, 0.0
        %v3237 = vmax.f32 %v2568, 0.0
        %v3238 = vmax.f32 %v2572, 0.0
        %v3239 = vmax.f32 %v2574, 0.0
        %v3240 = vmax.f32 %v2578, 0.0
        %v3241 = vmax.f32 %v2580, 0.0
        %v3242 = vmax.f32 %v2584, 0.0
        %v3243 = vmax.f32 %v2586, 0.0
        %v3244 = vmax.f32 %v2590, 0.0
        %v3245 = vmax.f32 %v2592, 0.0
        %v3246 = vmax.f32 %v2596, 0.0
        %v3247 = vmax.f32 %v2598, 0.0
        %v3248 = vmax.f32 %v2602, 0.0
        %v3249 = vmax.f32 %v2604, 0.0
        %v3250 = vmax.f32 %v2608, 0.0
        %v3251 = vmax.f32 %v2610, 0.0
        %v3252 = vmax.f32 %v2614, 0.0
        %v3253 = vmax.f32 %v2616, 0.0
        %v3254 = vmax.f32 %v2620, 0.0
        %v3255 = vmax.f32 %v2622, 0.0
        %v3256 = vmax.f32 %v2626, 0.0
        %v3257 = vmax.f32 %v2628, 0.0
        %v3258 = vmax.f32 %v2632, 0.0
        %v3259 = vmax.f32 %v2634, 0.0
        %v3260 = vmax.f32 %v2638, 0.0
        %v3261 = vmax.f32 %v2640, 0.0
        %v3262 = vmax.f32 %v2644, 0.0
        %v3263 = vmax.f32 %v2646, 0.0
        %v3264 = vmax.f32 %v2650, 0.0
        %v3265 = vmax.f32 %v2652, 0.0
        %v3266 = vmax.f32 %v2656, 0.0
        %v3267 = vmax.f32 %v2658, 0.0
        %v3268 = vmax.f32 %v2662, 0.0
        %v3269 = vmax.f32 %v2664, 0.0
        %v3270 = vmax.f32 %v2668, 0.0
        %v3271 = vmax.f32 %v2670, 0.0
        %v3272 = vmax.f32 %v2674, 0.0
        %v3273 = vmax.f32 %v2676, 0.0
        %v3274 = vmax.f32 %v2680, 0.0
        %v3275 = vmax.f32 %v2682, 0.0
        %v3276 = vmax.f32 %v2686, 0.0
        %v3277 = vmax.f32 %v2688, 0.0
        %v3278 = vmax.f32 %v2692, 0.0
        %v3279 = vmax.f32 %v2694, 0.0
        %v3280 = vmax.f32 %v2698, 0.0
        %v3281 = vmax.f32 %v2700, 0.0
        %v3282 = vmax.f32 %v2704, 0.0
        %v3283 = vmax.f32 %v2706, 0.0
        %v3284 = vmax.f32 %v2710, 0.0
        %v3285 = vmax.f32 %v2712, 0.0
        %v3286 = vmax.f32 %v2716, 0.0
        %v3287 = vmax.f32 %v2718, 0.0
        %v3288 = vmax.f32 %v2722, 0.0
        %v3289 = vmax.f32 %v2724, 0.0
        %v3290 = vmax.f32 %v2728, 0.0
        %v3291 = vmax.f32 %v2730, 0.0
        %v3292 = vmax.f32 %v2734, 0.0
        %v3293 = vmax.f32 %v2736, 0.0
        %v3294 = vmax.f32 %v2740, 0.0
        %v3295 = vmax.f32 %v2742, 0.0
        %v3296 = vmax.f32 %v2746, 0.0
        %v3297 = vmax.f32 %v2748, 0.0
        %v3298 = vmax.f32 %v2752, 0.0
        %v3299 = vmax.f32 %v2754, 0.0
        %v3300 = vmax.f32 %v2758, 0.0
        %v3301 = vmax.f32 %v2760, 0.0
        %v3302 = vmax.f32 %v2764, 0.0
        %v3303 = vmax.f32 %v2766, 0.0
        %v3304 = vmax.f32 %v2770, 0.0
        %v3305 = vmax.f32 %v2772, 0.0
        %v3306 = vmax.f32 %v2776, 0.0
        %v3307 = vmax.f32 %v2778, 0.0
        %v3308 = vmax.f32 %v2782, 0.0
        %v3309 = vmax.f32 %v2784, 0.0
        %v3310 = vmax.f32 %v2788, 0.0
        %v3311 = vmax.f32 %v2790, 0.0
        %v3312 = vmax.f32 %v2794, 0.0
        %v3313 = vmax.f32 %v2796, 0.0
        %v3314 = vmax.f32 %v2800, 0.0
        %v3315 = vmax.f32 %v2802, 0.0
        %v3316 = vld [vmem:[#allocation8] sm:$0xff]
        %v3317 = vld [vmem:[#allocation8 + $0x8] sm:$0xff]
        %v3318 = vld [vmem:[#allocation8 + $0x10] sm:$0xff]
        %v3319 = vld [vmem:[#allocation8 + $0x18] sm:$0xff]
        %v3320 = vld [vmem:[#allocation8 + $0x20] sm:$0xff]
        %v3321 = vld [vmem:[#allocation8 + $0x28] sm:$0xff]
        %v3322 = vld [vmem:[#allocation8 + $0x30] sm:$0xff]
        %v3323 = vld [vmem:[#allocation8 + $0x38] sm:$0xff]
        %v3324 = vld [vmem:[#allocation8 + $0x40] sm:$0xff]
        %v3325 = vld [vmem:[#allocation8 + $0x48] sm:$0xff]
        %v3326 = vld [vmem:[#allocation8 + $0x50] sm:$0xff]
        %v3327 = vld [vmem:[#allocation8 + $0x58] sm:$0xff]
        %v3328 = vld [vmem:[#allocation8 + $0x60] sm:$0xff]
        %v3329 = vld [vmem:[#allocation8 + $0x68] sm:$0xff]
        %v3330 = vld [vmem:[#allocation8 + $0x70] sm:$0xff]
        %v3331 = vld [vmem:[#allocation8 + $0x78] sm:$0xff]
        %v3332 = vld [vmem:[#allocation8 + $0x80] sm:$0xff]
        %v3333 = vld [vmem:[#allocation8 + $0x88] sm:$0xff]
        %v3334 = vld [vmem:[#allocation8 + $0x90] sm:$0xff]
        %v3335 = vld [vmem:[#allocation8 + $0x98] sm:$0xff]
        %v3336 = vld [vmem:[#allocation8 + $0xa0] sm:$0xff]
        %v3337 = vld [vmem:[#allocation8 + $0xa8] sm:$0xff]
        %v3338 = vld [vmem:[#allocation8 + $0xb0] sm:$0xff]
        %v3339 = vld [vmem:[#allocation8 + $0xb8] sm:$0xff]
        %v3340 = vld [vmem:[#allocation8 + $0xc0] sm:$0xff]
        %v3341 = vld [vmem:[#allocation8 + $0xc8] sm:$0xff]
        %v3342 = vld [vmem:[#allocation8 + $0xd0] sm:$0xff]
        %v3343 = vld [vmem:[#allocation8 + $0xd8] sm:$0xff]
        %v3344 = vld [vmem:[#allocation8 + $0xe0] sm:$0xff]
        %v3345 = vld [vmem:[#allocation8 + $0xe8] sm:$0xff]
        %v3346 = vld [vmem:[#allocation8 + $0xf0] sm:$0xff]
        %v3347 = vld [vmem:[#allocation8 + $0xf8] sm:$0xff]
        %v3348 = vld [vmem:[#allocation8 + $0x100] sm:$0xff]
        %v3349 = vld [vmem:[#allocation8 + $0x108] sm:$0xff]
        %v3350 = vld [vmem:[#allocation8 + $0x110] sm:$0xff]
        %v3351 = vld [vmem:[#allocation8 + $0x118] sm:$0xff]
        %v3352 = vld [vmem:[#allocation8 + $0x120] sm:$0xff]
        %v3353 = vld [vmem:[#allocation8 + $0x128] sm:$0xff]
        %v3354 = vld [vmem:[#allocation8 + $0x130] sm:$0xff]
        %v3355 = vld [vmem:[#allocation8 + $0x138] sm:$0xff]
        %v3356 = vld [vmem:[#allocation8 + $0x140] sm:$0xff]
        %v3357 = vld [vmem:[#allocation8 + $0x148] sm:$0xff]
        %v3358 = vld [vmem:[#allocation8 + $0x150] sm:$0xff]
        %v3359 = vld [vmem:[#allocation8 + $0x158] sm:$0xff]
        %v3360 = vld [vmem:[#allocation8 + $0x160] sm:$0xff]
        %v3361 = vld [vmem:[#allocation8 + $0x168] sm:$0xff]
        %v3362 = vld [vmem:[#allocation8 + $0x170] sm:$0xff]
        %v3363 = vld [vmem:[#allocation8 + $0x178] sm:$0xff]
        %v3364 = vld [vmem:[#allocation8 + $0x180] sm:$0xff]
        %v3365 = vld [vmem:[#allocation8 + $0x188] sm:$0xff]
        %v3366 = vld [vmem:[#allocation8 + $0x190] sm:$0xff]
        %v3367 = vld [vmem:[#allocation8 + $0x198] sm:$0xff]
        %v3368 = vld [vmem:[#allocation8 + $0x1a0] sm:$0xff]
        %v3369 = vld [vmem:[#allocation8 + $0x1a8] sm:$0xff]
        %v3370 = vld [vmem:[#allocation8 + $0x1b0] sm:$0xff]
        %v3371 = vld [vmem:[#allocation8 + $0x1b8] sm:$0xff]
        %v3372 = vld [vmem:[#allocation8 + $0x1c0] sm:$0xff]
        %v3373 = vld [vmem:[#allocation8 + $0x1c8] sm:$0xff]
        %v3374 = vld [vmem:[#allocation8 + $0x1d0] sm:$0xff]
        %v3375 = vld [vmem:[#allocation8 + $0x1d8] sm:$0xff]
        %v3376 = vld [vmem:[#allocation8 + $0x1e0] sm:$0xff]
        %v3377 = vld [vmem:[#allocation8 + $0x1e8] sm:$0xff]
        %v3378 = vld [vmem:[#allocation8 + $0x1f0] sm:$0xff]
        %v3379 = vld [vmem:[#allocation8 + $0x1f8] sm:$0xff]
        %v3380 = vld [vmem:[#allocation8 + $0x200] sm:$0xff]
        %v3381 = vld [vmem:[#allocation8 + $0x208] sm:$0xff]
        %v3382 = vld [vmem:[#allocation8 + $0x210] sm:$0xff]
        %v3383 = vld [vmem:[#allocation8 + $0x218] sm:$0xff]
        %v3384 = vld [vmem:[#allocation8 + $0x220] sm:$0xff]
        %v3385 = vld [vmem:[#allocation8 + $0x228] sm:$0xff]
        %v3386 = vld [vmem:[#allocation8 + $0x230] sm:$0xff]
        %v3387 = vld [vmem:[#allocation8 + $0x238] sm:$0xff]
        %v3388 = vld [vmem:[#allocation8 + $0x240] sm:$0xff]
        %v3389 = vld [vmem:[#allocation8 + $0x248] sm:$0xff]
        %v3390 = vld [vmem:[#allocation8 + $0x250] sm:$0xff]
        %v3391 = vld [vmem:[#allocation8 + $0x258] sm:$0xff]
        %v3392 = vld [vmem:[#allocation8 + $0x260] sm:$0xff]
        %v3393 = vld [vmem:[#allocation8 + $0x268] sm:$0xff]
        %v3394 = vld [vmem:[#allocation8 + $0x270] sm:$0xff]
        %v3395 = vld [vmem:[#allocation8 + $0x278] sm:$0xff]
        %v3396 = vld [vmem:[#allocation8 + $0x280] sm:$0xff]
        %v3397 = vld [vmem:[#allocation8 + $0x288] sm:$0xff]
        %v3398 = vld [vmem:[#allocation8 + $0x290] sm:$0xff]
        %v3399 = vld [vmem:[#allocation8 + $0x298] sm:$0xff]
        %v3400 = vld [vmem:[#allocation8 + $0x2a0] sm:$0xff]
        %v3401 = vld [vmem:[#allocation8 + $0x2a8] sm:$0xff]
        %v3402 = vld [vmem:[#allocation8 + $0x2b0] sm:$0xff]
        %v3403 = vld [vmem:[#allocation8 + $0x2b8] sm:$0xff]
        %v3404 = vld [vmem:[#allocation8 + $0x2c0] sm:$0xff]
        %v3405 = vld [vmem:[#allocation8 + $0x2c8] sm:$0xff]
        %v3406 = vld [vmem:[#allocation8 + $0x2d0] sm:$0xff]
        %v3407 = vld [vmem:[#allocation8 + $0x2d8] sm:$0xff]
        %v3408 = vld [vmem:[#allocation8 + $0x2e0] sm:$0xff]
        %v3409 = vld [vmem:[#allocation8 + $0x2e8] sm:$0xff]
        %v3410 = vld [vmem:[#allocation8 + $0x2f0] sm:$0xff]
        %v3411 = vld [vmem:[#allocation8 + $0x2f8] sm:$0xff]
        %v3412 = vld [vmem:[#allocation8 + $0x300] sm:$0xff]
        %v3413 = vld [vmem:[#allocation8 + $0x308] sm:$0xff]
        %v3414 = vld [vmem:[#allocation8 + $0x310] sm:$0xff]
        %v3415 = vld [vmem:[#allocation8 + $0x318] sm:$0xff]
        %v3416 = vld [vmem:[#allocation8 + $0x320] sm:$0xff]
        %v3417 = vld [vmem:[#allocation8 + $0x328] sm:$0xff]
        %v3418 = vld [vmem:[#allocation8 + $0x330] sm:$0xff]
        %v3419 = vld [vmem:[#allocation8 + $0x338] sm:$0xff]
        %v3420 = vld [vmem:[#allocation8 + $0x340] sm:$0xff]
        %v3421 = vld [vmem:[#allocation8 + $0x348] sm:$0xff]
        %v3422 = vld [vmem:[#allocation8 + $0x350] sm:$0xff]
        %v3423 = vld [vmem:[#allocation8 + $0x358] sm:$0xff]
        %v3424 = vld [vmem:[#allocation8 + $0x360] sm:$0xff]
        %v3425 = vld [vmem:[#allocation8 + $0x368] sm:$0xff]
        %v3426 = vld [vmem:[#allocation8 + $0x370] sm:$0xff]
        %v3427 = vld [vmem:[#allocation8 + $0x378] sm:$0xff]
        %v3428 = vld [vmem:[#allocation8 + $0x380] sm:$0xff]
        %v3429 = vld [vmem:[#allocation8 + $0x388] sm:$0xff]
        %v3430 = vld [vmem:[#allocation8 + $0x390] sm:$0xff]
        %v3431 = vld [vmem:[#allocation8 + $0x398] sm:$0xff]
        %v3432 = vld [vmem:[#allocation8 + $0x3a0] sm:$0xff]
        %v3433 = vld [vmem:[#allocation8 + $0x3a8] sm:$0xff]
        %v3434 = vld [vmem:[#allocation8 + $0x3b0] sm:$0xff]
        %v3435 = vld [vmem:[#allocation8 + $0x3b8] sm:$0xff]
        %v3436 = vld [vmem:[#allocation8 + $0x3c0] sm:$0xff]
        %v3437 = vld [vmem:[#allocation8 + $0x3c8] sm:$0xff]
        %v3438 = vld [vmem:[#allocation8 + $0x3d0] sm:$0xff]
        %v3439 = vld [vmem:[#allocation8 + $0x3d8] sm:$0xff]
        %v3440 = vld [vmem:[#allocation8 + $0x3e0] sm:$0xff]
        %v3441 = vld [vmem:[#allocation8 + $0x3e8] sm:$0xff]
        %v3442 = vld [vmem:[#allocation8 + $0x3f0] sm:$0xff]
        %v3443 = vld [vmem:[#allocation8 + $0x3f8] sm:$0xff]
        %v3444 = vld [vmem:[#allocation8 + $0x400] sm:$0xff]
        %v3445 = vld [vmem:[#allocation8 + $0x408] sm:$0xff]
        %v3446 = vld [vmem:[#allocation8 + $0x410] sm:$0xff]
        %v3447 = vld [vmem:[#allocation8 + $0x418] sm:$0xff]
        %v3448 = vld [vmem:[#allocation8 + $0x420] sm:$0xff]
        %v3449 = vld [vmem:[#allocation8 + $0x428] sm:$0xff]
        %v3450 = vld [vmem:[#allocation8 + $0x430] sm:$0xff]
        %v3451 = vld [vmem:[#allocation8 + $0x438] sm:$0xff]
        %v3452 = vld [vmem:[#allocation8 + $0x440] sm:$0xff]
        %v3453 = vld [vmem:[#allocation8 + $0x448] sm:$0xff]
        %v3454 = vld [vmem:[#allocation8 + $0x450] sm:$0xff]
        %v3455 = vld [vmem:[#allocation8 + $0x458] sm:$0xff]
        %v3456 = vld [vmem:[#allocation8 + $0x460] sm:$0xff]
        %v3457 = vld [vmem:[#allocation8 + $0x468] sm:$0xff]
        %v3458 = vld [vmem:[#allocation8 + $0x470] sm:$0xff]
        %v3459 = vld [vmem:[#allocation8 + $0x478] sm:$0xff]
        %v3460 = vld [vmem:[#allocation8 + $0x480] sm:$0xff]
        %v3461 = vld [vmem:[#allocation8 + $0x488] sm:$0xff]
        %v3462 = vld [vmem:[#allocation8 + $0x490] sm:$0xff]
        %v3463 = vld [vmem:[#allocation8 + $0x498] sm:$0xff]
        %v3464 = vld [vmem:[#allocation8 + $0x4a0] sm:$0xff]
        %v3465 = vld [vmem:[#allocation8 + $0x4a8] sm:$0xff]
        %v3466 = vld [vmem:[#allocation8 + $0x4b0] sm:$0xff]
        %v3467 = vld [vmem:[#allocation8 + $0x4b8] sm:$0xff]
        %v3468 = vld [vmem:[#allocation8 + $0x4c0] sm:$0xff]
        %v3469 = vld [vmem:[#allocation8 + $0x4c8] sm:$0xff]
        %v3470 = vld [vmem:[#allocation8 + $0x4d0] sm:$0xff]
        %v3471 = vld [vmem:[#allocation8 + $0x4d8] sm:$0xff]
        %v3472 = vld [vmem:[#allocation8 + $0x4e0] sm:$0xff]
        %v3473 = vld [vmem:[#allocation8 + $0x4e8] sm:$0xff]
        %v3474 = vld [vmem:[#allocation8 + $0x4f0] sm:$0xff]
        %v3475 = vld [vmem:[#allocation8 + $0x4f8] sm:$0xff]
        %v3476 = vld [vmem:[#allocation8 + $0x500] sm:$0xff]
        %v3477 = vld [vmem:[#allocation8 + $0x508] sm:$0xff]
        %v3478 = vld [vmem:[#allocation8 + $0x510] sm:$0xff]
        %v3479 = vld [vmem:[#allocation8 + $0x518] sm:$0xff]
        %v3480 = vld [vmem:[#allocation8 + $0x520] sm:$0xff]
        %v3481 = vld [vmem:[#allocation8 + $0x528] sm:$0xff]
        %v3482 = vld [vmem:[#allocation8 + $0x530] sm:$0xff]
        %v3483 = vld [vmem:[#allocation8 + $0x538] sm:$0xff]
        %v3484 = vld [vmem:[#allocation8 + $0x540] sm:$0xff]
        %v3485 = vld [vmem:[#allocation8 + $0x548] sm:$0xff]
        %v3486 = vld [vmem:[#allocation8 + $0x550] sm:$0xff]
        %v3487 = vld [vmem:[#allocation8 + $0x558] sm:$0xff]
        %v3488 = vld [vmem:[#allocation8 + $0x560] sm:$0xff]
        %v3489 = vld [vmem:[#allocation8 + $0x568] sm:$0xff]
        %v3490 = vld [vmem:[#allocation8 + $0x570] sm:$0xff]
        %v3491 = vld [vmem:[#allocation8 + $0x578] sm:$0xff]
        %v3492 = vld [vmem:[#allocation8 + $0x580] sm:$0xff]
        %v3493 = vld [vmem:[#allocation8 + $0x588] sm:$0xff]
        %v3494 = vld [vmem:[#allocation8 + $0x590] sm:$0xff]
        %v3495 = vld [vmem:[#allocation8 + $0x598] sm:$0xff]
        %v3496 = vld [vmem:[#allocation8 + $0x5a0] sm:$0xff]
        %v3497 = vld [vmem:[#allocation8 + $0x5a8] sm:$0xff]
        %v3498 = vld [vmem:[#allocation8 + $0x5b0] sm:$0xff]
        %v3499 = vld [vmem:[#allocation8 + $0x5b8] sm:$0xff]
        %v3500 = vld [vmem:[#allocation8 + $0x5c0] sm:$0xff]
        %v3501 = vld [vmem:[#allocation8 + $0x5c8] sm:$0xff]
        %v3502 = vld [vmem:[#allocation8 + $0x5d0] sm:$0xff]
        %v3503 = vld [vmem:[#allocation8 + $0x5d8] sm:$0xff]
        %v3504 = vld [vmem:[#allocation8 + $0x5e0] sm:$0xff]
        %v3505 = vld [vmem:[#allocation8 + $0x5e8] sm:$0xff]
        %v3506 = vld [vmem:[#allocation8 + $0x5f0] sm:$0xff]
        %v3507 = vld [vmem:[#allocation8 + $0x5f8] sm:$0xff]
        %v3508 = vld [vmem:[#allocation8 + $0x600] sm:$0xff]
        %v3509 = vld [vmem:[#allocation8 + $0x608] sm:$0xff]
        %v3510 = vld [vmem:[#allocation8 + $0x610] sm:$0xff]
        %v3511 = vld [vmem:[#allocation8 + $0x618] sm:$0xff]
        %v3512 = vld [vmem:[#allocation8 + $0x620] sm:$0xff]
        %v3513 = vld [vmem:[#allocation8 + $0x628] sm:$0xff]
        %v3514 = vld [vmem:[#allocation8 + $0x630] sm:$0xff]
        %v3515 = vld [vmem:[#allocation8 + $0x638] sm:$0xff]
        %v3516 = vld [vmem:[#allocation8 + $0x640] sm:$0xff]
        %v3517 = vld [vmem:[#allocation8 + $0x648] sm:$0xff]
        %v3518 = vld [vmem:[#allocation8 + $0x650] sm:$0xff]
        %v3519 = vld [vmem:[#allocation8 + $0x658] sm:$0xff]
        %v3520 = vld [vmem:[#allocation8 + $0x660] sm:$0xff]
        %v3521 = vld [vmem:[#allocation8 + $0x668] sm:$0xff]
        %v3522 = vld [vmem:[#allocation8 + $0x670] sm:$0xff]
        %v3523 = vld [vmem:[#allocation8 + $0x678] sm:$0xff]
        %v3524 = vld [vmem:[#allocation8 + $0x680] sm:$0xff]
        %v3525 = vld [vmem:[#allocation8 + $0x688] sm:$0xff]
        %v3526 = vld [vmem:[#allocation8 + $0x690] sm:$0xff]
        %v3527 = vld [vmem:[#allocation8 + $0x698] sm:$0xff]
        %v3528 = vld [vmem:[#allocation8 + $0x6a0] sm:$0xff]
        %v3529 = vld [vmem:[#allocation8 + $0x6a8] sm:$0xff]
        %v3530 = vld [vmem:[#allocation8 + $0x6b0] sm:$0xff]
        %v3531 = vld [vmem:[#allocation8 + $0x6b8] sm:$0xff]
        %v3532 = vld [vmem:[#allocation8 + $0x6c0] sm:$0xff]
        %v3533 = vld [vmem:[#allocation8 + $0x6c8] sm:$0xff]
        %v3534 = vld [vmem:[#allocation8 + $0x6d0] sm:$0xff]
        %v3535 = vld [vmem:[#allocation8 + $0x6d8] sm:$0xff]
        %v3536 = vld [vmem:[#allocation8 + $0x6e0] sm:$0xff]
        %v3537 = vld [vmem:[#allocation8 + $0x6e8] sm:$0xff]
        %v3538 = vld [vmem:[#allocation8 + $0x6f0] sm:$0xff]
        %v3539 = vld [vmem:[#allocation8 + $0x6f8] sm:$0xff]
        %v3540 = vld [vmem:[#allocation8 + $0x700] sm:$0xff]
        %v3541 = vld [vmem:[#allocation8 + $0x708] sm:$0xff]
        %v3542 = vld [vmem:[#allocation8 + $0x710] sm:$0xff]
        %v3543 = vld [vmem:[#allocation8 + $0x718] sm:$0xff]
        %v3544 = vld [vmem:[#allocation8 + $0x720] sm:$0xff]
        %v3545 = vld [vmem:[#allocation8 + $0x728] sm:$0xff]
        %v3546 = vld [vmem:[#allocation8 + $0x730] sm:$0xff]
        %v3547 = vld [vmem:[#allocation8 + $0x738] sm:$0xff]
        %v3548 = vld [vmem:[#allocation8 + $0x740] sm:$0xff]
        %v3549 = vld [vmem:[#allocation8 + $0x748] sm:$0xff]
        %v3550 = vld [vmem:[#allocation8 + $0x750] sm:$0xff]
        %v3551 = vld [vmem:[#allocation8 + $0x758] sm:$0xff]
        %v3552 = vld [vmem:[#allocation8 + $0x760] sm:$0xff]
        %v3553 = vld [vmem:[#allocation8 + $0x768] sm:$0xff]
        %v3554 = vld [vmem:[#allocation8 + $0x770] sm:$0xff]
        %v3555 = vld [vmem:[#allocation8 + $0x778] sm:$0xff]
        %v3556 = vld [vmem:[#allocation8 + $0x780] sm:$0xff]
        %v3557 = vld [vmem:[#allocation8 + $0x788] sm:$0xff]
        %v3558 = vld [vmem:[#allocation8 + $0x790] sm:$0xff]
        %v3559 = vld [vmem:[#allocation8 + $0x798] sm:$0xff]
        %v3560 = vld [vmem:[#allocation8 + $0x7a0] sm:$0xff]
        %v3561 = vld [vmem:[#allocation8 + $0x7a8] sm:$0xff]
        %v3562 = vld [vmem:[#allocation8 + $0x7b0] sm:$0xff]
        %v3563 = vld [vmem:[#allocation8 + $0x7b8] sm:$0xff]
        %v3564 = vld [vmem:[#allocation8 + $0x7c0] sm:$0xff]
        %v3565 = vld [vmem:[#allocation8 + $0x7c8] sm:$0xff]
        %v3566 = vld [vmem:[#allocation8 + $0x7d0] sm:$0xff]
        %v3567 = vld [vmem:[#allocation8 + $0x7d8] sm:$0xff]
        %v3568 = vld [vmem:[#allocation8 + $0x7e0] sm:$0xff]
        %v3569 = vld [vmem:[#allocation8 + $0x7e8] sm:$0xff]
        %v3570 = vld [vmem:[#allocation8 + $0x7f0] sm:$0xff]
        %v3571 = vld [vmem:[#allocation8 + $0x7f8] sm:$0xff]
        %v3572 = vld [vmem:[#allocation8 + $0x800] sm:$0xff]
        %v3573 = vld [vmem:[#allocation8 + $0x808] sm:$0xff]
        %v3574 = vld [vmem:[#allocation8 + $0x810] sm:$0xff]
        %v3575 = vld [vmem:[#allocation8 + $0x818] sm:$0xff]
        %v3576 = vld [vmem:[#allocation8 + $0x820] sm:$0xff]
        %v3577 = vld [vmem:[#allocation8 + $0x828] sm:$0xff]
        %v3578 = vld [vmem:[#allocation8 + $0x830] sm:$0xff]
        %v3579 = vld [vmem:[#allocation8 + $0x838] sm:$0xff]
        %v3580 = vld [vmem:[#allocation8 + $0x840] sm:$0xff]
        %v3581 = vld [vmem:[#allocation8 + $0x848] sm:$0xff]
        %v3582 = vld [vmem:[#allocation8 + $0x850] sm:$0xff]
        %v3583 = vld [vmem:[#allocation8 + $0x858] sm:$0xff]
        %v3584 = vld [vmem:[#allocation8 + $0x860] sm:$0xff]
        %v3585 = vld [vmem:[#allocation8 + $0x868] sm:$0xff]
        %v3586 = vld [vmem:[#allocation8 + $0x870] sm:$0xff]
        %v3587 = vld [vmem:[#allocation8 + $0x878] sm:$0xff]
        %v3588 = vld [vmem:[#allocation8 + $0x880] sm:$0xff]
        %v3589 = vld [vmem:[#allocation8 + $0x888] sm:$0xff]
        %v3590 = vld [vmem:[#allocation8 + $0x890] sm:$0xff]
        %v3591 = vld [vmem:[#allocation8 + $0x898] sm:$0xff]
        %v3592 = vld [vmem:[#allocation8 + $0x8a0] sm:$0xff]
        %v3593 = vld [vmem:[#allocation8 + $0x8a8] sm:$0xff]
        %v3594 = vld [vmem:[#allocation8 + $0x8b0] sm:$0xff]
        %v3595 = vld [vmem:[#allocation8 + $0x8b8] sm:$0xff]
        %v3596 = vld [vmem:[#allocation8 + $0x8c0] sm:$0xff]
        %v3597 = vld [vmem:[#allocation8 + $0x8c8] sm:$0xff]
        %v3598 = vld [vmem:[#allocation8 + $0x8d0] sm:$0xff]
        %v3599 = vld [vmem:[#allocation8 + $0x8d8] sm:$0xff]
        %v3600 = vld [vmem:[#allocation8 + $0x8e0] sm:$0xff]
        %v3601 = vld [vmem:[#allocation8 + $0x8e8] sm:$0xff]
        %v3602 = vld [vmem:[#allocation8 + $0x8f0] sm:$0xff]
        %v3603 = vld [vmem:[#allocation8 + $0x8f8] sm:$0xff]
        %v3604 = vld [vmem:[#allocation8 + $0x900] sm:$0xff]
        %v3605 = vld [vmem:[#allocation8 + $0x908] sm:$0xff]
        %v3606 = vld [vmem:[#allocation8 + $0x910] sm:$0xff]
        %v3607 = vld [vmem:[#allocation8 + $0x918] sm:$0xff]
        %v3608 = vld [vmem:[#allocation8 + $0x920] sm:$0xff]
        %v3609 = vld [vmem:[#allocation8 + $0x928] sm:$0xff]
        %v3610 = vld [vmem:[#allocation8 + $0x930] sm:$0xff]
        %v3611 = vld [vmem:[#allocation8 + $0x938] sm:$0xff]
        %v3612 = vld [vmem:[#allocation8 + $0x940] sm:$0xff]
        %v3613 = vld [vmem:[#allocation8 + $0x948] sm:$0xff]
        %v3614 = vld [vmem:[#allocation8 + $0x950] sm:$0xff]
        %v3615 = vld [vmem:[#allocation8 + $0x958] sm:$0xff]
        %v3616 = vld [vmem:[#allocation8 + $0x960] sm:$0xff]
        %v3617 = vld [vmem:[#allocation8 + $0x968] sm:$0xff]
        %v3618 = vld [vmem:[#allocation8 + $0x970] sm:$0xff]
        %v3619 = vld [vmem:[#allocation8 + $0x978] sm:$0xff]
        %v3620 = vld [vmem:[#allocation8 + $0x980] sm:$0xff]
        %v3621 = vld [vmem:[#allocation8 + $0x988] sm:$0xff]
        %v3622 = vld [vmem:[#allocation8 + $0x990] sm:$0xff]
        %v3623 = vld [vmem:[#allocation8 + $0x998] sm:$0xff]
        %v3624 = vld [vmem:[#allocation8 + $0x9a0] sm:$0xff]
        %v3625 = vld [vmem:[#allocation8 + $0x9a8] sm:$0xff]
        %v3626 = vld [vmem:[#allocation8 + $0x9b0] sm:$0xff]
        %v3627 = vld [vmem:[#allocation8 + $0x9b8] sm:$0xff]
        %v3628 = vld [vmem:[#allocation8 + $0x9c0] sm:$0xff]
        %v3629 = vld [vmem:[#allocation8 + $0x9c8] sm:$0xff]
        %v3630 = vld [vmem:[#allocation8 + $0x9d0] sm:$0xff]
        %v3631 = vld [vmem:[#allocation8 + $0x9d8] sm:$0xff]
        %v3632 = vld [vmem:[#allocation8 + $0x9e0] sm:$0xff]
        %v3633 = vld [vmem:[#allocation8 + $0x9e8] sm:$0xff]
        %v3634 = vld [vmem:[#allocation8 + $0x9f0] sm:$0xff]
        %v3635 = vld [vmem:[#allocation8 + $0x9f8] sm:$0xff]
        %v3636 = vld [vmem:[#allocation8 + $0xa00] sm:$0xff]
        %v3637 = vld [vmem:[#allocation8 + $0xa08] sm:$0xff]
        %v3638 = vld [vmem:[#allocation8 + $0xa10] sm:$0xff]
        %v3639 = vld [vmem:[#allocation8 + $0xa18] sm:$0xff]
        %v3640 = vld [vmem:[#allocation8 + $0xa20] sm:$0xff]
        %v3641 = vld [vmem:[#allocation8 + $0xa28] sm:$0xff]
        %v3642 = vld [vmem:[#allocation8 + $0xa30] sm:$0xff]
        %v3643 = vld [vmem:[#allocation8 + $0xa38] sm:$0xff]
        %v3644 = vld [vmem:[#allocation8 + $0xa40] sm:$0xff]
        %v3645 = vld [vmem:[#allocation8 + $0xa48] sm:$0xff]
        %v3646 = vld [vmem:[#allocation8 + $0xa50] sm:$0xff]
        %v3647 = vld [vmem:[#allocation8 + $0xa58] sm:$0xff]
        %v3648 = vld [vmem:[#allocation8 + $0xa60] sm:$0xff]
        %v3649 = vld [vmem:[#allocation8 + $0xa68] sm:$0xff]
        %v3650 = vld [vmem:[#allocation8 + $0xa70] sm:$0xff]
        %v3651 = vld [vmem:[#allocation8 + $0xa78] sm:$0xff]
        %v3652 = vld [vmem:[#allocation8 + $0xa80] sm:$0xff]
        %v3653 = vld [vmem:[#allocation8 + $0xa88] sm:$0xff]
        %v3654 = vld [vmem:[#allocation8 + $0xa90] sm:$0xff]
        %v3655 = vld [vmem:[#allocation8 + $0xa98] sm:$0xff]
        %v3656 = vld [vmem:[#allocation8 + $0xaa0] sm:$0xff]
        %v3657 = vld [vmem:[#allocation8 + $0xaa8] sm:$0xff]
        %v3658 = vld [vmem:[#allocation8 + $0xab0] sm:$0xff]
        %v3659 = vld [vmem:[#allocation8 + $0xab8] sm:$0xff]
        %v3660 = vld [vmem:[#allocation8 + $0xac0] sm:$0xff]
        %v3661 = vld [vmem:[#allocation8 + $0xac8] sm:$0xff]
        %v3662 = vld [vmem:[#allocation8 + $0xad0] sm:$0xff]
        %v3663 = vld [vmem:[#allocation8 + $0xad8] sm:$0xff]
        %v3664 = vld [vmem:[#allocation8 + $0xae0] sm:$0xff]
        %v3665 = vld [vmem:[#allocation8 + $0xae8] sm:$0xff]
        %v3666 = vld [vmem:[#allocation8 + $0xaf0] sm:$0xff]
        %v3667 = vld [vmem:[#allocation8 + $0xaf8] sm:$0xff]
        %v3668 = vld [vmem:[#allocation8 + $0xb00] sm:$0xff]
        %v3669 = vld [vmem:[#allocation8 + $0xb08] sm:$0xff]
        %v3670 = vld [vmem:[#allocation8 + $0xb10] sm:$0xff]
        %v3671 = vld [vmem:[#allocation8 + $0xb18] sm:$0xff]
        %v3672 = vld [vmem:[#allocation8 + $0xb20] sm:$0xff]
        %v3673 = vld [vmem:[#allocation8 + $0xb28] sm:$0xff]
        %v3674 = vld [vmem:[#allocation8 + $0xb30] sm:$0xff]
        %v3675 = vld [vmem:[#allocation8 + $0xb38] sm:$0xff]
        %v3676 = vld [vmem:[#allocation8 + $0xb40] sm:$0xff]
        %v3677 = vld [vmem:[#allocation8 + $0xb48] sm:$0xff]
        %v3678 = vld [vmem:[#allocation8 + $0xb50] sm:$0xff]
        %v3679 = vld [vmem:[#allocation8 + $0xb58] sm:$0xff]
        %v3680 = vld [vmem:[#allocation8 + $0xb60] sm:$0xff]
        %v3681 = vld [vmem:[#allocation8 + $0xb68] sm:$0xff]
        %v3682 = vld [vmem:[#allocation8 + $0xb70] sm:$0xff]
        %v3683 = vld [vmem:[#allocation8 + $0xb78] sm:$0xff]
        %v3684 = vld [vmem:[#allocation8 + $0xb80] sm:$0xff]
        %v3685 = vld [vmem:[#allocation8 + $0xb88] sm:$0xff]
        %v3686 = vld [vmem:[#allocation8 + $0xb90] sm:$0xff]
        %v3687 = vld [vmem:[#allocation8 + $0xb98] sm:$0xff]
        %v3688 = vld [vmem:[#allocation8 + $0xba0] sm:$0xff]
        %v3689 = vld [vmem:[#allocation8 + $0xba8] sm:$0xff]
        %v3690 = vld [vmem:[#allocation8 + $0xbb0] sm:$0xff]
        %v3691 = vld [vmem:[#allocation8 + $0xbb8] sm:$0xff]
        %v3692 = vld [vmem:[#allocation8 + $0xbc0] sm:$0xff]
        %v3693 = vld [vmem:[#allocation8 + $0xbc8] sm:$0xff]
        %v3694 = vld [vmem:[#allocation8 + $0xbd0] sm:$0xff]
        %v3695 = vld [vmem:[#allocation8 + $0xbd8] sm:$0xff]
        %v3696 = vld [vmem:[#allocation8 + $0xbe0] sm:$0xff]
        %v3697 = vld [vmem:[#allocation8 + $0xbe8] sm:$0xff]
        %v3698 = vld [vmem:[#allocation8 + $0xbf0] sm:$0xff]
        %v3699 = vld [vmem:[#allocation8 + $0xbf8] sm:$0xff]
        %v3700 = vld [vmem:[#allocation8 + $0xc00] sm:$0xff]
        %v3701 = vld [vmem:[#allocation8 + $0xc08] sm:$0xff]
        %v3702 = vld [vmem:[#allocation8 + $0xc10] sm:$0xff]
        %v3703 = vld [vmem:[#allocation8 + $0xc18] sm:$0xff]
        %v3704 = vld [vmem:[#allocation8 + $0xc20] sm:$0xff]
        %v3705 = vld [vmem:[#allocation8 + $0xc28] sm:$0xff]
        %v3706 = vld [vmem:[#allocation8 + $0xc30] sm:$0xff]
        %v3707 = vld [vmem:[#allocation8 + $0xc38] sm:$0xff]
        %v3708 = vld [vmem:[#allocation8 + $0xc40] sm:$0xff]
        %v3709 = vld [vmem:[#allocation8 + $0xc48] sm:$0xff]
        %v3710 = vld [vmem:[#allocation8 + $0xc50] sm:$0xff]
        %v3711 = vld [vmem:[#allocation8 + $0xc58] sm:$0xff]
        %v3712 = vld [vmem:[#allocation8 + $0xc60] sm:$0xff]
        %v3713 = vld [vmem:[#allocation8 + $0xc68] sm:$0xff]
        %v3714 = vld [vmem:[#allocation8 + $0xc70] sm:$0xff]
        %v3715 = vld [vmem:[#allocation8 + $0xc78] sm:$0xff]
        %v3716 = vld [vmem:[#allocation8 + $0xc80] sm:$0xff]
        %v3717 = vld [vmem:[#allocation8 + $0xc88] sm:$0xff]
        %v3718 = vld [vmem:[#allocation8 + $0xc90] sm:$0xff]
        %v3719 = vld [vmem:[#allocation8 + $0xc98] sm:$0xff]
        %v3720 = vld [vmem:[#allocation8 + $0xca0] sm:$0xff]
        %v3721 = vld [vmem:[#allocation8 + $0xca8] sm:$0xff]
        %v3722 = vld [vmem:[#allocation8 + $0xcb0] sm:$0xff]
        %v3723 = vld [vmem:[#allocation8 + $0xcb8] sm:$0xff]
        %v3724 = vld [vmem:[#allocation8 + $0xcc0] sm:$0xff]
        %v3725 = vld [vmem:[#allocation8 + $0xcc8] sm:$0xff]
        %v3726 = vld [vmem:[#allocation8 + $0xcd0] sm:$0xff]
        %v3727 = vld [vmem:[#allocation8 + $0xcd8] sm:$0xff]
        %v3728 = vld [vmem:[#allocation8 + $0xce0] sm:$0xff]
        %v3729 = vld [vmem:[#allocation8 + $0xce8] sm:$0xff]
        %v3730 = vld [vmem:[#allocation8 + $0xcf0] sm:$0xff]
        %v3731 = vld [vmem:[#allocation8 + $0xcf8] sm:$0xff]
        %v3732 = vld [vmem:[#allocation8 + $0xd00] sm:$0xff]
        %v3733 = vld [vmem:[#allocation8 + $0xd08] sm:$0xff]
        %v3734 = vld [vmem:[#allocation8 + $0xd10] sm:$0xff]
        %v3735 = vld [vmem:[#allocation8 + $0xd18] sm:$0xff]
        %v3736 = vld [vmem:[#allocation8 + $0xd20] sm:$0xff]
        %v3737 = vld [vmem:[#allocation8 + $0xd28] sm:$0xff]
        %v3738 = vld [vmem:[#allocation8 + $0xd30] sm:$0xff]
        %v3739 = vld [vmem:[#allocation8 + $0xd38] sm:$0xff]
        %v3740 = vld [vmem:[#allocation8 + $0xd40] sm:$0xff]
        %v3741 = vld [vmem:[#allocation8 + $0xd48] sm:$0xff]
        %v3742 = vld [vmem:[#allocation8 + $0xd50] sm:$0xff]
        %v3743 = vld [vmem:[#allocation8 + $0xd58] sm:$0xff]
        %v3744 = vld [vmem:[#allocation8 + $0xd60] sm:$0xff]
        %v3745 = vld [vmem:[#allocation8 + $0xd68] sm:$0xff]
        %v3746 = vld [vmem:[#allocation8 + $0xd70] sm:$0xff]
        %v3747 = vld [vmem:[#allocation8 + $0xd78] sm:$0xff]
        %v3748 = vld [vmem:[#allocation8 + $0xd80] sm:$0xff]
        %v3749 = vld [vmem:[#allocation8 + $0xd88] sm:$0xff]
        %v3750 = vld [vmem:[#allocation8 + $0xd90] sm:$0xff]
        %v3751 = vld [vmem:[#allocation8 + $0xd98] sm:$0xff]
        %v3752 = vld [vmem:[#allocation8 + $0xda0] sm:$0xff]
        %v3753 = vld [vmem:[#allocation8 + $0xda8] sm:$0xff]
        %v3754 = vld [vmem:[#allocation8 + $0xdb0] sm:$0xff]
        %v3755 = vld [vmem:[#allocation8 + $0xdb8] sm:$0xff]
        %v3756 = vld [vmem:[#allocation8 + $0xdc0] sm:$0xff]
        %v3757 = vld [vmem:[#allocation8 + $0xdc8] sm:$0xff]
        %v3758 = vld [vmem:[#allocation8 + $0xdd0] sm:$0xff]
        %v3759 = vld [vmem:[#allocation8 + $0xdd8] sm:$0xff]
        %v3760 = vld [vmem:[#allocation8 + $0xde0] sm:$0xff]
        %v3761 = vld [vmem:[#allocation8 + $0xde8] sm:$0xff]
        %v3762 = vld [vmem:[#allocation8 + $0xdf0] sm:$0xff]
        %v3763 = vld [vmem:[#allocation8 + $0xdf8] sm:$0xff]
        %v3764 = vld [vmem:[#allocation8 + $0xe00] sm:$0xff]
        %v3765 = vld [vmem:[#allocation8 + $0xe08] sm:$0xff]
        %v3766 = vld [vmem:[#allocation8 + $0xe10] sm:$0xff]
        %v3767 = vld [vmem:[#allocation8 + $0xe18] sm:$0xff]
        %v3768 = vld [vmem:[#allocation8 + $0xe20] sm:$0xff]
        %v3769 = vld [vmem:[#allocation8 + $0xe28] sm:$0xff]
        %v3770 = vld [vmem:[#allocation8 + $0xe30] sm:$0xff]
        %v3771 = vld [vmem:[#allocation8 + $0xe38] sm:$0xff]
        %v3772 = vld [vmem:[#allocation8 + $0xe40] sm:$0xff]
        %v3773 = vld [vmem:[#allocation8 + $0xe48] sm:$0xff]
        %v3774 = vld [vmem:[#allocation8 + $0xe50] sm:$0xff]
        %v3775 = vld [vmem:[#allocation8 + $0xe58] sm:$0xff]
        %v3776 = vld [vmem:[#allocation8 + $0xe60] sm:$0xff]
        %v3777 = vld [vmem:[#allocation8 + $0xe68] sm:$0xff]
        %v3778 = vld [vmem:[#allocation8 + $0xe70] sm:$0xff]
        %v3779 = vld [vmem:[#allocation8 + $0xe78] sm:$0xff]
        %v3780 = vld [vmem:[#allocation8 + $0xe80] sm:$0xff]
        %v3781 = vld [vmem:[#allocation8 + $0xe88] sm:$0xff]
        %v3782 = vld [vmem:[#allocation8 + $0xe90] sm:$0xff]
        %v3783 = vld [vmem:[#allocation8 + $0xe98] sm:$0xff]
        %v3784 = vld [vmem:[#allocation8 + $0xea0] sm:$0xff]
        %v3785 = vld [vmem:[#allocation8 + $0xea8] sm:$0xff]
        %v3786 = vld [vmem:[#allocation8 + $0xeb0] sm:$0xff]
        %v3787 = vld [vmem:[#allocation8 + $0xeb8] sm:$0xff]
        %v3788 = vld [vmem:[#allocation8 + $0xec0] sm:$0xff]
        %v3789 = vld [vmem:[#allocation8 + $0xec8] sm:$0xff]
        %v3790 = vld [vmem:[#allocation8 + $0xed0] sm:$0xff]
        %v3791 = vld [vmem:[#allocation8 + $0xed8] sm:$0xff]
        %v3792 = vld [vmem:[#allocation8 + $0xee0] sm:$0xff]
        %v3793 = vld [vmem:[#allocation8 + $0xee8] sm:$0xff]
        %v3794 = vld [vmem:[#allocation8 + $0xef0] sm:$0xff]
        %v3795 = vld [vmem:[#allocation8 + $0xef8] sm:$0xff]
        %v3796 = vld [vmem:[#allocation8 + $0xf00] sm:$0xff]
        %v3797 = vld [vmem:[#allocation8 + $0xf08] sm:$0xff]
        %v3798 = vld [vmem:[#allocation8 + $0xf10] sm:$0xff]
        %v3799 = vld [vmem:[#allocation8 + $0xf18] sm:$0xff]
        %v3800 = vld [vmem:[#allocation8 + $0xf20] sm:$0xff]
        %v3801 = vld [vmem:[#allocation8 + $0xf28] sm:$0xff]
        %v3802 = vld [vmem:[#allocation8 + $0xf30] sm:$0xff]
        %v3803 = vld [vmem:[#allocation8 + $0xf38] sm:$0xff]
        %v3804 = vld [vmem:[#allocation8 + $0xf40] sm:$0xff]
        %v3805 = vld [vmem:[#allocation8 + $0xf48] sm:$0xff]
        %v3806 = vld [vmem:[#allocation8 + $0xf50] sm:$0xff]
        %v3807 = vld [vmem:[#allocation8 + $0xf58] sm:$0xff]
        %v3808 = vld [vmem:[#allocation8 + $0xf60] sm:$0xff]
        %v3809 = vld [vmem:[#allocation8 + $0xf68] sm:$0xff]
        %v3810 = vld [vmem:[#allocation8 + $0xf70] sm:$0xff]
        %v3811 = vld [vmem:[#allocation8 + $0xf78] sm:$0xff]
        %v3812 = vld [vmem:[#allocation8 + $0xf80] sm:$0xff]
        %v3813 = vld [vmem:[#allocation8 + $0xf88] sm:$0xff]
        %v3814 = vld [vmem:[#allocation8 + $0xf90] sm:$0xff]
        %v3815 = vld [vmem:[#allocation8 + $0xf98] sm:$0xff]
        %v3816 = vld [vmem:[#allocation8 + $0xfa0] sm:$0xff]
        %v3817 = vld [vmem:[#allocation8 + $0xfa8] sm:$0xff]
        %v3818 = vld [vmem:[#allocation8 + $0xfb0] sm:$0xff]
        %v3819 = vld [vmem:[#allocation8 + $0xfb8] sm:$0xff]
        %v3820 = vld [vmem:[#allocation8 + $0xfc0] sm:$0xff]
        %v3821 = vld [vmem:[#allocation8 + $0xfc8] sm:$0xff]
        %v3822 = vld [vmem:[#allocation8 + $0xfd0] sm:$0xff]
        %v3823 = vld [vmem:[#allocation8 + $0xfd8] sm:$0xff]
        %v3824 = vld [vmem:[#allocation8 + $0xfe0] sm:$0xff]
        %v3825 = vld [vmem:[#allocation8 + $0xfe8] sm:$0xff]
        %v3826 = vld [vmem:[#allocation8 + $0xff0] sm:$0xff]
        %v3827 = vld [vmem:[#allocation8 + $0xff8] sm:$0xff]
        %v3828 = vld [vmem:[#allocation8 + $0x1000] sm:$0xff]
        %v3829 = vld [vmem:[#allocation8 + $0x1008] sm:$0xff]
        %v3830 = vld [vmem:[#allocation8 + $0x1010] sm:$0xff]
        %v3831 = vld [vmem:[#allocation8 + $0x1018] sm:$0xff]
        %v3832 = vld [vmem:[#allocation8 + $0x1020] sm:$0xff]
        %v3833 = vld [vmem:[#allocation8 + $0x1028] sm:$0xff]
        %v3834 = vld [vmem:[#allocation8 + $0x1030] sm:$0xff]
        %v3835 = vld [vmem:[#allocation8 + $0x1038] sm:$0xff]
        %v3836 = vld [vmem:[#allocation8 + $0x1040] sm:$0xff]
        %v3837 = vld [vmem:[#allocation8 + $0x1048] sm:$0xff]
        %v3838 = vld [vmem:[#allocation8 + $0x1050] sm:$0xff]
        %v3839 = vld [vmem:[#allocation8 + $0x1058] sm:$0xff]
        %v3840 = vld [vmem:[#allocation8 + $0x1060] sm:$0xff]
        %v3841 = vld [vmem:[#allocation8 + $0x1068] sm:$0xff]
        %v3842 = vld [vmem:[#allocation8 + $0x1070] sm:$0xff]
        %v3843 = vld [vmem:[#allocation8 + $0x1078] sm:$0xff]
        %v3844 = vld [vmem:[#allocation8 + $0x1080] sm:$0xff]
        %v3845 = vld [vmem:[#allocation8 + $0x1088] sm:$0xff]
        %v3846 = vld [vmem:[#allocation8 + $0x1090] sm:$0xff]
        %v3847 = vld [vmem:[#allocation8 + $0x1098] sm:$0xff]
        %v3848 = vld [vmem:[#allocation8 + $0x10a0] sm:$0xff]
        %v3849 = vld [vmem:[#allocation8 + $0x10a8] sm:$0xff]
        %v3850 = vld [vmem:[#allocation8 + $0x10b0] sm:$0xff]
        %v3851 = vld [vmem:[#allocation8 + $0x10b8] sm:$0xff]
        %v3852 = vld [vmem:[#allocation8 + $0x10c0] sm:$0xff]
        %v3853 = vld [vmem:[#allocation8 + $0x10c8] sm:$0xff]
        %v3854 = vld [vmem:[#allocation8 + $0x10d0] sm:$0xff]
        %v3855 = vld [vmem:[#allocation8 + $0x10d8] sm:$0xff]
        %v3856 = vld [vmem:[#allocation8 + $0x10e0] sm:$0xff]
        %v3857 = vld [vmem:[#allocation8 + $0x10e8] sm:$0xff]
        %v3858 = vld [vmem:[#allocation8 + $0x10f0] sm:$0xff]
        %v3859 = vld [vmem:[#allocation8 + $0x10f8] sm:$0xff]
        %v3860 = vld [vmem:[#allocation8 + $0x1100] sm:$0xff]
        %v3861 = vld [vmem:[#allocation8 + $0x1108] sm:$0xff]
        %v3862 = vld [vmem:[#allocation8 + $0x1110] sm:$0xff]
        %v3863 = vld [vmem:[#allocation8 + $0x1118] sm:$0xff]
        %v3864 = vld [vmem:[#allocation8 + $0x1120] sm:$0xff]
        %v3865 = vld [vmem:[#allocation8 + $0x1128] sm:$0xff]
        %v3866 = vld [vmem:[#allocation8 + $0x1130] sm:$0xff]
        %v3867 = vld [vmem:[#allocation8 + $0x1138] sm:$0xff]
        %v3868 = vld [vmem:[#allocation8 + $0x1140] sm:$0xff]
        %v3869 = vld [vmem:[#allocation8 + $0x1148] sm:$0xff]
        %v3870 = vld [vmem:[#allocation8 + $0x1150] sm:$0xff]
        %v3871 = vld [vmem:[#allocation8 + $0x1158] sm:$0xff]
        %v3872 = vld [vmem:[#allocation8 + $0x1160] sm:$0xff]
        %v3873 = vld [vmem:[#allocation8 + $0x1168] sm:$0xff]
        %v3874 = vld [vmem:[#allocation8 + $0x1170] sm:$0xff]
        %v3875 = vld [vmem:[#allocation8 + $0x1178] sm:$0xff]
        %v3876 = vld [vmem:[#allocation8 + $0x1180] sm:$0xff]
        %v3877 = vld [vmem:[#allocation8 + $0x1188] sm:$0xff]
        %v3878 = vld [vmem:[#allocation8 + $0x1190] sm:$0xff]
        %v3879 = vld [vmem:[#allocation8 + $0x1198] sm:$0xff]
        %v3880 = vld [vmem:[#allocation8 + $0x11a0] sm:$0xff]
        %v3881 = vld [vmem:[#allocation8 + $0x11a8] sm:$0xff]
        %v3882 = vld [vmem:[#allocation8 + $0x11b0] sm:$0xff]
        %v3883 = vld [vmem:[#allocation8 + $0x11b8] sm:$0xff]
        %v3884 = vld [vmem:[#allocation8 + $0x11c0] sm:$0xff]
        %v3885 = vld [vmem:[#allocation8 + $0x11c8] sm:$0xff]
        %v3886 = vld [vmem:[#allocation8 + $0x11d0] sm:$0xff]
        %v3887 = vld [vmem:[#allocation8 + $0x11d8] sm:$0xff]
        %v3888 = vld [vmem:[#allocation8 + $0x11e0] sm:$0xff]
        %v3889 = vld [vmem:[#allocation8 + $0x11e8] sm:$0xff]
        %v3890 = vld [vmem:[#allocation8 + $0x11f0] sm:$0xff]
        %v3891 = vld [vmem:[#allocation8 + $0x11f8] sm:$0xff]
        %v3892 = vld [vmem:[#allocation8 + $0x1200] sm:$0xff]
        %v3893 = vld [vmem:[#allocation8 + $0x1208] sm:$0xff]
        %v3894 = vld [vmem:[#allocation8 + $0x1210] sm:$0xff]
        %v3895 = vld [vmem:[#allocation8 + $0x1218] sm:$0xff]
        %v3896 = vld [vmem:[#allocation8 + $0x1220] sm:$0xff]
        %v3897 = vld [vmem:[#allocation8 + $0x1228] sm:$0xff]
        %v3898 = vld [vmem:[#allocation8 + $0x1230] sm:$0xff]
        %v3899 = vld [vmem:[#allocation8 + $0x1238] sm:$0xff]
        %v3900 = vld [vmem:[#allocation8 + $0x1240] sm:$0xff]
        %v3901 = vld [vmem:[#allocation8 + $0x1248] sm:$0xff]
        %v3902 = vld [vmem:[#allocation8 + $0x1250] sm:$0xff]
        %v3903 = vld [vmem:[#allocation8 + $0x1258] sm:$0xff]
        %v3904 = vld [vmem:[#allocation8 + $0x1260] sm:$0xff]
        %v3905 = vld [vmem:[#allocation8 + $0x1268] sm:$0xff]
        %v3906 = vld [vmem:[#allocation8 + $0x1270] sm:$0xff]
        %v3907 = vld [vmem:[#allocation8 + $0x1278] sm:$0xff]
        %v3908 = vld [vmem:[#allocation8 + $0x1280] sm:$0xff]
        %v3909 = vld [vmem:[#allocation8 + $0x1288] sm:$0xff]
        %v3910 = vld [vmem:[#allocation8 + $0x1290] sm:$0xff]
        %v3911 = vld [vmem:[#allocation8 + $0x1298] sm:$0xff]
        %v3912 = vld [vmem:[#allocation8 + $0x12a0] sm:$0xff]
        %v3913 = vld [vmem:[#allocation8 + $0x12a8] sm:$0xff]
        %v3914 = vld [vmem:[#allocation8 + $0x12b0] sm:$0xff]
        %v3915 = vld [vmem:[#allocation8 + $0x12b8] sm:$0xff]
        %v3916 = vld [vmem:[#allocation8 + $0x12c0] sm:$0xff]
        %v3917 = vld [vmem:[#allocation8 + $0x12c8] sm:$0xff]
        %v3918 = vld [vmem:[#allocation8 + $0x12d0] sm:$0xff]
        %v3919 = vld [vmem:[#allocation8 + $0x12d8] sm:$0xff]
        %v3920 = vld [vmem:[#allocation8 + $0x12e0] sm:$0xff]
        %v3921 = vld [vmem:[#allocation8 + $0x12e8] sm:$0xff]
        %v3922 = vld [vmem:[#allocation8 + $0x12f0] sm:$0xff]
        %v3923 = vld [vmem:[#allocation8 + $0x12f8] sm:$0xff]
        %v3924 = vld [vmem:[#allocation8 + $0x1300] sm:$0xff]
        %v3925 = vld [vmem:[#allocation8 + $0x1308] sm:$0xff]
        %v3926 = vld [vmem:[#allocation8 + $0x1310] sm:$0xff]
        %v3927 = vld [vmem:[#allocation8 + $0x1318] sm:$0xff]
        %v3928 = vld [vmem:[#allocation8 + $0x1320] sm:$0xff]
        %v3929 = vld [vmem:[#allocation8 + $0x1328] sm:$0xff]
        %v3930 = vld [vmem:[#allocation8 + $0x1330] sm:$0xff]
        %v3931 = vld [vmem:[#allocation8 + $0x1338] sm:$0xff]
        %v3932 = vld [vmem:[#allocation8 + $0x1340] sm:$0xff]
        %v3933 = vld [vmem:[#allocation8 + $0x1348] sm:$0xff]
        %v3934 = vld [vmem:[#allocation8 + $0x1350] sm:$0xff]
        %v3935 = vld [vmem:[#allocation8 + $0x1358] sm:$0xff]
        %v3936 = vld [vmem:[#allocation8 + $0x1360] sm:$0xff]
        %v3937 = vld [vmem:[#allocation8 + $0x1368] sm:$0xff]
        %v3938 = vld [vmem:[#allocation8 + $0x1370] sm:$0xff]
        %v3939 = vld [vmem:[#allocation8 + $0x1378] sm:$0xff]
        %v3940 = vld [vmem:[#allocation8 + $0x1380] sm:$0xff]
        %v3941 = vld [vmem:[#allocation8 + $0x1388] sm:$0xff]
        %v3942 = vld [vmem:[#allocation8 + $0x1390] sm:$0xff]
        %v3943 = vld [vmem:[#allocation8 + $0x1398] sm:$0xff]
        %v3944 = vld [vmem:[#allocation8 + $0x13a0] sm:$0xff]
        %v3945 = vld [vmem:[#allocation8 + $0x13a8] sm:$0xff]
        %v3946 = vld [vmem:[#allocation8 + $0x13b0] sm:$0xff]
        %v3947 = vld [vmem:[#allocation8 + $0x13b8] sm:$0xff]
        %v3948 = vld [vmem:[#allocation8 + $0x13c0] sm:$0xff]
        %v3949 = vld [vmem:[#allocation8 + $0x13c8] sm:$0xff]
        %v3950 = vld [vmem:[#allocation8 + $0x13d0] sm:$0xff]
        %v3951 = vld [vmem:[#allocation8 + $0x13d8] sm:$0xff]
        %v3952 = vld [vmem:[#allocation8 + $0x13e0] sm:$0xff]
        %v3953 = vld [vmem:[#allocation8 + $0x13e8] sm:$0xff]
        %v3954 = vld [vmem:[#allocation8 + $0x13f0] sm:$0xff]
        %v3955 = vld [vmem:[#allocation8 + $0x13f8] sm:$0xff]
        %3956 = vmatprep.subr.mxu0 %v2805
        %3957 = vmatpush1.msra.mxu0 %v2804
        %3958 = vmatprep.subr.mxu0 %v2807
        %3959 = vmatpush1.msra.mxu0 %v2806
        %3960 = vmatprep.subr.mxu0 %v2809
        %3961 = vmatpush1.msra.mxu0 %v2808
        %3962 = vmatprep.subr.mxu0 %v2811
        %3963 = vmatpush1.msra.mxu0 %v2810
        %3964 = vmatprep.subr.mxu0 %v2813
        %3965 = vmatpush1.msra.mxu0 %v2812
        %3966 = vmatprep.subr.mxu0 %v2815
        %3967 = vmatpush1.msra.mxu0 %v2814
        %3968 = vmatprep.subr.mxu0 %v2817
        %3969 = vmatpush1.msra.mxu0 %v2816
        %3970 = vmatprep.subr.mxu0 %v2819
        %3971 = vmatpush1.msra.mxu0 %v2818
        %3972 = vmatprep.subr.mxu0 %v2821
        %3973 = vmatpush1.msra.mxu0 %v2820
        %3974 = vmatprep.subr.mxu0 %v2823
        %3975 = vmatpush1.msra.mxu0 %v2822
        %3976 = vmatprep.subr.mxu0 %v2825
        %3977 = vmatpush1.msra.mxu0 %v2824
        %3978 = vmatprep.subr.mxu0 %v2827
        %3979 = vmatpush1.msra.mxu0 %v2826
        %3980 = vmatprep.subr.mxu0 %v2829
        %3981 = vmatpush1.msra.mxu0 %v2828
        %3982 = vmatprep.subr.mxu0 %v2831
        %3983 = vmatpush1.msra.mxu0 %v2830
        %3984 = vmatprep.subr.mxu0 %v2833
        %3985 = vmatpush1.msra.mxu0 %v2832
        %3986 = vmatprep.subr.mxu0 %v2835
        %3987 = vmatpush1.msra.mxu0 %v2834
        %3988 = vmatprep.subr.mxu0 %v2837
        %3989 = vmatpush1.msra.mxu0 %v2836
        %3990 = vmatprep.subr.mxu0 %v2839
        %3991 = vmatpush1.msra.mxu0 %v2838
        %3992 = vmatprep.subr.mxu0 %v2841
        %3993 = vmatpush1.msra.mxu0 %v2840
        %3994 = vmatprep.subr.mxu0 %v2843
        %3995 = vmatpush1.msra.mxu0 %v2842
        %3996 = vmatprep.subr.mxu0 %v2845
        %3997 = vmatpush1.msra.mxu0 %v2844
        %3998 = vmatprep.subr.mxu0 %v2847
        %3999 = vmatpush1.msra.mxu0 %v2846
        %4000 = vmatprep.subr.mxu0 %v2849
        %4001 = vmatpush1.msra.mxu0 %v2848
        %4002 = vmatprep.subr.mxu0 %v2851
        %4003 = vmatpush1.msra.mxu0 %v2850
        %4004 = vmatprep.subr.mxu0 %v2853
        %4005 = vmatpush1.msra.mxu0 %v2852
        %4006 = vmatprep.subr.mxu0 %v2855
        %4007 = vmatpush1.msra.mxu0 %v2854
        %4008 = vmatprep.subr.mxu0 %v2857
        %4009 = vmatpush1.msra.mxu0 %v2856
        %4010 = vmatprep.subr.mxu0 %v2859
        %4011 = vmatpush1.msra.mxu0 %v2858
        %4012 = vmatprep.subr.mxu0 %v2861
        %4013 = vmatpush1.msra.mxu0 %v2860
        %4014 = vmatprep.subr.mxu0 %v2863
        %4015 = vmatpush1.msra.mxu0 %v2862
        %4016 = vmatprep.subr.mxu0 %v2865
        %4017 = vmatpush1.msra.mxu0 %v2864
        %4018 = vmatprep.subr.mxu0 %v2867
        %4019 = vmatpush1.msra.mxu0 %v2866
        %4020 = vmatprep.mubr.f32.mxu0 %v3317
        %4021 = vmatmul.mubr.f32.gmra.mrb[0].mxu0 %v3316
        %v4022 = vpop.f32.mrb[0].mxu0
        %v4023 = vadd.f32 0.0, %v4022
        %v4024 = vpop.f32.mrb[0].mxu0
        %v4025 = vadd.f32 0.0, %v4024
        %4026 = vmatprep.mubr.f32.mxu0 %v3333
        %4027 = vmatmul.mubr.f32.gmra.mrb[0].mxu0 %v3332
        %v4028 = vpop.f32.mrb[0].mxu0
        %v4029 = vadd.f32 0.0, %v4028
        %v4030 = vpop.f32.mrb[0].mxu0
        %v4031 = vadd.f32 0.0, %v4030
        %4032 = vmatprep.mubr.f32.mxu0 %v3349
        %4033 = vmatmul.mubr.f32.gmra.mrb[0].mxu0 %v3348
        %v4034 = vpop.f32.mrb[0].mxu0
        %v4035 = vadd.f32 0.0, %v4034
        %v4036 = vpop.f32.mrb[0].mxu0
        %v4037 = vadd.f32 0.0, %v4036
        %4038 = vmatprep.mubr.f32.mxu0 %v3365
        %4039 = vmatmul.mubr.f32.gmra.mrb[0].mxu0 %v3364
        %v4040 = vpop.f32.mrb[0].mxu0
        %v4041 = vadd.f32 0.0, %v4040
        %v4042 = vpop.f32.mrb[0].mxu0
        %v4043 = vadd.f32 0.0, %v4042
        %4044 = vmatprep.mubr.f32.mxu0 %v3381
        %4045 = vmatmul.mubr.f32.gmra.mrb[0].mxu0 %v3380
        %v4046 = vpop.f32.mrb[0].mxu0
        %v4047 = vadd.f32 0.0, %v4046
        %v4048 = vpop.f32.mrb[0].mxu0
        %v4049 = vadd.f32 0.0, %v4048
        %4050 = vmatprep.mubr.f32.mxu0 %v3397
        %4051 = vmatmul.mubr.f32.gmra.mrb[0].mxu0 %v3396
        %v4052 = vpop.f32.mrb[0].mxu0
        %v4053 = vadd.f32 0.0, %v4052
        %v4054 = vpop.f32.mrb[0].mxu0
        %v4055 = vadd.f32 0.0, %v4054
        %4056 = vmatprep.mubr.f32.mxu0 %v3413
        %4057 = vmatmul.mubr.f32.gmra.mrb[0].mxu0 %v3412
        %v4058 = vpop.f32.mrb[0].mxu0
        %v4059 = vadd.f32 0.0, %v4058
        %v4060 = vpop.f32.mrb[0].mxu0
        %v4061 = vadd.f32 0.0, %v4060
        %4062 = vmatprep.mubr.f32.mxu0 %v3429
        %4063 = vmatmul.mubr.f32.gmra.mrb[0].mxu0 %v3428
        %v4064 = vpop.f32.mrb[0].mxu0
        %v4065 = vadd.f32 0.0, %v4064
        %v4066 = vpop.f32.mrb[0].mxu0
        %v4067 = vadd.f32 0.0, %v4066
        %4068 = vmatprep.mubr.f32.mxu0 %v3445
        %4069 = vmatmul.mubr.f32.gmra.mrb[0].mxu0 %v3444
        %v4070 = vpop.f32.mrb[0].mxu0
        %v4071 = vadd.f32 0.0, %v4070
        %v4072 = vpop.f32.mrb[0].mxu0
        %v4073 = vadd.f32 0.0, %v4072
        %4074 = vmatprep.mubr.f32.mxu0 %v3461
        %4075 = vmatmul.mubr.f32.gmra.mrb[0].mxu0 %v3460
        %v4076 = vpop.f32.mrb[0].mxu0
        %v4077 = vadd.f32 0.0, %v4076
        %v4078 = vpop.f32.mrb[0].mxu0
        %v4079 = vadd.f32 0.0, %v4078
        %4080 = vmatprep.mubr.f32.mxu0 %v3477
        %4081 = vmatmul.mubr.f32.gmra.mrb[0].mxu0 %v3476
        %v4082 = vpop.f32.mrb[0].mxu0
        %v4083 = vadd.f32 0.0, %v4082
        %v4084 = vpop.f32.mrb[0].mxu0
        %v4085 = vadd.f32 0.0, %v4084
        %4086 = vmatprep.mubr.f32.mxu0 %v3493
        %4087 = vmatmul.mubr.f32.gmra.mrb[0].mxu0 %v3492
        %v4088 = vpop.f32.mrb[0].mxu0
        %v4089 = vadd.f32 0.0, %v4088
        %v4090 = vpop.f32.mrb[0].mxu0
        %v4091 = vadd.f32 0.0, %v4090
        %4092 = vmatprep.mubr.f32.mxu0 %v3509
        %4093 = vmatmul.mubr.f32.gmra.mrb[0].mxu0 %v3508
        %v4094 = vpop.f32.mrb[0].mxu0
        %v4095 = vadd.f32 0.0, %v4094
        %v4096 = vpop.f32.mrb[0].mxu0
        %v4097 = vadd.f32 0.0, %v4096
        %4098 = vmatprep.mubr.f32.mxu0 %v3525
        %4099 = vmatmul.mubr.f32.gmra.mrb[0].mxu0 %v3524
        %v4100 = vpop.f32.mrb[0].mxu0
        %v4101 = vadd.f32 0.0, %v4100
        %v4102 = vpop.f32.mrb[0].mxu0
        %v4103 = vadd.f32 0.0, %v4102
        %4104 = vmatprep.mubr.f32.mxu0 %v3541
        %4105 = vmatmul.mubr.f32.gmra.mrb[0].mxu0 %v3540
        %v4106 = vpop.f32.mrb[0].mxu0
        %v4107 = vadd.f32 0.0, %v4106
        %v4108 = vpop.f32.mrb[0].mxu0
        %v4109 = vadd.f32 0.0, %v4108
        %4110 = vmatprep.mubr.f32.mxu0 %v3557
        %4111 = vmatmul.mubr.f32.gmra.mrb[0].mxu0 %v3556
        %v4112 = vpop.f32.mrb[0].mxu0
        %v4113 = vadd.f32 0.0, %v4112
        %v4114 = vpop.f32.mrb[0].mxu0
        %v4115 = vadd.f32 0.0, %v4114
        %4116 = vmatprep.mubr.f32.mxu0 %v3573
        %4117 = vmatmul.mubr.f32.gmra.mrb[0].mxu0 %v3572
        %v4118 = vpop.f32.mrb[0].mxu0
        %v4119 = vadd.f32 0.0, %v4118
        %v4120 = vpop.f32.mrb[0].mxu0
        %v4121 = vadd.f32 0.0, %v4120
        %4122 = vmatprep.mubr.f32.mxu0 %v3589
        %4123 = vmatmul.mubr.f32.gmra.mrb[0].mxu0 %v3588
        %v4124 = vpop.f32.mrb[0].mxu0
        %v4125 = vadd.f32 0.0, %v4124
        %v4126 = vpop.f32.mrb[0].mxu0
        %v4127 = vadd.f32 0.0, %v4126
        %4128 = vmatprep.mubr.f32.mxu0 %v3605
        %4129 = vmatmul.mubr.f32.gmra.mrb[0].mxu0 %v3604
        %v4130 = vpop.f32.mrb[0].mxu0
        %v4131 = vadd.f32 0.0, %v4130
        %v4132 = vpop.f32.mrb[0].mxu0
        %v4133 = vadd.f32 0.0, %v4132
        %4134 = vmatprep.mubr.f32.mxu0 %v3621
        %4135 = vmatmul.mubr.f32.gmra.mrb[0].mxu0 %v3620
        %v4136 = vpop.f32.mrb[0].mxu0
        %v4137 = vadd.f32 0.0, %v4136
        %v4138 = vpop.f32.mrb[0].mxu0
        %v4139 = vadd.f32 0.0, %v4138
        %4140 = vmatprep.mubr.f32.mxu0 %v3637
        %4141 = vmatmul.mubr.f32.gmra.mrb[0].mxu0 %v3636
        %v4142 = vpop.f32.mrb[0].mxu0
        %v4143 = vadd.f32 0.0, %v4142
        %v4144 = vpop.f32.mrb[0].mxu0
        %v4145 = vadd.f32 0.0, %v4144
        %4146 = vmatprep.mubr.f32.mxu0 %v3653
        %4147 = vmatmul.mubr.f32.gmra.mrb[0].mxu0 %v3652
        %v4148 = vpop.f32.mrb[0].mxu0
        %v4149 = vadd.f32 0.0, %v4148
        %v4150 = vpop.f32.mrb[0].mxu0
        %v4151 = vadd.f32 0.0, %v4150
        %4152 = vmatprep.mubr.f32.mxu0 %v3669
        %4153 = vmatmul.mubr.f32.gmra.mrb[0].mxu0 %v3668
        %v4154 = vpop.f32.mrb[0].mxu0
        %v4155 = vadd.f32 0.0, %v4154
        %v4156 = vpop.f32.mrb[0].mxu0
        %v4157 = vadd.f32 0.0, %v4156
        %4158 = vmatprep.mubr.f32.mxu0 %v3685
        %4159 = vmatmul.mubr.f32.gmra.mrb[0].mxu0 %v3684
        %v4160 = vpop.f32.mrb[0].mxu0
        %v4161 = vadd.f32 0.0, %v4160
        %v4162 = vpop.f32.mrb[0].mxu0
        %v4163 = vadd.f32 0.0, %v4162
        %4164 = vmatprep.mubr.f32.mxu0 %v3701
        %4165 = vmatmul.mubr.f32.gmra.mrb[0].mxu0 %v3700
        %v4166 = vpop.f32.mrb[0].mxu0
        %v4167 = vadd.f32 0.0, %v4166
        %v4168 = vpop.f32.mrb[0].mxu0
        %v4169 = vadd.f32 0.0, %v4168
        %4170 = vmatprep.mubr.f32.mxu0 %v3717
        %4171 = vmatmul.mubr.f32.gmra.mrb[0].mxu0 %v3716
        %v4172 = vpop.f32.mrb[0].mxu0
        %v4173 = vadd.f32 0.0, %v4172
        %v4174 = vpop.f32.mrb[0].mxu0
        %v4175 = vadd.f32 0.0, %v4174
        %4176 = vmatprep.mubr.f32.mxu0 %v3733
        %4177 = vmatmul.mubr.f32.gmra.mrb[0].mxu0 %v3732
        %v4178 = vpop.f32.mrb[0].mxu0
        %v4179 = vadd.f32 0.0, %v4178
        %v4180 = vpop.f32.mrb[0].mxu0
        %v4181 = vadd.f32 0.0, %v4180
        %4182 = vmatprep.mubr.f32.mxu0 %v3749
        %4183 = vmatmul.mubr.f32.gmra.mrb[0].mxu0 %v3748
        %v4184 = vpop.f32.mrb[0].mxu0
        %v4185 = vadd.f32 0.0, %v4184
        %v4186 = vpop.f32.mrb[0].mxu0
        %v4187 = vadd.f32 0.0, %v4186
        %4188 = vmatprep.mubr.f32.mxu0 %v3765
        %4189 = vmatmul.mubr.f32.gmra.mrb[0].mxu0 %v3764
        %v4190 = vpop.f32.mrb[0].mxu0
        %v4191 = vadd.f32 0.0, %v4190
        %v4192 = vpop.f32.mrb[0].mxu0
        %v4193 = vadd.f32 0.0, %v4192
        %4194 = vmatprep.mubr.f32.mxu0 %v3781
        %4195 = vmatmul.mubr.f32.gmra.mrb[0].mxu0 %v3780
        %v4196 = vpop.f32.mrb[0].mxu0
        %v4197 = vadd.f32 0.0, %v4196
        %v4198 = vpop.f32.mrb[0].mxu0
        %v4199 = vadd.f32 0.0, %v4198
        %4200 = vmatprep.mubr.f32.mxu0 %v3797
        %4201 = vmatmul.mubr.f32.gmra.mrb[0].mxu0 %v3796
        %v4202 = vpop.f32.mrb[0].mxu0
        %v4203 = vadd.f32 0.0, %v4202
        %v4204 = vpop.f32.mrb[0].mxu0
        %v4205 = vadd.f32 0.0, %v4204
        %4206 = vmatprep.mubr.f32.mxu0 %v3813
        %4207 = vmatmul.mubr.f32.gmra.mrb[0].mxu0 %v3812
        %v4208 = vpop.f32.mrb[0].mxu0
        %v4209 = vadd.f32 0.0, %v4208
        %v4210 = vpop.f32.mrb[0].mxu0
        %v4211 = vadd.f32 0.0, %v4210
        %4212 = vmatprep.mubr.f32.mxu0 %v3829
        %4213 = vmatmul.mubr.f32.gmra.mrb[0].mxu0 %v3828
        %v4214 = vpop.f32.mrb[0].mxu0
        %v4215 = vadd.f32 0.0, %v4214
        %v4216 = vpop.f32.mrb[0].mxu0
        %v4217 = vadd.f32 0.0, %v4216
        %4218 = vmatprep.mubr.f32.mxu0 %v3845
        %4219 = vmatmul.mubr.f32.gmra.mrb[0].mxu0 %v3844
        %v4220 = vpop.f32.mrb[0].mxu0
        %v4221 = vadd.f32 0.0, %v4220
        %v4222 = vpop.f32.mrb[0].mxu0
        %v4223 = vadd.f32 0.0, %v4222
        %4224 = vmatprep.mubr.f32.mxu0 %v3861
        %4225 = vmatmul.mubr.f32.gmra.mrb[0].mxu0 %v3860
        %v4226 = vpop.f32.mrb[0].mxu0
        %v4227 = vadd.f32 0.0, %v4226
        %v4228 = vpop.f32.mrb[0].mxu0
        %v4229 = vadd.f32 0.0, %v4228
        %4230 = vmatprep.mubr.f32.mxu0 %v3877
        %4231 = vmatmul.mubr.f32.gmra.mrb[0].mxu0 %v3876
        %v4232 = vpop.f32.mrb[0].mxu0
        %v4233 = vadd.f32 0.0, %v4232
        %v4234 = vpop.f32.mrb[0].mxu0
        %v4235 = vadd.f32 0.0, %v4234
        %4236 = vmatprep.mubr.f32.mxu0 %v3893
        %4237 = vmatmul.mubr.f32.gmra.mrb[0].mxu0 %v3892
        %v4238 = vpop.f32.mrb[0].mxu0
        %v4239 = vadd.f32 0.0, %v4238
        %v4240 = vpop.f32.mrb[0].mxu0
        %v4241 = vadd.f32 0.0, %v4240
        %4242 = vmatprep.mubr.f32.mxu0 %v3909
        %4243 = vmatmul.mubr.f32.gmra.mrb[0].mxu0 %v3908
        %v4244 = vpop.f32.mrb[0].mxu0
        %v4245 = vadd.f32 0.0, %v4244
        %v4246 = vpop.f32.mrb[0].mxu0
        %v4247 = vadd.f32 0.0, %v4246
        %4248 = vmatprep.mubr.f32.mxu0 %v3925
        %4249 = vmatmul.mubr.f32.gmra.mrb[0].mxu0 %v3924
        %v4250 = vpop.f32.mrb[0].mxu0
        %v4251 = vadd.f32 0.0, %v4250
        %v4252 = vpop.f32.mrb[0].mxu0
        %v4253 = vadd.f32 0.0, %v4252
        %4254 = vmatprep.mubr.f32.mxu0 %v3941
        %4255 = vmatmul.mubr.f32.gmra.mrb[0].mxu0 %v3940
        %v4256 = vpop.f32.mrb[0].mxu0
        %v4257 = vadd.f32 0.0, %v4256
        %v4258 = vpop.f32.mrb[0].mxu0
        %v4259 = vadd.f32 0.0, %v4258
        %4260 = vdwg.mxu0
        %4261 = vmatprep.subr.mxu0 %v2869
        %4262 = vmatpush1.msra.mxu0 %v2868
        %4263 = vmatprep.subr.mxu0 %v2871
        %4264 = vmatpush1.msra.mxu0 %v2870
        %4265 = vmatprep.subr.mxu0 %v2873
        %4266 = vmatpush1.msra.mxu0 %v2872
        %4267 = vmatprep.subr.mxu0 %v2875
        %4268 = vmatpush1.msra.mxu0 %v2874
        %4269 = vmatprep.subr.mxu0 %v2877
        %4270 = vmatpush1.msra.mxu0 %v2876
        %4271 = vmatprep.subr.mxu0 %v2879
        %4272 = vmatpush1.msra.mxu0 %v2878
        %4273 = vmatprep.subr.mxu0 %v2881
        %4274 = vmatpush1.msra.mxu0 %v2880
        %4275 = vmatprep.subr.mxu0 %v2883
        %4276 = vmatpush1.msra.mxu0 %v2882
        %4277 = vmatprep.subr.mxu0 %v2885
        %4278 = vmatpush1.msra.mxu0 %v2884
        %4279 = vmatprep.subr.mxu0 %v2887
        %4280 = vmatpush1.msra.mxu0 %v2886
        %4281 = vmatprep.subr.mxu0 %v2889
        %4282 = vmatpush1.msra.mxu0 %v2888
        %4283 = vmatprep.subr.mxu0 %v2891
        %4284 = vmatpush1.msra.mxu0 %v2890
        %4285 = vmatprep.subr.mxu0 %v2893
        %4286 = vmatpush1.msra.mxu0 %v2892
        %4287 = vmatprep.subr.mxu0 %v2895
        %4288 = vmatpush1.msra.mxu0 %v2894
        %4289 = vmatprep.subr.mxu0 %v2897
        %4290 = vmatpush1.msra.mxu0 %v2896
        %4291 = vmatprep.subr.mxu0 %v2899
        %4292 = vmatpush1.msra.mxu0 %v2898
        %4293 = vmatprep.subr.mxu0 %v2901
        %4294 = vmatpush1.msra.mxu0 %v2900
        %4295 = vmatprep.subr.mxu0 %v2903
        %4296 = vmatpush1.msra.mxu0 %v2902
        %4297 = vmatprep.subr.mxu0 %v2905
        %4298 = vmatpush1.msra.mxu0 %v2904
        %4299 = vmatprep.subr.mxu0 %v2907
        %4300 = vmatpush1.msra.mxu0 %v2906
        %4301 = vmatprep.subr.mxu0 %v2909
        %4302 = vmatpush1.msra.mxu0 %v2908
        %4303 = vmatprep.subr.mxu0 %v2911
        %4304 = vmatpush1.msra.mxu0 %v2910
        %4305 = vmatprep.subr.mxu0 %v2913
        %4306 = vmatpush1.msra.mxu0 %v2912
        %4307 = vmatprep.subr.mxu0 %v2915
        %4308 = vmatpush1.msra.mxu0 %v2914
        %4309 = vmatprep.subr.mxu0 %v2917
        %4310 = vmatpush1.msra.mxu0 %v2916
        %4311 = vmatprep.subr.mxu0 %v2919
        %4312 = vmatpush1.msra.mxu0 %v2918
        %4313 = vmatprep.subr.mxu0 %v2921
        %4314 = vmatpush1.msra.mxu0 %v2920
        %4315 = vmatprep.subr.mxu0 %v2923
        %4316 = vmatpush1.msra.mxu0 %v2922
        %4317 = vmatprep.subr.mxu0 %v2925
        %4318 = vmatpush1.msra.mxu0 %v2924
        %4319 = vmatprep.subr.mxu0 %v2927
        %4320 = vmatpush1.msra.mxu0 %v2926
        %4321 = vmatprep.subr.mxu0 %v2929
        %4322 = vmatpush1.msra.mxu0 %v2928
        %4323 = vmatprep.subr.mxu0 %v2931
        %4324 = vmatpush1.msra.mxu0 %v2930
        %4325 = vmatprep.mubr.f32.mxu0 %v3319
        %4326 = vmatmul.mubr.f32.gmra.mrb[0].mxu0 %v3318
        %v4327 = vpop.f32.mrb[0].mxu0
        %v4328 = vadd.f32 %v4023, %v4327
        %v4329 = vpop.f32.mrb[0].mxu0
        %v4330 = vadd.f32 %v4025, %v4329
        %4331 = vmatprep.mubr.f32.mxu0 %v3335
        %4332 = vmatmul.mubr.f32.gmra.mrb[0].mxu0 %v3334
        %v4333 = vpop.f32.mrb[0].mxu0
        %v4334 = vadd.f32 %v4029, %v4333
        %v4335 = vpop.f32.mrb[0].mxu0
        %v4336 = vadd.f32 %v4031, %v4335
        %4337 = vmatprep.mubr.f32.mxu0 %v3351
        %4338 = vmatmul.mubr.f32.gmra.mrb[0].mxu0 %v3350
        %v4339 = vpop.f32.mrb[0].mxu0
        %v4340 = vadd.f32 %v4035, %v4339
        %v4341 = vpop.f32.mrb[0].mxu0
        %v4342 = vadd.f32 %v4037, %v4341
        %4343 = vmatprep.mubr.f32.mxu0 %v3367
        %4344 = vmatmul.mubr.f32.gmra.mrb[0].mxu0 %v3366
        %v4345 = vpop.f32.mrb[0].mxu0
        %v4346 = vadd.f32 %v4041, %v4345
        %v4347 = vpop.f32.mrb[0].mxu0
        %v4348 = vadd.f32 %v4043, %v4347
        %4349 = vmatprep.mubr.f32.mxu0 %v3383
        %4350 = vmatmul.mubr.f32.gmra.mrb[0].mxu0 %v3382
        %v4351 = vpop.f32.mrb[0].mxu0
        %v4352 = vadd.f32 %v4047, %v4351
        %v4353 = vpop.f32.mrb[0].mxu0
        %v4354 = vadd.f32 %v4049, %v4353
        %4355 = vmatprep.mubr.f32.mxu0 %v3399
        %4356 = vmatmul.mubr.f32.gmra.mrb[0].mxu0 %v3398
        %v4357 = vpop.f32.mrb[0].mxu0
        %v4358 = vadd.f32 %v4053, %v4357
        %v4359 = vpop.f32.mrb[0].mxu0
        %v4360 = vadd.f32 %v4055, %v4359
        %4361 = vmatprep.mubr.f32.mxu0 %v3415
        %4362 = vmatmul.mubr.f32.gmra.mrb[0].mxu0 %v3414
        %v4363 = vpop.f32.mrb[0].mxu0
        %v4364 = vadd.f32 %v4059, %v4363
        %v4365 = vpop.f32.mrb[0].mxu0
        %v4366 = vadd.f32 %v4061, %v4365
        %4367 = vmatprep.mubr.f32.mxu0 %v3431
        %4368 = vmatmul.mubr.f32.gmra.mrb[0].mxu0 %v3430
        %v4369 = vpop.f32.mrb[0].mxu0
        %v4370 = vadd.f32 %v4065, %v4369
        %v4371 = vpop.f32.mrb[0].mxu0
        %v4372 = vadd.f32 %v4067, %v4371
        %4373 = vmatprep.mubr.f32.mxu0 %v3447
        %4374 = vmatmul.mubr.f32.gmra.mrb[0].mxu0 %v3446
        %v4375 = vpop.f32.mrb[0].mxu0
        %v4376 = vadd.f32 %v4071, %v4375
        %v4377 = vpop.f32.mrb[0].mxu0
        %v4378 = vadd.f32 %v4073, %v4377
        %4379 = vmatprep.mubr.f32.mxu0 %v3463
        %4380 = vmatmul.mubr.f32.gmra.mrb[0].mxu0 %v3462
        %v4381 = vpop.f32.mrb[0].mxu0
        %v4382 = vadd.f32 %v4077, %v4381
        %v4383 = vpop.f32.mrb[0].mxu0
        %v4384 = vadd.f32 %v4079, %v4383
        %4385 = vmatprep.mubr.f32.mxu0 %v3479
        %4386 = vmatmul.mubr.f32.gmra.mrb[0].mxu0 %v3478
        %v4387 = vpop.f32.mrb[0].mxu0
        %v4388 = vadd.f32 %v4083, %v4387
        %v4389 = vpop.f32.mrb[0].mxu0
        %v4390 = vadd.f32 %v4085, %v4389
        %4391 = vmatprep.mubr.f32.mxu0 %v3495
        %4392 = vmatmul.mubr.f32.gmra.mrb[0].mxu0 %v3494
        %v4393 = vpop.f32.mrb[0].mxu0
        %v4394 = vadd.f32 %v4089, %v4393
        %v4395 = vpop.f32.mrb[0].mxu0
        %v4396 = vadd.f32 %v4091, %v4395
        %4397 = vmatprep.mubr.f32.mxu0 %v3511
        %4398 = vmatmul.mubr.f32.gmra.mrb[0].mxu0 %v3510
        %v4399 = vpop.f32.mrb[0].mxu0
        %v4400 = vadd.f32 %v4095, %v4399
        %v4401 = vpop.f32.mrb[0].mxu0
        %v4402 = vadd.f32 %v4097, %v4401
        %4403 = vmatprep.mubr.f32.mxu0 %v3527
        %4404 = vmatmul.mubr.f32.gmra.mrb[0].mxu0 %v3526
        %v4405 = vpop.f32.mrb[0].mxu0
        %v4406 = vadd.f32 %v4101, %v4405
        %v4407 = vpop.f32.mrb[0].mxu0
        %v4408 = vadd.f32 %v4103, %v4407
        %4409 = vmatprep.mubr.f32.mxu0 %v3543
        %4410 = vmatmul.mubr.f32.gmra.mrb[0].mxu0 %v3542
        %v4411 = vpop.f32.mrb[0].mxu0
        %v4412 = vadd.f32 %v4107, %v4411
        %v4413 = vpop.f32.mrb[0].mxu0
        %v4414 = vadd.f32 %v4109, %v4413
        %4415 = vmatprep.mubr.f32.mxu0 %v3559
        %4416 = vmatmul.mubr.f32.gmra.mrb[0].mxu0 %v3558
        %v4417 = vpop.f32.mrb[0].mxu0
        %v4418 = vadd.f32 %v4113, %v4417
        %v4419 = vpop.f32.mrb[0].mxu0
        %v4420 = vadd.f32 %v4115, %v4419
        %4421 = vmatprep.mubr.f32.mxu0 %v3575
        %4422 = vmatmul.mubr.f32.gmra.mrb[0].mxu0 %v3574
        %v4423 = vpop.f32.mrb[0].mxu0
        %v4424 = vadd.f32 %v4119, %v4423
        %v4425 = vpop.f32.mrb[0].mxu0
        %v4426 = vadd.f32 %v4121, %v4425
        %4427 = vmatprep.mubr.f32.mxu0 %v3591
        %4428 = vmatmul.mubr.f32.gmra.mrb[0].mxu0 %v3590
        %v4429 = vpop.f32.mrb[0].mxu0
        %v4430 = vadd.f32 %v4125, %v4429
        %v4431 = vpop.f32.mrb[0].mxu0
        %v4432 = vadd.f32 %v4127, %v4431
        %4433 = vmatprep.mubr.f32.mxu0 %v3607
        %4434 = vmatmul.mubr.f32.gmra.mrb[0].mxu0 %v3606
        %v4435 = vpop.f32.mrb[0].mxu0
        %v4436 = vadd.f32 %v4131, %v4435
        %v4437 = vpop.f32.mrb[0].mxu0
        %v4438 = vadd.f32 %v4133, %v4437
        %4439 = vmatprep.mubr.f32.mxu0 %v3623
        %4440 = vmatmul.mubr.f32.gmra.mrb[0].mxu0 %v3622
        %v4441 = vpop.f32.mrb[0].mxu0
        %v4442 = vadd.f32 %v4137, %v4441
        %v4443 = vpop.f32.mrb[0].mxu0
        %v4444 = vadd.f32 %v4139, %v4443
        %4445 = vmatprep.mubr.f32.mxu0 %v3639
        %4446 = vmatmul.mubr.f32.gmra.mrb[0].mxu0 %v3638
        %v4447 = vpop.f32.mrb[0].mxu0
        %v4448 = vadd.f32 %v4143, %v4447
        %v4449 = vpop.f32.mrb[0].mxu0
        %v4450 = vadd.f32 %v4145, %v4449
        %4451 = vmatprep.mubr.f32.mxu0 %v3655
        %4452 = vmatmul.mubr.f32.gmra.mrb[0].mxu0 %v3654
        %v4453 = vpop.f32.mrb[0].mxu0
        %v4454 = vadd.f32 %v4149, %v4453
        %v4455 = vpop.f32.mrb[0].mxu0
        %v4456 = vadd.f32 %v4151, %v4455
        %4457 = vmatprep.mubr.f32.mxu0 %v3671
        %4458 = vmatmul.mubr.f32.gmra.mrb[0].mxu0 %v3670
        %v4459 = vpop.f32.mrb[0].mxu0
        %v4460 = vadd.f32 %v4155, %v4459
        %v4461 = vpop.f32.mrb[0].mxu0
        %v4462 = vadd.f32 %v4157, %v4461
        %4463 = vmatprep.mubr.f32.mxu0 %v3687
        %4464 = vmatmul.mubr.f32.gmra.mrb[0].mxu0 %v3686
        %v4465 = vpop.f32.mrb[0].mxu0
        %v4466 = vadd.f32 %v4161, %v4465
        %v4467 = vpop.f32.mrb[0].mxu0
        %v4468 = vadd.f32 %v4163, %v4467
        %4469 = vmatprep.mubr.f32.mxu0 %v3703
        %4470 = vmatmul.mubr.f32.gmra.mrb[0].mxu0 %v3702
        %v4471 = vpop.f32.mrb[0].mxu0
        %v4472 = vadd.f32 %v4167, %v4471
        %v4473 = vpop.f32.mrb[0].mxu0
        %v4474 = vadd.f32 %v4169, %v4473
        %4475 = vmatprep.mubr.f32.mxu0 %v3719
        %4476 = vmatmul.mubr.f32.gmra.mrb[0].mxu0 %v3718
        %v4477 = vpop.f32.mrb[0].mxu0
        %v4478 = vadd.f32 %v4173, %v4477
        %v4479 = vpop.f32.mrb[0].mxu0
        %v4480 = vadd.f32 %v4175, %v4479
        %4481 = vmatprep.mubr.f32.mxu0 %v3735
        %4482 = vmatmul.mubr.f32.gmra.mrb[0].mxu0 %v3734
        %v4483 = vpop.f32.mrb[0].mxu0
        %v4484 = vadd.f32 %v4179, %v4483
        %v4485 = vpop.f32.mrb[0].mxu0
        %v4486 = vadd.f32 %v4181, %v4485
        %4487 = vmatprep.mubr.f32.mxu0 %v3751
        %4488 = vmatmul.mubr.f32.gmra.mrb[0].mxu0 %v3750
        %v4489 = vpop.f32.mrb[0].mxu0
        %v4490 = vadd.f32 %v4185, %v4489
        %v4491 = vpop.f32.mrb[0].mxu0
        %v4492 = vadd.f32 %v4187, %v4491
        %4493 = vmatprep.mubr.f32.mxu0 %v3767
        %4494 = vmatmul.mubr.f32.gmra.mrb[0].mxu0 %v3766
        %v4495 = vpop.f32.mrb[0].mxu0
        %v4496 = vadd.f32 %v4191, %v4495
        %v4497 = vpop.f32.mrb[0].mxu0
        %v4498 = vadd.f32 %v4193, %v4497
        %4499 = vmatprep.mubr.f32.mxu0 %v3783
        %4500 = vmatmul.mubr.f32.gmra.mrb[0].mxu0 %v3782
        %v4501 = vpop.f32.mrb[0].mxu0
        %v4502 = vadd.f32 %v4197, %v4501
        %v4503 = vpop.f32.mrb[0].mxu0
        %v4504 = vadd.f32 %v4199, %v4503
        %4505 = vmatprep.mubr.f32.mxu0 %v3799
        %4506 = vmatmul.mubr.f32.gmra.mrb[0].mxu0 %v3798
        %v4507 = vpop.f32.mrb[0].mxu0
        %v4508 = vadd.f32 %v4203, %v4507
        %v4509 = vpop.f32.mrb[0].mxu0
        %v4510 = vadd.f32 %v4205, %v4509
        %4511 = vmatprep.mubr.f32.mxu0 %v3815
        %4512 = vmatmul.mubr.f32.gmra.mrb[0].mxu0 %v3814
        %v4513 = vpop.f32.mrb[0].mxu0
        %v4514 = vadd.f32 %v4209, %v4513
        %v4515 = vpop.f32.mrb[0].mxu0
        %v4516 = vadd.f32 %v4211, %v4515
        %4517 = vmatprep.mubr.f32.mxu0 %v3831
        %4518 = vmatmul.mubr.f32.gmra.mrb[0].mxu0 %v3830
        %v4519 = vpop.f32.mrb[0].mxu0
        %v4520 = vadd.f32 %v4215, %v4519
        %v4521 = vpop.f32.mrb[0].mxu0
        %v4522 = vadd.f32 %v4217, %v4521
        %4523 = vmatprep.mubr.f32.mxu0 %v3847
        %4524 = vmatmul.mubr.f32.gmra.mrb[0].mxu0 %v3846
        %v4525 = vpop.f32.mrb[0].mxu0
        %v4526 = vadd.f32 %v4221, %v4525
        %v4527 = vpop.f32.mrb[0].mxu0
        %v4528 = vadd.f32 %v4223, %v4527
        %4529 = vmatprep.mubr.f32.mxu0 %v3863
        %4530 = vmatmul.mubr.f32.gmra.mrb[0].mxu0 %v3862
        %v4531 = vpop.f32.mrb[0].mxu0
        %v4532 = vadd.f32 %v4227, %v4531
        %v4533 = vpop.f32.mrb[0].mxu0
        %v4534 = vadd.f32 %v4229, %v4533
        %4535 = vmatprep.mubr.f32.mxu0 %v3879
        %4536 = vmatmul.mubr.f32.gmra.mrb[0].mxu0 %v3878
        %v4537 = vpop.f32.mrb[0].mxu0
        %v4538 = vadd.f32 %v4233, %v4537
        %v4539 = vpop.f32.mrb[0].mxu0
        %v4540 = vadd.f32 %v4235, %v4539
        %4541 = vmatprep.mubr.f32.mxu0 %v3895
        %4542 = vmatmul.mubr.f32.gmra.mrb[0].mxu0 %v3894
        %v4543 = vpop.f32.mrb[0].mxu0
        %v4544 = vadd.f32 %v4239, %v4543
        %v4545 = vpop.f32.mrb[0].mxu0
        %v4546 = vadd.f32 %v4241, %v4545
        %4547 = vmatprep.mubr.f32.mxu0 %v3911
        %4548 = vmatmul.mubr.f32.gmra.mrb[0].mxu0 %v3910
        %v4549 = vpop.f32.mrb[0].mxu0
        %v4550 = vadd.f32 %v4245, %v4549
        %v4551 = vpop.f32.mrb[0].mxu0
        %v4552 = vadd.f32 %v4247, %v4551
        %4553 = vmatprep.mubr.f32.mxu0 %v3927
        %4554 = vmatmul.mubr.f32.gmra.mrb[0].mxu0 %v3926
        %v4555 = vpop.f32.mrb[0].mxu0
        %v4556 = vadd.f32 %v4251, %v4555
        %v4557 = vpop.f32.mrb[0].mxu0
        %v4558 = vadd.f32 %v4253, %v4557
        %4559 = vmatprep.mubr.f32.mxu0 %v3943
        %4560 = vmatmul.mubr.f32.gmra.mrb[0].mxu0 %v3942
        %v4561 = vpop.f32.mrb[0].mxu0
        %v4562 = vadd.f32 %v4257, %v4561
        %v4563 = vpop.f32.mrb[0].mxu0
        %v4564 = vadd.f32 %v4259, %v4563
        %4565 = vdwg.mxu0
        %4566 = vmatprep.subr.mxu0 %v2933
        %4567 = vmatpush1.msra.mxu0 %v2932
        %4568 = vmatprep.subr.mxu0 %v2935
        %4569 = vmatpush1.msra.mxu0 %v2934
        %4570 = vmatprep.subr.mxu0 %v2937
        %4571 = vmatpush1.msra.mxu0 %v2936
        %4572 = vmatprep.subr.mxu0 %v2939
        %4573 = vmatpush1.msra.mxu0 %v2938
        %4574 = vmatprep.subr.mxu0 %v2941
        %4575 = vmatpush1.msra.mxu0 %v2940
        %4576 = vmatprep.subr.mxu0 %v2943
        %4577 = vmatpush1.msra.mxu0 %v2942
        %4578 = vmatprep.subr.mxu0 %v2945
        %4579 = vmatpush1.msra.mxu0 %v2944
        %4580 = vmatprep.subr.mxu0 %v2947
        %4581 = vmatpush1.msra.mxu0 %v2946
        %4582 = vmatprep.subr.mxu0 %v2949
        %4583 = vmatpush1.msra.mxu0 %v2948
        %4584 = vmatprep.subr.mxu0 %v2951
        %4585 = vmatpush1.msra.mxu0 %v2950
        %4586 = vmatprep.subr.mxu0 %v2953
        %4587 = vmatpush1.msra.mxu0 %v2952
        %4588 = vmatprep.subr.mxu0 %v2955
        %4589 = vmatpush1.msra.mxu0 %v2954
        %4590 = vmatprep.subr.mxu0 %v2957
        %4591 = vmatpush1.msra.mxu0 %v2956
        %4592 = vmatprep.subr.mxu0 %v2959
        %4593 = vmatpush1.msra.mxu0 %v2958
        %4594 = vmatprep.subr.mxu0 %v2961
        %4595 = vmatpush1.msra.mxu0 %v2960
        %4596 = vmatprep.subr.mxu0 %v2963
        %4597 = vmatpush1.msra.mxu0 %v2962
        %4598 = vmatprep.subr.mxu0 %v2965
        %4599 = vmatpush1.msra.mxu0 %v2964
        %4600 = vmatprep.subr.mxu0 %v2967
        %4601 = vmatpush1.msra.mxu0 %v2966
        %4602 = vmatprep.subr.mxu0 %v2969
        %4603 = vmatpush1.msra.mxu0 %v2968
        %4604 = vmatprep.subr.mxu0 %v2971
        %4605 = vmatpush1.msra.mxu0 %v2970
        %4606 = vmatprep.subr.mxu0 %v2973
        %4607 = vmatpush1.msra.mxu0 %v2972
        %4608 = vmatprep.subr.mxu0 %v2975
        %4609 = vmatpush1.msra.mxu0 %v2974
        %4610 = vmatprep.subr.mxu0 %v2977
        %4611 = vmatpush1.msra.mxu0 %v2976
        %4612 = vmatprep.subr.mxu0 %v2979
        %4613 = vmatpush1.msra.mxu0 %v2978
        %4614 = vmatprep.subr.mxu0 %v2981
        %4615 = vmatpush1.msra.mxu0 %v2980
        %4616 = vmatprep.subr.mxu0 %v2983
        %4617 = vmatpush1.msra.mxu0 %v2982
        %4618 = vmatprep.subr.mxu0 %v2985
        %4619 = vmatpush1.msra.mxu0 %v2984
        %4620 = vmatprep.subr.mxu0 %v2987
        %4621 = vmatpush1.msra.mxu0 %v2986
        %4622 = vmatprep.subr.mxu0 %v2989
        %4623 = vmatpush1.msra.mxu0 %v2988
        %4624 = vmatprep.subr.mxu0 %v2991
        %4625 = vmatpush1.msra.mxu0 %v2990
        %4626 = vmatprep.subr.mxu0 %v2993
        %4627 = vmatpush1.msra.mxu0 %v2992
        %4628 = vmatprep.subr.mxu0 %v2995
        %4629 = vmatpush1.msra.mxu0 %v2994
        %4630 = vmatprep.mubr.f32.mxu0 %v3321
        %4631 = vmatmul.mubr.f32.gmra.mrb[0].mxu0 %v3320
        %v4632 = vpop.f32.mrb[0].mxu0
        %v4633 = vadd.f32 %v4328, %v4632
        %v4634 = vpop.f32.mrb[0].mxu0
        %v4635 = vadd.f32 %v4330, %v4634
        %4636 = vmatprep.mubr.f32.mxu0 %v3337
        %4637 = vmatmul.mubr.f32.gmra.mrb[0].mxu0 %v3336
        %v4638 = vpop.f32.mrb[0].mxu0
        %v4639 = vadd.f32 %v4334, %v4638
        %v4640 = vpop.f32.mrb[0].mxu0
        %v4641 = vadd.f32 %v4336, %v4640
        %4642 = vmatprep.mubr.f32.mxu0 %v3353
        %4643 = vmatmul.mubr.f32.gmra.mrb[0].mxu0 %v3352
        %v4644 = vpop.f32.mrb[0].mxu0
        %v4645 = vadd.f32 %v4340, %v4644
        %v4646 = vpop.f32.mrb[0].mxu0
        %v4647 = vadd.f32 %v4342, %v4646
        %4648 = vmatprep.mubr.f32.mxu0 %v3369
        %4649 = vmatmul.mubr.f32.gmra.mrb[0].mxu0 %v3368
        %v4650 = vpop.f32.mrb[0].mxu0
        %v4651 = vadd.f32 %v4346, %v4650
        %v4652 = vpop.f32.mrb[0].mxu0
        %v4653 = vadd.f32 %v4348, %v4652
        %4654 = vmatprep.mubr.f32.mxu0 %v3385
        %4655 = vmatmul.mubr.f32.gmra.mrb[0].mxu0 %v3384
        %v4656 = vpop.f32.mrb[0].mxu0
        %v4657 = vadd.f32 %v4352, %v4656
        %v4658 = vpop.f32.mrb[0].mxu0
        %v4659 = vadd.f32 %v4354, %v4658
        %4660 = vmatprep.mubr.f32.mxu0 %v3401
        %4661 = vmatmul.mubr.f32.gmra.mrb[0].mxu0 %v3400
        %v4662 = vpop.f32.mrb[0].mxu0
        %v4663 = vadd.f32 %v4358, %v4662
        %v4664 = vpop.f32.mrb[0].mxu0
        %v4665 = vadd.f32 %v4360, %v4664
        %4666 = vmatprep.mubr.f32.mxu0 %v3417
        %4667 = vmatmul.mubr.f32.gmra.mrb[0].mxu0 %v3416
        %v4668 = vpop.f32.mrb[0].mxu0
        %v4669 = vadd.f32 %v4364, %v4668
        %v4670 = vpop.f32.mrb[0].mxu0
        %v4671 = vadd.f32 %v4366, %v4670
        %4672 = vmatprep.mubr.f32.mxu0 %v3433
        %4673 = vmatmul.mubr.f32.gmra.mrb[0].mxu0 %v3432
        %v4674 = vpop.f32.mrb[0].mxu0
        %v4675 = vadd.f32 %v4370, %v4674
        %v4676 = vpop.f32.mrb[0].mxu0
        %v4677 = vadd.f32 %v4372, %v4676
        %4678 = vmatprep.mubr.f32.mxu0 %v3449
        %4679 = vmatmul.mubr.f32.gmra.mrb[0].mxu0 %v3448
        %v4680 = vpop.f32.mrb[0].mxu0
        %v4681 = vadd.f32 %v4376, %v4680
        %v4682 = vpop.f32.mrb[0].mxu0
        %v4683 = vadd.f32 %v4378, %v4682
        %4684 = vmatprep.mubr.f32.mxu0 %v3465
        %4685 = vmatmul.mubr.f32.gmra.mrb[0].mxu0 %v3464
        %v4686 = vpop.f32.mrb[0].mxu0
        %v4687 = vadd.f32 %v4382, %v4686
        %v4688 = vpop.f32.mrb[0].mxu0
        %v4689 = vadd.f32 %v4384, %v4688
        %4690 = vmatprep.mubr.f32.mxu0 %v3481
        %4691 = vmatmul.mubr.f32.gmra.mrb[0].mxu0 %v3480
        %v4692 = vpop.f32.mrb[0].mxu0
        %v4693 = vadd.f32 %v4388, %v4692
        %v4694 = vpop.f32.mrb[0].mxu0
        %v4695 = vadd.f32 %v4390, %v4694
        %4696 = vmatprep.mubr.f32.mxu0 %v3497
        %4697 = vmatmul.mubr.f32.gmra.mrb[0].mxu0 %v3496
        %v4698 = vpop.f32.mrb[0].mxu0
        %v4699 = vadd.f32 %v4394, %v4698
        %v4700 = vpop.f32.mrb[0].mxu0
        %v4701 = vadd.f32 %v4396, %v4700
        %4702 = vmatprep.mubr.f32.mxu0 %v3513
        %4703 = vmatmul.mubr.f32.gmra.mrb[0].mxu0 %v3512
        %v4704 = vpop.f32.mrb[0].mxu0
        %v4705 = vadd.f32 %v4400, %v4704
        %v4706 = vpop.f32.mrb[0].mxu0
        %v4707 = vadd.f32 %v4402, %v4706
        %4708 = vmatprep.mubr.f32.mxu0 %v3529
        %4709 = vmatmul.mubr.f32.gmra.mrb[0].mxu0 %v3528
        %v4710 = vpop.f32.mrb[0].mxu0
        %v4711 = vadd.f32 %v4406, %v4710
        %v4712 = vpop.f32.mrb[0].mxu0
        %v4713 = vadd.f32 %v4408, %v4712
        %4714 = vmatprep.mubr.f32.mxu0 %v3545
        %4715 = vmatmul.mubr.f32.gmra.mrb[0].mxu0 %v3544
        %v4716 = vpop.f32.mrb[0].mxu0
        %v4717 = vadd.f32 %v4412, %v4716
        %v4718 = vpop.f32.mrb[0].mxu0
        %v4719 = vadd.f32 %v4414, %v4718
        %4720 = vmatprep.mubr.f32.mxu0 %v3561
        %4721 = vmatmul.mubr.f32.gmra.mrb[0].mxu0 %v3560
        %v4722 = vpop.f32.mrb[0].mxu0
        %v4723 = vadd.f32 %v4418, %v4722
        %v4724 = vpop.f32.mrb[0].mxu0
        %v4725 = vadd.f32 %v4420, %v4724
        %4726 = vmatprep.mubr.f32.mxu0 %v3577
        %4727 = vmatmul.mubr.f32.gmra.mrb[0].mxu0 %v3576
        %v4728 = vpop.f32.mrb[0].mxu0
        %v4729 = vadd.f32 %v4424, %v4728
        %v4730 = vpop.f32.mrb[0].mxu0
        %v4731 = vadd.f32 %v4426, %v4730
        %4732 = vmatprep.mubr.f32.mxu0 %v3593
        %4733 = vmatmul.mubr.f32.gmra.mrb[0].mxu0 %v3592
        %v4734 = vpop.f32.mrb[0].mxu0
        %v4735 = vadd.f32 %v4430, %v4734
        %v4736 = vpop.f32.mrb[0].mxu0
        %v4737 = vadd.f32 %v4432, %v4736
        %4738 = vmatprep.mubr.f32.mxu0 %v3609
        %4739 = vmatmul.mubr.f32.gmra.mrb[0].mxu0 %v3608
        %v4740 = vpop.f32.mrb[0].mxu0
        %v4741 = vadd.f32 %v4436, %v4740
        %v4742 = vpop.f32.mrb[0].mxu0
        %v4743 = vadd.f32 %v4438, %v4742
        %4744 = vmatprep.mubr.f32.mxu0 %v3625
        %4745 = vmatmul.mubr.f32.gmra.mrb[0].mxu0 %v3624
        %v4746 = vpop.f32.mrb[0].mxu0
        %v4747 = vadd.f32 %v4442, %v4746
        %v4748 = vpop.f32.mrb[0].mxu0
        %v4749 = vadd.f32 %v4444, %v4748
        %4750 = vmatprep.mubr.f32.mxu0 %v3641
        %4751 = vmatmul.mubr.f32.gmra.mrb[0].mxu0 %v3640
        %v4752 = vpop.f32.mrb[0].mxu0
        %v4753 = vadd.f32 %v4448, %v4752
        %v4754 = vpop.f32.mrb[0].mxu0
        %v4755 = vadd.f32 %v4450, %v4754
        %4756 = vmatprep.mubr.f32.mxu0 %v3657
        %4757 = vmatmul.mubr.f32.gmra.mrb[0].mxu0 %v3656
        %v4758 = vpop.f32.mrb[0].mxu0
        %v4759 = vadd.f32 %v4454, %v4758
        %v4760 = vpop.f32.mrb[0].mxu0
        %v4761 = vadd.f32 %v4456, %v4760
        %4762 = vmatprep.mubr.f32.mxu0 %v3673
        %4763 = vmatmul.mubr.f32.gmra.mrb[0].mxu0 %v3672
        %v4764 = vpop.f32.mrb[0].mxu0
        %v4765 = vadd.f32 %v4460, %v4764
        %v4766 = vpop.f32.mrb[0].mxu0
        %v4767 = vadd.f32 %v4462, %v4766
        %4768 = vmatprep.mubr.f32.mxu0 %v3689
        %4769 = vmatmul.mubr.f32.gmra.mrb[0].mxu0 %v3688
        %v4770 = vpop.f32.mrb[0].mxu0
        %v4771 = vadd.f32 %v4466, %v4770
        %v4772 = vpop.f32.mrb[0].mxu0
        %v4773 = vadd.f32 %v4468, %v4772
        %4774 = vmatprep.mubr.f32.mxu0 %v3705
        %4775 = vmatmul.mubr.f32.gmra.mrb[0].mxu0 %v3704
        %v4776 = vpop.f32.mrb[0].mxu0
        %v4777 = vadd.f32 %v4472, %v4776
        %v4778 = vpop.f32.mrb[0].mxu0
        %v4779 = vadd.f32 %v4474, %v4778
        %4780 = vmatprep.mubr.f32.mxu0 %v3721
        %4781 = vmatmul.mubr.f32.gmra.mrb[0].mxu0 %v3720
        %v4782 = vpop.f32.mrb[0].mxu0
        %v4783 = vadd.f32 %v4478, %v4782
        %v4784 = vpop.f32.mrb[0].mxu0
        %v4785 = vadd.f32 %v4480, %v4784
        %4786 = vmatprep.mubr.f32.mxu0 %v3737
        %4787 = vmatmul.mubr.f32.gmra.mrb[0].mxu0 %v3736
        %v4788 = vpop.f32.mrb[0].mxu0
        %v4789 = vadd.f32 %v4484, %v4788
        %v4790 = vpop.f32.mrb[0].mxu0
        %v4791 = vadd.f32 %v4486, %v4790
        %4792 = vmatprep.mubr.f32.mxu0 %v3753
        %4793 = vmatmul.mubr.f32.gmra.mrb[0].mxu0 %v3752
        %v4794 = vpop.f32.mrb[0].mxu0
        %v4795 = vadd.f32 %v4490, %v4794
        %v4796 = vpop.f32.mrb[0].mxu0
        %v4797 = vadd.f32 %v4492, %v4796
        %4798 = vmatprep.mubr.f32.mxu0 %v3769
        %4799 = vmatmul.mubr.f32.gmra.mrb[0].mxu0 %v3768
        %v4800 = vpop.f32.mrb[0].mxu0
        %v4801 = vadd.f32 %v4496, %v4800
        %v4802 = vpop.f32.mrb[0].mxu0
        %v4803 = vadd.f32 %v4498, %v4802
        %4804 = vmatprep.mubr.f32.mxu0 %v3785
        %4805 = vmatmul.mubr.f32.gmra.mrb[0].mxu0 %v3784
        %v4806 = vpop.f32.mrb[0].mxu0
        %v4807 = vadd.f32 %v4502, %v4806
        %v4808 = vpop.f32.mrb[0].mxu0
        %v4809 = vadd.f32 %v4504, %v4808
        %4810 = vmatprep.mubr.f32.mxu0 %v3801
        %4811 = vmatmul.mubr.f32.gmra.mrb[0].mxu0 %v3800
        %v4812 = vpop.f32.mrb[0].mxu0
        %v4813 = vadd.f32 %v4508, %v4812
        %v4814 = vpop.f32.mrb[0].mxu0
        %v4815 = vadd.f32 %v4510, %v4814
        %4816 = vmatprep.mubr.f32.mxu0 %v3817
        %4817 = vmatmul.mubr.f32.gmra.mrb[0].mxu0 %v3816
        %v4818 = vpop.f32.mrb[0].mxu0
        %v4819 = vadd.f32 %v4514, %v4818
        %v4820 = vpop.f32.mrb[0].mxu0
        %v4821 = vadd.f32 %v4516, %v4820
        %4822 = vmatprep.mubr.f32.mxu0 %v3833
        %4823 = vmatmul.mubr.f32.gmra.mrb[0].mxu0 %v3832
        %v4824 = vpop.f32.mrb[0].mxu0
        %v4825 = vadd.f32 %v4520, %v4824
        %v4826 = vpop.f32.mrb[0].mxu0
        %v4827 = vadd.f32 %v4522, %v4826
        %4828 = vmatprep.mubr.f32.mxu0 %v3849
        %4829 = vmatmul.mubr.f32.gmra.mrb[0].mxu0 %v3848
        %v4830 = vpop.f32.mrb[0].mxu0
        %v4831 = vadd.f32 %v4526, %v4830
        %v4832 = vpop.f32.mrb[0].mxu0
        %v4833 = vadd.f32 %v4528, %v4832
        %4834 = vmatprep.mubr.f32.mxu0 %v3865
        %4835 = vmatmul.mubr.f32.gmra.mrb[0].mxu0 %v3864
        %v4836 = vpop.f32.mrb[0].mxu0
        %v4837 = vadd.f32 %v4532, %v4836
        %v4838 = vpop.f32.mrb[0].mxu0
        %v4839 = vadd.f32 %v4534, %v4838
        %4840 = vmatprep.mubr.f32.mxu0 %v3881
        %4841 = vmatmul.mubr.f32.gmra.mrb[0].mxu0 %v3880
        %v4842 = vpop.f32.mrb[0].mxu0
        %v4843 = vadd.f32 %v4538, %v4842
        %v4844 = vpop.f32.mrb[0].mxu0
        %v4845 = vadd.f32 %v4540, %v4844
        %4846 = vmatprep.mubr.f32.mxu0 %v3897
        %4847 = vmatmul.mubr.f32.gmra.mrb[0].mxu0 %v3896
        %v4848 = vpop.f32.mrb[0].mxu0
        %v4849 = vadd.f32 %v4544, %v4848
        %v4850 = vpop.f32.mrb[0].mxu0
        %v4851 = vadd.f32 %v4546, %v4850
        %4852 = vmatprep.mubr.f32.mxu0 %v3913
        %4853 = vmatmul.mubr.f32.gmra.mrb[0].mxu0 %v3912
        %v4854 = vpop.f32.mrb[0].mxu0
        %v4855 = vadd.f32 %v4550, %v4854
        %v4856 = vpop.f32.mrb[0].mxu0
        %v4857 = vadd.f32 %v4552, %v4856
        %4858 = vmatprep.mubr.f32.mxu0 %v3929
        %4859 = vmatmul.mubr.f32.gmra.mrb[0].mxu0 %v3928
        %v4860 = vpop.f32.mrb[0].mxu0
        %v4861 = vadd.f32 %v4556, %v4860
        %v4862 = vpop.f32.mrb[0].mxu0
        %v4863 = vadd.f32 %v4558, %v4862
        %4864 = vmatprep.mubr.f32.mxu0 %v3945
        %4865 = vmatmul.mubr.f32.gmra.mrb[0].mxu0 %v3944
        %v4866 = vpop.f32.mrb[0].mxu0
        %v4867 = vadd.f32 %v4562, %v4866
        %v4868 = vpop.f32.mrb[0].mxu0
        %v4869 = vadd.f32 %v4564, %v4868
        %4870 = vdwg.mxu0
        %4871 = vmatprep.subr.mxu0 %v2997
        %4872 = vmatpush1.msra.mxu0 %v2996
        %4873 = vmatprep.subr.mxu0 %v2999
        %4874 = vmatpush1.msra.mxu0 %v2998
        %4875 = vmatprep.subr.mxu0 %v3001
        %4876 = vmatpush1.msra.mxu0 %v3000
        %4877 = vmatprep.subr.mxu0 %v3003
        %4878 = vmatpush1.msra.mxu0 %v3002
        %4879 = vmatprep.subr.mxu0 %v3005
        %4880 = vmatpush1.msra.mxu0 %v3004
        %4881 = vmatprep.subr.mxu0 %v3007
        %4882 = vmatpush1.msra.mxu0 %v3006
        %4883 = vmatprep.subr.mxu0 %v3009
        %4884 = vmatpush1.msra.mxu0 %v3008
        %4885 = vmatprep.subr.mxu0 %v3011
        %4886 = vmatpush1.msra.mxu0 %v3010
        %4887 = vmatprep.subr.mxu0 %v3013
        %4888 = vmatpush1.msra.mxu0 %v3012
        %4889 = vmatprep.subr.mxu0 %v3015
        %4890 = vmatpush1.msra.mxu0 %v3014
        %4891 = vmatprep.subr.mxu0 %v3017
        %4892 = vmatpush1.msra.mxu0 %v3016
        %4893 = vmatprep.subr.mxu0 %v3019
        %4894 = vmatpush1.msra.mxu0 %v3018
        %4895 = vmatprep.subr.mxu0 %v3021
        %4896 = vmatpush1.msra.mxu0 %v3020
        %4897 = vmatprep.subr.mxu0 %v3023
        %4898 = vmatpush1.msra.mxu0 %v3022
        %4899 = vmatprep.subr.mxu0 %v3025
        %4900 = vmatpush1.msra.mxu0 %v3024
        %4901 = vmatprep.subr.mxu0 %v3027
        %4902 = vmatpush1.msra.mxu0 %v3026
        %4903 = vmatprep.subr.mxu0 %v3029
        %4904 = vmatpush1.msra.mxu0 %v3028
        %4905 = vmatprep.subr.mxu0 %v3031
        %4906 = vmatpush1.msra.mxu0 %v3030
        %4907 = vmatprep.subr.mxu0 %v3033
        %4908 = vmatpush1.msra.mxu0 %v3032
        %4909 = vmatprep.subr.mxu0 %v3035
        %4910 = vmatpush1.msra.mxu0 %v3034
        %4911 = vmatprep.subr.mxu0 %v3037
        %4912 = vmatpush1.msra.mxu0 %v3036
        %4913 = vmatprep.subr.mxu0 %v3039
        %4914 = vmatpush1.msra.mxu0 %v3038
        %4915 = vmatprep.subr.mxu0 %v3041
        %4916 = vmatpush1.msra.mxu0 %v3040
        %4917 = vmatprep.subr.mxu0 %v3043
        %4918 = vmatpush1.msra.mxu0 %v3042
        %4919 = vmatprep.subr.mxu0 %v3045
        %4920 = vmatpush1.msra.mxu0 %v3044
        %4921 = vmatprep.subr.mxu0 %v3047
        %4922 = vmatpush1.msra.mxu0 %v3046
        %4923 = vmatprep.subr.mxu0 %v3049
        %4924 = vmatpush1.msra.mxu0 %v3048
        %4925 = vmatprep.subr.mxu0 %v3051
        %4926 = vmatpush1.msra.mxu0 %v3050
        %4927 = vmatprep.subr.mxu0 %v3053
        %4928 = vmatpush1.msra.mxu0 %v3052
        %4929 = vmatprep.subr.mxu0 %v3055
        %4930 = vmatpush1.msra.mxu0 %v3054
        %4931 = vmatprep.subr.mxu0 %v3057
        %4932 = vmatpush1.msra.mxu0 %v3056
        %4933 = vmatprep.subr.mxu0 %v3059
        %4934 = vmatpush1.msra.mxu0 %v3058
        %4935 = vmatprep.mubr.f32.mxu0 %v3323
        %4936 = vmatmul.mubr.f32.gmra.mrb[0].mxu0 %v3322
        %v4937 = vpop.f32.mrb[0].mxu0
        %v4938 = vadd.f32 %v4633, %v4937
        %v4939 = vpop.f32.mrb[0].mxu0
        %v4940 = vadd.f32 %v4635, %v4939
        %4941 = vmatprep.mubr.f32.mxu0 %v3339
        %4942 = vmatmul.mubr.f32.gmra.mrb[0].mxu0 %v3338
        %v4943 = vpop.f32.mrb[0].mxu0
        %v4944 = vadd.f32 %v4639, %v4943
        %v4945 = vpop.f32.mrb[0].mxu0
        %v4946 = vadd.f32 %v4641, %v4945
        %4947 = vmatprep.mubr.f32.mxu0 %v3355
        %4948 = vmatmul.mubr.f32.gmra.mrb[0].mxu0 %v3354
        %v4949 = vpop.f32.mrb[0].mxu0
        %v4950 = vadd.f32 %v4645, %v4949
        %v4951 = vpop.f32.mrb[0].mxu0
        %v4952 = vadd.f32 %v4647, %v4951
        %4953 = vmatprep.mubr.f32.mxu0 %v3371
        %4954 = vmatmul.mubr.f32.gmra.mrb[0].mxu0 %v3370
        %v4955 = vpop.f32.mrb[0].mxu0
        %v4956 = vadd.f32 %v4651, %v4955
        %v4957 = vpop.f32.mrb[0].mxu0
        %v4958 = vadd.f32 %v4653, %v4957
        %4959 = vmatprep.mubr.f32.mxu0 %v3387
        %4960 = vmatmul.mubr.f32.gmra.mrb[0].mxu0 %v3386
        %v4961 = vpop.f32.mrb[0].mxu0
        %v4962 = vadd.f32 %v4657, %v4961
        %v4963 = vpop.f32.mrb[0].mxu0
        %v4964 = vadd.f32 %v4659, %v4963
        %4965 = vmatprep.mubr.f32.mxu0 %v3403
        %4966 = vmatmul.mubr.f32.gmra.mrb[0].mxu0 %v3402
        %v4967 = vpop.f32.mrb[0].mxu0
        %v4968 = vadd.f32 %v4663, %v4967
        %v4969 = vpop.f32.mrb[0].mxu0
        %v4970 = vadd.f32 %v4665, %v4969
        %4971 = vmatprep.mubr.f32.mxu0 %v3419
        %4972 = vmatmul.mubr.f32.gmra.mrb[0].mxu0 %v3418
        %v4973 = vpop.f32.mrb[0].mxu0
        %v4974 = vadd.f32 %v4669, %v4973
        %v4975 = vpop.f32.mrb[0].mxu0
        %v4976 = vadd.f32 %v4671, %v4975
        %4977 = vmatprep.mubr.f32.mxu0 %v3435
        %4978 = vmatmul.mubr.f32.gmra.mrb[0].mxu0 %v3434
        %v4979 = vpop.f32.mrb[0].mxu0
        %v4980 = vadd.f32 %v4675, %v4979
        %v4981 = vpop.f32.mrb[0].mxu0
        %v4982 = vadd.f32 %v4677, %v4981
        %4983 = vmatprep.mubr.f32.mxu0 %v3451
        %4984 = vmatmul.mubr.f32.gmra.mrb[0].mxu0 %v3450
        %v4985 = vpop.f32.mrb[0].mxu0
        %v4986 = vadd.f32 %v4681, %v4985
        %v4987 = vpop.f32.mrb[0].mxu0
        %v4988 = vadd.f32 %v4683, %v4987
        %4989 = vmatprep.mubr.f32.mxu0 %v3467
        %4990 = vmatmul.mubr.f32.gmra.mrb[0].mxu0 %v3466
        %v4991 = vpop.f32.mrb[0].mxu0
        %v4992 = vadd.f32 %v4687, %v4991
        %v4993 = vpop.f32.mrb[0].mxu0
        %v4994 = vadd.f32 %v4689, %v4993
        %4995 = vmatprep.mubr.f32.mxu0 %v3483
        %4996 = vmatmul.mubr.f32.gmra.mrb[0].mxu0 %v3482
        %v4997 = vpop.f32.mrb[0].mxu0
        %v4998 = vadd.f32 %v4693, %v4997
        %v4999 = vpop.f32.mrb[0].mxu0
        %v5000 = vadd.f32 %v4695, %v4999
        %5001 = vmatprep.mubr.f32.mxu0 %v3499
        %5002 = vmatmul.mubr.f32.gmra.mrb[0].mxu0 %v3498
        %v5003 = vpop.f32.mrb[0].mxu0
        %v5004 = vadd.f32 %v4699, %v5003
        %v5005 = vpop.f32.mrb[0].mxu0
        %v5006 = vadd.f32 %v4701, %v5005
        %5007 = vmatprep.mubr.f32.mxu0 %v3515
        %5008 = vmatmul.mubr.f32.gmra.mrb[0].mxu0 %v3514
        %v5009 = vpop.f32.mrb[0].mxu0
        %v5010 = vadd.f32 %v4705, %v5009
        %v5011 = vpop.f32.mrb[0].mxu0
        %v5012 = vadd.f32 %v4707, %v5011
        %5013 = vmatprep.mubr.f32.mxu0 %v3531
        %5014 = vmatmul.mubr.f32.gmra.mrb[0].mxu0 %v3530
        %v5015 = vpop.f32.mrb[0].mxu0
        %v5016 = vadd.f32 %v4711, %v5015
        %v5017 = vpop.f32.mrb[0].mxu0
        %v5018 = vadd.f32 %v4713, %v5017
        %5019 = vmatprep.mubr.f32.mxu0 %v3547
        %5020 = vmatmul.mubr.f32.gmra.mrb[0].mxu0 %v3546
        %v5021 = vpop.f32.mrb[0].mxu0
        %v5022 = vadd.f32 %v4717, %v5021
        %v5023 = vpop.f32.mrb[0].mxu0
        %v5024 = vadd.f32 %v4719, %v5023
        %5025 = vmatprep.mubr.f32.mxu0 %v3563
        %5026 = vmatmul.mubr.f32.gmra.mrb[0].mxu0 %v3562
        %v5027 = vpop.f32.mrb[0].mxu0
        %v5028 = vadd.f32 %v4723, %v5027
        %v5029 = vpop.f32.mrb[0].mxu0
        %v5030 = vadd.f32 %v4725, %v5029
        %5031 = vmatprep.mubr.f32.mxu0 %v3579
        %5032 = vmatmul.mubr.f32.gmra.mrb[0].mxu0 %v3578
        %v5033 = vpop.f32.mrb[0].mxu0
        %v5034 = vadd.f32 %v4729, %v5033
        %v5035 = vpop.f32.mrb[0].mxu0
        %v5036 = vadd.f32 %v4731, %v5035
        %5037 = vmatprep.mubr.f32.mxu0 %v3595
        %5038 = vmatmul.mubr.f32.gmra.mrb[0].mxu0 %v3594
        %v5039 = vpop.f32.mrb[0].mxu0
        %v5040 = vadd.f32 %v4735, %v5039
        %v5041 = vpop.f32.mrb[0].mxu0
        %v5042 = vadd.f32 %v4737, %v5041
        %5043 = vmatprep.mubr.f32.mxu0 %v3611
        %5044 = vmatmul.mubr.f32.gmra.mrb[0].mxu0 %v3610
        %v5045 = vpop.f32.mrb[0].mxu0
        %v5046 = vadd.f32 %v4741, %v5045
        %v5047 = vpop.f32.mrb[0].mxu0
        %v5048 = vadd.f32 %v4743, %v5047
        %5049 = vmatprep.mubr.f32.mxu0 %v3627
        %5050 = vmatmul.mubr.f32.gmra.mrb[0].mxu0 %v3626
        %v5051 = vpop.f32.mrb[0].mxu0
        %v5052 = vadd.f32 %v4747, %v5051
        %v5053 = vpop.f32.mrb[0].mxu0
        %v5054 = vadd.f32 %v4749, %v5053
        %5055 = vmatprep.mubr.f32.mxu0 %v3643
        %5056 = vmatmul.mubr.f32.gmra.mrb[0].mxu0 %v3642
        %v5057 = vpop.f32.mrb[0].mxu0
        %v5058 = vadd.f32 %v4753, %v5057
        %v5059 = vpop.f32.mrb[0].mxu0
        %v5060 = vadd.f32 %v4755, %v5059
        %5061 = vmatprep.mubr.f32.mxu0 %v3659
        %5062 = vmatmul.mubr.f32.gmra.mrb[0].mxu0 %v3658
        %v5063 = vpop.f32.mrb[0].mxu0
        %v5064 = vadd.f32 %v4759, %v5063
        %v5065 = vpop.f32.mrb[0].mxu0
        %v5066 = vadd.f32 %v4761, %v5065
        %5067 = vmatprep.mubr.f32.mxu0 %v3675
        %5068 = vmatmul.mubr.f32.gmra.mrb[0].mxu0 %v3674
        %v5069 = vpop.f32.mrb[0].mxu0
        %v5070 = vadd.f32 %v4765, %v5069
        %v5071 = vpop.f32.mrb[0].mxu0
        %v5072 = vadd.f32 %v4767, %v5071
        %5073 = vmatprep.mubr.f32.mxu0 %v3691
        %5074 = vmatmul.mubr.f32.gmra.mrb[0].mxu0 %v3690
        %v5075 = vpop.f32.mrb[0].mxu0
        %v5076 = vadd.f32 %v4771, %v5075
        %v5077 = vpop.f32.mrb[0].mxu0
        %v5078 = vadd.f32 %v4773, %v5077
        %5079 = vmatprep.mubr.f32.mxu0 %v3707
        %5080 = vmatmul.mubr.f32.gmra.mrb[0].mxu0 %v3706
        %v5081 = vpop.f32.mrb[0].mxu0
        %v5082 = vadd.f32 %v4777, %v5081
        %v5083 = vpop.f32.mrb[0].mxu0
        %v5084 = vadd.f32 %v4779, %v5083
        %5085 = vmatprep.mubr.f32.mxu0 %v3723
        %5086 = vmatmul.mubr.f32.gmra.mrb[0].mxu0 %v3722
        %v5087 = vpop.f32.mrb[0].mxu0
        %v5088 = vadd.f32 %v4783, %v5087
        %v5089 = vpop.f32.mrb[0].mxu0
        %v5090 = vadd.f32 %v4785, %v5089
        %5091 = vmatprep.mubr.f32.mxu0 %v3739
        %5092 = vmatmul.mubr.f32.gmra.mrb[0].mxu0 %v3738
        %v5093 = vpop.f32.mrb[0].mxu0
        %v5094 = vadd.f32 %v4789, %v5093
        %v5095 = vpop.f32.mrb[0].mxu0
        %v5096 = vadd.f32 %v4791, %v5095
        %5097 = vmatprep.mubr.f32.mxu0 %v3755
        %5098 = vmatmul.mubr.f32.gmra.mrb[0].mxu0 %v3754
        %v5099 = vpop.f32.mrb[0].mxu0
        %v5100 = vadd.f32 %v4795, %v5099
        %v5101 = vpop.f32.mrb[0].mxu0
        %v5102 = vadd.f32 %v4797, %v5101
        %5103 = vmatprep.mubr.f32.mxu0 %v3771
        %5104 = vmatmul.mubr.f32.gmra.mrb[0].mxu0 %v3770
        %v5105 = vpop.f32.mrb[0].mxu0
        %v5106 = vadd.f32 %v4801, %v5105
        %v5107 = vpop.f32.mrb[0].mxu0
        %v5108 = vadd.f32 %v4803, %v5107
        %5109 = vmatprep.mubr.f32.mxu0 %v3787
        %5110 = vmatmul.mubr.f32.gmra.mrb[0].mxu0 %v3786
        %v5111 = vpop.f32.mrb[0].mxu0
        %v5112 = vadd.f32 %v4807, %v5111
        %v5113 = vpop.f32.mrb[0].mxu0
        %v5114 = vadd.f32 %v4809, %v5113
        %5115 = vmatprep.mubr.f32.mxu0 %v3803
        %5116 = vmatmul.mubr.f32.gmra.mrb[0].mxu0 %v3802
        %v5117 = vpop.f32.mrb[0].mxu0
        %v5118 = vadd.f32 %v4813, %v5117
        %v5119 = vpop.f32.mrb[0].mxu0
        %v5120 = vadd.f32 %v4815, %v5119
        %5121 = vmatprep.mubr.f32.mxu0 %v3819
        %5122 = vmatmul.mubr.f32.gmra.mrb[0].mxu0 %v3818
        %v5123 = vpop.f32.mrb[0].mxu0
        %v5124 = vadd.f32 %v4819, %v5123
        %v5125 = vpop.f32.mrb[0].mxu0
        %v5126 = vadd.f32 %v4821, %v5125
        %5127 = vmatprep.mubr.f32.mxu0 %v3835
        %5128 = vmatmul.mubr.f32.gmra.mrb[0].mxu0 %v3834
        %v5129 = vpop.f32.mrb[0].mxu0
        %v5130 = vadd.f32 %v4825, %v5129
        %v5131 = vpop.f32.mrb[0].mxu0
        %v5132 = vadd.f32 %v4827, %v5131
        %5133 = vmatprep.mubr.f32.mxu0 %v3851
        %5134 = vmatmul.mubr.f32.gmra.mrb[0].mxu0 %v3850
        %v5135 = vpop.f32.mrb[0].mxu0
        %v5136 = vadd.f32 %v4831, %v5135
        %v5137 = vpop.f32.mrb[0].mxu0
        %v5138 = vadd.f32 %v4833, %v5137
        %5139 = vmatprep.mubr.f32.mxu0 %v3867
        %5140 = vmatmul.mubr.f32.gmra.mrb[0].mxu0 %v3866
        %v5141 = vpop.f32.mrb[0].mxu0
        %v5142 = vadd.f32 %v4837, %v5141
        %v5143 = vpop.f32.mrb[0].mxu0
        %v5144 = vadd.f32 %v4839, %v5143
        %5145 = vmatprep.mubr.f32.mxu0 %v3883
        %5146 = vmatmul.mubr.f32.gmra.mrb[0].mxu0 %v3882
        %v5147 = vpop.f32.mrb[0].mxu0
        %v5148 = vadd.f32 %v4843, %v5147
        %v5149 = vpop.f32.mrb[0].mxu0
        %v5150 = vadd.f32 %v4845, %v5149
        %5151 = vmatprep.mubr.f32.mxu0 %v3899
        %5152 = vmatmul.mubr.f32.gmra.mrb[0].mxu0 %v3898
        %v5153 = vpop.f32.mrb[0].mxu0
        %v5154 = vadd.f32 %v4849, %v5153
        %v5155 = vpop.f32.mrb[0].mxu0
        %v5156 = vadd.f32 %v4851, %v5155
        %5157 = vmatprep.mubr.f32.mxu0 %v3915
        %5158 = vmatmul.mubr.f32.gmra.mrb[0].mxu0 %v3914
        %v5159 = vpop.f32.mrb[0].mxu0
        %v5160 = vadd.f32 %v4855, %v5159
        %v5161 = vpop.f32.mrb[0].mxu0
        %v5162 = vadd.f32 %v4857, %v5161
        %5163 = vmatprep.mubr.f32.mxu0 %v3931
        %5164 = vmatmul.mubr.f32.gmra.mrb[0].mxu0 %v3930
        %v5165 = vpop.f32.mrb[0].mxu0
        %v5166 = vadd.f32 %v4861, %v5165
        %v5167 = vpop.f32.mrb[0].mxu0
        %v5168 = vadd.f32 %v4863, %v5167
        %5169 = vmatprep.mubr.f32.mxu0 %v3947
        %5170 = vmatmul.mubr.f32.gmra.mrb[0].mxu0 %v3946
        %v5171 = vpop.f32.mrb[0].mxu0
        %v5172 = vadd.f32 %v4867, %v5171
        %v5173 = vpop.f32.mrb[0].mxu0
        %v5174 = vadd.f32 %v4869, %v5173
        %5175 = vdwg.mxu0
        %5176 = vmatprep.subr.mxu0 %v3061
        %5177 = vmatpush1.msra.mxu0 %v3060
        %5178 = vmatprep.subr.mxu0 %v3063
        %5179 = vmatpush1.msra.mxu0 %v3062
        %5180 = vmatprep.subr.mxu0 %v3065
        %5181 = vmatpush1.msra.mxu0 %v3064
        %5182 = vmatprep.subr.mxu0 %v3067
        %5183 = vmatpush1.msra.mxu0 %v3066
        %5184 = vmatprep.subr.mxu0 %v3069
        %5185 = vmatpush1.msra.mxu0 %v3068
        %5186 = vmatprep.subr.mxu0 %v3071
        %5187 = vmatpush1.msra.mxu0 %v3070
        %5188 = vmatprep.subr.mxu0 %v3073
        %5189 = vmatpush1.msra.mxu0 %v3072
        %5190 = vmatprep.subr.mxu0 %v3075
        %5191 = vmatpush1.msra.mxu0 %v3074
        %5192 = vmatprep.subr.mxu0 %v3077
        %5193 = vmatpush1.msra.mxu0 %v3076
        %5194 = vmatprep.subr.mxu0 %v3079
        %5195 = vmatpush1.msra.mxu0 %v3078
        %5196 = vmatprep.subr.mxu0 %v3081
        %5197 = vmatpush1.msra.mxu0 %v3080
        %5198 = vmatprep.subr.mxu0 %v3083
        %5199 = vmatpush1.msra.mxu0 %v3082
        %5200 = vmatprep.subr.mxu0 %v3085
        %5201 = vmatpush1.msra.mxu0 %v3084
        %5202 = vmatprep.subr.mxu0 %v3087
        %5203 = vmatpush1.msra.mxu0 %v3086
        %5204 = vmatprep.subr.mxu0 %v3089
        %5205 = vmatpush1.msra.mxu0 %v3088
        %5206 = vmatprep.subr.mxu0 %v3091
        %5207 = vmatpush1.msra.mxu0 %v3090
        %5208 = vmatprep.subr.mxu0 %v3093
        %5209 = vmatpush1.msra.mxu0 %v3092
        %5210 = vmatprep.subr.mxu0 %v3095
        %5211 = vmatpush1.msra.mxu0 %v3094
        %5212 = vmatprep.subr.mxu0 %v3097
        %5213 = vmatpush1.msra.mxu0 %v3096
        %5214 = vmatprep.subr.mxu0 %v3099
        %5215 = vmatpush1.msra.mxu0 %v3098
        %5216 = vmatprep.subr.mxu0 %v3101
        %5217 = vmatpush1.msra.mxu0 %v3100
        %5218 = vmatprep.subr.mxu0 %v3103
        %5219 = vmatpush1.msra.mxu0 %v3102
        %5220 = vmatprep.subr.mxu0 %v3105
        %5221 = vmatpush1.msra.mxu0 %v3104
        %5222 = vmatprep.subr.mxu0 %v3107
        %5223 = vmatpush1.msra.mxu0 %v3106
        %5224 = vmatprep.subr.mxu0 %v3109
        %5225 = vmatpush1.msra.mxu0 %v3108
        %5226 = vmatprep.subr.mxu0 %v3111
        %5227 = vmatpush1.msra.mxu0 %v3110
        %5228 = vmatprep.subr.mxu0 %v3113
        %5229 = vmatpush1.msra.mxu0 %v3112
        %5230 = vmatprep.subr.mxu0 %v3115
        %5231 = vmatpush1.msra.mxu0 %v3114
        %5232 = vmatprep.subr.mxu0 %v3117
        %5233 = vmatpush1.msra.mxu0 %v3116
        %5234 = vmatprep.subr.mxu0 %v3119
        %5235 = vmatpush1.msra.mxu0 %v3118
        %5236 = vmatprep.subr.mxu0 %v3121
        %5237 = vmatpush1.msra.mxu0 %v3120
        %5238 = vmatprep.subr.mxu0 %v3123
        %5239 = vmatpush1.msra.mxu0 %v3122
        %5240 = vmatprep.mubr.f32.mxu0 %v3325
        %5241 = vmatmul.mubr.f32.gmra.mrb[0].mxu0 %v3324
        %v5242 = vpop.f32.mrb[0].mxu0
        %v5243 = vadd.f32 %v4938, %v5242
        %v5244 = vpop.f32.mrb[0].mxu0
        %v5245 = vadd.f32 %v4940, %v5244
        %5246 = vmatprep.mubr.f32.mxu0 %v3341
        %5247 = vmatmul.mubr.f32.gmra.mrb[0].mxu0 %v3340
        %v5248 = vpop.f32.mrb[0].mxu0
        %v5249 = vadd.f32 %v4944, %v5248
        %v5250 = vpop.f32.mrb[0].mxu0
        %v5251 = vadd.f32 %v4946, %v5250
        %5252 = vmatprep.mubr.f32.mxu0 %v3357
        %5253 = vmatmul.mubr.f32.gmra.mrb[0].mxu0 %v3356
        %v5254 = vpop.f32.mrb[0].mxu0
        %v5255 = vadd.f32 %v4950, %v5254
        %v5256 = vpop.f32.mrb[0].mxu0
        %v5257 = vadd.f32 %v4952, %v5256
        %5258 = vmatprep.mubr.f32.mxu0 %v3373
        %5259 = vmatmul.mubr.f32.gmra.mrb[0].mxu0 %v3372
        %v5260 = vpop.f32.mrb[0].mxu0
        %v5261 = vadd.f32 %v4956, %v5260
        %v5262 = vpop.f32.mrb[0].mxu0
        %v5263 = vadd.f32 %v4958, %v5262
        %5264 = vmatprep.mubr.f32.mxu0 %v3389
        %5265 = vmatmul.mubr.f32.gmra.mrb[0].mxu0 %v3388
        %v5266 = vpop.f32.mrb[0].mxu0
        %v5267 = vadd.f32 %v4962, %v5266
        %v5268 = vpop.f32.mrb[0].mxu0
        %v5269 = vadd.f32 %v4964, %v5268
        %5270 = vmatprep.mubr.f32.mxu0 %v3405
        %5271 = vmatmul.mubr.f32.gmra.mrb[0].mxu0 %v3404
        %v5272 = vpop.f32.mrb[0].mxu0
        %v5273 = vadd.f32 %v4968, %v5272
        %v5274 = vpop.f32.mrb[0].mxu0
        %v5275 = vadd.f32 %v4970, %v5274
        %5276 = vmatprep.mubr.f32.mxu0 %v3421
        %5277 = vmatmul.mubr.f32.gmra.mrb[0].mxu0 %v3420
        %v5278 = vpop.f32.mrb[0].mxu0
        %v5279 = vadd.f32 %v4974, %v5278
        %v5280 = vpop.f32.mrb[0].mxu0
        %v5281 = vadd.f32 %v4976, %v5280
        %5282 = vmatprep.mubr.f32.mxu0 %v3437
        %5283 = vmatmul.mubr.f32.gmra.mrb[0].mxu0 %v3436
        %v5284 = vpop.f32.mrb[0].mxu0
        %v5285 = vadd.f32 %v4980, %v5284
        %v5286 = vpop.f32.mrb[0].mxu0
        %v5287 = vadd.f32 %v4982, %v5286
        %5288 = vmatprep.mubr.f32.mxu0 %v3453
        %5289 = vmatmul.mubr.f32.gmra.mrb[0].mxu0 %v3452
        %v5290 = vpop.f32.mrb[0].mxu0
        %v5291 = vadd.f32 %v4986, %v5290
        %v5292 = vpop.f32.mrb[0].mxu0
        %v5293 = vadd.f32 %v4988, %v5292
        %5294 = vmatprep.mubr.f32.mxu0 %v3469
        %5295 = vmatmul.mubr.f32.gmra.mrb[0].mxu0 %v3468
        %v5296 = vpop.f32.mrb[0].mxu0
        %v5297 = vadd.f32 %v4992, %v5296
        %v5298 = vpop.f32.mrb[0].mxu0
        %v5299 = vadd.f32 %v4994, %v5298
        %5300 = vmatprep.mubr.f32.mxu0 %v3485
        %5301 = vmatmul.mubr.f32.gmra.mrb[0].mxu0 %v3484
        %v5302 = vpop.f32.mrb[0].mxu0
        %v5303 = vadd.f32 %v4998, %v5302
        %v5304 = vpop.f32.mrb[0].mxu0
        %v5305 = vadd.f32 %v5000, %v5304
        %5306 = vmatprep.mubr.f32.mxu0 %v3501
        %5307 = vmatmul.mubr.f32.gmra.mrb[0].mxu0 %v3500
        %v5308 = vpop.f32.mrb[0].mxu0
        %v5309 = vadd.f32 %v5004, %v5308
        %v5310 = vpop.f32.mrb[0].mxu0
        %v5311 = vadd.f32 %v5006, %v5310
        %5312 = vmatprep.mubr.f32.mxu0 %v3517
        %5313 = vmatmul.mubr.f32.gmra.mrb[0].mxu0 %v3516
        %v5314 = vpop.f32.mrb[0].mxu0
        %v5315 = vadd.f32 %v5010, %v5314
        %v5316 = vpop.f32.mrb[0].mxu0
        %v5317 = vadd.f32 %v5012, %v5316
        %5318 = vmatprep.mubr.f32.mxu0 %v3533
        %5319 = vmatmul.mubr.f32.gmra.mrb[0].mxu0 %v3532
        %v5320 = vpop.f32.mrb[0].mxu0
        %v5321 = vadd.f32 %v5016, %v5320
        %v5322 = vpop.f32.mrb[0].mxu0
        %v5323 = vadd.f32 %v5018, %v5322
        %5324 = vmatprep.mubr.f32.mxu0 %v3549
        %5325 = vmatmul.mubr.f32.gmra.mrb[0].mxu0 %v3548
        %v5326 = vpop.f32.mrb[0].mxu0
        %v5327 = vadd.f32 %v5022, %v5326
        %v5328 = vpop.f32.mrb[0].mxu0
        %v5329 = vadd.f32 %v5024, %v5328
        %5330 = vmatprep.mubr.f32.mxu0 %v3565
        %5331 = vmatmul.mubr.f32.gmra.mrb[0].mxu0 %v3564
        %v5332 = vpop.f32.mrb[0].mxu0
        %v5333 = vadd.f32 %v5028, %v5332
        %v5334 = vpop.f32.mrb[0].mxu0
        %v5335 = vadd.f32 %v5030, %v5334
        %5336 = vmatprep.mubr.f32.mxu0 %v3581
        %5337 = vmatmul.mubr.f32.gmra.mrb[0].mxu0 %v3580
        %v5338 = vpop.f32.mrb[0].mxu0
        %v5339 = vadd.f32 %v5034, %v5338
        %v5340 = vpop.f32.mrb[0].mxu0
        %v5341 = vadd.f32 %v5036, %v5340
        %5342 = vmatprep.mubr.f32.mxu0 %v3597
        %5343 = vmatmul.mubr.f32.gmra.mrb[0].mxu0 %v3596
        %v5344 = vpop.f32.mrb[0].mxu0
        %v5345 = vadd.f32 %v5040, %v5344
        %v5346 = vpop.f32.mrb[0].mxu0
        %v5347 = vadd.f32 %v5042, %v5346
        %5348 = vmatprep.mubr.f32.mxu0 %v3613
        %5349 = vmatmul.mubr.f32.gmra.mrb[0].mxu0 %v3612
        %v5350 = vpop.f32.mrb[0].mxu0
        %v5351 = vadd.f32 %v5046, %v5350
        %v5352 = vpop.f32.mrb[0].mxu0
        %v5353 = vadd.f32 %v5048, %v5352
        %5354 = vmatprep.mubr.f32.mxu0 %v3629
        %5355 = vmatmul.mubr.f32.gmra.mrb[0].mxu0 %v3628
        %v5356 = vpop.f32.mrb[0].mxu0
        %v5357 = vadd.f32 %v5052, %v5356
        %v5358 = vpop.f32.mrb[0].mxu0
        %v5359 = vadd.f32 %v5054, %v5358
        %5360 = vmatprep.mubr.f32.mxu0 %v3645
        %5361 = vmatmul.mubr.f32.gmra.mrb[0].mxu0 %v3644
        %v5362 = vpop.f32.mrb[0].mxu0
        %v5363 = vadd.f32 %v5058, %v5362
        %v5364 = vpop.f32.mrb[0].mxu0
        %v5365 = vadd.f32 %v5060, %v5364
        %5366 = vmatprep.mubr.f32.mxu0 %v3661
        %5367 = vmatmul.mubr.f32.gmra.mrb[0].mxu0 %v3660
        %v5368 = vpop.f32.mrb[0].mxu0
        %v5369 = vadd.f32 %v5064, %v5368
        %v5370 = vpop.f32.mrb[0].mxu0
        %v5371 = vadd.f32 %v5066, %v5370
        %5372 = vmatprep.mubr.f32.mxu0 %v3677
        %5373 = vmatmul.mubr.f32.gmra.mrb[0].mxu0 %v3676
        %v5374 = vpop.f32.mrb[0].mxu0
        %v5375 = vadd.f32 %v5070, %v5374
        %v5376 = vpop.f32.mrb[0].mxu0
        %v5377 = vadd.f32 %v5072, %v5376
        %5378 = vmatprep.mubr.f32.mxu0 %v3693
        %5379 = vmatmul.mubr.f32.gmra.mrb[0].mxu0 %v3692
        %v5380 = vpop.f32.mrb[0].mxu0
        %v5381 = vadd.f32 %v5076, %v5380
        %v5382 = vpop.f32.mrb[0].mxu0
        %v5383 = vadd.f32 %v5078, %v5382
        %5384 = vmatprep.mubr.f32.mxu0 %v3709
        %5385 = vmatmul.mubr.f32.gmra.mrb[0].mxu0 %v3708
        %v5386 = vpop.f32.mrb[0].mxu0
        %v5387 = vadd.f32 %v5082, %v5386
        %v5388 = vpop.f32.mrb[0].mxu0
        %v5389 = vadd.f32 %v5084, %v5388
        %5390 = vmatprep.mubr.f32.mxu0 %v3725
        %5391 = vmatmul.mubr.f32.gmra.mrb[0].mxu0 %v3724
        %v5392 = vpop.f32.mrb[0].mxu0
        %v5393 = vadd.f32 %v5088, %v5392
        %v5394 = vpop.f32.mrb[0].mxu0
        %v5395 = vadd.f32 %v5090, %v5394
        %5396 = vmatprep.mubr.f32.mxu0 %v3741
        %5397 = vmatmul.mubr.f32.gmra.mrb[0].mxu0 %v3740
        %v5398 = vpop.f32.mrb[0].mxu0
        %v5399 = vadd.f32 %v5094, %v5398
        %v5400 = vpop.f32.mrb[0].mxu0
        %v5401 = vadd.f32 %v5096, %v5400
        %5402 = vmatprep.mubr.f32.mxu0 %v3757
        %5403 = vmatmul.mubr.f32.gmra.mrb[0].mxu0 %v3756
        %v5404 = vpop.f32.mrb[0].mxu0
        %v5405 = vadd.f32 %v5100, %v5404
        %v5406 = vpop.f32.mrb[0].mxu0
        %v5407 = vadd.f32 %v5102, %v5406
        %5408 = vmatprep.mubr.f32.mxu0 %v3773
        %5409 = vmatmul.mubr.f32.gmra.mrb[0].mxu0 %v3772
        %v5410 = vpop.f32.mrb[0].mxu0
        %v5411 = vadd.f32 %v5106, %v5410
        %v5412 = vpop.f32.mrb[0].mxu0
        %v5413 = vadd.f32 %v5108, %v5412
        %5414 = vmatprep.mubr.f32.mxu0 %v3789
        %5415 = vmatmul.mubr.f32.gmra.mrb[0].mxu0 %v3788
        %v5416 = vpop.f32.mrb[0].mxu0
        %v5417 = vadd.f32 %v5112, %v5416
        %v5418 = vpop.f32.mrb[0].mxu0
        %v5419 = vadd.f32 %v5114, %v5418
        %5420 = vmatprep.mubr.f32.mxu0 %v3805
        %5421 = vmatmul.mubr.f32.gmra.mrb[0].mxu0 %v3804
        %v5422 = vpop.f32.mrb[0].mxu0
        %v5423 = vadd.f32 %v5118, %v5422
        %v5424 = vpop.f32.mrb[0].mxu0
        %v5425 = vadd.f32 %v5120, %v5424
        %5426 = vmatprep.mubr.f32.mxu0 %v3821
        %5427 = vmatmul.mubr.f32.gmra.mrb[0].mxu0 %v3820
        %v5428 = vpop.f32.mrb[0].mxu0
        %v5429 = vadd.f32 %v5124, %v5428
        %v5430 = vpop.f32.mrb[0].mxu0
        %v5431 = vadd.f32 %v5126, %v5430
        %5432 = vmatprep.mubr.f32.mxu0 %v3837
        %5433 = vmatmul.mubr.f32.gmra.mrb[0].mxu0 %v3836
        %v5434 = vpop.f32.mrb[0].mxu0
        %v5435 = vadd.f32 %v5130, %v5434
        %v5436 = vpop.f32.mrb[0].mxu0
        %v5437 = vadd.f32 %v5132, %v5436
        %5438 = vmatprep.mubr.f32.mxu0 %v3853
        %5439 = vmatmul.mubr.f32.gmra.mrb[0].mxu0 %v3852
        %v5440 = vpop.f32.mrb[0].mxu0
        %v5441 = vadd.f32 %v5136, %v5440
        %v5442 = vpop.f32.mrb[0].mxu0
        %v5443 = vadd.f32 %v5138, %v5442
        %5444 = vmatprep.mubr.f32.mxu0 %v3869
        %5445 = vmatmul.mubr.f32.gmra.mrb[0].mxu0 %v3868
        %v5446 = vpop.f32.mrb[0].mxu0
        %v5447 = vadd.f32 %v5142, %v5446
        %v5448 = vpop.f32.mrb[0].mxu0
        %v5449 = vadd.f32 %v5144, %v5448
        %5450 = vmatprep.mubr.f32.mxu0 %v3885
        %5451 = vmatmul.mubr.f32.gmra.mrb[0].mxu0 %v3884
        %v5452 = vpop.f32.mrb[0].mxu0
        %v5453 = vadd.f32 %v5148, %v5452
        %v5454 = vpop.f32.mrb[0].mxu0
        %v5455 = vadd.f32 %v5150, %v5454
        %5456 = vmatprep.mubr.f32.mxu0 %v3901
        %5457 = vmatmul.mubr.f32.gmra.mrb[0].mxu0 %v3900
        %v5458 = vpop.f32.mrb[0].mxu0
        %v5459 = vadd.f32 %v5154, %v5458
        %v5460 = vpop.f32.mrb[0].mxu0
        %v5461 = vadd.f32 %v5156, %v5460
        %5462 = vmatprep.mubr.f32.mxu0 %v3917
        %5463 = vmatmul.mubr.f32.gmra.mrb[0].mxu0 %v3916
        %v5464 = vpop.f32.mrb[0].mxu0
        %v5465 = vadd.f32 %v5160, %v5464
        %v5466 = vpop.f32.mrb[0].mxu0
        %v5467 = vadd.f32 %v5162, %v5466
        %5468 = vmatprep.mubr.f32.mxu0 %v3933
        %5469 = vmatmul.mubr.f32.gmra.mrb[0].mxu0 %v3932
        %v5470 = vpop.f32.mrb[0].mxu0
        %v5471 = vadd.f32 %v5166, %v5470
        %v5472 = vpop.f32.mrb[0].mxu0
        %v5473 = vadd.f32 %v5168, %v5472
        %5474 = vmatprep.mubr.f32.mxu0 %v3949
        %5475 = vmatmul.mubr.f32.gmra.mrb[0].mxu0 %v3948
        %v5476 = vpop.f32.mrb[0].mxu0
        %v5477 = vadd.f32 %v5172, %v5476
        %v5478 = vpop.f32.mrb[0].mxu0
        %v5479 = vadd.f32 %v5174, %v5478
        %5480 = vdwg.mxu0
        %5481 = vmatprep.subr.mxu0 %v3125
        %5482 = vmatpush1.msra.mxu0 %v3124
        %5483 = vmatprep.subr.mxu0 %v3127
        %5484 = vmatpush1.msra.mxu0 %v3126
        %5485 = vmatprep.subr.mxu0 %v3129
        %5486 = vmatpush1.msra.mxu0 %v3128
        %5487 = vmatprep.subr.mxu0 %v3131
        %5488 = vmatpush1.msra.mxu0 %v3130
        %5489 = vmatprep.subr.mxu0 %v3133
        %5490 = vmatpush1.msra.mxu0 %v3132
        %5491 = vmatprep.subr.mxu0 %v3135
        %5492 = vmatpush1.msra.mxu0 %v3134
        %5493 = vmatprep.subr.mxu0 %v3137
        %5494 = vmatpush1.msra.mxu0 %v3136
        %5495 = vmatprep.subr.mxu0 %v3139
        %5496 = vmatpush1.msra.mxu0 %v3138
        %5497 = vmatprep.subr.mxu0 %v3141
        %5498 = vmatpush1.msra.mxu0 %v3140
        %5499 = vmatprep.subr.mxu0 %v3143
        %5500 = vmatpush1.msra.mxu0 %v3142
        %5501 = vmatprep.subr.mxu0 %v3145
        %5502 = vmatpush1.msra.mxu0 %v3144
        %5503 = vmatprep.subr.mxu0 %v3147
        %5504 = vmatpush1.msra.mxu0 %v3146
        %5505 = vmatprep.subr.mxu0 %v3149
        %5506 = vmatpush1.msra.mxu0 %v3148
        %5507 = vmatprep.subr.mxu0 %v3151
        %5508 = vmatpush1.msra.mxu0 %v3150
        %5509 = vmatprep.subr.mxu0 %v3153
        %5510 = vmatpush1.msra.mxu0 %v3152
        %5511 = vmatprep.subr.mxu0 %v3155
        %5512 = vmatpush1.msra.mxu0 %v3154
        %5513 = vmatprep.subr.mxu0 %v3157
        %5514 = vmatpush1.msra.mxu0 %v3156
        %5515 = vmatprep.subr.mxu0 %v3159
        %5516 = vmatpush1.msra.mxu0 %v3158
        %5517 = vmatprep.subr.mxu0 %v3161
        %5518 = vmatpush1.msra.mxu0 %v3160
        %5519 = vmatprep.subr.mxu0 %v3163
        %5520 = vmatpush1.msra.mxu0 %v3162
        %5521 = vmatprep.subr.mxu0 %v3165
        %5522 = vmatpush1.msra.mxu0 %v3164
        %5523 = vmatprep.subr.mxu0 %v3167
        %5524 = vmatpush1.msra.mxu0 %v3166
        %5525 = vmatprep.subr.mxu0 %v3169
        %5526 = vmatpush1.msra.mxu0 %v3168
        %5527 = vmatprep.subr.mxu0 %v3171
        %5528 = vmatpush1.msra.mxu0 %v3170
        %5529 = vmatprep.subr.mxu0 %v3173
        %5530 = vmatpush1.msra.mxu0 %v3172
        %5531 = vmatprep.subr.mxu0 %v3175
        %5532 = vmatpush1.msra.mxu0 %v3174
        %5533 = vmatprep.subr.mxu0 %v3177
        %5534 = vmatpush1.msra.mxu0 %v3176
        %5535 = vmatprep.subr.mxu0 %v3179
        %5536 = vmatpush1.msra.mxu0 %v3178
        %5537 = vmatprep.subr.mxu0 %v3181
        %5538 = vmatpush1.msra.mxu0 %v3180
        %5539 = vmatprep.subr.mxu0 %v3183
        %5540 = vmatpush1.msra.mxu0 %v3182
        %5541 = vmatprep.subr.mxu0 %v3185
        %5542 = vmatpush1.msra.mxu0 %v3184
        %5543 = vmatprep.subr.mxu0 %v3187
        %5544 = vmatpush1.msra.mxu0 %v3186
        %5545 = vmatprep.mubr.f32.mxu0 %v3327
        %5546 = vmatmul.mubr.f32.gmra.mrb[0].mxu0 %v3326
        %v5547 = vpop.f32.mrb[0].mxu0
        %v5548 = vadd.f32 %v5243, %v5547
        %v5549 = vpop.f32.mrb[0].mxu0
        %v5550 = vadd.f32 %v5245, %v5549
        %5551 = vmatprep.mubr.f32.mxu0 %v3343
        %5552 = vmatmul.mubr.f32.gmra.mrb[0].mxu0 %v3342
        %v5553 = vpop.f32.mrb[0].mxu0
        %v5554 = vadd.f32 %v5249, %v5553
        %v5555 = vpop.f32.mrb[0].mxu0
        %v5556 = vadd.f32 %v5251, %v5555
        %5557 = vmatprep.mubr.f32.mxu0 %v3359
        %5558 = vmatmul.mubr.f32.gmra.mrb[0].mxu0 %v3358
        %v5559 = vpop.f32.mrb[0].mxu0
        %v5560 = vadd.f32 %v5255, %v5559
        %v5561 = vpop.f32.mrb[0].mxu0
        %v5562 = vadd.f32 %v5257, %v5561
        %5563 = vmatprep.mubr.f32.mxu0 %v3375
        %5564 = vmatmul.mubr.f32.gmra.mrb[0].mxu0 %v3374
        %v5565 = vpop.f32.mrb[0].mxu0
        %v5566 = vadd.f32 %v5261, %v5565
        %v5567 = vpop.f32.mrb[0].mxu0
        %v5568 = vadd.f32 %v5263, %v5567
        %5569 = vmatprep.mubr.f32.mxu0 %v3391
        %5570 = vmatmul.mubr.f32.gmra.mrb[0].mxu0 %v3390
        %v5571 = vpop.f32.mrb[0].mxu0
        %v5572 = vadd.f32 %v5267, %v5571
        %v5573 = vpop.f32.mrb[0].mxu0
        %v5574 = vadd.f32 %v5269, %v5573
        %5575 = vmatprep.mubr.f32.mxu0 %v3407
        %5576 = vmatmul.mubr.f32.gmra.mrb[0].mxu0 %v3406
        %v5577 = vpop.f32.mrb[0].mxu0
        %v5578 = vadd.f32 %v5273, %v5577
        %v5579 = vpop.f32.mrb[0].mxu0
        %v5580 = vadd.f32 %v5275, %v5579
        %5581 = vmatprep.mubr.f32.mxu0 %v3423
        %5582 = vmatmul.mubr.f32.gmra.mrb[0].mxu0 %v3422
        %v5583 = vpop.f32.mrb[0].mxu0
        %v5584 = vadd.f32 %v5279, %v5583
        %v5585 = vpop.f32.mrb[0].mxu0
        %v5586 = vadd.f32 %v5281, %v5585
        %5587 = vmatprep.mubr.f32.mxu0 %v3439
        %5588 = vmatmul.mubr.f32.gmra.mrb[0].mxu0 %v3438
        %v5589 = vpop.f32.mrb[0].mxu0
        %v5590 = vadd.f32 %v5285, %v5589
        %v5591 = vpop.f32.mrb[0].mxu0
        %v5592 = vadd.f32 %v5287, %v5591
        %5593 = vmatprep.mubr.f32.mxu0 %v3455
        %5594 = vmatmul.mubr.f32.gmra.mrb[0].mxu0 %v3454
        %v5595 = vpop.f32.mrb[0].mxu0
        %v5596 = vadd.f32 %v5291, %v5595
        %v5597 = vpop.f32.mrb[0].mxu0
        %v5598 = vadd.f32 %v5293, %v5597
        %5599 = vmatprep.mubr.f32.mxu0 %v3471
        %5600 = vmatmul.mubr.f32.gmra.mrb[0].mxu0 %v3470
        %v5601 = vpop.f32.mrb[0].mxu0
        %v5602 = vadd.f32 %v5297, %v5601
        %v5603 = vpop.f32.mrb[0].mxu0
        %v5604 = vadd.f32 %v5299, %v5603
        %5605 = vmatprep.mubr.f32.mxu0 %v3487
        %5606 = vmatmul.mubr.f32.gmra.mrb[0].mxu0 %v3486
        %v5607 = vpop.f32.mrb[0].mxu0
        %v5608 = vadd.f32 %v5303, %v5607
        %v5609 = vpop.f32.mrb[0].mxu0
        %v5610 = vadd.f32 %v5305, %v5609
        %5611 = vmatprep.mubr.f32.mxu0 %v3503
        %5612 = vmatmul.mubr.f32.gmra.mrb[0].mxu0 %v3502
        %v5613 = vpop.f32.mrb[0].mxu0
        %v5614 = vadd.f32 %v5309, %v5613
        %v5615 = vpop.f32.mrb[0].mxu0
        %v5616 = vadd.f32 %v5311, %v5615
        %5617 = vmatprep.mubr.f32.mxu0 %v3519
        %5618 = vmatmul.mubr.f32.gmra.mrb[0].mxu0 %v3518
        %v5619 = vpop.f32.mrb[0].mxu0
        %v5620 = vadd.f32 %v5315, %v5619
        %v5621 = vpop.f32.mrb[0].mxu0
        %v5622 = vadd.f32 %v5317, %v5621
        %5623 = vmatprep.mubr.f32.mxu0 %v3535
        %5624 = vmatmul.mubr.f32.gmra.mrb[0].mxu0 %v3534
        %v5625 = vpop.f32.mrb[0].mxu0
        %v5626 = vadd.f32 %v5321, %v5625
        %v5627 = vpop.f32.mrb[0].mxu0
        %v5628 = vadd.f32 %v5323, %v5627
        %5629 = vmatprep.mubr.f32.mxu0 %v3551
        %5630 = vmatmul.mubr.f32.gmra.mrb[0].mxu0 %v3550
        %v5631 = vpop.f32.mrb[0].mxu0
        %v5632 = vadd.f32 %v5327, %v5631
        %v5633 = vpop.f32.mrb[0].mxu0
        %v5634 = vadd.f32 %v5329, %v5633
        %5635 = vmatprep.mubr.f32.mxu0 %v3567
        %5636 = vmatmul.mubr.f32.gmra.mrb[0].mxu0 %v3566
        %v5637 = vpop.f32.mrb[0].mxu0
        %v5638 = vadd.f32 %v5333, %v5637
        %v5639 = vpop.f32.mrb[0].mxu0
        %v5640 = vadd.f32 %v5335, %v5639
        %5641 = vmatprep.mubr.f32.mxu0 %v3583
        %5642 = vmatmul.mubr.f32.gmra.mrb[0].mxu0 %v3582
        %v5643 = vpop.f32.mrb[0].mxu0
        %v5644 = vadd.f32 %v5339, %v5643
        %v5645 = vpop.f32.mrb[0].mxu0
        %v5646 = vadd.f32 %v5341, %v5645
        %5647 = vmatprep.mubr.f32.mxu0 %v3599
        %5648 = vmatmul.mubr.f32.gmra.mrb[0].mxu0 %v3598
        %v5649 = vpop.f32.mrb[0].mxu0
        %v5650 = vadd.f32 %v5345, %v5649
        %v5651 = vpop.f32.mrb[0].mxu0
        %v5652 = vadd.f32 %v5347, %v5651
        %5653 = vmatprep.mubr.f32.mxu0 %v3615
        %5654 = vmatmul.mubr.f32.gmra.mrb[0].mxu0 %v3614
        %v5655 = vpop.f32.mrb[0].mxu0
        %v5656 = vadd.f32 %v5351, %v5655
        %v5657 = vpop.f32.mrb[0].mxu0
        %v5658 = vadd.f32 %v5353, %v5657
        %5659 = vmatprep.mubr.f32.mxu0 %v3631
        %5660 = vmatmul.mubr.f32.gmra.mrb[0].mxu0 %v3630
        %v5661 = vpop.f32.mrb[0].mxu0
        %v5662 = vadd.f32 %v5357, %v5661
        %v5663 = vpop.f32.mrb[0].mxu0
        %v5664 = vadd.f32 %v5359, %v5663
        %5665 = vmatprep.mubr.f32.mxu0 %v3647
        %5666 = vmatmul.mubr.f32.gmra.mrb[0].mxu0 %v3646
        %v5667 = vpop.f32.mrb[0].mxu0
        %v5668 = vadd.f32 %v5363, %v5667
        %v5669 = vpop.f32.mrb[0].mxu0
        %v5670 = vadd.f32 %v5365, %v5669
        %5671 = vmatprep.mubr.f32.mxu0 %v3663
        %5672 = vmatmul.mubr.f32.gmra.mrb[0].mxu0 %v3662
        %v5673 = vpop.f32.mrb[0].mxu0
        %v5674 = vadd.f32 %v5369, %v5673
        %v5675 = vpop.f32.mrb[0].mxu0
        %v5676 = vadd.f32 %v5371, %v5675
        %5677 = vmatprep.mubr.f32.mxu0 %v3679
        %5678 = vmatmul.mubr.f32.gmra.mrb[0].mxu0 %v3678
        %v5679 = vpop.f32.mrb[0].mxu0
        %v5680 = vadd.f32 %v5375, %v5679
        %v5681 = vpop.f32.mrb[0].mxu0
        %v5682 = vadd.f32 %v5377, %v5681
        %5683 = vmatprep.mubr.f32.mxu0 %v3695
        %5684 = vmatmul.mubr.f32.gmra.mrb[0].mxu0 %v3694
        %v5685 = vpop.f32.mrb[0].mxu0
        %v5686 = vadd.f32 %v5381, %v5685
        %v5687 = vpop.f32.mrb[0].mxu0
        %v5688 = vadd.f32 %v5383, %v5687
        %5689 = vmatprep.mubr.f32.mxu0 %v3711
        %5690 = vmatmul.mubr.f32.gmra.mrb[0].mxu0 %v3710
        %v5691 = vpop.f32.mrb[0].mxu0
        %v5692 = vadd.f32 %v5387, %v5691
        %v5693 = vpop.f32.mrb[0].mxu0
        %v5694 = vadd.f32 %v5389, %v5693
        %5695 = vmatprep.mubr.f32.mxu0 %v3727
        %5696 = vmatmul.mubr.f32.gmra.mrb[0].mxu0 %v3726
        %v5697 = vpop.f32.mrb[0].mxu0
        %v5698 = vadd.f32 %v5393, %v5697
        %v5699 = vpop.f32.mrb[0].mxu0
        %v5700 = vadd.f32 %v5395, %v5699
        %5701 = vmatprep.mubr.f32.mxu0 %v3743
        %5702 = vmatmul.mubr.f32.gmra.mrb[0].mxu0 %v3742
        %v5703 = vpop.f32.mrb[0].mxu0
        %v5704 = vadd.f32 %v5399, %v5703
        %v5705 = vpop.f32.mrb[0].mxu0
        %v5706 = vadd.f32 %v5401, %v5705
        %5707 = vmatprep.mubr.f32.mxu0 %v3759
        %5708 = vmatmul.mubr.f32.gmra.mrb[0].mxu0 %v3758
        %v5709 = vpop.f32.mrb[0].mxu0
        %v5710 = vadd.f32 %v5405, %v5709
        %v5711 = vpop.f32.mrb[0].mxu0
        %v5712 = vadd.f32 %v5407, %v5711
        %5713 = vmatprep.mubr.f32.mxu0 %v3775
        %5714 = vmatmul.mubr.f32.gmra.mrb[0].mxu0 %v3774
        %v5715 = vpop.f32.mrb[0].mxu0
        %v5716 = vadd.f32 %v5411, %v5715
        %v5717 = vpop.f32.mrb[0].mxu0
        %v5718 = vadd.f32 %v5413, %v5717
        %5719 = vmatprep.mubr.f32.mxu0 %v3791
        %5720 = vmatmul.mubr.f32.gmra.mrb[0].mxu0 %v3790
        %v5721 = vpop.f32.mrb[0].mxu0
        %v5722 = vadd.f32 %v5417, %v5721
        %v5723 = vpop.f32.mrb[0].mxu0
        %v5724 = vadd.f32 %v5419, %v5723
        %5725 = vmatprep.mubr.f32.mxu0 %v3807
        %5726 = vmatmul.mubr.f32.gmra.mrb[0].mxu0 %v3806
        %v5727 = vpop.f32.mrb[0].mxu0
        %v5728 = vadd.f32 %v5423, %v5727
        %v5729 = vpop.f32.mrb[0].mxu0
        %v5730 = vadd.f32 %v5425, %v5729
        %5731 = vmatprep.mubr.f32.mxu0 %v3823
        %5732 = vmatmul.mubr.f32.gmra.mrb[0].mxu0 %v3822
        %v5733 = vpop.f32.mrb[0].mxu0
        %v5734 = vadd.f32 %v5429, %v5733
        %v5735 = vpop.f32.mrb[0].mxu0
        %v5736 = vadd.f32 %v5431, %v5735
        %5737 = vmatprep.mubr.f32.mxu0 %v3839
        %5738 = vmatmul.mubr.f32.gmra.mrb[0].mxu0 %v3838
        %v5739 = vpop.f32.mrb[0].mxu0
        %v5740 = vadd.f32 %v5435, %v5739
        %v5741 = vpop.f32.mrb[0].mxu0
        %v5742 = vadd.f32 %v5437, %v5741
        %5743 = vmatprep.mubr.f32.mxu0 %v3855
        %5744 = vmatmul.mubr.f32.gmra.mrb[0].mxu0 %v3854
        %v5745 = vpop.f32.mrb[0].mxu0
        %v5746 = vadd.f32 %v5441, %v5745
        %v5747 = vpop.f32.mrb[0].mxu0
        %v5748 = vadd.f32 %v5443, %v5747
        %5749 = vmatprep.mubr.f32.mxu0 %v3871
        %5750 = vmatmul.mubr.f32.gmra.mrb[0].mxu0 %v3870
        %v5751 = vpop.f32.mrb[0].mxu0
        %v5752 = vadd.f32 %v5447, %v5751
        %v5753 = vpop.f32.mrb[0].mxu0
        %v5754 = vadd.f32 %v5449, %v5753
        %5755 = vmatprep.mubr.f32.mxu0 %v3887
        %5756 = vmatmul.mubr.f32.gmra.mrb[0].mxu0 %v3886
        %v5757 = vpop.f32.mrb[0].mxu0
        %v5758 = vadd.f32 %v5453, %v5757
        %v5759 = vpop.f32.mrb[0].mxu0
        %v5760 = vadd.f32 %v5455, %v5759
        %5761 = vmatprep.mubr.f32.mxu0 %v3903
        %5762 = vmatmul.mubr.f32.gmra.mrb[0].mxu0 %v3902
        %v5763 = vpop.f32.mrb[0].mxu0
        %v5764 = vadd.f32 %v5459, %v5763
        %v5765 = vpop.f32.mrb[0].mxu0
        %v5766 = vadd.f32 %v5461, %v5765
        %5767 = vmatprep.mubr.f32.mxu0 %v3919
        %5768 = vmatmul.mubr.f32.gmra.mrb[0].mxu0 %v3918
        %v5769 = vpop.f32.mrb[0].mxu0
        %v5770 = vadd.f32 %v5465, %v5769
        %v5771 = vpop.f32.mrb[0].mxu0
        %v5772 = vadd.f32 %v5467, %v5771
        %5773 = vmatprep.mubr.f32.mxu0 %v3935
        %5774 = vmatmul.mubr.f32.gmra.mrb[0].mxu0 %v3934
        %v5775 = vpop.f32.mrb[0].mxu0
        %v5776 = vadd.f32 %v5471, %v5775
        %v5777 = vpop.f32.mrb[0].mxu0
        %v5778 = vadd.f32 %v5473, %v5777
        %5779 = vmatprep.mubr.f32.mxu0 %v3951
        %5780 = vmatmul.mubr.f32.gmra.mrb[0].mxu0 %v3950
        %v5781 = vpop.f32.mrb[0].mxu0
        %v5782 = vadd.f32 %v5477, %v5781
        %v5783 = vpop.f32.mrb[0].mxu0
        %v5784 = vadd.f32 %v5479, %v5783
        %5785 = vdwg.mxu0
        %5786 = vmatprep.subr.mxu0 %v3189
        %5787 = vmatpush1.msra.mxu0 %v3188
        %5788 = vmatprep.subr.mxu0 %v3191
        %5789 = vmatpush1.msra.mxu0 %v3190
        %5790 = vmatprep.subr.mxu0 %v3193
        %5791 = vmatpush1.msra.mxu0 %v3192
        %5792 = vmatprep.subr.mxu0 %v3195
        %5793 = vmatpush1.msra.mxu0 %v3194
        %5794 = vmatprep.subr.mxu0 %v3197
        %5795 = vmatpush1.msra.mxu0 %v3196
        %5796 = vmatprep.subr.mxu0 %v3199
        %5797 = vmatpush1.msra.mxu0 %v3198
        %5798 = vmatprep.subr.mxu0 %v3201
        %5799 = vmatpush1.msra.mxu0 %v3200
        %5800 = vmatprep.subr.mxu0 %v3203
        %5801 = vmatpush1.msra.mxu0 %v3202
        %5802 = vmatprep.subr.mxu0 %v3205
        %5803 = vmatpush1.msra.mxu0 %v3204
        %5804 = vmatprep.subr.mxu0 %v3207
        %5805 = vmatpush1.msra.mxu0 %v3206
        %5806 = vmatprep.subr.mxu0 %v3209
        %5807 = vmatpush1.msra.mxu0 %v3208
        %5808 = vmatprep.subr.mxu0 %v3211
        %5809 = vmatpush1.msra.mxu0 %v3210
        %5810 = vmatprep.subr.mxu0 %v3213
        %5811 = vmatpush1.msra.mxu0 %v3212
        %5812 = vmatprep.subr.mxu0 %v3215
        %5813 = vmatpush1.msra.mxu0 %v3214
        %5814 = vmatprep.subr.mxu0 %v3217
        %5815 = vmatpush1.msra.mxu0 %v3216
        %5816 = vmatprep.subr.mxu0 %v3219
        %5817 = vmatpush1.msra.mxu0 %v3218
        %5818 = vmatprep.subr.mxu0 %v3221
        %5819 = vmatpush1.msra.mxu0 %v3220
        %5820 = vmatprep.subr.mxu0 %v3223
        %5821 = vmatpush1.msra.mxu0 %v3222
        %5822 = vmatprep.subr.mxu0 %v3225
        %5823 = vmatpush1.msra.mxu0 %v3224
        %5824 = vmatprep.subr.mxu0 %v3227
        %5825 = vmatpush1.msra.mxu0 %v3226
        %5826 = vmatprep.subr.mxu0 %v3229
        %5827 = vmatpush1.msra.mxu0 %v3228
        %5828 = vmatprep.subr.mxu0 %v3231
        %5829 = vmatpush1.msra.mxu0 %v3230
        %5830 = vmatprep.subr.mxu0 %v3233
        %5831 = vmatpush1.msra.mxu0 %v3232
        %5832 = vmatprep.subr.mxu0 %v3235
        %5833 = vmatpush1.msra.mxu0 %v3234
        %5834 = vmatprep.subr.mxu0 %v3237
        %5835 = vmatpush1.msra.mxu0 %v3236
        %5836 = vmatprep.subr.mxu0 %v3239
        %5837 = vmatpush1.msra.mxu0 %v3238
        %5838 = vmatprep.subr.mxu0 %v3241
        %5839 = vmatpush1.msra.mxu0 %v3240
        %5840 = vmatprep.subr.mxu0 %v3243
        %5841 = vmatpush1.msra.mxu0 %v3242
        %5842 = vmatprep.subr.mxu0 %v3245
        %5843 = vmatpush1.msra.mxu0 %v3244
        %5844 = vmatprep.subr.mxu0 %v3247
        %5845 = vmatpush1.msra.mxu0 %v3246
        %5846 = vmatprep.subr.mxu0 %v3249
        %5847 = vmatpush1.msra.mxu0 %v3248
        %5848 = vmatprep.subr.mxu0 %v3251
        %5849 = vmatpush1.msra.mxu0 %v3250
        %5850 = vmatprep.mubr.f32.mxu0 %v3329
        %5851 = vmatmul.mubr.f32.gmra.mrb[0].mxu0 %v3328
        %v5852 = vpop.f32.mrb[0].mxu0
        %v5853 = vadd.f32 %v5548, %v5852
        %v5854 = vpop.f32.mrb[0].mxu0
        %v5855 = vadd.f32 %v5550, %v5854
        %5856 = vmatprep.mubr.f32.mxu0 %v3345
        %5857 = vmatmul.mubr.f32.gmra.mrb[0].mxu0 %v3344
        %v5858 = vpop.f32.mrb[0].mxu0
        %v5859 = vadd.f32 %v5554, %v5858
        %v5860 = vpop.f32.mrb[0].mxu0
        %v5861 = vadd.f32 %v5556, %v5860
        %5862 = vmatprep.mubr.f32.mxu0 %v3361
        %5863 = vmatmul.mubr.f32.gmra.mrb[0].mxu0 %v3360
        %v5864 = vpop.f32.mrb[0].mxu0
        %v5865 = vadd.f32 %v5560, %v5864
        %v5866 = vpop.f32.mrb[0].mxu0
        %v5867 = vadd.f32 %v5562, %v5866
        %5868 = vmatprep.mubr.f32.mxu0 %v3377
        %5869 = vmatmul.mubr.f32.gmra.mrb[0].mxu0 %v3376
        %v5870 = vpop.f32.mrb[0].mxu0
        %v5871 = vadd.f32 %v5566, %v5870
        %v5872 = vpop.f32.mrb[0].mxu0
        %v5873 = vadd.f32 %v5568, %v5872
        %5874 = vmatprep.mubr.f32.mxu0 %v3393
        %5875 = vmatmul.mubr.f32.gmra.mrb[0].mxu0 %v3392
        %v5876 = vpop.f32.mrb[0].mxu0
        %v5877 = vadd.f32 %v5572, %v5876
        %v5878 = vpop.f32.mrb[0].mxu0
        %v5879 = vadd.f32 %v5574, %v5878
        %5880 = vmatprep.mubr.f32.mxu0 %v3409
        %5881 = vmatmul.mubr.f32.gmra.mrb[0].mxu0 %v3408
        %v5882 = vpop.f32.mrb[0].mxu0
        %v5883 = vadd.f32 %v5578, %v5882
        %v5884 = vpop.f32.mrb[0].mxu0
        %v5885 = vadd.f32 %v5580, %v5884
        %5886 = vmatprep.mubr.f32.mxu0 %v3425
        %5887 = vmatmul.mubr.f32.gmra.mrb[0].mxu0 %v3424
        %v5888 = vpop.f32.mrb[0].mxu0
        %v5889 = vadd.f32 %v5584, %v5888
        %v5890 = vpop.f32.mrb[0].mxu0
        %v5891 = vadd.f32 %v5586, %v5890
        %5892 = vmatprep.mubr.f32.mxu0 %v3441
        %5893 = vmatmul.mubr.f32.gmra.mrb[0].mxu0 %v3440
        %v5894 = vpop.f32.mrb[0].mxu0
        %v5895 = vadd.f32 %v5590, %v5894
        %v5896 = vpop.f32.mrb[0].mxu0
        %v5897 = vadd.f32 %v5592, %v5896
        %5898 = vmatprep.mubr.f32.mxu0 %v3457
        %5899 = vmatmul.mubr.f32.gmra.mrb[0].mxu0 %v3456
        %v5900 = vpop.f32.mrb[0].mxu0
        %v5901 = vadd.f32 %v5596, %v5900
        %v5902 = vpop.f32.mrb[0].mxu0
        %v5903 = vadd.f32 %v5598, %v5902
        %5904 = vmatprep.mubr.f32.mxu0 %v3473
        %5905 = vmatmul.mubr.f32.gmra.mrb[0].mxu0 %v3472
        %v5906 = vpop.f32.mrb[0].mxu0
        %v5907 = vadd.f32 %v5602, %v5906
        %v5908 = vpop.f32.mrb[0].mxu0
        %v5909 = vadd.f32 %v5604, %v5908
        %5910 = vmatprep.mubr.f32.mxu0 %v3489
        %5911 = vmatmul.mubr.f32.gmra.mrb[0].mxu0 %v3488
        %v5912 = vpop.f32.mrb[0].mxu0
        %v5913 = vadd.f32 %v5608, %v5912
        %v5914 = vpop.f32.mrb[0].mxu0
        %v5915 = vadd.f32 %v5610, %v5914
        %5916 = vmatprep.mubr.f32.mxu0 %v3505
        %5917 = vmatmul.mubr.f32.gmra.mrb[0].mxu0 %v3504
        %v5918 = vpop.f32.mrb[0].mxu0
        %v5919 = vadd.f32 %v5614, %v5918
        %v5920 = vpop.f32.mrb[0].mxu0
        %v5921 = vadd.f32 %v5616, %v5920
        %5922 = vmatprep.mubr.f32.mxu0 %v3521
        %5923 = vmatmul.mubr.f32.gmra.mrb[0].mxu0 %v3520
        %v5924 = vpop.f32.mrb[0].mxu0
        %v5925 = vadd.f32 %v5620, %v5924
        %v5926 = vpop.f32.mrb[0].mxu0
        %v5927 = vadd.f32 %v5622, %v5926
        %5928 = vmatprep.mubr.f32.mxu0 %v3537
        %5929 = vmatmul.mubr.f32.gmra.mrb[0].mxu0 %v3536
        %v5930 = vpop.f32.mrb[0].mxu0
        %v5931 = vadd.f32 %v5626, %v5930
        %v5932 = vpop.f32.mrb[0].mxu0
        %v5933 = vadd.f32 %v5628, %v5932
        %5934 = vmatprep.mubr.f32.mxu0 %v3553
        %5935 = vmatmul.mubr.f32.gmra.mrb[0].mxu0 %v3552
        %v5936 = vpop.f32.mrb[0].mxu0
        %v5937 = vadd.f32 %v5632, %v5936
        %v5938 = vpop.f32.mrb[0].mxu0
        %v5939 = vadd.f32 %v5634, %v5938
        %5940 = vmatprep.mubr.f32.mxu0 %v3569
        %5941 = vmatmul.mubr.f32.gmra.mrb[0].mxu0 %v3568
        %v5942 = vpop.f32.mrb[0].mxu0
        %v5943 = vadd.f32 %v5638, %v5942
        %v5944 = vpop.f32.mrb[0].mxu0
        %v5945 = vadd.f32 %v5640, %v5944
        %5946 = vmatprep.mubr.f32.mxu0 %v3585
        %5947 = vmatmul.mubr.f32.gmra.mrb[0].mxu0 %v3584
        %v5948 = vpop.f32.mrb[0].mxu0
        %v5949 = vadd.f32 %v5644, %v5948
        %v5950 = vpop.f32.mrb[0].mxu0
        %v5951 = vadd.f32 %v5646, %v5950
        %5952 = vmatprep.mubr.f32.mxu0 %v3601
        %5953 = vmatmul.mubr.f32.gmra.mrb[0].mxu0 %v3600
        %v5954 = vpop.f32.mrb[0].mxu0
        %v5955 = vadd.f32 %v5650, %v5954
        %v5956 = vpop.f32.mrb[0].mxu0
        %v5957 = vadd.f32 %v5652, %v5956
        %5958 = vmatprep.mubr.f32.mxu0 %v3617
        %5959 = vmatmul.mubr.f32.gmra.mrb[0].mxu0 %v3616
        %v5960 = vpop.f32.mrb[0].mxu0
        %v5961 = vadd.f32 %v5656, %v5960
        %v5962 = vpop.f32.mrb[0].mxu0
        %v5963 = vadd.f32 %v5658, %v5962
        %5964 = vmatprep.mubr.f32.mxu0 %v3633
        %5965 = vmatmul.mubr.f32.gmra.mrb[0].mxu0 %v3632
        %v5966 = vpop.f32.mrb[0].mxu0
        %v5967 = vadd.f32 %v5662, %v5966
        %v5968 = vpop.f32.mrb[0].mxu0
        %v5969 = vadd.f32 %v5664, %v5968
        %5970 = vmatprep.mubr.f32.mxu0 %v3649
        %5971 = vmatmul.mubr.f32.gmra.mrb[0].mxu0 %v3648
        %v5972 = vpop.f32.mrb[0].mxu0
        %v5973 = vadd.f32 %v5668, %v5972
        %v5974 = vpop.f32.mrb[0].mxu0
        %v5975 = vadd.f32 %v5670, %v5974
        %5976 = vmatprep.mubr.f32.mxu0 %v3665
        %5977 = vmatmul.mubr.f32.gmra.mrb[0].mxu0 %v3664
        %v5978 = vpop.f32.mrb[0].mxu0
        %v5979 = vadd.f32 %v5674, %v5978
        %v5980 = vpop.f32.mrb[0].mxu0
        %v5981 = vadd.f32 %v5676, %v5980
        %5982 = vmatprep.mubr.f32.mxu0 %v3681
        %5983 = vmatmul.mubr.f32.gmra.mrb[0].mxu0 %v3680
        %v5984 = vpop.f32.mrb[0].mxu0
        %v5985 = vadd.f32 %v5680, %v5984
        %v5986 = vpop.f32.mrb[0].mxu0
        %v5987 = vadd.f32 %v5682, %v5986
        %5988 = vmatprep.mubr.f32.mxu0 %v3697
        %5989 = vmatmul.mubr.f32.gmra.mrb[0].mxu0 %v3696
        %v5990 = vpop.f32.mrb[0].mxu0
        %v5991 = vadd.f32 %v5686, %v5990
        %v5992 = vpop.f32.mrb[0].mxu0
        %v5993 = vadd.f32 %v5688, %v5992
        %5994 = vmatprep.mubr.f32.mxu0 %v3713
        %5995 = vmatmul.mubr.f32.gmra.mrb[0].mxu0 %v3712
        %v5996 = vpop.f32.mrb[0].mxu0
        %v5997 = vadd.f32 %v5692, %v5996
        %v5998 = vpop.f32.mrb[0].mxu0
        %v5999 = vadd.f32 %v5694, %v5998
        %6000 = vmatprep.mubr.f32.mxu0 %v3729
        %6001 = vmatmul.mubr.f32.gmra.mrb[0].mxu0 %v3728
        %v6002 = vpop.f32.mrb[0].mxu0
        %v6003 = vadd.f32 %v5698, %v6002
        %v6004 = vpop.f32.mrb[0].mxu0
        %v6005 = vadd.f32 %v5700, %v6004
        %6006 = vmatprep.mubr.f32.mxu0 %v3745
        %6007 = vmatmul.mubr.f32.gmra.mrb[0].mxu0 %v3744
        %v6008 = vpop.f32.mrb[0].mxu0
        %v6009 = vadd.f32 %v5704, %v6008
        %v6010 = vpop.f32.mrb[0].mxu0
        %v6011 = vadd.f32 %v5706, %v6010
        %6012 = vmatprep.mubr.f32.mxu0 %v3761
        %6013 = vmatmul.mubr.f32.gmra.mrb[0].mxu0 %v3760
        %v6014 = vpop.f32.mrb[0].mxu0
        %v6015 = vadd.f32 %v5710, %v6014
        %v6016 = vpop.f32.mrb[0].mxu0
        %v6017 = vadd.f32 %v5712, %v6016
        %6018 = vmatprep.mubr.f32.mxu0 %v3777
        %6019 = vmatmul.mubr.f32.gmra.mrb[0].mxu0 %v3776
        %v6020 = vpop.f32.mrb[0].mxu0
        %v6021 = vadd.f32 %v5716, %v6020
        %v6022 = vpop.f32.mrb[0].mxu0
        %v6023 = vadd.f32 %v5718, %v6022
        %6024 = vmatprep.mubr.f32.mxu0 %v3793
        %6025 = vmatmul.mubr.f32.gmra.mrb[0].mxu0 %v3792
        %v6026 = vpop.f32.mrb[0].mxu0
        %v6027 = vadd.f32 %v5722, %v6026
        %v6028 = vpop.f32.mrb[0].mxu0
        %v6029 = vadd.f32 %v5724, %v6028
        %6030 = vmatprep.mubr.f32.mxu0 %v3809
        %6031 = vmatmul.mubr.f32.gmra.mrb[0].mxu0 %v3808
        %v6032 = vpop.f32.mrb[0].mxu0
        %v6033 = vadd.f32 %v5728, %v6032
        %v6034 = vpop.f32.mrb[0].mxu0
        %v6035 = vadd.f32 %v5730, %v6034
        %6036 = vmatprep.mubr.f32.mxu0 %v3825
        %6037 = vmatmul.mubr.f32.gmra.mrb[0].mxu0 %v3824
        %v6038 = vpop.f32.mrb[0].mxu0
        %v6039 = vadd.f32 %v5734, %v6038
        %v6040 = vpop.f32.mrb[0].mxu0
        %v6041 = vadd.f32 %v5736, %v6040
        %6042 = vmatprep.mubr.f32.mxu0 %v3841
        %6043 = vmatmul.mubr.f32.gmra.mrb[0].mxu0 %v3840
        %v6044 = vpop.f32.mrb[0].mxu0
        %v6045 = vadd.f32 %v5740, %v6044
        %v6046 = vpop.f32.mrb[0].mxu0
        %v6047 = vadd.f32 %v5742, %v6046
        %6048 = vmatprep.mubr.f32.mxu0 %v3857
        %6049 = vmatmul.mubr.f32.gmra.mrb[0].mxu0 %v3856
        %v6050 = vpop.f32.mrb[0].mxu0
        %v6051 = vadd.f32 %v5746, %v6050
        %v6052 = vpop.f32.mrb[0].mxu0
        %v6053 = vadd.f32 %v5748, %v6052
        %6054 = vmatprep.mubr.f32.mxu0 %v3873
        %6055 = vmatmul.mubr.f32.gmra.mrb[0].mxu0 %v3872
        %v6056 = vpop.f32.mrb[0].mxu0
        %v6057 = vadd.f32 %v5752, %v6056
        %v6058 = vpop.f32.mrb[0].mxu0
        %v6059 = vadd.f32 %v5754, %v6058
        %6060 = vmatprep.mubr.f32.mxu0 %v3889
        %6061 = vmatmul.mubr.f32.gmra.mrb[0].mxu0 %v3888
        %v6062 = vpop.f32.mrb[0].mxu0
        %v6063 = vadd.f32 %v5758, %v6062
        %v6064 = vpop.f32.mrb[0].mxu0
        %v6065 = vadd.f32 %v5760, %v6064
        %6066 = vmatprep.mubr.f32.mxu0 %v3905
        %6067 = vmatmul.mubr.f32.gmra.mrb[0].mxu0 %v3904
        %v6068 = vpop.f32.mrb[0].mxu0
        %v6069 = vadd.f32 %v5764, %v6068
        %v6070 = vpop.f32.mrb[0].mxu0
        %v6071 = vadd.f32 %v5766, %v6070
        %6072 = vmatprep.mubr.f32.mxu0 %v3921
        %6073 = vmatmul.mubr.f32.gmra.mrb[0].mxu0 %v3920
        %v6074 = vpop.f32.mrb[0].mxu0
        %v6075 = vadd.f32 %v5770, %v6074
        %v6076 = vpop.f32.mrb[0].mxu0
        %v6077 = vadd.f32 %v5772, %v6076
        %6078 = vmatprep.mubr.f32.mxu0 %v3937
        %6079 = vmatmul.mubr.f32.gmra.mrb[0].mxu0 %v3936
        %v6080 = vpop.f32.mrb[0].mxu0
        %v6081 = vadd.f32 %v5776, %v6080
        %v6082 = vpop.f32.mrb[0].mxu0
        %v6083 = vadd.f32 %v5778, %v6082
        %6084 = vmatprep.mubr.f32.mxu0 %v3953
        %6085 = vmatmul.mubr.f32.gmra.mrb[0].mxu0 %v3952
        %v6086 = vpop.f32.mrb[0].mxu0
        %v6087 = vadd.f32 %v5782, %v6086
        %v6088 = vpop.f32.mrb[0].mxu0
        %v6089 = vadd.f32 %v5784, %v6088
        %6090 = vdwg.mxu0
        %6091 = vmatprep.subr.mxu0 %v3253
        %6092 = vmatpush1.msra.mxu0 %v3252
        %6093 = vmatprep.subr.mxu0 %v3255
        %6094 = vmatpush1.msra.mxu0 %v3254
        %6095 = vmatprep.subr.mxu0 %v3257
        %6096 = vmatpush1.msra.mxu0 %v3256
        %6097 = vmatprep.subr.mxu0 %v3259
        %6098 = vmatpush1.msra.mxu0 %v3258
        %6099 = vmatprep.subr.mxu0 %v3261
        %6100 = vmatpush1.msra.mxu0 %v3260
        %6101 = vmatprep.subr.mxu0 %v3263
        %6102 = vmatpush1.msra.mxu0 %v3262
        %6103 = vmatprep.subr.mxu0 %v3265
        %6104 = vmatpush1.msra.mxu0 %v3264
        %6105 = vmatprep.subr.mxu0 %v3267
        %6106 = vmatpush1.msra.mxu0 %v3266
        %6107 = vmatprep.subr.mxu0 %v3269
        %6108 = vmatpush1.msra.mxu0 %v3268
        %6109 = vmatprep.subr.mxu0 %v3271
        %6110 = vmatpush1.msra.mxu0 %v3270
        %6111 = vmatprep.subr.mxu0 %v3273
        %6112 = vmatpush1.msra.mxu0 %v3272
        %6113 = vmatprep.subr.mxu0 %v3275
        %6114 = vmatpush1.msra.mxu0 %v3274
        %6115 = vmatprep.subr.mxu0 %v3277
        %6116 = vmatpush1.msra.mxu0 %v3276
        %6117 = vmatprep.subr.mxu0 %v3279
        %6118 = vmatpush1.msra.mxu0 %v3278
        %6119 = vmatprep.subr.mxu0 %v3281
        %6120 = vmatpush1.msra.mxu0 %v3280
        %6121 = vmatprep.subr.mxu0 %v3283
        %6122 = vmatpush1.msra.mxu0 %v3282
        %6123 = vmatprep.subr.mxu0 %v3285
        %6124 = vmatpush1.msra.mxu0 %v3284
        %6125 = vmatprep.subr.mxu0 %v3287
        %6126 = vmatpush1.msra.mxu0 %v3286
        %6127 = vmatprep.subr.mxu0 %v3289
        %6128 = vmatpush1.msra.mxu0 %v3288
        %6129 = vmatprep.subr.mxu0 %v3291
        %6130 = vmatpush1.msra.mxu0 %v3290
        %6131 = vmatprep.subr.mxu0 %v3293
        %6132 = vmatpush1.msra.mxu0 %v3292
        %6133 = vmatprep.subr.mxu0 %v3295
        %6134 = vmatpush1.msra.mxu0 %v3294
        %6135 = vmatprep.subr.mxu0 %v3297
        %6136 = vmatpush1.msra.mxu0 %v3296
        %6137 = vmatprep.subr.mxu0 %v3299
        %6138 = vmatpush1.msra.mxu0 %v3298
        %6139 = vmatprep.subr.mxu0 %v3301
        %6140 = vmatpush1.msra.mxu0 %v3300
        %6141 = vmatprep.subr.mxu0 %v3303
        %6142 = vmatpush1.msra.mxu0 %v3302
        %6143 = vmatprep.subr.mxu0 %v3305
        %6144 = vmatpush1.msra.mxu0 %v3304
        %6145 = vmatprep.subr.mxu0 %v3307
        %6146 = vmatpush1.msra.mxu0 %v3306
        %6147 = vmatprep.subr.mxu0 %v3309
        %6148 = vmatpush1.msra.mxu0 %v3308
        %6149 = vmatprep.subr.mxu0 %v3311
        %6150 = vmatpush1.msra.mxu0 %v3310
        %6151 = vmatprep.subr.mxu0 %v3313
        %6152 = vmatpush1.msra.mxu0 %v3312
        %6153 = vmatprep.subr.mxu0 %v3315
        %6154 = vmatpush1.msra.mxu0 %v3314
        %6155 = vmatprep.mubr.f32.mxu0 %v3331
        %6156 = vmatmul.mubr.f32.gmra.mrb[0].mxu0 %v3330
        %v6157 = vpop.f32.mrb[0].mxu0
        %v6158 = vadd.f32 %v5853, %v6157
        %v6159 = vpop.f32.mrb[0].mxu0
        %v6160 = vadd.f32 %v5855, %v6159
        %6161 = vmatprep.mubr.f32.mxu0 %v3347
        %6162 = vmatmul.mubr.f32.gmra.mrb[0].mxu0 %v3346
        %v6163 = vpop.f32.mrb[0].mxu0
        %v6164 = vadd.f32 %v5859, %v6163
        %v6165 = vpop.f32.mrb[0].mxu0
        %v6166 = vadd.f32 %v5861, %v6165
        %6167 = vmatprep.mubr.f32.mxu0 %v3363
        %6168 = vmatmul.mubr.f32.gmra.mrb[0].mxu0 %v3362
        %v6169 = vpop.f32.mrb[0].mxu0
        %v6170 = vadd.f32 %v5865, %v6169
        %v6171 = vpop.f32.mrb[0].mxu0
        %v6172 = vadd.f32 %v5867, %v6171
        %6173 = vmatprep.mubr.f32.mxu0 %v3379
        %6174 = vmatmul.mubr.f32.gmra.mrb[0].mxu0 %v3378
        %v6175 = vpop.f32.mrb[0].mxu0
        %v6176 = vadd.f32 %v5871, %v6175
        %v6177 = vpop.f32.mrb[0].mxu0
        %v6178 = vadd.f32 %v5873, %v6177
        %6179 = vmatprep.mubr.f32.mxu0 %v3395
        %6180 = vmatmul.mubr.f32.gmra.mrb[0].mxu0 %v3394
        %v6181 = vpop.f32.mrb[0].mxu0
        %v6182 = vadd.f32 %v5877, %v6181
        %v6183 = vpop.f32.mrb[0].mxu0
        %v6184 = vadd.f32 %v5879, %v6183
        %6185 = vmatprep.mubr.f32.mxu0 %v3411
        %6186 = vmatmul.mubr.f32.gmra.mrb[0].mxu0 %v3410
        %v6187 = vpop.f32.mrb[0].mxu0
        %v6188 = vadd.f32 %v5883, %v6187
        %v6189 = vpop.f32.mrb[0].mxu0
        %v6190 = vadd.f32 %v5885, %v6189
        %6191 = vmatprep.mubr.f32.mxu0 %v3427
        %6192 = vmatmul.mubr.f32.gmra.mrb[0].mxu0 %v3426
        %v6193 = vpop.f32.mrb[0].mxu0
        %v6194 = vadd.f32 %v5889, %v6193
        %v6195 = vpop.f32.mrb[0].mxu0
        %v6196 = vadd.f32 %v5891, %v6195
        %6197 = vmatprep.mubr.f32.mxu0 %v3443
        %6198 = vmatmul.mubr.f32.gmra.mrb[0].mxu0 %v3442
        %v6199 = vpop.f32.mrb[0].mxu0
        %v6200 = vadd.f32 %v5895, %v6199
        %v6201 = vpop.f32.mrb[0].mxu0
        %v6202 = vadd.f32 %v5897, %v6201
        %6203 = vmatprep.mubr.f32.mxu0 %v3459
        %6204 = vmatmul.mubr.f32.gmra.mrb[0].mxu0 %v3458
        %v6205 = vpop.f32.mrb[0].mxu0
        %v6206 = vadd.f32 %v5901, %v6205
        %v6207 = vpop.f32.mrb[0].mxu0
        %v6208 = vadd.f32 %v5903, %v6207
        %6209 = vmatprep.mubr.f32.mxu0 %v3475
        %6210 = vmatmul.mubr.f32.gmra.mrb[0].mxu0 %v3474
        %v6211 = vpop.f32.mrb[0].mxu0
        %v6212 = vadd.f32 %v5907, %v6211
        %v6213 = vpop.f32.mrb[0].mxu0
        %v6214 = vadd.f32 %v5909, %v6213
        %6215 = vmatprep.mubr.f32.mxu0 %v3491
        %6216 = vmatmul.mubr.f32.gmra.mrb[0].mxu0 %v3490
        %v6217 = vpop.f32.mrb[0].mxu0
        %v6218 = vadd.f32 %v5913, %v6217
        %v6219 = vpop.f32.mrb[0].mxu0
        %v6220 = vadd.f32 %v5915, %v6219
        %6221 = vmatprep.mubr.f32.mxu0 %v3507
        %6222 = vmatmul.mubr.f32.gmra.mrb[0].mxu0 %v3506
        %v6223 = vpop.f32.mrb[0].mxu0
        %v6224 = vadd.f32 %v5919, %v6223
        %v6225 = vpop.f32.mrb[0].mxu0
        %v6226 = vadd.f32 %v5921, %v6225
        %6227 = vmatprep.mubr.f32.mxu0 %v3523
        %6228 = vmatmul.mubr.f32.gmra.mrb[0].mxu0 %v3522
        %v6229 = vpop.f32.mrb[0].mxu0
        %v6230 = vadd.f32 %v5925, %v6229
        %v6231 = vpop.f32.mrb[0].mxu0
        %v6232 = vadd.f32 %v5927, %v6231
        %6233 = vmatprep.mubr.f32.mxu0 %v3539
        %6234 = vmatmul.mubr.f32.gmra.mrb[0].mxu0 %v3538
        %v6235 = vpop.f32.mrb[0].mxu0
        %v6236 = vadd.f32 %v5931, %v6235
        %v6237 = vpop.f32.mrb[0].mxu0
        %v6238 = vadd.f32 %v5933, %v6237
        %6239 = vmatprep.mubr.f32.mxu0 %v3555
        %6240 = vmatmul.mubr.f32.gmra.mrb[0].mxu0 %v3554
        %v6241 = vpop.f32.mrb[0].mxu0
        %v6242 = vadd.f32 %v5937, %v6241
        %v6243 = vpop.f32.mrb[0].mxu0
        %v6244 = vadd.f32 %v5939, %v6243
        %6245 = vmatprep.mubr.f32.mxu0 %v3571
        %6246 = vmatmul.mubr.f32.gmra.mrb[0].mxu0 %v3570
        %v6247 = vpop.f32.mrb[0].mxu0
        %v6248 = vadd.f32 %v5943, %v6247
        %v6249 = vpop.f32.mrb[0].mxu0
        %v6250 = vadd.f32 %v5945, %v6249
        %6251 = vmatprep.mubr.f32.mxu0 %v3587
        %6252 = vmatmul.mubr.f32.gmra.mrb[0].mxu0 %v3586
        %v6253 = vpop.f32.mrb[0].mxu0
        %v6254 = vadd.f32 %v5949, %v6253
        %v6255 = vpop.f32.mrb[0].mxu0
        %v6256 = vadd.f32 %v5951, %v6255
        %6257 = vmatprep.mubr.f32.mxu0 %v3603
        %6258 = vmatmul.mubr.f32.gmra.mrb[0].mxu0 %v3602
        %v6259 = vpop.f32.mrb[0].mxu0
        %v6260 = vadd.f32 %v5955, %v6259
        %v6261 = vpop.f32.mrb[0].mxu0
        %v6262 = vadd.f32 %v5957, %v6261
        %6263 = vmatprep.mubr.f32.mxu0 %v3619
        %6264 = vmatmul.mubr.f32.gmra.mrb[0].mxu0 %v3618
        %v6265 = vpop.f32.mrb[0].mxu0
        %v6266 = vadd.f32 %v5961, %v6265
        %v6267 = vpop.f32.mrb[0].mxu0
        %v6268 = vadd.f32 %v5963, %v6267
        %6269 = vmatprep.mubr.f32.mxu0 %v3635
        %6270 = vmatmul.mubr.f32.gmra.mrb[0].mxu0 %v3634
        %v6271 = vpop.f32.mrb[0].mxu0
        %v6272 = vadd.f32 %v5967, %v6271
        %v6273 = vpop.f32.mrb[0].mxu0
        %v6274 = vadd.f32 %v5969, %v6273
        %6275 = vmatprep.mubr.f32.mxu0 %v3651
        %6276 = vmatmul.mubr.f32.gmra.mrb[0].mxu0 %v3650
        %v6277 = vpop.f32.mrb[0].mxu0
        %v6278 = vadd.f32 %v5973, %v6277
        %v6279 = vpop.f32.mrb[0].mxu0
        %v6280 = vadd.f32 %v5975, %v6279
        %6281 = vmatprep.mubr.f32.mxu0 %v3667
        %6282 = vmatmul.mubr.f32.gmra.mrb[0].mxu0 %v3666
        %v6283 = vpop.f32.mrb[0].mxu0
        %v6284 = vadd.f32 %v5979, %v6283
        %v6285 = vpop.f32.mrb[0].mxu0
        %v6286 = vadd.f32 %v5981, %v6285
        %6287 = vmatprep.mubr.f32.mxu0 %v3683
        %6288 = vmatmul.mubr.f32.gmra.mrb[0].mxu0 %v3682
        %v6289 = vpop.f32.mrb[0].mxu0
        %v6290 = vadd.f32 %v5985, %v6289
        %v6291 = vpop.f32.mrb[0].mxu0
        %v6292 = vadd.f32 %v5987, %v6291
        %6293 = vmatprep.mubr.f32.mxu0 %v3699
        %6294 = vmatmul.mubr.f32.gmra.mrb[0].mxu0 %v3698
        %v6295 = vpop.f32.mrb[0].mxu0
        %v6296 = vadd.f32 %v5991, %v6295
        %v6297 = vpop.f32.mrb[0].mxu0
        %v6298 = vadd.f32 %v5993, %v6297
        %6299 = vmatprep.mubr.f32.mxu0 %v3715
        %6300 = vmatmul.mubr.f32.gmra.mrb[0].mxu0 %v3714
        %v6301 = vpop.f32.mrb[0].mxu0
        %v6302 = vadd.f32 %v5997, %v6301
        %v6303 = vpop.f32.mrb[0].mxu0
        %v6304 = vadd.f32 %v5999, %v6303
        %6305 = vmatprep.mubr.f32.mxu0 %v3731
        %6306 = vmatmul.mubr.f32.gmra.mrb[0].mxu0 %v3730
        %v6307 = vpop.f32.mrb[0].mxu0
        %v6308 = vadd.f32 %v6003, %v6307
        %v6309 = vpop.f32.mrb[0].mxu0
        %v6310 = vadd.f32 %v6005, %v6309
        %6311 = vmatprep.mubr.f32.mxu0 %v3747
        %6312 = vmatmul.mubr.f32.gmra.mrb[0].mxu0 %v3746
        %v6313 = vpop.f32.mrb[0].mxu0
        %v6314 = vadd.f32 %v6009, %v6313
        %v6315 = vpop.f32.mrb[0].mxu0
        %v6316 = vadd.f32 %v6011, %v6315
        %6317 = vmatprep.mubr.f32.mxu0 %v3763
        %6318 = vmatmul.mubr.f32.gmra.mrb[0].mxu0 %v3762
        %v6319 = vpop.f32.mrb[0].mxu0
        %v6320 = vadd.f32 %v6015, %v6319
        %v6321 = vpop.f32.mrb[0].mxu0
        %v6322 = vadd.f32 %v6017, %v6321
        %6323 = vmatprep.mubr.f32.mxu0 %v3779
        %6324 = vmatmul.mubr.f32.gmra.mrb[0].mxu0 %v3778
        %v6325 = vpop.f32.mrb[0].mxu0
        %v6326 = vadd.f32 %v6021, %v6325
        %v6327 = vpop.f32.mrb[0].mxu0
        %v6328 = vadd.f32 %v6023, %v6327
        %6329 = vmatprep.mubr.f32.mxu0 %v3795
        %6330 = vmatmul.mubr.f32.gmra.mrb[0].mxu0 %v3794
        %v6331 = vpop.f32.mrb[0].mxu0
        %v6332 = vadd.f32 %v6027, %v6331
        %v6333 = vpop.f32.mrb[0].mxu0
        %v6334 = vadd.f32 %v6029, %v6333
        %6335 = vmatprep.mubr.f32.mxu0 %v3811
        %6336 = vmatmul.mubr.f32.gmra.mrb[0].mxu0 %v3810
        %v6337 = vpop.f32.mrb[0].mxu0
        %v6338 = vadd.f32 %v6033, %v6337
        %v6339 = vpop.f32.mrb[0].mxu0
        %v6340 = vadd.f32 %v6035, %v6339
        %6341 = vmatprep.mubr.f32.mxu0 %v3827
        %6342 = vmatmul.mubr.f32.gmra.mrb[0].mxu0 %v3826
        %v6343 = vpop.f32.mrb[0].mxu0
        %v6344 = vadd.f32 %v6039, %v6343
        %v6345 = vpop.f32.mrb[0].mxu0
        %v6346 = vadd.f32 %v6041, %v6345
        %6347 = vmatprep.mubr.f32.mxu0 %v3843
        %6348 = vmatmul.mubr.f32.gmra.mrb[0].mxu0 %v3842
        %v6349 = vpop.f32.mrb[0].mxu0
        %v6350 = vadd.f32 %v6045, %v6349
        %v6351 = vpop.f32.mrb[0].mxu0
        %v6352 = vadd.f32 %v6047, %v6351
        %6353 = vmatprep.mubr.f32.mxu0 %v3859
        %6354 = vmatmul.mubr.f32.gmra.mrb[0].mxu0 %v3858
        %v6355 = vpop.f32.mrb[0].mxu0
        %v6356 = vadd.f32 %v6051, %v6355
        %v6357 = vpop.f32.mrb[0].mxu0
        %v6358 = vadd.f32 %v6053, %v6357
        %6359 = vmatprep.mubr.f32.mxu0 %v3875
        %6360 = vmatmul.mubr.f32.gmra.mrb[0].mxu0 %v3874
        %v6361 = vpop.f32.mrb[0].mxu0
        %v6362 = vadd.f32 %v6057, %v6361
        %v6363 = vpop.f32.mrb[0].mxu0
        %v6364 = vadd.f32 %v6059, %v6363
        %6365 = vmatprep.mubr.f32.mxu0 %v3891
        %6366 = vmatmul.mubr.f32.gmra.mrb[0].mxu0 %v3890
        %v6367 = vpop.f32.mrb[0].mxu0
        %v6368 = vadd.f32 %v6063, %v6367
        %v6369 = vpop.f32.mrb[0].mxu0
        %v6370 = vadd.f32 %v6065, %v6369
        %6371 = vmatprep.mubr.f32.mxu0 %v3907
        %6372 = vmatmul.mubr.f32.gmra.mrb[0].mxu0 %v3906
        %v6373 = vpop.f32.mrb[0].mxu0
        %v6374 = vadd.f32 %v6069, %v6373
        %v6375 = vpop.f32.mrb[0].mxu0
        %v6376 = vadd.f32 %v6071, %v6375
        %6377 = vmatprep.mubr.f32.mxu0 %v3923
        %6378 = vmatmul.mubr.f32.gmra.mrb[0].mxu0 %v3922
        %v6379 = vpop.f32.mrb[0].mxu0
        %v6380 = vadd.f32 %v6075, %v6379
        %v6381 = vpop.f32.mrb[0].mxu0
        %v6382 = vadd.f32 %v6077, %v6381
        %6383 = vmatprep.mubr.f32.mxu0 %v3939
        %6384 = vmatmul.mubr.f32.gmra.mrb[0].mxu0 %v3938
        %v6385 = vpop.f32.mrb[0].mxu0
        %v6386 = vadd.f32 %v6081, %v6385
        %v6387 = vpop.f32.mrb[0].mxu0
        %v6388 = vadd.f32 %v6083, %v6387
        %6389 = vmatprep.mubr.f32.mxu0 %v3955
        %6390 = vmatmul.mubr.f32.gmra.mrb[0].mxu0 %v3954
        %v6391 = vpop.f32.mrb[0].mxu0
        %v6392 = vadd.f32 %v6087, %v6391
        %v6393 = vpop.f32.mrb[0].mxu0
        %v6394 = vadd.f32 %v6089, %v6393
        %6395 = vdwg.mxu0
        %s6396 = sld [smem:[#allocation11]]
        %v6397 = vstv %s6396
        %v6398 = vadd.f32 %v6158, %v6397
        %v6399 = vadd.f32 %v6160, %v6397
        %v6400 = vadd.f32 %v6164, %v6397
        %v6401 = vadd.f32 %v6166, %v6397
        %v6402 = vadd.f32 %v6170, %v6397
        %v6403 = vadd.f32 %v6172, %v6397
        %v6404 = vadd.f32 %v6176, %v6397
        %v6405 = vadd.f32 %v6178, %v6397
        %v6406 = vadd.f32 %v6182, %v6397
        %v6407 = vadd.f32 %v6184, %v6397
        %v6408 = vadd.f32 %v6188, %v6397
        %v6409 = vadd.f32 %v6190, %v6397
        %v6410 = vadd.f32 %v6194, %v6397
        %v6411 = vadd.f32 %v6196, %v6397
        %v6412 = vadd.f32 %v6200, %v6397
        %v6413 = vadd.f32 %v6202, %v6397
        %v6414 = vmax.f32 %v6398, 0.0
        %v6415 = vmax.f32 %v6399, 0.0
        %v6416 = vmax.f32 %v6400, 0.0
        %v6417 = vmax.f32 %v6401, 0.0
        %v6418 = vmax.f32 %v6402, 0.0
        %v6419 = vmax.f32 %v6403, 0.0
        %v6420 = vmax.f32 %v6404, 0.0
        %v6421 = vmax.f32 %v6405, 0.0
        %v6422 = vmax.f32 %v6406, 0.0
        %v6423 = vmax.f32 %v6407, 0.0
        %v6424 = vmax.f32 %v6408, 0.0
        %v6425 = vmax.f32 %v6409, 0.0
        %v6426 = vmax.f32 %v6410, 0.0
        %v6427 = vmax.f32 %v6411, 0.0
        %v6428 = vmax.f32 %v6412, 0.0
        %v6429 = vmax.f32 %v6413, 0.0
        %v6430 = vand.u32 2147483647, %v6398
        %v6431 = vand.u32 2147483647, %v6399
        %v6432 = vand.u32 2147483647, %v6400
        %v6433 = vand.u32 2147483647, %v6401
        %v6434 = vand.u32 2147483647, %v6402
        %v6435 = vand.u32 2147483647, %v6403
        %v6436 = vand.u32 2147483647, %v6404
        %v6437 = vand.u32 2147483647, %v6405
        %v6438 = vand.u32 2147483647, %v6406
        %v6439 = vand.u32 2147483647, %v6407
        %v6440 = vand.u32 2147483647, %v6408
        %v6441 = vand.u32 2147483647, %v6409
        %v6442 = vand.u32 2147483647, %v6410
        %v6443 = vand.u32 2147483647, %v6411
        %v6444 = vand.u32 2147483647, %v6412
        %v6445 = vand.u32 2147483647, %v6413
        %v6446 = vsub.f32 0.0, %v6430
        %v6447 = vsub.f32 0.0, %v6431
        %v6448 = vsub.f32 0.0, %v6432
        %v6449 = vsub.f32 0.0, %v6433
        %v6450 = vsub.f32 0.0, %v6434
        %v6451 = vsub.f32 0.0, %v6435
        %v6452 = vsub.f32 0.0, %v6436
        %v6453 = vsub.f32 0.0, %v6437
        %v6454 = vsub.f32 0.0, %v6438
        %v6455 = vsub.f32 0.0, %v6439
        %v6456 = vsub.f32 0.0, %v6440
        %v6457 = vsub.f32 0.0, %v6441
        %v6458 = vsub.f32 0.0, %v6442
        %v6459 = vsub.f32 0.0, %v6443
        %v6460 = vsub.f32 0.0, %v6444
        %v6461 = vsub.f32 0.0, %v6445
        %v6462 = vmul.f32 %v6446, 1.442695
        %v6463 = vpow.pop %v6462
        %v6464 = vmul.f32 %v6447, 1.442695
        %v6465 = vpow.pop %v6464
        %v6466 = vmul.f32 %v6448, 1.442695
        %v6467 = vpow.pop %v6466
        %v6468 = vmul.f32 %v6449, 1.442695
        %v6469 = vpow.pop %v6468
        %v6470 = vmul.f32 %v6450, 1.442695
        %v6471 = vpow.pop %v6470
        %v6472 = vmul.f32 %v6451, 1.442695
        %v6473 = vpow.pop %v6472
        %v6474 = vmul.f32 %v6452, 1.442695
        %v6475 = vpow.pop %v6474
        %v6476 = vmul.f32 %v6453, 1.442695
        %v6477 = vpow.pop %v6476
        %v6478 = vmul.f32 %v6454, 1.442695
        %v6479 = vpow.pop %v6478
        %v6480 = vmul.f32 %v6455, 1.442695
        %v6481 = vpow.pop %v6480
        %v6482 = vmul.f32 %v6456, 1.442695
        %v6483 = vpow.pop %v6482
        %v6484 = vmul.f32 %v6457, 1.442695
        %v6485 = vpow.pop %v6484
        %v6486 = vmul.f32 %v6458, 1.442695
        %v6487 = vpow.pop %v6486
        %v6488 = vmul.f32 %v6459, 1.442695
        %v6489 = vpow.pop %v6488
        %v6490 = vmul.f32 %v6460, 1.442695
        %v6491 = vpow.pop %v6490
        %v6492 = vmul.f32 %v6461, 1.442695
        %v6493 = vpow.pop %v6492
        %v6494 = vadd.f32 %v6463, 1.0
        %v6495 = vlog2.pop %v6494
        %v6496 = vmul.f32 %v6495, 0.6931472
        %v6497 = vmul.f32 -0.5, %v6463
        %v6498 = vadd.f32 %v6497, 1.0
        %v6499 = vmul.f32 %v6498, %v6463
        %v6500 = vand.u32 2147483647, %v6463
        %vm6501 = vcmp.lt.f32.partialorder %v6500, 0.0004427343
        %v6502 = vsel %vm6501, %v6499, %v6496
        %v6503 = vadd.f32 %v6465, 1.0
        %v6504 = vlog2.pop %v6503
        %v6505 = vmul.f32 %v6504, 0.6931472
        %v6506 = vmul.f32 -0.5, %v6465
        %v6507 = vadd.f32 %v6506, 1.0
        %v6508 = vmul.f32 %v6507, %v6465
        %v6509 = vand.u32 2147483647, %v6465
        %vm6510 = vcmp.lt.f32.partialorder %v6509, 0.0004427343
        %v6511 = vsel %vm6510, %v6508, %v6505
        %v6512 = vadd.f32 %v6467, 1.0
        %v6513 = vlog2.pop %v6512
        %v6514 = vmul.f32 %v6513, 0.6931472
        %v6515 = vmul.f32 -0.5, %v6467
        %v6516 = vadd.f32 %v6515, 1.0
        %v6517 = vmul.f32 %v6516, %v6467
        %v6518 = vand.u32 2147483647, %v6467
        %vm6519 = vcmp.lt.f32.partialorder %v6518, 0.0004427343
        %v6520 = vsel %vm6519, %v6517, %v6514
        %v6521 = vadd.f32 %v6469, 1.0
        %v6522 = vlog2.pop %v6521
        %v6523 = vmul.f32 %v6522, 0.6931472
        %v6524 = vmul.f32 -0.5, %v6469
        %v6525 = vadd.f32 %v6524, 1.0
        %v6526 = vmul.f32 %v6525, %v6469
        %v6527 = vand.u32 2147483647, %v6469
        %vm6528 = vcmp.lt.f32.partialorder %v6527, 0.0004427343
        %v6529 = vsel %vm6528, %v6526, %v6523
        %v6530 = vadd.f32 %v6471, 1.0
        %v6531 = vlog2.pop %v6530
        %v6532 = vmul.f32 %v6531, 0.6931472
        %v6533 = vmul.f32 -0.5, %v6471
        %v6534 = vadd.f32 %v6533, 1.0
        %v6535 = vmul.f32 %v6534, %v6471
        %v6536 = vand.u32 2147483647, %v6471
        %vm6537 = vcmp.lt.f32.partialorder %v6536, 0.0004427343
        %v6538 = vsel %vm6537, %v6535, %v6532
        %v6539 = vadd.f32 %v6473, 1.0
        %v6540 = vlog2.pop %v6539
        %v6541 = vmul.f32 %v6540, 0.6931472
        %v6542 = vmul.f32 -0.5, %v6473
        %v6543 = vadd.f32 %v6542, 1.0
        %v6544 = vmul.f32 %v6543, %v6473
        %v6545 = vand.u32 2147483647, %v6473
        %vm6546 = vcmp.lt.f32.partialorder %v6545, 0.0004427343
        %v6547 = vsel %vm6546, %v6544, %v6541
        %v6548 = vadd.f32 %v6475, 1.0
        %v6549 = vlog2.pop %v6548
        %v6550 = vmul.f32 %v6549, 0.6931472
        %v6551 = vmul.f32 -0.5, %v6475
        %v6552 = vadd.f32 %v6551, 1.0
        %v6553 = vmul.f32 %v6552, %v6475
        %v6554 = vand.u32 2147483647, %v6475
        %vm6555 = vcmp.lt.f32.partialorder %v6554, 0.0004427343
        %v6556 = vsel %vm6555, %v6553, %v6550
        %v6557 = vadd.f32 %v6477, 1.0
        %v6558 = vlog2.pop %v6557
        %v6559 = vmul.f32 %v6558, 0.6931472
        %v6560 = vmul.f32 -0.5, %v6477
        %v6561 = vadd.f32 %v6560, 1.0
        %v6562 = vmul.f32 %v6561, %v6477
        %v6563 = vand.u32 2147483647, %v6477
        %vm6564 = vcmp.lt.f32.partialorder %v6563, 0.0004427343
        %v6565 = vsel %vm6564, %v6562, %v6559
        %v6566 = vadd.f32 %v6479, 1.0
        %v6567 = vlog2.pop %v6566
        %v6568 = vmul.f32 %v6567, 0.6931472
        %v6569 = vmul.f32 -0.5, %v6479
        %v6570 = vadd.f32 %v6569, 1.0
        %v6571 = vmul.f32 %v6570, %v6479
        %v6572 = vand.u32 2147483647, %v6479
        %vm6573 = vcmp.lt.f32.partialorder %v6572, 0.0004427343
        %v6574 = vsel %vm6573, %v6571, %v6568
        %v6575 = vadd.f32 %v6481, 1.0
        %v6576 = vlog2.pop %v6575
        %v6577 = vmul.f32 %v6576, 0.6931472
        %v6578 = vmul.f32 -0.5, %v6481
        %v6579 = vadd.f32 %v6578, 1.0
        %v6580 = vmul.f32 %v6579, %v6481
        %v6581 = vand.u32 2147483647, %v6481
        %vm6582 = vcmp.lt.f32.partialorder %v6581, 0.0004427343
        %v6583 = vsel %vm6582, %v6580, %v6577
        %v6584 = vadd.f32 %v6483, 1.0
        %v6585 = vlog2.pop %v6584
        %v6586 = vmul.f32 %v6585, 0.6931472
        %v6587 = vmul.f32 -0.5, %v6483
        %v6588 = vadd.f32 %v6587, 1.0
        %v6589 = vmul.f32 %v6588, %v6483
        %v6590 = vand.u32 2147483647, %v6483
        %vm6591 = vcmp.lt.f32.partialorder %v6590, 0.0004427343
        %v6592 = vsel %vm6591, %v6589, %v6586
        %v6593 = vadd.f32 %v6485, 1.0
        %v6594 = vlog2.pop %v6593
        %v6595 = vmul.f32 %v6594, 0.6931472
        %v6596 = vmul.f32 -0.5, %v6485
        %v6597 = vadd.f32 %v6596, 1.0
        %v6598 = vmul.f32 %v6597, %v6485
        %v6599 = vand.u32 2147483647, %v6485
        %vm6600 = vcmp.lt.f32.partialorder %v6599, 0.0004427343
        %v6601 = vsel %vm6600, %v6598, %v6595
        %v6602 = vadd.f32 %v6487, 1.0
        %v6603 = vlog2.pop %v6602
        %v6604 = vmul.f32 %v6603, 0.6931472
        %v6605 = vmul.f32 -0.5, %v6487
        %v6606 = vadd.f32 %v6605, 1.0
        %v6607 = vmul.f32 %v6606, %v6487
        %v6608 = vand.u32 2147483647, %v6487
        %vm6609 = vcmp.lt.f32.partialorder %v6608, 0.0004427343
        %v6610 = vsel %vm6609, %v6607, %v6604
        %v6611 = vadd.f32 %v6489, 1.0
        %v6612 = vlog2.pop %v6611
        %v6613 = vmul.f32 %v6612, 0.6931472
        %v6614 = vmul.f32 -0.5, %v6489
        %v6615 = vadd.f32 %v6614, 1.0
        %v6616 = vmul.f32 %v6615, %v6489
        %v6617 = vand.u32 2147483647, %v6489
        %vm6618 = vcmp.lt.f32.partialorder %v6617, 0.0004427343
        %v6619 = vsel %vm6618, %v6616, %v6613
        %v6620 = vadd.f32 %v6491, 1.0
        %v6621 = vlog2.pop %v6620
        %v6622 = vmul.f32 %v6621, 0.6931472
        %v6623 = vmul.f32 -0.5, %v6491
        %v6624 = vadd.f32 %v6623, 1.0
        %v6625 = vmul.f32 %v6624, %v6491
        %v6626 = vand.u32 2147483647, %v6491
        %vm6627 = vcmp.lt.f32.partialorder %v6626, 0.0004427343
        %v6628 = vsel %vm6627, %v6625, %v6622
        %v6629 = vadd.f32 %v6493, 1.0
        %v6630 = vlog2.pop %v6629
        %v6631 = vmul.f32 %v6630, 0.6931472
        %v6632 = vmul.f32 -0.5, %v6493
        %v6633 = vadd.f32 %v6632, 1.0
        %v6634 = vmul.f32 %v6633, %v6493
        %v6635 = vand.u32 2147483647, %v6493
        %vm6636 = vcmp.lt.f32.partialorder %v6635, 0.0004427343
        %v6637 = vsel %vm6636, %v6634, %v6631
        %v6638 = vadd.f32 %v6414, %v6502
        %v6639 = vadd.f32 %v6415, %v6511
        %v6640 = vadd.f32 %v6416, %v6520
        %v6641 = vadd.f32 %v6417, %v6529
        %v6642 = vadd.f32 %v6418, %v6538
        %v6643 = vadd.f32 %v6419, %v6547
        %v6644 = vadd.f32 %v6420, %v6556
        %v6645 = vadd.f32 %v6421, %v6565
        %v6646 = vadd.f32 %v6422, %v6574
        %v6647 = vadd.f32 %v6423, %v6583
        %v6648 = vadd.f32 %v6424, %v6592
        %v6649 = vadd.f32 %v6425, %v6601
        %v6650 = vadd.f32 %v6426, %v6610
        %v6651 = vadd.f32 %v6427, %v6619
        %v6652 = vadd.f32 %v6428, %v6628
        %v6653 = vadd.f32 %v6429, %v6637
        %vm6654 = vcmp.eq.s32.totalorder %v344, 63
        %vm6655 = vcmp.eq.s32.totalorder %v345, 63
        %vm6656 = vcmp.eq.s32.totalorder %v346, 63
        %vm6657 = vcmp.eq.s32.totalorder %v347, 63
        %vm6658 = vcmp.eq.s32.totalorder %v348, 63
        %vm6659 = vcmp.eq.s32.totalorder %v349, 63
        %vm6660 = vcmp.eq.s32.totalorder %v350, 63
        %vm6661 = vcmp.eq.s32.totalorder %v351, 63
        %v6662 = vmul.f32 %v342, 0.015625
        %v6663 = vmul.f32 %v342, 0.015873017
        %v6665 = vlaneseq
        %v6666 = vshrl.u32 %v6665, 7
        %v6667 = vsub.s32 0, %v6666
        %v6668 = vrot.slane %v6662, %v6667
        %v6669 = vlaneseq
        %v6670 = vshrl.u32 %v6669, 7
        %v6671 = vsub.s32 1, %v6670
        %v6672 = vrot.slane %v6662, %v6671
        %v6676 = vlaneseq
        %v6677 = vshrl.u32 %v6676, 7
        %v6678 = vsub.s32 0, %v6677
        %v6679 = vrot.slane %v6663, %v6678
        %v6680 = vlaneseq
        %v6681 = vshrl.u32 %v6680, 7
        %v6682 = vsub.s32 1, %v6681
        %v6683 = vrot.slane %v6663, %v6682
        %v6686 = vsel %vm6654, %v6668, %v6679
        %v6687 = vsel %vm6654, %v6672, %v6683
        %v6688 = vsel %vm6655, %v6668, %v6679
        %v6689 = vsel %vm6655, %v6672, %v6683
        %v6690 = vsel %vm6656, %v6668, %v6679
        %v6691 = vsel %vm6656, %v6672, %v6683
        %v6692 = vsel %vm6657, %v6668, %v6679
        %v6693 = vsel %vm6657, %v6672, %v6683
        %v6694 = vsel %vm6658, %v6668, %v6679
        %v6695 = vsel %vm6658, %v6672, %v6683
        %v6696 = vsel %vm6659, %v6668, %v6679
        %v6697 = vsel %vm6659, %v6672, %v6683
        %v6698 = vsel %vm6660, %v6668, %v6679
        %v6699 = vsel %vm6660, %v6672, %v6683
        %v6700 = vsel %vm6661, %v6668, %v6679
        %v6701 = vsel %vm6661, %v6672, %v6683
        %v6702 = vsub.f32 0.0, %v6686
        %v6703 = vsub.f32 0.0, %v6687
        %v6704 = vsub.f32 0.0, %v6688
        %v6705 = vsub.f32 0.0, %v6689
        %v6706 = vsub.f32 0.0, %v6690
        %v6707 = vsub.f32 0.0, %v6691
        %v6708 = vsub.f32 0.0, %v6692
        %v6709 = vsub.f32 0.0, %v6693
        %v6710 = vsub.f32 0.0, %v6694
        %v6711 = vsub.f32 0.0, %v6695
        %v6712 = vsub.f32 0.0, %v6696
        %v6713 = vsub.f32 0.0, %v6697
        %v6714 = vsub.f32 0.0, %v6698
        %v6715 = vsub.f32 0.0, %v6699
        %v6716 = vsub.f32 0.0, %v6700
        %v6717 = vsub.f32 0.0, %v6701
        %v6718 = vmul.f32 %v6702, %v6638
        %v6719 = vmul.f32 %v6703, %v6639
        %v6720 = vmul.f32 %v6704, %v6640
        %v6721 = vmul.f32 %v6705, %v6641
        %v6722 = vmul.f32 %v6706, %v6642
        %v6723 = vmul.f32 %v6707, %v6643
        %v6724 = vmul.f32 %v6708, %v6644
        %v6725 = vmul.f32 %v6709, %v6645
        %v6726 = vmul.f32 %v6710, %v6646
        %v6727 = vmul.f32 %v6711, %v6647
        %v6728 = vmul.f32 %v6712, %v6648
        %v6729 = vmul.f32 %v6713, %v6649
        %v6730 = vmul.f32 %v6714, %v6650
        %v6731 = vmul.f32 %v6715, %v6651
        %v6732 = vmul.f32 %v6716, %v6652
        %v6733 = vmul.f32 %v6717, %v6653
        %v6734 = vmul.f32 %v6718, 1.442695
        %v6735 = vpow.pop %v6734
        %v6736 = vmul.f32 %v6719, 1.442695
        %v6737 = vpow.pop %v6736
        %v6738 = vmul.f32 %v6720, 1.442695
        %v6739 = vpow.pop %v6738
        %v6740 = vmul.f32 %v6721, 1.442695
        %v6741 = vpow.pop %v6740
        %v6742 = vmul.f32 %v6722, 1.442695
        %v6743 = vpow.pop %v6742
        %v6744 = vmul.f32 %v6723, 1.442695
        %v6745 = vpow.pop %v6744
        %v6746 = vmul.f32 %v6724, 1.442695
        %v6747 = vpow.pop %v6746
        %v6748 = vmul.f32 %v6725, 1.442695
        %v6749 = vpow.pop %v6748
        %v6750 = vmul.f32 %v6726, 1.442695
        %v6751 = vpow.pop %v6750
        %v6752 = vmul.f32 %v6727, 1.442695
        %v6753 = vpow.pop %v6752
        %v6754 = vmul.f32 %v6728, 1.442695
        %v6755 = vpow.pop %v6754
        %v6756 = vmul.f32 %v6729, 1.442695
        %v6757 = vpow.pop %v6756
        %v6758 = vmul.f32 %v6730, 1.442695
        %v6759 = vpow.pop %v6758
        %v6760 = vmul.f32 %v6731, 1.442695
        %v6761 = vpow.pop %v6760
        %v6762 = vmul.f32 %v6732, 1.442695
        %v6763 = vpow.pop %v6762
        %v6764 = vmul.f32 %v6733, 1.442695
        %v6765 = vpow.pop %v6764
        %v6766 = vsub.f32 1.0, %v6735
        %v6767 = vsub.f32 1.0, %v6737
        %v6768 = vsub.f32 1.0, %v6739
        %v6769 = vsub.f32 1.0, %v6741
        %v6770 = vsub.f32 1.0, %v6743
        %v6771 = vsub.f32 1.0, %v6745
        %v6772 = vsub.f32 1.0, %v6747
        %v6773 = vsub.f32 1.0, %v6749
        %v6774 = vsub.f32 1.0, %v6751
        %v6775 = vsub.f32 1.0, %v6753
        %v6776 = vsub.f32 1.0, %v6755
        %v6777 = vsub.f32 1.0, %v6757
        %v6778 = vsub.f32 1.0, %v6759
        %v6779 = vsub.f32 1.0, %v6761
        %v6780 = vsub.f32 1.0, %v6763
        %v6781 = vsub.f32 1.0, %v6765
        %v6782 = vsub.f32 1.0, %v6766
        %v6783 = vsub.f32 1.0, %v6767
        %v6784 = vsub.f32 1.0, %v6768
        %v6785 = vsub.f32 1.0, %v6769
        %v6786 = vsub.f32 1.0, %v6770
        %v6787 = vsub.f32 1.0, %v6771
        %v6788 = vsub.f32 1.0, %v6772
        %v6789 = vsub.f32 1.0, %v6773
        %v6790 = vsub.f32 1.0, %v6774
        %v6791 = vsub.f32 1.0, %v6775
        %v6792 = vsub.f32 1.0, %v6776
        %v6793 = vsub.f32 1.0, %v6777
        %v6794 = vsub.f32 1.0, %v6778
        %v6795 = vsub.f32 1.0, %v6779
        %v6796 = vsub.f32 1.0, %v6780
        %v6797 = vsub.f32 1.0, %v6781
        %v6798 = vadd.f32 %v6782, 1e-15
        %v6799 = vadd.f32 %v6783, 1e-15
        %v6800 = vadd.f32 %v6784, 1e-15
        %v6801 = vadd.f32 %v6785, 1e-15
        %v6802 = vadd.f32 %v6786, 1e-15
        %v6803 = vadd.f32 %v6787, 1e-15
        %v6804 = vadd.f32 %v6788, 1e-15
        %v6805 = vadd.f32 %v6789, 1e-15
        %v6806 = vadd.f32 %v6790, 1e-15
        %v6807 = vadd.f32 %v6791, 1e-15
        %v6808 = vadd.f32 %v6792, 1e-15
        %v6809 = vadd.f32 %v6793, 1e-15
        %v6810 = vadd.f32 %v6794, 1e-15
        %v6811 = vadd.f32 %v6795, 1e-15
        %v6812 = vadd.f32 %v6796, 1e-15
        %v6813 = vadd.f32 %v6797, 1e-15
        %v6814 = vlog2.pop %v6798
        %v6815 = vmul.f32 %v6814, 0.6931472
        %v6816 = vlog2.pop %v6799
        %v6817 = vmul.f32 %v6816, 0.6931472
        %v6818 = vlog2.pop %v6800
        %v6819 = vmul.f32 %v6818, 0.6931472
        %v6820 = vlog2.pop %v6801
        %v6821 = vmul.f32 %v6820, 0.6931472
        %v6822 = vlog2.pop %v6802
        %v6823 = vmul.f32 %v6822, 0.6931472
        %v6824 = vlog2.pop %v6803
        %v6825 = vmul.f32 %v6824, 0.6931472
        %v6826 = vlog2.pop %v6804
        %v6827 = vmul.f32 %v6826, 0.6931472
        %v6828 = vlog2.pop %v6805
        %v6829 = vmul.f32 %v6828, 0.6931472
        %v6830 = vlog2.pop %v6806
        %v6831 = vmul.f32 %v6830, 0.6931472
        %v6832 = vlog2.pop %v6807
        %v6833 = vmul.f32 %v6832, 0.6931472
        %v6834 = vlog2.pop %v6808
        %v6835 = vmul.f32 %v6834, 0.6931472
        %v6836 = vlog2.pop %v6809
        %v6837 = vmul.f32 %v6836, 0.6931472
        %v6838 = vlog2.pop %v6810
        %v6839 = vmul.f32 %v6838, 0.6931472
        %v6840 = vlog2.pop %v6811
        %v6841 = vmul.f32 %v6840, 0.6931472
        %v6842 = vlog2.pop %v6812
        %v6843 = vmul.f32 %v6842, 0.6931472
        %v6844 = vlog2.pop %v6813
        %v6845 = vmul.f32 %v6844, 0.6931472
        %v6846 = vld [vmem:[#allocation9] sm:$0xff]
        %v6847 = vld [vmem:[#allocation9 + $0x8] sm:$0xff]
        %v6848 = vld [vmem:[#allocation9 + $0x10] sm:$0xff]
        %v6849 = vld [vmem:[#allocation9 + $0x18] sm:$0xff]
        %v6850 = vld [vmem:[#allocation9 + $0x20] sm:$0xff]
        %v6851 = vld [vmem:[#allocation9 + $0x28] sm:$0xff]
        %v6852 = vld [vmem:[#allocation9 + $0x30] sm:$0xff]
        %v6853 = vld [vmem:[#allocation9 + $0x38] sm:$0xff]
        %vm6854 = vcmask 523264
        %v6856 = vsel %vm6854, %v6846, 0
        %v6859 = vsel %vm6854, %v6847, 0
        %v6862 = vsel %vm6854, %v6848, 0
        %v6865 = vsel %vm6854, %v6849, 0
        %v6868 = vsel %vm6854, %v6850, 0
        %v6871 = vsel %vm6854, %v6851, 0
        %v6874 = vsel %vm6854, %v6852, 0
        %v6877 = vsel %vm6854, %v6853, 0
        %6879 = vmatprep.subr.mxu0 %v6817
        %6880 = vmatpush1.msra.mxu0 %v6815
        %6881 = vmatprep.subr.mxu0 %v6821
        %6882 = vmatpush1.msra.mxu0 %v6819
        %6883 = vmatprep.subr.mxu0 %v6825
        %6884 = vmatpush1.msra.mxu0 %v6823
        %6885 = vmatprep.subr.mxu0 %v6829
        %6886 = vmatpush1.msra.mxu0 %v6827
        %6887 = vmatprep.subr.mxu0 %v6833
        %6888 = vmatpush1.msra.mxu0 %v6831
        %6889 = vmatprep.subr.mxu0 %v6837
        %6890 = vmatpush1.msra.mxu0 %v6835
        %6891 = vmatprep.subr.mxu0 %v6841
        %6892 = vmatpush1.msra.mxu0 %v6839
        %6893 = vmatprep.subr.mxu0 %v6845
        %6894 = vmatpush1.msra.mxu0 %v6843
        %6895 = vmatprep.subr.mxu0 0.0
        %6896 = vmatpush1.msra.mxu0 0.0
        %6897 = vmatprep.subr.mxu0 0.0
        %6898 = vmatpush1.msra.mxu0 0.0
        %6899 = vmatprep.subr.mxu0 0.0
        %6900 = vmatpush1.msra.mxu0 0.0
        %6901 = vmatprep.subr.mxu0 0.0
        %6902 = vmatpush1.msra.mxu0 0.0
        %6903 = vmatprep.subr.mxu0 0.0
        %6904 = vmatpush1.msra.mxu0 0.0
        %6905 = vmatprep.subr.mxu0 0.0
        %6906 = vmatpush1.msra.mxu0 0.0
        %6907 = vmatprep.subr.mxu0 0.0
        %6908 = vmatpush1.msra.mxu0 0.0
        %6909 = vmatprep.subr.mxu0 0.0
        %6910 = vmatpush1.msra.mxu0 0.0
        %6911 = vmatprep.subr.mxu0 0.0
        %6912 = vmatpush1.msra.mxu0 0.0
        %6913 = vmatprep.subr.mxu0 0.0
        %6914 = vmatpush1.msra.mxu0 0.0
        %6915 = vmatprep.subr.mxu0 0.0
        %6916 = vmatpush1.msra.mxu0 0.0
        %6917 = vmatprep.subr.mxu0 0.0
        %6918 = vmatpush1.msra.mxu0 0.0
        %6919 = vmatprep.subr.mxu0 0.0
        %6920 = vmatpush1.msra.mxu0 0.0
        %6921 = vmatprep.subr.mxu0 0.0
        %6922 = vmatpush1.msra.mxu0 0.0
        %6923 = vmatprep.subr.mxu0 0.0
        %6924 = vmatpush1.msra.mxu0 0.0
        %6925 = vmatprep.subr.mxu0 0.0
        %6926 = vmatpush1.msra.mxu0 0.0
        %6927 = vmatprep.subr.mxu0 0.0
        %6928 = vmatpush1.msra.mxu0 0.0
        %6929 = vmatprep.subr.mxu0 0.0
        %6930 = vmatpush1.msra.mxu0 0.0
        %6931 = vmatprep.subr.mxu0 0.0
        %6932 = vmatpush1.msra.mxu0 0.0
        %6933 = vmatprep.subr.mxu0 0.0
        %6934 = vmatpush1.msra.mxu0 0.0
        %6935 = vmatprep.subr.mxu0 0.0
        %6936 = vmatpush1.msra.mxu0 0.0
        %6937 = vmatprep.subr.mxu0 0.0
        %6938 = vmatpush1.msra.mxu0 0.0
        %6939 = vmatprep.subr.mxu0 0.0
        %6940 = vmatpush1.msra.mxu0 0.0
        %6941 = vmatprep.subr.mxu0 0.0
        %6942 = vmatpush1.msra.mxu0 0.0
        %6943 = vmatprep.mubr.f32.mxu0 0.0
        %6944 = vmatmul.mubr.f32.gmra.mrb[0].mxu0 %v6856
        %v6945 = vpop.f32.mrb[0].mxu0
        %v6946 = vadd.f32 0.0, %v6945
        %v6947 = vpop.f32.mrb[0].mxu0
        %v6948 = vadd.f32 0.0, %v6947
        %6949 = vmatprep.mubr.f32.mxu0 0.0
        %6950 = vmatmul.mubr.f32.gmra.mrb[0].mxu0 %v6859
        %v6951 = vpop.f32.mrb[0].mxu0
        %v6952 = vadd.f32 0.0, %v6951
        %v6953 = vpop.f32.mrb[0].mxu0
        %v6954 = vadd.f32 0.0, %v6953
        %6955 = vmatprep.mubr.f32.mxu0 0.0
        %6956 = vmatmul.mubr.f32.gmra.mrb[0].mxu0 %v6862
        %v6957 = vpop.f32.mrb[0].mxu0
        %v6958 = vadd.f32 0.0, %v6957
        %v6959 = vpop.f32.mrb[0].mxu0
        %v6960 = vadd.f32 0.0, %v6959
        %6961 = vmatprep.mubr.f32.mxu0 0.0
        %6962 = vmatmul.mubr.f32.gmra.mrb[0].mxu0 %v6865
        %v6963 = vpop.f32.mrb[0].mxu0
        %v6964 = vadd.f32 0.0, %v6963
        %v6965 = vpop.f32.mrb[0].mxu0
        %v6966 = vadd.f32 0.0, %v6965
        %6967 = vmatprep.mubr.f32.mxu0 0.0
        %6968 = vmatmul.mubr.f32.gmra.mrb[0].mxu0 %v6868
        %v6969 = vpop.f32.mrb[0].mxu0
        %v6970 = vadd.f32 0.0, %v6969
        %v6971 = vpop.f32.mrb[0].mxu0
        %v6972 = vadd.f32 0.0, %v6971
        %6973 = vmatprep.mubr.f32.mxu0 0.0
        %6974 = vmatmul.mubr.f32.gmra.mrb[0].mxu0 %v6871
        %v6975 = vpop.f32.mrb[0].mxu0
        %v6976 = vadd.f32 0.0, %v6975
        %v6977 = vpop.f32.mrb[0].mxu0
        %v6978 = vadd.f32 0.0, %v6977
        %6979 = vmatprep.mubr.f32.mxu0 0.0
        %6980 = vmatmul.mubr.f32.gmra.mrb[0].mxu0 %v6874
        %v6981 = vpop.f32.mrb[0].mxu0
        %v6982 = vadd.f32 0.0, %v6981
        %v6983 = vpop.f32.mrb[0].mxu0
        %v6984 = vadd.f32 0.0, %v6983
        %6985 = vmatprep.mubr.f32.mxu0 0.0
        %6986 = vmatmul.mubr.f32.gmra.mrb[0].mxu0 %v6877
        %v6987 = vpop.f32.mrb[0].mxu0
        %v6988 = vadd.f32 0.0, %v6987
        %v6989 = vpop.f32.mrb[0].mxu0
        %v6990 = vadd.f32 0.0, %v6989
        %6991 = vdwg.mxu0
        %v6992 = vmul.f32 %v6946, 1.442695
        %v6993 = vpow.pop %v6992
        %v6994 = vmul.f32 %v6948, 1.442695
        %v6995 = vpow.pop %v6994
        %v6996 = vmul.f32 %v6952, 1.442695
        %v6997 = vpow.pop %v6996
        %v6998 = vmul.f32 %v6954, 1.442695
        %v6999 = vpow.pop %v6998
        %v7000 = vmul.f32 %v6958, 1.442695
        %v7001 = vpow.pop %v7000
        %v7002 = vmul.f32 %v6960, 1.442695
        %v7003 = vpow.pop %v7002
        %v7004 = vmul.f32 %v6964, 1.442695
        %v7005 = vpow.pop %v7004
        %v7006 = vmul.f32 %v6966, 1.442695
        %v7007 = vpow.pop %v7006
        %v7008 = vmul.f32 %v6970, 1.442695
        %v7009 = vpow.pop %v7008
        %v7010 = vmul.f32 %v6972, 1.442695
        %v7011 = vpow.pop %v7010
        %v7012 = vmul.f32 %v6976, 1.442695
        %v7013 = vpow.pop %v7012
        %v7014 = vmul.f32 %v6978, 1.442695
        %v7015 = vpow.pop %v7014
        %v7016 = vmul.f32 %v6982, 1.442695
        %v7017 = vpow.pop %v7016
        %v7018 = vmul.f32 %v6984, 1.442695
        %v7019 = vpow.pop %v7018
        %v7020 = vmul.f32 %v6988, 1.442695
        %v7021 = vpow.pop %v7020
        %v7022 = vmul.f32 %v6990, 1.442695
        %v7023 = vpow.pop %v7022
        %v7024 = vmul.f32 %v6766, %v6993
        %v7025 = vmul.f32 %v6767, %v6995
        %v7026 = vmul.f32 %v6768, %v6997
        %v7027 = vmul.f32 %v6769, %v6999
        %v7028 = vmul.f32 %v6770, %v7001
        %v7029 = vmul.f32 %v6771, %v7003
        %v7030 = vmul.f32 %v6772, %v7005
        %v7031 = vmul.f32 %v6773, %v7007
        %v7032 = vmul.f32 %v6774, %v7009
        %v7033 = vmul.f32 %v6775, %v7011
        %v7034 = vmul.f32 %v6776, %v7013
        %v7035 = vmul.f32 %v6777, %v7015
        %v7036 = vmul.f32 %v6778, %v7017
        %v7037 = vmul.f32 %v6779, %v7019
        %v7038 = vmul.f32 %v6780, %v7021
        %v7039 = vmul.f32 %v6781, %v7023
        %v7040 = vadd.f32 %v7024, %v7026
        %v7041 = vadd.f32 %v7040, %v7028
        %v7042 = vadd.f32 %v7041, %v7030
        %v7043 = vadd.f32 %v7042, %v7032
        %v7044 = vadd.f32 %v7043, %v7034
        %v7045 = vadd.f32 %v7044, %v7036
        %v7046 = vadd.f32 %v7045, %v7038
        %v7047 = vrot.slane %v7046, 4
        %v7048 = vadd.f32 %v7046, %v7047
        %v7049 = vrot.slane %v7048, 2
        %v7050 = vadd.f32 %v7048, %v7049
        %v7051 = vrot.slane %v7050, 1
        %v7052 = vadd.f32 %v7050, %v7051
        %v7053 = vadd.f32 %v7025, %v7027
        %v7054 = vadd.f32 %v7053, %v7029
        %v7055 = vadd.f32 %v7054, %v7031
        %v7056 = vadd.f32 %v7055, %v7033
        %v7057 = vadd.f32 %v7056, %v7035
        %v7058 = vadd.f32 %v7057, %v7037
        %v7059 = vadd.f32 %v7058, %v7039
        %v7060 = vrot.slane %v7059, 4
        %v7061 = vadd.f32 %v7059, %v7060
        %v7062 = vrot.slane %v7061, 2
        %v7063 = vadd.f32 %v7061, %v7062
        %v7064 = vrot.slane %v7063, 1
        %v7065 = vadd.f32 %v7063, %v7064
        %v7066 = vmul.f32 %v7024, %v406
        %v7067 = vmul.f32 %v7025, %v407
        %v7068 = vmul.f32 %v7026, %v408
        %v7069 = vmul.f32 %v7027, %v409
        %v7070 = vmul.f32 %v7028, %v410
        %v7071 = vmul.f32 %v7029, %v411
        %v7072 = vmul.f32 %v7030, %v412
        %v7073 = vmul.f32 %v7031, %v413
        %v7074 = vmul.f32 %v7032, %v414
        %v7075 = vmul.f32 %v7033, %v415
        %v7076 = vmul.f32 %v7034, %v416
        %v7077 = vmul.f32 %v7035, %v417
        %v7078 = vmul.f32 %v7036, %v418
        %v7079 = vmul.f32 %v7037, %v419
        %v7080 = vmul.f32 %v7038, %v420
        %v7081 = vmul.f32 %v7039, %v421
        %v7082 = vadd.f32 %v7066, %v7068
        %v7083 = vadd.f32 %v7082, %v7070
        %v7084 = vadd.f32 %v7083, %v7072
        %v7085 = vadd.f32 %v7084, %v7074
        %v7086 = vadd.f32 %v7085, %v7076
        %v7087 = vadd.f32 %v7086, %v7078
        %v7088 = vadd.f32 %v7087, %v7080
        %v7089 = vrot.slane %v7088, 4
        %v7090 = vadd.f32 %v7088, %v7089
        %v7091 = vrot.slane %v7090, 2
        %v7092 = vadd.f32 %v7090, %v7091
        %v7093 = vrot.slane %v7092, 1
        %v7094 = vadd.f32 %v7092, %v7093
        %v7095 = vadd.f32 %v7067, %v7069
        %v7096 = vadd.f32 %v7095, %v7071
        %v7097 = vadd.f32 %v7096, %v7073
        %v7098 = vadd.f32 %v7097, %v7075
        %v7099 = vadd.f32 %v7098, %v7077
        %v7100 = vadd.f32 %v7099, %v7079
        %v7101 = vadd.f32 %v7100, %v7081
        %v7102 = vrot.slane %v7101, 4
        %v7103 = vadd.f32 %v7101, %v7102
        %v7104 = vrot.slane %v7103, 2
        %v7105 = vadd.f32 %v7103, %v7104
        %v7106 = vrot.slane %v7105, 1
        %v7107 = vadd.f32 %v7105, %v7106
        %7108 = vst [vmem:[%s334] sm:$0xff] %v7024
        %7109 = vst [vmem:[%s334 + $0x8] sm:$0xff] %v7025
        %7110 = vst [vmem:[%s334 + $0x10] sm:$0xff] %v7026
        %7111 = vst [vmem:[%s334 + $0x18] sm:$0xff] %v7027
        %7112 = vst [vmem:[%s334 + $0x20] sm:$0xff] %v7028
        %7113 = vst [vmem:[%s334 + $0x28] sm:$0xff] %v7029
        %7114 = vst [vmem:[%s334 + $0x30] sm:$0xff] %v7030
        %7115 = vst [vmem:[%s334 + $0x38] sm:$0xff] %v7031
        %7116 = vst [vmem:[%s334 + $0x40] sm:$0xff] %v7032
        %7117 = vst [vmem:[%s334 + $0x48] sm:$0xff] %v7033
        %7118 = vst [vmem:[%s334 + $0x50] sm:$0xff] %v7034
        %7119 = vst [vmem:[%s334 + $0x58] sm:$0xff] %v7035
        %7120 = vst [vmem:[%s334 + $0x60] sm:$0xff] %v7036
        %7121 = vst [vmem:[%s334 + $0x68] sm:$0xff] %v7037
        %7122 = vst [vmem:[%s334 + $0x70] sm:$0xff] %v7038
        %7123 = vst [vmem:[%s334 + $0x78] sm:$0xff] %v7039
        %v7124 = vsub.f32 1.0, %v7052
        %v7125 = vsub.f32 1.0, %v7065
        %s7126 = sld [smem:[#allocation11 + $0x1]]
        %v7127 = vstv %s7126
        %v7128 = vadd.f32 %v6206, %v7127
        %v7129 = vadd.f32 %v6208, %v7127
        %v7130 = vadd.f32 %v6212, %v7127
        %v7131 = vadd.f32 %v6214, %v7127
        %v7132 = vadd.f32 %v6218, %v7127
        %v7133 = vadd.f32 %v6220, %v7127
        %v7134 = vadd.f32 %v6224, %v7127
        %v7135 = vadd.f32 %v6226, %v7127
        %v7136 = vadd.f32 %v6230, %v7127
        %v7137 = vadd.f32 %v6232, %v7127
        %v7138 = vadd.f32 %v6236, %v7127
        %v7139 = vadd.f32 %v6238, %v7127
        %v7140 = vadd.f32 %v6242, %v7127
        %v7141 = vadd.f32 %v6244, %v7127
        %v7142 = vadd.f32 %v6248, %v7127
        %v7143 = vadd.f32 %v6250, %v7127
        %v7144 = vsub.f32 0.0, %v7128
        %v7145 = vsub.f32 0.0, %v7129
        %v7146 = vsub.f32 0.0, %v7130
        %v7147 = vsub.f32 0.0, %v7131
        %v7148 = vsub.f32 0.0, %v7132
        %v7149 = vsub.f32 0.0, %v7133
        %v7150 = vsub.f32 0.0, %v7134
        %v7151 = vsub.f32 0.0, %v7135
        %v7152 = vsub.f32 0.0, %v7136
        %v7153 = vsub.f32 0.0, %v7137
        %v7154 = vsub.f32 0.0, %v7138
        %v7155 = vsub.f32 0.0, %v7139
        %v7156 = vsub.f32 0.0, %v7140
        %v7157 = vsub.f32 0.0, %v7141
        %v7158 = vsub.f32 0.0, %v7142
        %v7159 = vsub.f32 0.0, %v7143
        %v7160 = vmul.f32 %v7144, 1.442695
        %v7161 = vpow.pop %v7160
        %v7162 = vmul.f32 %v7145, 1.442695
        %v7163 = vpow.pop %v7162
        %v7164 = vmul.f32 %v7146, 1.442695
        %v7165 = vpow.pop %v7164
        %v7166 = vmul.f32 %v7147, 1.442695
        %v7167 = vpow.pop %v7166
        %v7168 = vmul.f32 %v7148, 1.442695
        %v7169 = vpow.pop %v7168
        %v7170 = vmul.f32 %v7149, 1.442695
        %v7171 = vpow.pop %v7170
        %v7172 = vmul.f32 %v7150, 1.442695
        %v7173 = vpow.pop %v7172
        %v7174 = vmul.f32 %v7151, 1.442695
        %v7175 = vpow.pop %v7174
        %v7176 = vmul.f32 %v7152, 1.442695
        %v7177 = vpow.pop %v7176
        %v7178 = vmul.f32 %v7153, 1.442695
        %v7179 = vpow.pop %v7178
        %v7180 = vmul.f32 %v7154, 1.442695
        %v7181 = vpow.pop %v7180
        %v7182 = vmul.f32 %v7155, 1.442695
        %v7183 = vpow.pop %v7182
        %v7184 = vmul.f32 %v7156, 1.442695
        %v7185 = vpow.pop %v7184
        %v7186 = vmul.f32 %v7157, 1.442695
        %v7187 = vpow.pop %v7186
        %v7188 = vmul.f32 %v7158, 1.442695
        %v7189 = vpow.pop %v7188
        %v7190 = vmul.f32 %v7159, 1.442695
        %v7191 = vpow.pop %v7190
        %v7192 = vadd.f32 %v7161, 1.0
        %v7193 = vadd.f32 %v7163, 1.0
        %v7194 = vadd.f32 %v7165, 1.0
        %v7195 = vadd.f32 %v7167, 1.0
        %v7196 = vadd.f32 %v7169, 1.0
        %v7197 = vadd.f32 %v7171, 1.0
        %v7198 = vadd.f32 %v7173, 1.0
        %v7199 = vadd.f32 %v7175, 1.0
        %v7200 = vadd.f32 %v7177, 1.0
        %v7201 = vadd.f32 %v7179, 1.0
        %v7202 = vadd.f32 %v7181, 1.0
        %v7203 = vadd.f32 %v7183, 1.0
        %v7204 = vadd.f32 %v7185, 1.0
        %v7205 = vadd.f32 %v7187, 1.0
        %v7206 = vadd.f32 %v7189, 1.0
        %v7207 = vadd.f32 %v7191, 1.0
        %v7208 = vrcp.pop %v7192
        %v7209 = vmul.f32 1.0, %v7208
        %v7210 = vrcp.pop %v7193
        %v7211 = vmul.f32 1.0, %v7210
        %v7212 = vrcp.pop %v7194
        %v7213 = vmul.f32 1.0, %v7212
        %v7214 = vrcp.pop %v7195
        %v7215 = vmul.f32 1.0, %v7214
        %v7216 = vrcp.pop %v7196
        %v7217 = vmul.f32 1.0, %v7216
        %v7218 = vrcp.pop %v7197
        %v7219 = vmul.f32 1.0, %v7218
        %v7220 = vrcp.pop %v7198
        %v7221 = vmul.f32 1.0, %v7220
        %v7222 = vrcp.pop %v7199
        %v7223 = vmul.f32 1.0, %v7222
        %v7224 = vrcp.pop %v7200
        %v7225 = vmul.f32 1.0, %v7224
        %v7226 = vrcp.pop %v7201
        %v7227 = vmul.f32 1.0, %v7226
        %v7228 = vrcp.pop %v7202
        %v7229 = vmul.f32 1.0, %v7228
        %v7230 = vrcp.pop %v7203
        %v7231 = vmul.f32 1.0, %v7230
        %v7232 = vrcp.pop %v7204
        %v7233 = vmul.f32 1.0, %v7232
        %v7234 = vrcp.pop %v7205
        %v7235 = vmul.f32 1.0, %v7234
        %v7236 = vrcp.pop %v7206
        %v7237 = vmul.f32 1.0, %v7236
        %v7238 = vrcp.pop %v7207
        %v7239 = vmul.f32 1.0, %v7238
        %v7240 = vmul.f32 %v7024, %v7209
        %v7241 = vmul.f32 %v7025, %v7211
        %v7242 = vmul.f32 %v7026, %v7213
        %v7243 = vmul.f32 %v7027, %v7215
        %v7244 = vmul.f32 %v7028, %v7217
        %v7245 = vmul.f32 %v7029, %v7219
        %v7246 = vmul.f32 %v7030, %v7221
        %v7247 = vmul.f32 %v7031, %v7223
        %v7248 = vmul.f32 %v7032, %v7225
        %v7249 = vmul.f32 %v7033, %v7227
        %v7250 = vmul.f32 %v7034, %v7229
        %v7251 = vmul.f32 %v7035, %v7231
        %v7252 = vmul.f32 %v7036, %v7233
        %v7253 = vmul.f32 %v7037, %v7235
        %v7254 = vmul.f32 %v7038, %v7237
        %v7255 = vmul.f32 %v7039, %v7239
        %v7256 = vadd.f32 %v7240, %v7242
        %v7257 = vadd.f32 %v7256, %v7244
        %v7258 = vadd.f32 %v7257, %v7246
        %v7259 = vadd.f32 %v7258, %v7248
        %v7260 = vadd.f32 %v7259, %v7250
        %v7261 = vadd.f32 %v7260, %v7252
        %v7262 = vadd.f32 %v7261, %v7254
        %v7263 = vrot.slane %v7262, 4
        %v7264 = vadd.f32 %v7262, %v7263
        %v7265 = vrot.slane %v7264, 2
        %v7266 = vadd.f32 %v7264, %v7265
        %v7267 = vrot.slane %v7266, 1
        %v7268 = vadd.f32 %v7266, %v7267
        %v7269 = vadd.f32 %v7241, %v7243
        %v7270 = vadd.f32 %v7269, %v7245
        %v7271 = vadd.f32 %v7270, %v7247
        %v7272 = vadd.f32 %v7271, %v7249
        %v7273 = vadd.f32 %v7272, %v7251
        %v7274 = vadd.f32 %v7273, %v7253
        %v7275 = vadd.f32 %v7274, %v7255
        %v7276 = vrot.slane %v7275, 4
        %v7277 = vadd.f32 %v7275, %v7276
        %v7278 = vrot.slane %v7277, 2
        %v7279 = vadd.f32 %v7277, %v7278
        %v7280 = vrot.slane %v7279, 1
        %v7281 = vadd.f32 %v7279, %v7280
        %s7282 = sld [smem:[#allocation11 + $0x5]]
        %v7283 = vstv %s7282
        %v7284 = vmul.f32 %v7124, %v7283
        %v7285 = vmul.f32 %v7125, %v7283
        %v7286 = vadd.f32 %v7268, %v7284
        %v7287 = vadd.f32 %v7281, %v7285
        %s7288 = sld [smem:[#allocation11 + $0x2]]
        %v7289 = vstv %s7288
        %v7290 = vadd.f32 %v6254, %v7289
        %v7291 = vadd.f32 %v6256, %v7289
        %v7292 = vadd.f32 %v6260, %v7289
        %v7293 = vadd.f32 %v6262, %v7289
        %v7294 = vadd.f32 %v6266, %v7289
        %v7295 = vadd.f32 %v6268, %v7289
        %v7296 = vadd.f32 %v6272, %v7289
        %v7297 = vadd.f32 %v6274, %v7289
        %v7298 = vadd.f32 %v6278, %v7289
        %v7299 = vadd.f32 %v6280, %v7289
        %v7300 = vadd.f32 %v6284, %v7289
        %v7301 = vadd.f32 %v6286, %v7289
        %v7302 = vadd.f32 %v6290, %v7289
        %v7303 = vadd.f32 %v6292, %v7289
        %v7304 = vadd.f32 %v6296, %v7289
        %v7305 = vadd.f32 %v6298, %v7289
        %v7306 = vsub.f32 0.0, %v7290
        %v7307 = vsub.f32 0.0, %v7291
        %v7308 = vsub.f32 0.0, %v7292
        %v7309 = vsub.f32 0.0, %v7293
        %v7310 = vsub.f32 0.0, %v7294
        %v7311 = vsub.f32 0.0, %v7295
        %v7312 = vsub.f32 0.0, %v7296
        %v7313 = vsub.f32 0.0, %v7297
        %v7314 = vsub.f32 0.0, %v7298
        %v7315 = vsub.f32 0.0, %v7299
        %v7316 = vsub.f32 0.0, %v7300
        %v7317 = vsub.f32 0.0, %v7301
        %v7318 = vsub.f32 0.0, %v7302
        %v7319 = vsub.f32 0.0, %v7303
        %v7320 = vsub.f32 0.0, %v7304
        %v7321 = vsub.f32 0.0, %v7305
        %v7322 = vmul.f32 %v7306, 1.442695
        %v7323 = vpow.pop %v7322
        %v7324 = vmul.f32 %v7307, 1.442695
        %v7325 = vpow.pop %v7324
        %v7326 = vmul.f32 %v7308, 1.442695
        %v7327 = vpow.pop %v7326
        %v7328 = vmul.f32 %v7309, 1.442695
        %v7329 = vpow.pop %v7328
        %v7330 = vmul.f32 %v7310, 1.442695
        %v7331 = vpow.pop %v7330
        %v7332 = vmul.f32 %v7311, 1.442695
        %v7333 = vpow.pop %v7332
        %v7334 = vmul.f32 %v7312, 1.442695
        %v7335 = vpow.pop %v7334
        %v7336 = vmul.f32 %v7313, 1.442695
        %v7337 = vpow.pop %v7336
        %v7338 = vmul.f32 %v7314, 1.442695
        %v7339 = vpow.pop %v7338
        %v7340 = vmul.f32 %v7315, 1.442695
        %v7341 = vpow.pop %v7340
        %v7342 = vmul.f32 %v7316, 1.442695
        %v7343 = vpow.pop %v7342
        %v7344 = vmul.f32 %v7317, 1.442695
        %v7345 = vpow.pop %v7344
        %v7346 = vmul.f32 %v7318, 1.442695
        %v7347 = vpow.pop %v7346
        %v7348 = vmul.f32 %v7319, 1.442695
        %v7349 = vpow.pop %v7348
        %v7350 = vmul.f32 %v7320, 1.442695
        %v7351 = vpow.pop %v7350
        %v7352 = vmul.f32 %v7321, 1.442695
        %v7353 = vpow.pop %v7352
        %v7354 = vadd.f32 %v7323, 1.0
        %v7355 = vadd.f32 %v7325, 1.0
        %v7356 = vadd.f32 %v7327, 1.0
        %v7357 = vadd.f32 %v7329, 1.0
        %v7358 = vadd.f32 %v7331, 1.0
        %v7359 = vadd.f32 %v7333, 1.0
        %v7360 = vadd.f32 %v7335, 1.0
        %v7361 = vadd.f32 %v7337, 1.0
        %v7362 = vadd.f32 %v7339, 1.0
        %v7363 = vadd.f32 %v7341, 1.0
        %v7364 = vadd.f32 %v7343, 1.0
        %v7365 = vadd.f32 %v7345, 1.0
        %v7366 = vadd.f32 %v7347, 1.0
        %v7367 = vadd.f32 %v7349, 1.0
        %v7368 = vadd.f32 %v7351, 1.0
        %v7369 = vadd.f32 %v7353, 1.0
        %v7370 = vrcp.pop %v7354
        %v7371 = vmul.f32 1.0, %v7370
        %v7372 = vrcp.pop %v7355
        %v7373 = vmul.f32 1.0, %v7372
        %v7374 = vrcp.pop %v7356
        %v7375 = vmul.f32 1.0, %v7374
        %v7376 = vrcp.pop %v7357
        %v7377 = vmul.f32 1.0, %v7376
        %v7378 = vrcp.pop %v7358
        %v7379 = vmul.f32 1.0, %v7378
        %v7380 = vrcp.pop %v7359
        %v7381 = vmul.f32 1.0, %v7380
        %v7382 = vrcp.pop %v7360
        %v7383 = vmul.f32 1.0, %v7382
        %v7384 = vrcp.pop %v7361
        %v7385 = vmul.f32 1.0, %v7384
        %v7386 = vrcp.pop %v7362
        %v7387 = vmul.f32 1.0, %v7386
        %v7388 = vrcp.pop %v7363
        %v7389 = vmul.f32 1.0, %v7388
        %v7390 = vrcp.pop %v7364
        %v7391 = vmul.f32 1.0, %v7390
        %v7392 = vrcp.pop %v7365
        %v7393 = vmul.f32 1.0, %v7392
        %v7394 = vrcp.pop %v7366
        %v7395 = vmul.f32 1.0, %v7394
        %v7396 = vrcp.pop %v7367
        %v7397 = vmul.f32 1.0, %v7396
        %v7398 = vrcp.pop %v7368
        %v7399 = vmul.f32 1.0, %v7398
        %v7400 = vrcp.pop %v7369
        %v7401 = vmul.f32 1.0, %v7400
        %v7402 = vmul.f32 %v7024, %v7371
        %v7403 = vmul.f32 %v7025, %v7373
        %v7404 = vmul.f32 %v7026, %v7375
        %v7405 = vmul.f32 %v7027, %v7377
        %v7406 = vmul.f32 %v7028, %v7379
        %v7407 = vmul.f32 %v7029, %v7381
        %v7408 = vmul.f32 %v7030, %v7383
        %v7409 = vmul.f32 %v7031, %v7385
        %v7410 = vmul.f32 %v7032, %v7387
        %v7411 = vmul.f32 %v7033, %v7389
        %v7412 = vmul.f32 %v7034, %v7391
        %v7413 = vmul.f32 %v7035, %v7393
        %v7414 = vmul.f32 %v7036, %v7395
        %v7415 = vmul.f32 %v7037, %v7397
        %v7416 = vmul.f32 %v7038, %v7399
        %v7417 = vmul.f32 %v7039, %v7401
        %v7418 = vadd.f32 %v7402, %v7404
        %v7419 = vadd.f32 %v7418, %v7406
        %v7420 = vadd.f32 %v7419, %v7408
        %v7421 = vadd.f32 %v7420, %v7410
        %v7422 = vadd.f32 %v7421, %v7412
        %v7423 = vadd.f32 %v7422, %v7414
        %v7424 = vadd.f32 %v7423, %v7416
        %v7425 = vrot.slane %v7424, 4
        %v7426 = vadd.f32 %v7424, %v7425
        %v7427 = vrot.slane %v7426, 2
        %v7428 = vadd.f32 %v7426, %v7427
        %v7429 = vrot.slane %v7428, 1
        %v7430 = vadd.f32 %v7428, %v7429
        %v7431 = vadd.f32 %v7403, %v7405
        %v7432 = vadd.f32 %v7431, %v7407
        %v7433 = vadd.f32 %v7432, %v7409
        %v7434 = vadd.f32 %v7433, %v7411
        %v7435 = vadd.f32 %v7434, %v7413
        %v7436 = vadd.f32 %v7435, %v7415
        %v7437 = vadd.f32 %v7436, %v7417
        %v7438 = vrot.slane %v7437, 4
        %v7439 = vadd.f32 %v7437, %v7438
        %v7440 = vrot.slane %v7439, 2
        %v7441 = vadd.f32 %v7439, %v7440
        %v7442 = vrot.slane %v7441, 1
        %v7443 = vadd.f32 %v7441, %v7442
        %s7444 = sld [smem:[#allocation11 + $0x6]]
        %v7445 = vstv %s7444
        %v7446 = vmul.f32 %v7124, %v7445
        %v7447 = vmul.f32 %v7125, %v7445
        %v7448 = vadd.f32 %v7430, %v7446
        %v7449 = vadd.f32 %v7443, %v7447
        %s7450 = sld [smem:[#allocation11 + $0x3]]
        %v7451 = vstv %s7450
        %v7452 = vadd.f32 %v6302, %v7451
        %v7453 = vadd.f32 %v6304, %v7451
        %v7454 = vadd.f32 %v6308, %v7451
        %v7455 = vadd.f32 %v6310, %v7451
        %v7456 = vadd.f32 %v6314, %v7451
        %v7457 = vadd.f32 %v6316, %v7451
        %v7458 = vadd.f32 %v6320, %v7451
        %v7459 = vadd.f32 %v6322, %v7451
        %v7460 = vadd.f32 %v6326, %v7451
        %v7461 = vadd.f32 %v6328, %v7451
        %v7462 = vadd.f32 %v6332, %v7451
        %v7463 = vadd.f32 %v6334, %v7451
        %v7464 = vadd.f32 %v6338, %v7451
        %v7465 = vadd.f32 %v6340, %v7451
        %v7466 = vadd.f32 %v6344, %v7451
        %v7467 = vadd.f32 %v6346, %v7451
        %v7468 = vsub.f32 0.0, %v7452
        %v7469 = vsub.f32 0.0, %v7453
        %v7470 = vsub.f32 0.0, %v7454
        %v7471 = vsub.f32 0.0, %v7455
        %v7472 = vsub.f32 0.0, %v7456
        %v7473 = vsub.f32 0.0, %v7457
        %v7474 = vsub.f32 0.0, %v7458
        %v7475 = vsub.f32 0.0, %v7459
        %v7476 = vsub.f32 0.0, %v7460
        %v7477 = vsub.f32 0.0, %v7461
        %v7478 = vsub.f32 0.0, %v7462
        %v7479 = vsub.f32 0.0, %v7463
        %v7480 = vsub.f32 0.0, %v7464
        %v7481 = vsub.f32 0.0, %v7465
        %v7482 = vsub.f32 0.0, %v7466
        %v7483 = vsub.f32 0.0, %v7467
        %v7484 = vmul.f32 %v7468, 1.442695
        %v7485 = vpow.pop %v7484
        %v7486 = vmul.f32 %v7469, 1.442695
        %v7487 = vpow.pop %v7486
        %v7488 = vmul.f32 %v7470, 1.442695
        %v7489 = vpow.pop %v7488
        %v7490 = vmul.f32 %v7471, 1.442695
        %v7491 = vpow.pop %v7490
        %v7492 = vmul.f32 %v7472, 1.442695
        %v7493 = vpow.pop %v7492
        %v7494 = vmul.f32 %v7473, 1.442695
        %v7495 = vpow.pop %v7494
        %v7496 = vmul.f32 %v7474, 1.442695
        %v7497 = vpow.pop %v7496
        %v7498 = vmul.f32 %v7475, 1.442695
        %v7499 = vpow.pop %v7498
        %v7500 = vmul.f32 %v7476, 1.442695
        %v7501 = vpow.pop %v7500
        %v7502 = vmul.f32 %v7477, 1.442695
        %v7503 = vpow.pop %v7502
        %v7504 = vmul.f32 %v7478, 1.442695
        %v7505 = vpow.pop %v7504
        %v7506 = vmul.f32 %v7479, 1.442695
        %v7507 = vpow.pop %v7506
        %v7508 = vmul.f32 %v7480, 1.442695
        %v7509 = vpow.pop %v7508
        %v7510 = vmul.f32 %v7481, 1.442695
        %v7511 = vpow.pop %v7510
        %v7512 = vmul.f32 %v7482, 1.442695
        %v7513 = vpow.pop %v7512
        %v7514 = vmul.f32 %v7483, 1.442695
        %v7515 = vpow.pop %v7514
        %v7516 = vadd.f32 %v7485, 1.0
        %v7517 = vadd.f32 %v7487, 1.0
        %v7518 = vadd.f32 %v7489, 1.0
        %v7519 = vadd.f32 %v7491, 1.0
        %v7520 = vadd.f32 %v7493, 1.0
        %v7521 = vadd.f32 %v7495, 1.0
        %v7522 = vadd.f32 %v7497, 1.0
        %v7523 = vadd.f32 %v7499, 1.0
        %v7524 = vadd.f32 %v7501, 1.0
        %v7525 = vadd.f32 %v7503, 1.0
        %v7526 = vadd.f32 %v7505, 1.0
        %v7527 = vadd.f32 %v7507, 1.0
        %v7528 = vadd.f32 %v7509, 1.0
        %v7529 = vadd.f32 %v7511, 1.0
        %v7530 = vadd.f32 %v7513, 1.0
        %v7531 = vadd.f32 %v7515, 1.0
        %v7532 = vrcp.pop %v7516
        %v7533 = vmul.f32 1.0, %v7532
        %v7534 = vrcp.pop %v7517
        %v7535 = vmul.f32 1.0, %v7534
        %v7536 = vrcp.pop %v7518
        %v7537 = vmul.f32 1.0, %v7536
        %v7538 = vrcp.pop %v7519
        %v7539 = vmul.f32 1.0, %v7538
        %v7540 = vrcp.pop %v7520
        %v7541 = vmul.f32 1.0, %v7540
        %v7542 = vrcp.pop %v7521
        %v7543 = vmul.f32 1.0, %v7542
        %v7544 = vrcp.pop %v7522
        %v7545 = vmul.f32 1.0, %v7544
        %v7546 = vrcp.pop %v7523
        %v7547 = vmul.f32 1.0, %v7546
        %v7548 = vrcp.pop %v7524
        %v7549 = vmul.f32 1.0, %v7548
        %v7550 = vrcp.pop %v7525
        %v7551 = vmul.f32 1.0, %v7550
        %v7552 = vrcp.pop %v7526
        %v7553 = vmul.f32 1.0, %v7552
        %v7554 = vrcp.pop %v7527
        %v7555 = vmul.f32 1.0, %v7554
        %v7556 = vrcp.pop %v7528
        %v7557 = vmul.f32 1.0, %v7556
        %v7558 = vrcp.pop %v7529
        %v7559 = vmul.f32 1.0, %v7558
        %v7560 = vrcp.pop %v7530
        %v7561 = vmul.f32 1.0, %v7560
        %v7562 = vrcp.pop %v7531
        %v7563 = vmul.f32 1.0, %v7562
        %v7564 = vmul.f32 %v7024, %v7533
        %v7565 = vmul.f32 %v7025, %v7535
        %v7566 = vmul.f32 %v7026, %v7537
        %v7567 = vmul.f32 %v7027, %v7539
        %v7568 = vmul.f32 %v7028, %v7541
        %v7569 = vmul.f32 %v7029, %v7543
        %v7570 = vmul.f32 %v7030, %v7545
        %v7571 = vmul.f32 %v7031, %v7547
        %v7572 = vmul.f32 %v7032, %v7549
        %v7573 = vmul.f32 %v7033, %v7551
        %v7574 = vmul.f32 %v7034, %v7553
        %v7575 = vmul.f32 %v7035, %v7555
        %v7576 = vmul.f32 %v7036, %v7557
        %v7577 = vmul.f32 %v7037, %v7559
        %v7578 = vmul.f32 %v7038, %v7561
        %v7579 = vmul.f32 %v7039, %v7563
        %v7580 = vadd.f32 %v7564, %v7566
        %v7581 = vadd.f32 %v7580, %v7568
        %v7582 = vadd.f32 %v7581, %v7570
        %v7583 = vadd.f32 %v7582, %v7572
        %v7584 = vadd.f32 %v7583, %v7574
        %v7585 = vadd.f32 %v7584, %v7576
        %v7586 = vadd.f32 %v7585, %v7578
        %v7587 = vrot.slane %v7586, 4
        %v7588 = vadd.f32 %v7586, %v7587
        %v7589 = vrot.slane %v7588, 2
        %v7590 = vadd.f32 %v7588, %v7589
        %v7591 = vrot.slane %v7590, 1
        %v7592 = vadd.f32 %v7590, %v7591
        %v7593 = vadd.f32 %v7565, %v7567
        %v7594 = vadd.f32 %v7593, %v7569
        %v7595 = vadd.f32 %v7594, %v7571
        %v7596 = vadd.f32 %v7595, %v7573
        %v7597 = vadd.f32 %v7596, %v7575
        %v7598 = vadd.f32 %v7597, %v7577
        %v7599 = vadd.f32 %v7598, %v7579
        %v7600 = vrot.slane %v7599, 4
        %v7601 = vadd.f32 %v7599, %v7600
        %v7602 = vrot.slane %v7601, 2
        %v7603 = vadd.f32 %v7601, %v7602
        %v7604 = vrot.slane %v7603, 1
        %v7605 = vadd.f32 %v7603, %v7604
        %s7606 = sld [smem:[#allocation11 + $0x7]]
        %v7607 = vstv %s7606
        %v7608 = vmul.f32 %v7124, %v7607
        %v7609 = vmul.f32 %v7125, %v7607
        %v7610 = vadd.f32 %v7592, %v7608
        %v7611 = vadd.f32 %v7605, %v7609
        %s7612 = sld [smem:[#allocation11 + $0x4]]
        %v7613 = vstv %s7612
        %v7614 = vadd.f32 %v6350, %v7613
        %v7615 = vadd.f32 %v6352, %v7613
        %v7616 = vadd.f32 %v6356, %v7613
        %v7617 = vadd.f32 %v6358, %v7613
        %v7618 = vadd.f32 %v6362, %v7613
        %v7619 = vadd.f32 %v6364, %v7613
        %v7620 = vadd.f32 %v6368, %v7613
        %v7621 = vadd.f32 %v6370, %v7613
        %v7622 = vadd.f32 %v6374, %v7613
        %v7623 = vadd.f32 %v6376, %v7613
        %v7624 = vadd.f32 %v6380, %v7613
        %v7625 = vadd.f32 %v6382, %v7613
        %v7626 = vadd.f32 %v6386, %v7613
        %v7627 = vadd.f32 %v6388, %v7613
        %v7628 = vadd.f32 %v6392, %v7613
        %v7629 = vadd.f32 %v6394, %v7613
        %v7630 = vsub.f32 0.0, %v7614
        %v7631 = vsub.f32 0.0, %v7615
        %v7632 = vsub.f32 0.0, %v7616
        %v7633 = vsub.f32 0.0, %v7617
        %v7634 = vsub.f32 0.0, %v7618
        %v7635 = vsub.f32 0.0, %v7619
        %v7636 = vsub.f32 0.0, %v7620
        %v7637 = vsub.f32 0.0, %v7621
        %v7638 = vsub.f32 0.0, %v7622
        %v7639 = vsub.f32 0.0, %v7623
        %v7640 = vsub.f32 0.0, %v7624
        %v7641 = vsub.f32 0.0, %v7625
        %v7642 = vsub.f32 0.0, %v7626
        %v7643 = vsub.f32 0.0, %v7627
        %v7644 = vsub.f32 0.0, %v7628
        %v7645 = vsub.f32 0.0, %v7629
        %v7646 = vmul.f32 %v7630, 1.442695
        %v7647 = vpow.pop %v7646
        %v7648 = vmul.f32 %v7631, 1.442695
        %v7649 = vpow.pop %v7648
        %v7650 = vmul.f32 %v7632, 1.442695
        %v7651 = vpow.pop %v7650
        %v7652 = vmul.f32 %v7633, 1.442695
        %v7653 = vpow.pop %v7652
        %v7654 = vmul.f32 %v7634, 1.442695
        %v7655 = vpow.pop %v7654
        %v7656 = vmul.f32 %v7635, 1.442695
        %v7657 = vpow.pop %v7656
        %v7658 = vmul.f32 %v7636, 1.442695
        %v7659 = vpow.pop %v7658
        %v7660 = vmul.f32 %v7637, 1.442695
        %v7661 = vpow.pop %v7660
        %v7662 = vmul.f32 %v7638, 1.442695
        %v7663 = vpow.pop %v7662
        %v7664 = vmul.f32 %v7639, 1.442695
        %v7665 = vpow.pop %v7664
        %v7666 = vmul.f32 %v7640, 1.442695
        %v7667 = vpow.pop %v7666
        %v7668 = vmul.f32 %v7641, 1.442695
        %v7669 = vpow.pop %v7668
        %v7670 = vmul.f32 %v7642, 1.442695
        %v7671 = vpow.pop %v7670
        %v7672 = vmul.f32 %v7643, 1.442695
        %v7673 = vpow.pop %v7672
        %v7674 = vmul.f32 %v7644, 1.442695
        %v7675 = vpow.pop %v7674
        %v7676 = vmul.f32 %v7645, 1.442695
        %v7677 = vpow.pop %v7676
        %v7678 = vadd.f32 %v7647, 1.0
        %v7679 = vadd.f32 %v7649, 1.0
        %v7680 = vadd.f32 %v7651, 1.0
        %v7681 = vadd.f32 %v7653, 1.0
        %v7682 = vadd.f32 %v7655, 1.0
        %v7683 = vadd.f32 %v7657, 1.0
        %v7684 = vadd.f32 %v7659, 1.0
        %v7685 = vadd.f32 %v7661, 1.0
        %v7686 = vadd.f32 %v7663, 1.0
        %v7687 = vadd.f32 %v7665, 1.0
        %v7688 = vadd.f32 %v7667, 1.0
        %v7689 = vadd.f32 %v7669, 1.0
        %v7690 = vadd.f32 %v7671, 1.0
        %v7691 = vadd.f32 %v7673, 1.0
        %v7692 = vadd.f32 %v7675, 1.0
        %v7693 = vadd.f32 %v7677, 1.0
        %v7694 = vrcp.pop %v7678
        %v7695 = vmul.f32 1.0, %v7694
        %v7696 = vrcp.pop %v7679
        %v7697 = vmul.f32 1.0, %v7696
        %v7698 = vrcp.pop %v7680
        %v7699 = vmul.f32 1.0, %v7698
        %v7700 = vrcp.pop %v7681
        %v7701 = vmul.f32 1.0, %v7700
        %v7702 = vrcp.pop %v7682
        %v7703 = vmul.f32 1.0, %v7702
        %v7704 = vrcp.pop %v7683
        %v7705 = vmul.f32 1.0, %v7704
        %v7706 = vrcp.pop %v7684
        %v7707 = vmul.f32 1.0, %v7706
        %v7708 = vrcp.pop %v7685
        %v7709 = vmul.f32 1.0, %v7708
        %v7710 = vrcp.pop %v7686
        %v7711 = vmul.f32 1.0, %v7710
        %v7712 = vrcp.pop %v7687
        %v7713 = vmul.f32 1.0, %v7712
        %v7714 = vrcp.pop %v7688
        %v7715 = vmul.f32 1.0, %v7714
        %v7716 = vrcp.pop %v7689
        %v7717 = vmul.f32 1.0, %v7716
        %v7718 = vrcp.pop %v7690
        %v7719 = vmul.f32 1.0, %v7718
        %v7720 = vrcp.pop %v7691
        %v7721 = vmul.f32 1.0, %v7720
        %v7722 = vrcp.pop %v7692
        %v7723 = vmul.f32 1.0, %v7722
        %v7724 = vrcp.pop %v7693
        %v7725 = vmul.f32 1.0, %v7724
        %v7726 = vmul.f32 %v7024, %v7695
        %v7727 = vmul.f32 %v7025, %v7697
        %v7728 = vmul.f32 %v7026, %v7699
        %v7729 = vmul.f32 %v7027, %v7701
        %v7730 = vmul.f32 %v7028, %v7703
        %v7731 = vmul.f32 %v7029, %v7705
        %v7732 = vmul.f32 %v7030, %v7707
        %v7733 = vmul.f32 %v7031, %v7709
        %v7734 = vmul.f32 %v7032, %v7711
        %v7735 = vmul.f32 %v7033, %v7713
        %v7736 = vmul.f32 %v7034, %v7715
        %v7737 = vmul.f32 %v7035, %v7717
        %v7738 = vmul.f32 %v7036, %v7719
        %v7739 = vmul.f32 %v7037, %v7721
        %v7740 = vmul.f32 %v7038, %v7723
        %v7741 = vmul.f32 %v7039, %v7725
        %v7742 = vadd.f32 %v7726, %v7728
        %v7743 = vadd.f32 %v7742, %v7730
        %v7744 = vadd.f32 %v7743, %v7732
        %v7745 = vadd.f32 %v7744, %v7734
        %v7746 = vadd.f32 %v7745, %v7736
        %v7747 = vadd.f32 %v7746, %v7738
        %v7748 = vadd.f32 %v7747, %v7740
        %v7749 = vrot.slane %v7748, 4
        %v7750 = vadd.f32 %v7748, %v7749
        %v7751 = vrot.slane %v7750, 2
        %v7752 = vadd.f32 %v7750, %v7751
        %v7753 = vrot.slane %v7752, 1
        %v7754 = vadd.f32 %v7752, %v7753
        %v7755 = vadd.f32 %v7727, %v7729
        %v7756 = vadd.f32 %v7755, %v7731
        %v7757 = vadd.f32 %v7756, %v7733
        %v7758 = vadd.f32 %v7757, %v7735
        %v7759 = vadd.f32 %v7758, %v7737
        %v7760 = vadd.f32 %v7759, %v7739
        %v7761 = vadd.f32 %v7760, %v7741
        %v7762 = vrot.slane %v7761, 4
        %v7763 = vadd.f32 %v7761, %v7762
        %v7764 = vrot.slane %v7763, 2
        %v7765 = vadd.f32 %v7763, %v7764
        %v7766 = vrot.slane %v7765, 1
        %v7767 = vadd.f32 %v7765, %v7766
        %s7768 = sld [smem:[#allocation11 + $0x8]]
        %v7769 = vstv %s7768
        %v7770 = vmul.f32 %v7124, %v7769
        %v7771 = vmul.f32 %v7125, %v7769
        %v7772 = vadd.f32 %v7754, %v7770
        %v7773 = vadd.f32 %v7767, %v7771
        %vm7774 = vcmask 1040384
        %v7775 = vsel %vm7774, %v7286, %v7448
        %v7776 = vsel %vm7774, %v7287, %v7449
        %vm7777 = vcmask 1041408
        %v7778 = vsel %vm7777, %v7775, %v7610
        %v7779 = vsel %vm7777, %v7776, %v7611
        %vm7780 = vcmask 1042432
        %v7781 = vsel %vm7780, %v7778, %v7772
        %v7782 = vsel %vm7780, %v7779, %v7773
        %vm7783 = vcmask 1043456
        %v7784 = vsel %vm7783, %v7781, %v7094
        %v7785 = vsel %vm7783, %v7782, %v7107
        %vm7786 = vcmask 1044480
        %v7787 = vsel %vm7786, %v7784, %v7052
        %v7788 = vsel %vm7786, %v7785, %v7065
        %7789 = vst [vmem:[%s327] sm:$0x3f] %v7787
        %7790 = vst [vmem:[%s327 + $0x8] sm:$0x3f] %v7788
        %s7791 = sand.u32 %s148, 1
        %s7792 = scalar_lea.sflag [#allocation4], %s7791
        %s7793 = sand.u32 %s148, 1
        %s7794 = smul.addr %s7793, 16
        %s7795 = scalar_lea.vmem [#allocation12], %s7794
        %s7796 = sand.u32 %s174, 1
        %s7797 = scalar_lea.sflag [#allocation14], %s7796
        %s7798 = sand.u32 %s174, 1
        %s7799 = smul.addr %s7798, 128
        %s7800 = scalar_lea.vmem [#allocation13], %s7799
        // Predicated region
        $region61: #{tpu_custom_call.1} parent=39 // pred_check
          %p7801 = pneg %p158
        $region62: #{tpu_custom_call.1} parent=39 // pred_check_branch
          %7803 = sbr.rel (%p7801) target = $region64
        $region63: #{tpu_custom_call.1} parent=39 // pred_region
          %s7804 = smul.u32 2, %s30
          %s7806 = ssub.s32 256, 256
          %7807 = vsyncadd %s7792, %s7806
          %s7808 = smul.addr %s7804, 128
          %s7809 = scalar_lea.hbm %s5, %s7808
          %s7811 = sshll.u32 %s7795, 4
          %s7812 = int_to_ptr.vmem [resolvable:$true] %s7811
          %7814 = dma.vmem_to_hbm [thread:$0]  %s7812, 256, %s7809, %s7792
        $region64: #{tpu_custom_call.1} parent=39 // pred_fallthru
          _
        // Predicated region
        $region65: #{tpu_custom_call.1} parent=39 // pred_check
          %p7815 = pneg %p184
        $region66: #{tpu_custom_call.1} parent=39 // pred_check_branch
          %7817 = sbr.rel (%p7815) target = $region68
        $region67: #{tpu_custom_call.1} parent=39 // pred_region
          %s7818 = smul.u32 2, %s30
          %s7820 = ssub.s32 2048, 2048
          %7821 = vsyncadd %s7797, %s7820
          %s7822 = smul.addr %s7818, 128
          %s7823 = scalar_lea.hbm %s6, %s7822
          %s7824 = sshll.u32 %s7800, 4
          %s7825 = int_to_ptr.vmem [resolvable:$true] %s7824
          %7830 = dma.vmem_to_hbm [thread:$0]  %s7825, 2048, %s7823, %s7797, 256, 2048, 16
        $region68: #{tpu_custom_call.1} parent=39 // pred_fallthru
          _
      $region40: #{tpu_custom_call.1} parent=5 // pred_fallthru
        _
      %p7831 = scmp.le.s32.totalorder 2, %s25
      // Predicated region
      $region69: #{tpu_custom_call.1} parent=5 // pred_check
        %p7832 = pneg %p7831
      $region70: #{tpu_custom_call.1} parent=5 // pred_check_branch
        %7834 = sbr.rel (%p7832) target = $region72
      $region71: #{tpu_custom_call.1} parent=5 // pred_region
        %s7835 = ssub.s32 %s25, 2
        // Predicated region
        $region73: #{tpu_custom_call.1} parent=71 // pred_check
          %p7836 = pneg %p164
        $region74: #{tpu_custom_call.1} parent=71 // pred_check_branch
          %7838 = sbr.rel (%p7836) target = $region76
        $region75: #{tpu_custom_call.1} parent=71 // pred_region
          %s7839 = sand.u32 %s149, 1
          %s7840 = scalar_lea.sflag [#allocation4], %s7839
          %s7841 = sand.u32 %s149, 1
          %s7842 = smul.addr %s7841, 16
          %s7843 = scalar_lea.vmem [#allocation12], %s7842
          %7844 = dma.done %s7840, 256
        $region76: #{tpu_custom_call.1} parent=71 // pred_fallthru
          _
        // Predicated region
        $region77: #{tpu_custom_call.1} parent=71 // pred_check
          %p7845 = pneg %p190
        $region78: #{tpu_custom_call.1} parent=71 // pred_check_branch
          %7847 = sbr.rel (%p7845) target = $region80
        $region79: #{tpu_custom_call.1} parent=71 // pred_region
          %s7848 = sand.u32 %s175, 1
          %s7849 = scalar_lea.sflag [#allocation14], %s7848
          %s7850 = sand.u32 %s175, 1
          %s7851 = smul.addr %s7850, 128
          %s7852 = scalar_lea.vmem [#allocation13], %s7851
          %7853 = dma.done %s7849, 2048
        $region80: #{tpu_custom_call.1} parent=71 // pred_fallthru
          _
      $region72: #{tpu_custom_call.1} parent=5 // pred_fallthru
        _
    $region6: #{tpu_custom_call.1} parent=1 // loop_footer
      %s29 = sadd.s32 1, %s25
    $region7: #{tpu_custom_call.1} parent=1 // loop_footer_branch
      %24 = sbr.rel target = $region3
    $region8: #{tpu_custom_call.1} parent=1 // loop_exit
      _
    %7854 = vsyncpa [#allocation3], 1
    %s7855 = scalar_lea.sflag [#allocation3], 1
    %7856 = vsyncpa %s7855, 1
    %7857 = vsyncpa [#allocation7], 1
    %7858 = vsyncpa [#allocation10], 1
    %7859 = vsyncpa [#allocation4], 1
    %s7860 = scalar_lea.sflag [#allocation4], 1
    %7861 = vsyncpa %s7860, 1
    %7862 = vsyncpa [#allocation14], 1
    %s7863 = scalar_lea.sflag [#allocation14], 1
    %7864 = vsyncpa %s7863, 1
    %7865 = vsyncpa [#allocation5], 1
    %s7866 = scalar_lea.sflag [#allocation5], 1
    %7867 = vsyncpa %s7866, 1

</llo_original>
